<compile_context>
chip_gen: v7x
topology: tpu7x:2x2x1
jax: 0.10.0
libtpu: 0.0.40
codegen_flags: <defaults>
</compile_context>

<pallas_src>
import functools
import math

import jax
import jax.numpy as jnp
from jax import lax
from jax.experimental import pallas as pl
from jax.experimental.pallas import tpu as pltpu

LN_EPS = 1e-5
NEG_BIG = -1e30
VMEM_LIMIT = 64 * 1024 * 1024  # safe on v5e/v6e (128 MiB) and v7x (64 MiB physical)


# ----------------------------------------------------------------------------
# In-kernel math helpers (operate on loaded values, not refs)
# ----------------------------------------------------------------------------
def _silu(x):
    # EUP approx reciprocal sits in its own VLIW slot; fine for the hot SiLU path.
    return x * pl.reciprocal(1.0 + jnp.exp(-x), approx=True)


def _sigmoid_exact(x):
    return 1.0 / (1.0 + jnp.exp(-x))


def _softplus(x):
    return jnp.maximum(x, 0.0) + jnp.log(1.0 + jnp.exp(-jnp.abs(x)))


def _layernorm(y, g, b):
    mu = jnp.mean(y, axis=-1, keepdims=True)
    var = jnp.mean((y - mu) ** 2, axis=-1, keepdims=True)
    return (y - mu) * lax.rsqrt(var + LN_EPS) * g + b


def _softmax_lastdim(y):
    m = jnp.max(y, axis=-1, keepdims=True)
    e = jnp.exp(y - m)
    return e / jnp.sum(e, axis=-1, keepdims=True)     # exact division


# ----------------------------------------------------------------------------
# Kernel 1: per-layer prep, tiled over node rows.
#   (optional fused input projection) + pos encoder + x_enhanced +
#   ONE lane-dense matmul xe @ W_all producing both x@W1_tgt and x@W1_src slabs.
# ----------------------------------------------------------------------------
def _layer_prep_kernel(*refs, num_scales, h, has_in_proj):
    if has_in_proj:
        (x_ref, inw_ref, inp_ref, pb_ref, wp1_ref, bp1_ref, wp2_ref, bp2_ref,
         wall_ref, xe_ref, a_ref, b_ref) = refs
    else:
        (x_ref, pb_ref, wp1_ref, bp1_ref, wp2_ref, bp2_ref,
         wall_ref, xe_ref, a_ref, b_ref) = refs

    x = x_ref[...]
    if has_in_proj:
        p = inp_ref[...]                               # [3,H]: bias, ln gamma, ln beta
        y0 = jnp.dot(x.astype(jnp.bfloat16), inw_ref[...],
                     preferred_element_type=jnp.float32) + p[0:1]
        x = _silu(_layernorm(y0, p[1:2], p[2:3]))      # dropout = identity

    pb = pb_ref[...]
    pos = pb[:, 0:3]                                   # f32 positions (keep precision)
    pe = _silu(jnp.dot(pos, wp1_ref[...],
                       preferred_element_type=jnp.float32) + bp1_ref[...])
    pe = jnp.dot(pe, wp2_ref[...], preferred_element_type=jnp.float32) + bp2_ref[...]
    xe = x + pe
    xe_ref[...] = xe

    # single lane-dense MXU call replaces 2*S per-scale matmuls
    y = jnp.dot(xe.astype(jnp.bfloat16), wall_ref[...],
                preferred_element_type=jnp.float32)    # [tile, 2*S*2H]
    s2h = num_scales * 2 * h
    a_ref[...] = y[:, :s2h]                            # x @ W1_tgt  (all scales)
    b_ref[...] = y[:, s2h:]                            # x @ W1_src  (all scales)


def layer_prep(x, pb, lp, *, in_proj, num_scales, tile):
    Np, F = x.shape
    H = lp["pos2_w"].shape[1]
    Hh = lp["pos1_w"].shape[1]
    S2H = num_scales * 2 * H
    has = in_proj is not None
    kern = functools.partial(_layer_prep_kernel, num_scales=num_scales, h=H,
                             has_in_proj=has)

    in_specs = [pl.BlockSpec((tile, F), lambda i: (i, 0))]
    args = [x]
    if has:
        in_w, in_p = in_proj
        in_specs += [pl.BlockSpec((F, H), lambda i: (0, 0)),
                     pl.BlockSpec((3, H), lambda i: (0, 0))]
        args += [in_w, in_p]
    in_specs += [
        pl.BlockSpec((tile, pb.shape[1]), lambda i: (i, 0)),
        pl.BlockSpec((3, Hh), lambda i: (0, 0)),
        pl.BlockSpec((1, Hh), lambda i: (0, 0)),
        pl.BlockSpec((Hh, H), lambda i: (0, 0)),
        pl.BlockSpec((1, H), lambda i: (0, 0)),
        pl.BlockSpec((H, 2 * S2H), lambda i: (0, 0)),
    ]
    args += [pb, lp["pos1_w"], lp["pos1_b"], lp["pos2_w"], lp["pos2_b"], lp["w_all"]]

    return pl.pallas_call(
        kern,
        out_shape=(jax.ShapeDtypeStruct((Np, H), jnp.float32),
                   jax.ShapeDtypeStruct((Np, S2H), jnp.float32),
                   jax.ShapeDtypeStruct((Np, S2H), jnp.float32)),
        grid=(Np // tile,),
        in_specs=in_specs,
        out_specs=(pl.BlockSpec((tile, H), lambda i: (i, 0)),
                   pl.BlockSpec((tile, S2H), lambda i: (i, 0)),
                   pl.BlockSpec((tile, S2H), lambda i: (i, 0))),
        compiler_params=pltpu.CompilerParams(
            dimension_semantics=("parallel",), vmem_limit_bytes=VMEM_LIMIT),
    )(*args)


# ----------------------------------------------------------------------------
# Kernel 2: fused multi-scale EGNN layer.
#   grid = (target tiles ["parallel"], source tiles ["arbitrary"]).
#   Edge geometry + adjacency mask are built in VMEM from pos/batch; edge
#   intermediates are bounded by [tile, src_tile, 2H] and never touch HBM.
#   Aggregation accumulates into a VMEM scratch; scale attention + update MLP +
#   residual + LayerNorm run on the last source step.
# ----------------------------------------------------------------------------
def _egnn_layer_kernel(a_ref, b_ref, pbt_ref, pbs_ref, xe_ref,
                       wgeom_ref, cgb_ref, w2_ref, b2_ref,
                       ws1_ref, bs1_ref, ws2_ref, bs2_ref,
                       wu1_ref, u1p_ref, wu2_ref, u2p_ref,
                       o_ref, agg_ref, *, num_scales, tile_t, src_t, h, radius):
    two_h = 2 * h
    j = pl.program_id(1)

    @pl.when(j == 0)
    def _():
        agg_ref[...] = jnp.zeros_like(agg_ref)

    # --- edge geometry + adjacency mask, computed in VMEM (never stored to HBM) ---
    pbt = pbt_ref[...]                                  # [T, 4]  pos | batch (targets)
    pbs = pbs_ref[...]                                  # [Sr, 4] pos | batch (sources)
    pos_t = pbt[:, 0:3]
    pos_s = pbs[:, 0:3]
    diff = pos_s[None, :, :] - pos_t[:, None, :]        # [T, Sr, 3]  (pos_j - pos_i)
    dx = diff[:, :, 0:1]
    dy = diff[:, :, 1:2]
    dz = diff[:, :, 2:3]
    d2 = dx * dx + dy * dy + dz * dz                    # [T, Sr, 1]
    dist = jnp.sqrt(d2)
    inv_d = 1.0 / (dist + 1e-8)                         # exact (matches reference)
    dn = dist * (1.0 / (radius + 1e-8))
    ex = dx * inv_d
    ey = dy * inv_d
    ez = dz * inv_d

    same3 = pbt[:, 3:4][:, None, :] == pbs[:, 3:4][None, :, :]          # [T, Sr, 1]
    row_ids = lax.broadcasted_iota(jnp.int32, (tile_t, src_t, 1), 0) + \
        pl.program_id(0) * tile_t
    col_ids = lax.broadcasted_iota(jnp.int32, (tile_t, src_t, 1), 1) + \
        pl.program_id(1) * src_t
    edge_mask = jnp.where(same3 & (d2 <= radius * radius) & (row_ids != col_ids),
                          1.0, 0.0)                                     # [T, Sr, 1]
    # TODO(synk): radius_graph's max_num_neighbors=32 cap and the empty-graph
    # early-return branch of the reference are data-dependent and not replicated.

    a = a_ref[...]                                      # [T, S*2H]
    b = b_ref[...]                                      # [Sr, S*2H]
    for s in range(num_scales):                         # static, tiny S
        a_s = a[:, s * two_h:(s + 1) * two_h]
        b_s = b[:, s * two_h:(s + 1) * two_h]
        wg = wgeom_ref[s]                               # [4, 2H]
        cgb = cgb_ref[s]                                # [3, 2H]: scale*w+b1, ln g, ln b
        # K=4 geometry "matmul" done as 4 VPU FMAs (frees MXU push slots)
        gh = (ex * wg[0:1][None] + ey * wg[1:2][None] + ez * wg[2:3][None]
              + dn * wg[3:4][None] + cgb[0:1][None])                    # [T, Sr, 2H]
        pre = a_s[:, None, :] + b_s[None, :, :] + gh
        hm = _silu(_layernorm(pre, cgb[1:2][None], cgb[2:3][None]))
        msg = jnp.dot(hm.reshape(tile_t * src_t, two_h).astype(jnp.bfloat16),
                      w2_ref[s], preferred_element_type=jnp.float32) + b2_ref[s]
        msg = msg.reshape(tile_t, src_t, h) * edge_mask
        agg_ref[s] += jnp.sum(msg, axis=1)              # masked sum over sources

    @pl.when(j == pl.num_programs(1) - 1)
    def _():
        xe = xe_ref[...]
        combined = jnp.concatenate([agg_ref[s_] for s_ in range(num_scales)],
                                   axis=-1)             # [T, S*H]
        sa = _silu(jnp.dot(combined.astype(jnp.bfloat16), ws1_ref[...],
                           preferred_element_type=jnp.float32) + bs1_ref[...])
        aw = _softmax_lastdim(
            jnp.dot(sa.astype(jnp.bfloat16), ws2_ref[...],
                    preferred_element_type=jnp.float32) + bs2_ref[...])  # [T, S]
        weighted = combined[:, 0:h] * aw[:, 0:1]
        for s in range(1, num_scales):
            weighted = weighted + combined[:, s * h:(s + 1) * h] * aw[:, s:s + 1]

        # update MLP + residual + LayerNorm (dropout = identity)
        u1p = u1p_ref[...]
        hu = jnp.dot(jnp.concatenate([xe, weighted], axis=-1).astype(jnp.bfloat16),
                     wu1_ref[...], preferred_element_type=jnp.float32) + u1p[0:1]
        hu = _silu(_layernorm(hu, u1p[1:2], u1p[2:3]))
        u2p = u2p_ref[...]
        out = jnp.dot(hu.astype(jnp.bfloat16), wu2_ref[...],
                      preferred_element_type=jnp.float32) + u2p[0:1] + xe
        o_ref[...] = _layernorm(out, u2p[1:2], u2p[2:3])


def egnn_layer(a_all, b_all, pb, xe, lp, *, radius, num_scales, tile, src_tile):
    Np, S2H = a_all.shape
    H = xe.shape[1]
    H2 = 2 * H
    S = num_scales
    PBW = pb.shape[1]
    Hq = lp["satt1_w"].shape[1]
    kern = functools.partial(_egnn_layer_kernel, num_scales=S, tile_t=tile,
                             src_t=src_tile, h=H, radius=radius)
    # NOTE: grid-invariant weight refs are still double-buffered by default;
    # single-buffering them (pl.Buffered(1)) would free a little VMEM on v7x.
    return pl.pallas_call(
        kern,
        out_shape=jax.ShapeDtypeStruct((Np, H), jnp.float32),
        grid=(Np // tile, Np // src_tile),
        in_specs=[
            pl.BlockSpec((tile, S2H), lambda i, j: (i, 0)),       # x_i @ W1_tgt rows
            pl.BlockSpec((src_tile, S2H), lambda i, j: (j, 0)),   # x_j @ W1_src rows
            pl.BlockSpec((tile, PBW), lambda i, j: (i, 0)),       # pos|batch (targets)
            pl.BlockSpec((src_tile, PBW), lambda i, j: (j, 0)),   # pos|batch (sources)
            pl.BlockSpec((tile, H), lambda i, j: (i, 0)),         # x_enhanced rows
            pl.BlockSpec((S, 4, H2), lambda i, j: (0, 0, 0)),     # W1 geometry slice
            pl.BlockSpec((S, 3, H2), lambda i, j: (0, 0, 0)),     # scale*w+b1, ln g, ln b
            pl.BlockSpec((S, H2, H), lambda i, j: (0, 0, 0)),     # msg l2 W (bf16)
            pl.BlockSpec((S, 1, H), lambda i, j: (0, 0, 0)),      # msg l2 b
            pl.BlockSpec((S * H, Hq), lambda i, j: (0, 0)),       # scale-attn l1 W
            pl.BlockSpec((1, Hq), lambda i, j: (0, 0)),
            pl.BlockSpec((Hq, S), lambda i, j: (0, 0)),           # scale-attn l2 W
            pl.BlockSpec((1, S), lambda i, j: (0, 0)),
            pl.BlockSpec((H2, H2), lambda i, j: (0, 0)),          # update l1 W
            pl.BlockSpec((3, H2), lambda i, j: (0, 0)),           # (b, ln g, ln b)
            pl.BlockSpec((H2, H), lambda i, j: (0, 0)),           # update l2 W
            pl.BlockSpec((3, H), lambda i, j: (0, 0)),            # (b, norm g, norm b)
        ],
        out_specs=pl.BlockSpec((tile, H), lambda i, j: (i, 0)),
        scratch_shapes=[pltpu.VMEM((S, tile, H), jnp.float32)],
        compiler_params=pltpu.CompilerParams(
            dimension_semantics=("parallel", "arbitrary"),
            vmem_limit_bytes=VMEM_LIMIT),
    )(a_all, b_all, pb, pb, xe,
      lp["wgeom"], lp["cgb"], lp["w2"], lp["b2"],
      lp["satt1_w"], lp["satt1_b"], lp["satt2_w"], lp["satt2_b"],
      lp["upd1_w"], lp["upd1_p"], lp["upd2_w"], lp["upd2_p"])


# ----------------------------------------------------------------------------
# Kernel 3: adaptive pooling + topo extractor + output projection + topo head,
#           all fused into one grid=(1,) launch (per-graph tensors are tiny).
# ----------------------------------------------------------------------------
def _pool_heads_kernel(x_ref, seg_ref, segT_ref,
                       wa1_ref, ba1_ref, wa2_ref, ba2_ref, wf_ref, fp_ref,
                       t1w_ref, t1b_ref, t2w_ref, t2b_ref,
                       o1w_ref, o1p_ref, o2w_ref, o2p_ref, o3w_ref, o3b_ref,
                       h1w_ref, h1b_ref, h2w_ref, h2b_ref,
                       emb_ref, logit_ref, topo_ref, *, num_graphs):
    x = x_ref[...]                                      # [Np, H]
    seg = seg_ref[...]                                  # [B, Np] one-hot segments
    segT = segT_ref[...]                                # [Np, B]

    # node-level attention, softmax over ALL (real) nodes (dim=0, as in reference)
    a = _silu(jnp.dot(x, wa1_ref[...], preferred_element_type=jnp.float32) + ba1_ref[...])
    logits = jnp.dot(a, wa2_ref[...], preferred_element_type=jnp.float32) + ba2_ref[...]
    valid = jnp.sum(segT, axis=1, keepdims=True)        # [Np,1]; 0 for padded nodes
    logits = jnp.where(valid > 0.5, logits, NEG_BIG)
    m = jnp.max(logits, axis=0, keepdims=True)
    e = jnp.exp(logits - m)
    aw = e / jnp.sum(e, axis=0, keepdims=True)          # exact division

    counts = jnp.sum(seg, axis=1, keepdims=True)        # [B,1]
    mean_pool = jnp.dot(seg, x, preferred_element_type=jnp.float32) / \
        jnp.maximum(counts, 1.0)                        # exact division
    attn_pool = jnp.dot(seg, x * aw, preferred_element_type=jnp.float32)
    # per-graph masked max on [Np, H]; never builds a [B, Np, H] intermediate
    rows = []
    for g in range(num_graphs):
        xg = jnp.where(segT[:, g:g + 1] > 0.5, x, NEG_BIG)
        rows.append(jnp.max(xg, axis=0, keepdims=True))
    max_pool = jnp.concatenate(rows, axis=0)            # [B, H]
    max_pool = jnp.where(counts > 0.5, max_pool, 0.0)   # guard empty batch slots

    combined = jnp.concatenate([mean_pool, max_pool, attn_pool], axis=-1)
    fp = fp_ref[...]
    pooled = _silu(_layernorm(
        jnp.dot(combined, wf_ref[...], preferred_element_type=jnp.float32) + fp[0:1],
        fp[1:2], fp[2:3]))

    # topo extractor: four heads batched horizontally (l1) + block-diagonal l2
    h1 = _silu(jnp.dot(pooled, t1w_ref[...],
                       preferred_element_type=jnp.float32) + t1b_ref[...])
    pre = jnp.dot(h1, t2w_ref[...], preferred_element_type=jnp.float32) + t2b_ref[...]
    topo = jnp.concatenate([
        jnp.tanh(pre[:, 0:1]),            # Chern estimate
        _sigmoid_exact(pre[:, 1:5]),      # Z2 invariants (exact sigmoid)
        _softplus(pre[:, 5:6]),           # gap estimate
        pre[:, 6:14],                     # symmetry features
    ], axis=-1)
    topo_ref[...] = topo

    # output projection (dropout = identity)
    fin = jnp.concatenate([pooled, topo], axis=-1)
    o1p = o1p_ref[...]
    hh = jnp.dot(fin, o1w_ref[...], preferred_element_type=jnp.float32) + o1p[0:1]
    hh = _silu(_layernorm(hh, o1p[1:2], o1p[2:3]))
    o2p = o2p_ref[...]
    hh = jnp.dot(hh, o2w_ref[...], preferred_element_type=jnp.float32) + o2p[0:1]
    hh = _silu(_layernorm(hh, o2p[1:2], o2p[2:3]))
    emb = jnp.dot(hh, o3w_ref[...], preferred_element_type=jnp.float32) + o3b_ref[...]
    emb_ref[...] = emb

    # topological head
    t = _silu(jnp.dot(emb, h1w_ref[...], preferred_element_type=jnp.float32) + h1b_ref[...])
    logit_ref[...] = jnp.dot(t, h2w_ref[...],
                             preferred_element_type=jnp.float32) + h2b_ref[...]


def pool_heads(x, seg, segT, pp, hp):
    Np, H = x.shape
    B = seg.shape[0]
    Hh = pp["att1_w"].shape[1]
    T1 = hp["t1w"].shape[1]
    T2r = hp["t2w"].shape[0]
    TD = hp["t2w"].shape[1]
    OH = hp["o2w"].shape[1]
    OD = hp["o3w"].shape[1]
    HH = hp["h1w"].shape[1]
    kern = functools.partial(_pool_heads_kernel, num_graphs=B)
    return pl.pallas_call(
        kern,
        out_shape=(jax.ShapeDtypeStruct((B, OD), jnp.float32),
                   jax.ShapeDtypeStruct((B, 3), jnp.float32),
                   jax.ShapeDtypeStruct((B, TD), jnp.float32)),
        grid=(1,),
        in_specs=[
            pl.BlockSpec((Np, H), lambda i: (0, 0)),
            pl.BlockSpec((B, Np), lambda i: (0, 0)),
            pl.BlockSpec((Np, B), lambda i: (0, 0)),
            pl.BlockSpec((H, Hh), lambda i: (0, 0)),
            pl.BlockSpec((1, Hh), lambda i: (0, 0)),
            pl.BlockSpec((Hh, 1), lambda i: (0, 0)),
            pl.BlockSpec((1, 1), lambda i: (0, 0)),
            pl.BlockSpec((3 * H, H), lambda i: (0, 0)),
            pl.BlockSpec((3, H), lambda i: (0, 0)),
            pl.BlockSpec((H, T1), lambda i: (0, 0)),
            pl.BlockSpec((1, T1), lambda i: (0, 0)),
            pl.BlockSpec((T2r, TD), lambda i: (0, 0)),
            pl.BlockSpec((1, TD), lambda i: (0, 0)),
            pl.BlockSpec((H + TD, H), lambda i: (0, 0)),
            pl.BlockSpec((3, H), lambda i: (0, 0)),
            pl.BlockSpec((H, OH), lambda i: (0, 0)),
            pl.BlockSpec((3, OH), lambda i: (0, 0)),
            pl.BlockSpec((OH, OD), lambda i: (0, 0)),
            pl.BlockSpec((1, OD), lambda i: (0, 0)),
            pl.BlockSpec((OD, HH), lambda i: (0, 0)),
            pl.BlockSpec((1, HH), lambda i: (0, 0)),
            pl.BlockSpec((HH, 3), lambda i: (0, 0)),
            pl.BlockSpec((1, 3), lambda i: (0, 0)),
        ],
        out_specs=(pl.BlockSpec((B, OD), lambda i: (0, 0)),
                   pl.BlockSpec((B, 3), lambda i: (0, 0)),
                   pl.BlockSpec((B, TD), lambda i: (0, 0))),
        compiler_params=pltpu.CompilerParams(
            dimension_semantics=("arbitrary",), vmem_limit_bytes=VMEM_LIMIT),
    )(x, seg, segT,
      pp["att1_w"], pp["att1_b"], pp["att2_w"], pp["att2_b"], pp["fus_w"], pp["fus_p"],
      hp["t1w"], hp["t1b"], hp["t2w"], hp["t2b"],
      hp["o1w"], hp["o1p"], hp["o2w"], hp["o2p"], hp["o3w"], hp["o3b"],
      hp["h1w"], hp["h1b"], hp["h2w"], hp["h2b"])


# ----------------------------------------------------------------------------
# Parameters (deterministic synthetic init, pre-packed into kernel layout)
# ----------------------------------------------------------------------------
def _pack_bln(dim):
    """Pack (bias, LayerNorm gamma, LayerNorm beta) rows into one [3, dim] array."""
    return jnp.stack([jnp.zeros((dim,), jnp.float32),
                      jnp.ones((dim,), jnp.float32),
                      jnp.zeros((dim,), jnp.float32)], axis=0)


def make_params(key, node_dim, H, num_layers, out_dim, num_scales,
                scale_factors=(1.0, 2.0, 4.0)):
    assert len(scale_factors) >= num_scales
    c = [0]
    BF = jnp.bfloat16

    def lin_w(fi, fo, dtype=jnp.float32):
        k = jax.random.fold_in(key, c[0])
        c[0] += 1
        w = jax.random.normal(k, (fi, fo), jnp.float32) * (float(fi) ** -0.5)
        return w.astype(dtype)

    H2 = 2 * H
    p = {"in_w": lin_w(node_dim, H, BF), "in_p": _pack_bln(H)}

    layers = []
    for _ in range(num_layers):
        w1t, w1s, wgeom, cgb, w2, b2 = [], [], [], [], [], []
        for s in range(num_scales):
            W1 = lin_w(2 * H + 5, H2)          # f32 master, split analytically
            b1 = jnp.zeros((H2,), jnp.float32)
            g1 = jnp.ones((H2,), jnp.float32)
            be1 = jnp.zeros((H2,), jnp.float32)
            w1t.append(W1[:H])                 # multiplies x_i (target)
            w1s.append(W1[H:2 * H])            # multiplies x_j (source)
            wgeom.append(W1[2 * H:2 * H + 4])  # multiplies edge_attr (VPU FMAs)
            # scale scalar folded into a per-scale constant: scale*w1_scale + b1
            cgb.append(jnp.stack([scale_factors[s] * W1[2 * H + 4] + b1, g1, be1], 0))
            w2.append(lin_w(H2, H, BF))
            b2.append(jnp.zeros((1, H), jnp.float32))
        # one lane-dense weight: [H, 2*S*2H] = [ Wt(s0)|..|Wt(sS-1) | Ws(s0)|..|Ws(sS-1) ]
        w_all = jnp.concatenate(w1t + w1s, axis=1).astype(BF)
        layers.append({
            "pos1_w": lin_w(3, H // 2), "pos1_b": jnp.zeros((1, H // 2), jnp.float32),
            "pos2_w": lin_w(H // 2, H), "pos2_b": jnp.zeros((1, H), jnp.float32),
            "w_all": w_all,
            "wgeom": jnp.stack(wgeom, 0), "cgb": jnp.stack(cgb, 0),
            "w2": jnp.stack(w2, 0), "b2": jnp.stack(b2, 0),
            "satt1_w": lin_w(H * num_scales, H // 4, BF),
            "satt1_b": jnp.zeros((1, H // 4), jnp.float32),
            "satt2_w": lin_w(H // 4, num_scales, BF),
            "satt2_b": jnp.zeros((1, num_scales), jnp.float32),
            "upd1_w": lin_w(H2, H2, BF), "upd1_p": _pack_bln(H2),
            "upd2_w": lin_w(H2, H, BF), "upd2_p": _pack_bln(H),
        })
    p["layers"] = layers

    p["pool"] = {
        "att1_w": lin_w(H, H // 2), "att1_b": jnp.zeros((1, H // 2), jnp.float32),
        "att2_w": lin_w(H // 2, 1), "att2_b": jnp.zeros((1, 1), jnp.float32),
        "fus_w": lin_w(3 * H, H), "fus_p": _pack_bln(H),
    }

    # topo extractor: batch the 4 first-layer matmuls, block-diagonal second layer
    c1, z1, g1_, s1 = lin_w(H, H // 2), lin_w(H, H // 2), lin_w(H, H // 4), lin_w(H, H // 2)
    t1w = jnp.concatenate([c1, z1, g1_, s1], axis=1)
    c2, z2, g2, s2 = lin_w(H // 2, 1), lin_w(H // 2, 4), lin_w(H // 4, 1), lin_w(H // 2, 8)
    widths_in = [H // 2, H // 2, H // 4, H // 2]
    widths_out = [1, 4, 1, 8]
    t2w = jnp.zeros((sum(widths_in), sum(widths_out)), jnp.float32)
    r = 0
    cc = 0
    for w_, ri, co in zip([c2, z2, g2, s2], widths_in, widths_out):
        t2w = t2w.at[r:r + ri, cc:cc + co].set(w_)
        r += ri
        cc += co
    topo_dim = sum(widths_out)   # 14

    p["heads"] = {
        "t1w": t1w, "t1b": jnp.zeros((1, t1w.shape[1]), jnp.float32),
        "t2w": t2w, "t2b": jnp.zeros((1, topo_dim), jnp.float32),
        "o1w": lin_w(H + topo_dim, H), "o1p": _pack_bln(H),
        "o2w": lin_w(H, H // 2), "o2p": _pack_bln(H // 2),
        "o3w": lin_w(H // 2, out_dim), "o3b": jnp.zeros((1, out_dim), jnp.float32),
        "h1w": lin_w(out_dim, out_dim // 2),
        "h1b": jnp.zeros((1, out_dim // 2), jnp.float32),
        "h2w": lin_w(out_dim // 2, 3), "h2b": jnp.zeros((1, 3), jnp.float32),
    }
    return p


# ----------------------------------------------------------------------------
# Forward pass
# ----------------------------------------------------------------------------
def build_forward(radius, num_layers, num_scales, num_graphs, *, tile=128, src_tile=64):
    # For production sizes pick tile in 128-512 and src_tile so that a few
    # [tile, src_tile, 2H] f32 intermediates fit the per-generation VMEM budget
    # (v7x: 64 MiB).  The toy test below uses tile=src_tile=8.
    assert tile % 8 == 0 and src_tile % 8 == 0

    def forward(params, x_in, pos, batch):
        N = x_in.shape[0]
        mult = tile * src_tile // math.gcd(tile, src_tile)
        Np = -(-N // mult) * mult
        pad = Np - N
        if pad:  # padded nodes: batch=-1 -> no edges to real nodes, excluded from pools
            x_in = jnp.pad(x_in, ((0, pad), (0, 0)))
            pos = jnp.pad(pos, ((0, pad), (0, 0)))
            batch = jnp.concatenate([batch, jnp.full((pad,), -1, batch.dtype)])

        # packed per-node geometry bookkeeping: [pos(3) | batch(1)]
        pb = jnp.concatenate([pos, batch.astype(jnp.float32)[:, None]], axis=-1)

        # ---- message passing layers (2 fused pallas_calls per layer) ----
        x = x_in
        for li, lp in enumerate(params["layers"]):
            in_proj = (params["in_w"], params["in_p"]) if li == 0 else None
            xe, a_all, b_all = layer_prep(x, pb, lp, in_proj=in_proj,
                                          num_scales=num_scales, tile=tile)
            x = egnn_layer(a_all, b_all, pb, xe, lp, radius=radius,
                           num_scales=num_scales, tile=tile, src_tile=src_tile)

        # ---- pooling + topo extractor + output projection + topo head (1 kernel) ----
        seg = (batch[None, :] == jnp.arange(num_graphs, dtype=batch.dtype)[:, None]
               ).astype(jnp.float32)            # [B, Np]; padded nodes excluded
        segT = jnp.transpose(seg)               # [Np, B]
        return pool_heads(x, seg, segT, params["pool"], params["heads"])

    return forward


# ----------------------------------------------------------------------------
if __name__ == "__main__":
    NODE_DIM, HIDDEN, NUM_LAYERS, OUT_DIM, NUM_SCALES = 8, 32, 2, 16, 3
    RADIUS = 4.0
    N_NODES, N_GRAPHS = 16, 2
    TILE, SRC_TILE = 8, 8   # small test shapes; use 128-512 / 32-128 at production N, H

    key = jax.random.PRNGKey(0)
    kx, kp, kw = jax.random.split(key, 3)
    x = jax.random.normal(kx, (N_NODES, NODE_DIM), jnp.float32)
    pos = jax.random.uniform(kp, (N_NODES, 3), jnp.float32, 0.0, 3.0)
    batch = jnp.concatenate([jnp.zeros(N_NODES // 2, jnp.int32),
                             jnp.ones(N_NODES // 2, jnp.int32)])

    params = make_params(kw, NODE_DIM, HIDDEN, NUM_LAYERS, OUT_DIM, NUM_SCALES)
    fwd = jax.jit(build_forward(RADIUS, NUM_LAYERS, NUM_SCALES, N_GRAPHS,
                                tile=TILE, src_tile=SRC_TILE))

    emb, topo_logits, topo_feats = fwd(params, x, pos, batch)
    jax.block_until_ready((emb, topo_logits, topo_feats))

    assert emb.shape == (N_GRAPHS, OUT_DIM)
    assert topo_logits.shape == (N_GRAPHS, 3)
    assert topo_feats.shape == (N_GRAPHS, 1 + 4 + 1 + 8)
    assert bool(jnp.all(jnp.isfinite(emb)))
    assert bool(jnp.all(jnp.isfinite(topo_logits)))
    assert bool(jnp.all(jnp.isfinite(topo_feats)))
    print("KERNEL_OK")
</pallas_src>

<mosaic_0001>
module attributes {stable_mosaic.version = 11 : i64} {
  func.func @_layer_prep_kernel(%arg0: i32, %arg1: memref<8x32xf32, #tpu.memory_space<vmem>>, %arg2: memref<8x4xf32, #tpu.memory_space<vmem>>, %arg3: memref<3x16xf32, #tpu.memory_space<vmem>>, %arg4: memref<1x16xf32, #tpu.memory_space<vmem>>, %arg5: memref<16x32xf32, #tpu.memory_space<vmem>>, %arg6: memref<1x32xf32, #tpu.memory_space<vmem>>, %arg7: memref<32x384xbf16, #tpu.memory_space<vmem>>, %arg8: memref<8x32xf32, #tpu.memory_space<vmem>>, %arg9: memref<8x192xf32, #tpu.memory_space<vmem>>, %arg10: memref<8x192xf32, #tpu.memory_space<vmem>>) attributes {dimension_semantics = [#tpu.dimension_semantics<parallel>], iteration_bounds = array<i64: 2>, scalar_prefetch = 0 : i64, scratch_operands = 0 : i64, tpu.core_type = #tpu.core_type<tc>, window_params = [{transform_indices = @transform_0, window_bounds = array<i64: 8, 32>}, {transform_indices = @transform_1, window_bounds = array<i64: 8, 4>}, {pipeline_mode = #tpu.pipeline_mode<synchronous>, transform_indices = @transform_2, window_bounds = array<i64: 3, 16>}, {pipeline_mode = #tpu.pipeline_mode<synchronous>, transform_indices = @transform_3, window_bounds = array<i64: 1, 16>}, {pipeline_mode = #tpu.pipeline_mode<synchronous>, transform_indices = @transform_4, window_bounds = array<i64: 16, 32>}, {pipeline_mode = #tpu.pipeline_mode<synchronous>, transform_indices = @transform_5, window_bounds = array<i64: 1, 32>}, {pipeline_mode = #tpu.pipeline_mode<synchronous>, transform_indices = @transform_6, window_bounds = array<i64: 32, 384>}, {transform_indices = @transform_7, window_bounds = array<i64: 8, 32>}, {transform_indices = @transform_8, window_bounds = array<i64: 8, 192>}, {transform_indices = @transform_9, window_bounds = array<i64: 8, 192>}]} {
    %c0 = arith.constant 0 : index
    %c0_0 = arith.constant 0 : index
    %0 = vector.load %arg1[%c0, %c0_0] : memref<8x32xf32, #tpu.memory_space<vmem>>, vector<8x32xf32>
    %c0_1 = arith.constant 0 : index
    %c0_2 = arith.constant 0 : index
    %1 = vector.load %arg2[%c0_1, %c0_2] : memref<8x4xf32, #tpu.memory_space<vmem>>, vector<8x4xf32>
    %2 = vector.extract_strided_slice %1 {offsets = [0, 0], sizes = [8, 3], strides = [1, 1]} : vector<8x4xf32> to vector<8x3xf32>
    %c0_3 = arith.constant 0 : index
    %c0_4 = arith.constant 0 : index
    %3 = vector.load %arg3[%c0_3, %c0_4] : memref<3x16xf32, #tpu.memory_space<vmem>>, vector<3x16xf32>
    %cst = arith.constant dense<0.000000e+00> : vector<8x16xf32>
    %4 = tpu.matmul %2, %3, %cst {dimension_numbers = #tpu.dot_dimension_numbers<[1], [0], [0], [1], [0, 0, 1, 1], [], []>} : vector<8x3xf32>, vector<3x16xf32>, vector<8x16xf32> -> vector<8x16xf32>
    %c0_5 = arith.constant 0 : index
    %c0_6 = arith.constant 0 : index
    %5 = vector.load %arg4[%c0_5, %c0_6] : memref<1x16xf32, #tpu.memory_space<vmem>>, vector<1x16xf32>
    %6 = vector.broadcast %5 : vector<1x16xf32> to vector<8x16xf32>
    %7 = arith.addf %4, %6 : vector<8x16xf32>
    %cst_7 = arith.constant 0.000000e+00 : f32
    %8 = vector.broadcast %cst_7 : f32 to vector<8x16xf32>
    %9 = arith.subf %8, %7 : vector<8x16xf32>
    %10 = math.exp %9 : vector<8x16xf32>
    %cst_8 = arith.constant 1.000000e+00 : f32
    %11 = vector.broadcast %cst_8 : f32 to vector<8x16xf32>
    %12 = arith.addf %11, %10 : vector<8x16xf32>
    %13 = tpu.reciprocal %12 {approx = true} : vector<8x16xf32> -> vector<8x16xf32>
    %14 = arith.mulf %7, %13 : vector<8x16xf32>
    %c0_9 = arith.constant 0 : index
    %c0_10 = arith.constant 0 : index
    %15 = vector.load %arg5[%c0_9, %c0_10] : memref<16x32xf32, #tpu.memory_space<vmem>>, vector<16x32xf32>
    %cst_11 = arith.constant dense<0.000000e+00> : vector<8x32xf32>
    %16 = tpu.matmul %14, %15, %cst_11 {dimension_numbers = #tpu.dot_dimension_numbers<[1], [0], [0], [1], [0, 0, 1, 1], [], []>} : vector<8x16xf32>, vector<16x32xf32>, vector<8x32xf32> -> vector<8x32xf32>
    %c0_12 = arith.constant 0 : index
    %c0_13 = arith.constant 0 : index
    %17 = vector.load %arg6[%c0_12, %c0_13] : memref<1x32xf32, #tpu.memory_space<vmem>>, vector<1x32xf32>
    %18 = vector.broadcast %17 : vector<1x32xf32> to vector<8x32xf32>
    %19 = arith.addf %16, %18 : vector<8x32xf32>
    %20 = arith.addf %0, %19 : vector<8x32xf32>
    %c0_14 = arith.constant 0 : index
    %c0_15 = arith.constant 0 : index
    %21 = vector.load %arg8[%c0_14, %c0_15] : memref<8x32xf32, #tpu.memory_space<vmem>>, vector<8x32xf32>
    tpu.vector_store %arg8[%c0_14, %c0_15], %20 {strides = array<i32>} : memref<8x32xf32, #tpu.memory_space<vmem>>, vector<8x32xf32>,
    %22 = arith.truncf %20 : vector<8x32xf32> to vector<8x32xbf16>
    %c0_16 = arith.constant 0 : index
    %c0_17 = arith.constant 0 : index
    %23 = vector.load %arg7[%c0_16, %c0_17] : memref<32x384xbf16, #tpu.memory_space<vmem>>, vector<32x384xbf16>
    %cst_18 = arith.constant dense<0.000000e+00> : vector<8x384xf32>
    %24 = tpu.matmul %22, %23, %cst_18 {dimension_numbers = #tpu.dot_dimension_numbers<[1], [0], [0], [1], [0, 0, 1, 1], [], []>} : vector<8x32xbf16>, vector<32x384xbf16>, vector<8x384xf32> -> vector<8x384xf32>
    %25 = vector.extract_strided_slice %24 {offsets = [0, 0], sizes = [8, 192], strides = [1, 1]} : vector<8x384xf32> to vector<8x192xf32>
    %c0_19 = arith.constant 0 : index
    %c0_20 = arith.constant 0 : index
    %26 = vector.load %arg9[%c0_19, %c0_20] : memref<8x192xf32, #tpu.memory_space<vmem>>, vector<8x192xf32>
    tpu.vector_store %arg9[%c0_19, %c0_20], %25 {strides = array<i32>} : memref<8x192xf32, #tpu.memory_space<vmem>>, vector<8x192xf32>,
    %27 = vector.extract_strided_slice %24 {offsets = [0, 192], sizes = [8, 192], strides = [1, 1]} : vector<8x384xf32> to vector<8x192xf32>
    %c0_21 = arith.constant 0 : index
    %c0_22 = arith.constant 0 : index
    %28 = vector.load %arg10[%c0_21, %c0_22] : memref<8x192xf32, #tpu.memory_space<vmem>>, vector<8x192xf32>
    tpu.vector_store %arg10[%c0_21, %c0_22], %27 {strides = array<i32>} : memref<8x192xf32, #tpu.memory_space<vmem>>, vector<8x192xf32>,
    return
  }
  func.func @transform_0(%arg0: i32) -> (i32, i32) {
    %c0_i32 = arith.constant 0 : i32
    %c0_i32_0 = arith.constant 0 : i32
    return %arg0, %c0_i32 : i32, i32
  }
  func.func @transform_1(%arg0: i32) -> (i32, i32) {
    %c0_i32 = arith.constant 0 : i32
    %c0_i32_0 = arith.constant 0 : i32
    return %arg0, %c0_i32 : i32, i32
  }
  func.func @transform_2(%arg0: i32) -> (i32, i32) {
    %c0_i32 = arith.constant 0 : i32
    %c0_i32_0 = arith.constant 0 : i32
    %c0_i32_1 = arith.constant 0 : i32
    return %c0_i32, %c0_i32_0 : i32, i32
  }
  func.func @transform_3(%arg0: i32) -> (i32, i32) {
    %c0_i32 = arith.constant 0 : i32
    %c0_i32_0 = arith.constant 0 : i32
    %c0_i32_1 = arith.constant 0 : i32
    return %c0_i32, %c0_i32_0 : i32, i32
  }
  func.func @transform_4(%arg0: i32) -> (i32, i32) {
    %c0_i32 = arith.constant 0 : i32
    %c0_i32_0 = arith.constant 0 : i32
    %c0_i32_1 = arith.constant 0 : i32
    return %c0_i32, %c0_i32_0 : i32, i32
  }
  func.func @transform_5(%arg0: i32) -> (i32, i32) {
    %c0_i32 = arith.constant 0 : i32
    %c0_i32_0 = arith.constant 0 : i32
    %c0_i32_1 = arith.constant 0 : i32
    return %c0_i32, %c0_i32_0 : i32, i32
  }
  func.func @transform_6(%arg0: i32) -> (i32, i32) {
    %c0_i32 = arith.constant 0 : i32
    %c0_i32_0 = arith.constant 0 : i32
    %c0_i32_1 = arith.constant 0 : i32
    return %c0_i32, %c0_i32_0 : i32, i32
  }
  func.func @transform_7(%arg0: i32) -> (i32, i32) {
    %c0_i32 = arith.constant 0 : i32
    %c0_i32_0 = arith.constant 0 : i32
    return %arg0, %c0_i32 : i32, i32
  }
  func.func @transform_8(%arg0: i32) -> (i32, i32) {
    %c0_i32 = arith.constant 0 : i32
    %c0_i32_0 = arith.constant 0 : i32
    return %arg0, %c0_i32 : i32, i32
  }
  func.func @transform_9(%arg0: i32) -> (i32, i32) {
    %c0_i32 = arith.constant 0 : i32
    %c0_i32_0 = arith.constant 0 : i32
    return %arg0, %c0_i32 : i32, i32
  }
}

module attributes {stable_mosaic.version = 11 : i64} {
  func.func @_layer_prep_kernel(%arg0: i32, %arg1: memref<8x8xf32, #tpu.memory_space<vmem>>, %arg2: memref<8x32xbf16, #tpu.memory_space<vmem>>, %arg3: memref<3x32xf32, #tpu.memory_space<vmem>>, %arg4: memref<8x4xf32, #tpu.memory_space<vmem>>, %arg5: memref<3x16xf32, #tpu.memory_space<vmem>>, %arg6: memref<1x16xf32, #tpu.memory_space<vmem>>, %arg7: memref<16x32xf32, #tpu.memory_space<vmem>>, %arg8: memref<1x32xf32, #tpu.memory_space<vmem>>, %arg9: memref<32x384xbf16, #tpu.memory_space<vmem>>, %arg10: memref<8x32xf32, #tpu.memory_space<vmem>>, %arg11: memref<8x192xf32, #tpu.memory_space<vmem>>, %arg12: memref<8x192xf32, #tpu.memory_space<vmem>>) attributes {dimension_semantics = [#tpu.dimension_semantics<parallel>], iteration_bounds = array<i64: 2>, scalar_prefetch = 0 : i64, scratch_operands = 0 : i64, tpu.core_type = #tpu.core_type<tc>, window_params = [{transform_indices = @transform_0, window_bounds = array<i64: 8, 8>}, {pipeline_mode = #tpu.pipeline_mode<synchronous>, transform_indices = @transform_1, window_bounds = array<i64: 8, 32>}, {pipeline_mode = #tpu.pipeline_mode<synchronous>, transform_indices = @transform_2, window_bounds = array<i64: 3, 32>}, {transform_indices = @transform_3, window_bounds = array<i64: 8, 4>}, {pipeline_mode = #tpu.pipeline_mode<synchronous>, transform_indices = @transform_4, window_bounds = array<i64: 3, 16>}, {pipeline_mode = #tpu.pipeline_mode<synchronous>, transform_indices = @transform_5, window_bounds = array<i64: 1, 16>}, {pipeline_mode = #tpu.pipeline_mode<synchronous>, transform_indices = @transform_6, window_bounds = array<i64: 16, 32>}, {pipeline_mode = #tpu.pipeline_mode<synchronous>, transform_indices = @transform_7, window_bounds = array<i64: 1, 32>}, {pipeline_mode = #tpu.pipeline_mode<synchronous>, transform_indices = @transform_8, window_bounds = array<i64: 32, 384>}, {transform_indices = @transform_9, window_bounds = array<i64: 8, 32>}, {transform_indices = @transform_10, window_bounds = array<i64: 8, 192>}, {transform_indices = @transform_11, window_bounds = array<i64: 8, 192>}]} {
    %c0 = arith.constant 0 : index
    %c0_0 = arith.constant 0 : index
    %0 = vector.load %arg1[%c0, %c0_0] : memref<8x8xf32, #tpu.memory_space<vmem>>, vector<8x8xf32>
    %c0_1 = arith.constant 0 : index
    %c0_2 = arith.constant 0 : index
    %1 = vector.load %arg3[%c0_1, %c0_2] : memref<3x32xf32, #tpu.memory_space<vmem>>, vector<3x32xf32>
    %2 = arith.truncf %0 : vector<8x8xf32> to vector<8x8xbf16>
    %c0_3 = arith.constant 0 : index
    %c0_4 = arith.constant 0 : index
    %3 = vector.load %arg2[%c0_3, %c0_4] : memref<8x32xbf16, #tpu.memory_space<vmem>>, vector<8x32xbf16>
    %cst = arith.constant dense<0.000000e+00> : vector<8x32xf32>
    %4 = tpu.matmul %2, %3, %cst {dimension_numbers = #tpu.dot_dimension_numbers<[1], [0], [0], [1], [0, 0, 1, 1], [], []>} : vector<8x8xbf16>, vector<8x32xbf16>, vector<8x32xf32> -> vector<8x32xf32>
    %5 = vector.extract_strided_slice %1 {offsets = [0, 0], sizes = [1, 32], strides = [1, 1]} : vector<3x32xf32> to vector<1x32xf32>
    %6 = vector.broadcast %5 : vector<1x32xf32> to vector<8x32xf32>
    %7 = arith.addf %4, %6 : vector<8x32xf32>
    %8 = vector.extract_strided_slice %1 {offsets = [1, 0], sizes = [1, 32], strides = [1, 1]} : vector<3x32xf32> to vector<1x32xf32>
    %9 = vector.extract_strided_slice %1 {offsets = [2, 0], sizes = [1, 32], strides = [1, 1]} : vector<3x32xf32> to vector<1x32xf32>
    %cst_5 = arith.constant dense<0.000000e+00> : vector<8xf32>
    %10 = vector.multi_reduction <add>, %7, %cst_5 [1] : vector<8x32xf32> to vector<8xf32>
    %11 = vector.shape_cast %10 : vector<8xf32> to vector<8x1xf32>
    %cst_6 = arith.constant 3.200000e+01 : f32
    %12 = vector.broadcast %cst_6 : f32 to vector<8x1xf32>
    %13 = arith.divf %11, %12 : vector<8x1xf32>
    %14 = vector.broadcast %13 : vector<8x1xf32> to vector<8x32xf32>
    %15 = arith.subf %7, %14 : vector<8x32xf32>
    %16 = arith.mulf %15, %15 : vector<8x32xf32>
    %cst_7 = arith.constant dense<0.000000e+00> : vector<8xf32>
    %17 = vector.multi_reduction <add>, %16, %cst_7 [1] : vector<8x32xf32> to vector<8xf32>
    %18 = vector.shape_cast %17 : vector<8xf32> to vector<8x1xf32>
    %cst_8 = arith.constant 3.200000e+01 : f32
    %19 = vector.broadcast %cst_8 : f32 to vector<8x1xf32>
    %20 = arith.divf %18, %19 : vector<8x1xf32>
    %21 = vector.broadcast %13 : vector<8x1xf32> to vector<8x32xf32>
    %22 = arith.subf %7, %21 : vector<8x32xf32>
    %cst_9 = arith.constant 9.99999974E-6 : f32
    %23 = vector.broadcast %cst_9 : f32 to vector<8x1xf32>
    %24 = arith.addf %20, %23 : vector<8x1xf32>
    %25 = math.rsqrt %24 : vector<8x1xf32>
    %26 = vector.broadcast %25 : vector<8x1xf32> to vector<8x32xf32>
    %27 = arith.mulf %22, %26 : vector<8x32xf32>
    %28 = vector.broadcast %8 : vector<1x32xf32> to vector<8x32xf32>
    %29 = arith.mulf %27, %28 : vector<8x32xf32>
    %30 = vector.broadcast %9 : vector<1x32xf32> to vector<8x32xf32>
    %31 = arith.addf %29, %30 : vector<8x32xf32>
    %cst_10 = arith.constant 0.000000e+00 : f32
    %32 = vector.broadcast %cst_10 : f32 to vector<8x32xf32>
    %33 = arith.subf %32, %31 : vector<8x32xf32>
    %34 = math.exp %33 : vector<8x32xf32>
    %cst_11 = arith.constant 1.000000e+00 : f32
    %35 = vector.broadcast %cst_11 : f32 to vector<8x32xf32>
    %36 = arith.addf %35, %34 : vector<8x32xf32>
    %37 = tpu.reciprocal %36 {approx = true} : vector<8x32xf32> -> vector<8x32xf32>
    %38 = arith.mulf %31, %37 : vector<8x32xf32>
    %c0_12 = arith.constant 0 : index
    %c0_13 = arith.constant 0 : index
    %39 = vector.load %arg4[%c0_12, %c0_13] : memref<8x4xf32, #tpu.memory_space<vmem>>, vector<8x4xf32>
    %40 = vector.extract_strided_slice %39 {offsets = [0, 0], sizes = [8, 3], strides = [1, 1]} : vector<8x4xf32> to vector<8x3xf32>
    %c0_14 = arith.constant 0 : index
    %c0_15 = arith.constant 0 : index
    %41 = vector.load %arg5[%c0_14, %c0_15] : memref<3x16xf32, #tpu.memory_space<vmem>>, vector<3x16xf32>
    %cst_16 = arith.constant dense<0.000000e+00> : vector<8x16xf32>
    %42 = tpu.matmul %40, %41, %cst_16 {dimension_numbers = #tpu.dot_dimension_numbers<[1], [0], [0], [1], [0, 0, 1, 1], [], []>} : vector<8x3xf32>, vector<3x16xf32>, vector<8x16xf32> -> vector<8x16xf32>
    %c0_17 = arith.constant 0 : index
    %c0_18 = arith.constant 0 : index
    %43 = vector.load %arg6[%c0_17, %c0_18] : memref<1x16xf32, #tpu.memory_space<vmem>>, vector<1x16xf32>
    %44 = vector.broadcast %43 : vector<1x16xf32> to vector<8x16xf32>
    %45 = arith.addf %42, %44 : vector<8x16xf32>
    %cst_19 = arith.constant 0.000000e+00 : f32
    %46 = vector.broadcast %cst_19 : f32 to vector<8x16xf32>
    %47 = arith.subf %46, %45 : vector<8x16xf32>
    %48 = math.exp %47 : vector<8x16xf32>
    %cst_20 = arith.constant 1.000000e+00 : f32
    %49 = vector.broadcast %cst_20 : f32 to vector<8x16xf32>
    %50 = arith.addf %49, %48 : vector<8x16xf32>
    %51 = tpu.reciprocal %50 {approx = true} : vector<8x16xf32> -> vector<8x16xf32>
    %52 = arith.mulf %45, %51 : vector<8x16xf32>
    %c0_21 = arith.constant 0 : index
    %c0_22 = arith.constant 0 : index
    %53 = vector.load %arg7[%c0_21, %c0_22] : memref<16x32xf32, #tpu.memory_space<vmem>>, vector<16x32xf32>
    %cst_23 = arith.constant dense<0.000000e+00> : vector<8x32xf32>
    %54 = tpu.matmul %52, %53, %cst_23 {dimension_numbers = #tpu.dot_dimension_numbers<[1], [0], [0], [1], [0, 0, 1, 1], [], []>} : vector<8x16xf32>, vector<16x32xf32>, vector<8x32xf32> -> vector<8x32xf32>
    %c0_24 = arith.constant 0 : index
    %c0_25 = arith.constant 0 : index
    %55 = vector.load %arg8[%c0_24, %c0_25] : memref<1x32xf32, #tpu.memory_space<vmem>>, vector<1x32xf32>
    %56 = vector.broadcast %55 : vector<1x32xf32> to vector<8x32xf32>
    %57 = arith.addf %54, %56 : vector<8x32xf32>
    %58 = arith.addf %38, %57 : vector<8x32xf32>
    %c0_26 = arith.constant 0 : index
    %c0_27 = arith.constant 0 : index
    %59 = vector.load %arg10[%c0_26, %c0_27] : memref<8x32xf32, #tpu.memory_space<vmem>>, vector<8x32xf32>
    tpu.vector_store %arg10[%c0_26, %c0_27], %58 {strides = array<i32>} : memref<8x32xf32, #tpu.memory_space<vmem>>, vector<8x32xf32>,
    %60 = arith.truncf %58 : vector<8x32xf32> to vector<8x32xbf16>
    %c0_28 = arith.constant 0 : index
    %c0_29 = arith.constant 0 : index
    %61 = vector.load %arg9[%c0_28, %c0_29] : memref<32x384xbf16, #tpu.memory_space<vmem>>, vector<32x384xbf16>
    %cst_30 = arith.constant dense<0.000000e+00> : vector<8x384xf32>
    %62 = tpu.matmul %60, %61, %cst_30 {dimension_numbers = #tpu.dot_dimension_numbers<[1], [0], [0], [1], [0, 0, 1, 1], [], []>} : vector<8x32xbf16>, vector<32x384xbf16>, vector<8x384xf32> -> vector<8x384xf32>
    %63 = vector.extract_strided_slice %62 {offsets = [0, 0], sizes = [8, 192], strides = [1, 1]} : vector<8x384xf32> to vector<8x192xf32>
    %c0_31 = arith.constant 0 : index
    %c0_32 = arith.constant 0 : index
    %64 = vector.load %arg11[%c0_31, %c0_32] : memref<8x192xf32, #tpu.memory_space<vmem>>, vector<8x192xf32>
    tpu.vector_store %arg11[%c0_31, %c0_32], %63 {strides = array<i32>} : memref<8x192xf32, #tpu.memory_space<vmem>>, vector<8x192xf32>,
    %65 = vector.extract_strided_slice %62 {offsets = [0, 192], sizes = [8, 192], strides = [1, 1]} : vector<8x384xf32> to vector<8x192xf32>
    %c0_33 = arith.constant 0 : index
    %c0_34 = arith.constant 0 : index
    %66 = vector.load %arg12[%c0_33, %c0_34] : memref<8x192xf32, #tpu.memory_space<vmem>>, vector<8x192xf32>
    tpu.vector_store %arg12[%c0_33, %c0_34], %65 {strides = array<i32>} : memref<8x192xf32, #tpu.memory_space<vmem>>, vector<8x192xf32>,
    return
  }
  func.func @transform_0(%arg0: i32) -> (i32, i32) {
    %c0_i32 = arith.constant 0 : i32
    %c0_i32_0 = arith.constant 0 : i32
    return %arg0, %c0_i32 : i32, i32
  }
  func.func @transform_1(%arg0: i32) -> (i32, i32) {
    %c0_i32 = arith.constant 0 : i32
    %c0_i32_0 = arith.constant 0 : i32
    %c0_i32_1 = arith.constant 0 : i32
    return %c0_i32, %c0_i32_0 : i32, i32
  }
  func.func @transform_2(%arg0: i32) -> (i32, i32) {
    %c0_i32 = arith.constant 0 : i32
    %c0_i32_0 = arith.constant 0 : i32
    %c0_i32_1 = arith.constant 0 : i32
    return %c0_i32, %c0_i32_0 : i32, i32
  }
  func.func @transform_3(%arg0: i32) -> (i32, i32) {
    %c0_i32 = arith.constant 0 : i32
    %c0_i32_0 = arith.constant 0 : i32
    return %arg0, %c0_i32 : i32, i32
  }
  func.func @transform_4(%arg0: i32) -> (i32, i32) {
    %c0_i32 = arith.constant 0 : i32
    %c0_i32_0 = arith.constant 0 : i32
    %c0_i32_1 = arith.constant 0 : i32
    return %c0_i32, %c0_i32_0 : i32, i32
  }
  func.func @transform_5(%arg0: i32) -> (i32, i32) {
    %c0_i32 = arith.constant 0 : i32
    %c0_i32_0 = arith.constant 0 : i32
    %c0_i32_1 = arith.constant 0 : i32
    return %c0_i32, %c0_i32_0 : i32, i32
  }
  func.func @transform_6(%arg0: i32) -> (i32, i32) {
    %c0_i32 = arith.constant 0 : i32
    %c0_i32_0 = arith.constant 0 : i32
    %c0_i32_1 = arith.constant 0 : i32
    return %c0_i32, %c0_i32_0 : i32, i32
  }
  func.func @transform_7(%arg0: i32) -> (i32, i32) {
    %c0_i32 = arith.constant 0 : i32
    %c0_i32_0 = arith.constant 0 : i32
    %c0_i32_1 = arith.constant 0 : i32
    return %c0_i32, %c0_i32_0 : i32, i32
  }
  func.func @transform_8(%arg0: i32) -> (i32, i32) {
    %c0_i32 = arith.constant 0 : i32
    %c0_i32_0 = arith.constant 0 : i32
    %c0_i32_1 = arith.constant 0 : i32
    return %c0_i32, %c0_i32_0 : i32, i32
  }
  func.func @transform_9(%arg0: i32) -> (i32, i32) {
    %c0_i32 = arith.constant 0 : i32
    %c0_i32_0 = arith.constant 0 : i32
    return %arg0, %c0_i32 : i32, i32
  }
  func.func @transform_10(%arg0: i32) -> (i32, i32) {
    %c0_i32 = arith.constant 0 : i32
    %c0_i32_0 = arith.constant 0 : i32
    return %arg0, %c0_i32 : i32, i32
  }
  func.func @transform_11(%arg0: i32) -> (i32, i32) {
    %c0_i32 = arith.constant 0 : i32
    %c0_i32_0 = arith.constant 0 : i32
    return %arg0, %c0_i32 : i32, i32
  }
}

module attributes {stable_mosaic.version = 11 : i64} {
  func.func @_egnn_layer_kernel(%arg0: i32, %arg1: i32, %arg2: memref<8x192xf32, #tpu.memory_space<vmem>>, %arg3: memref<8x192xf32, #tpu.memory_space<vmem>>, %arg4: memref<8x4xf32, #tpu.memory_space<vmem>>, %arg5: memref<8x4xf32, #tpu.memory_space<vmem>>, %arg6: memref<8x32xf32, #tpu.memory_space<vmem>>, %arg7: memref<3x4x64xf32, #tpu.memory_space<vmem>>, %arg8: memref<3x3x64xf32, #tpu.memory_space<vmem>>, %arg9: memref<3x64x32xbf16, #tpu.memory_space<vmem>>, %arg10: memref<3x1x32xf32, #tpu.memory_space<vmem>>, %arg11: memref<96x8xbf16, #tpu.memory_space<vmem>>, %arg12: memref<1x8xf32, #tpu.memory_space<vmem>>, %arg13: memref<8x3xbf16, #tpu.memory_space<vmem>>, %arg14: memref<1x3xf32, #tpu.memory_space<vmem>>, %arg15: memref<64x64xbf16, #tpu.memory_space<vmem>>, %arg16: memref<3x64xf32, #tpu.memory_space<vmem>>, %arg17: memref<64x32xbf16, #tpu.memory_space<vmem>>, %arg18: memref<3x32xf32, #tpu.memory_space<vmem>>, %arg19: memref<8x32xf32, #tpu.memory_space<vmem>>, %arg20: memref<3x8x32xf32, #tpu.memory_space<vmem>>) attributes {dimension_semantics = [#tpu.dimension_semantics<parallel>, #tpu.dimension_semantics<arbitrary>], iteration_bounds = array<i64: 2, 2>, scalar_prefetch = 0 : i64, scratch_operands = 1 : i64, tpu.core_type = #tpu.core_type<tc>, window_params = [{transform_indices = @transform_0, window_bounds = array<i64: 8, 192>}, {transform_indices = @transform_1, window_bounds = array<i64: 8, 192>}, {transform_indices = @transform_2, window_bounds = array<i64: 8, 4>}, {transform_indices = @transform_3, window_bounds = array<i64: 8, 4>}, {transform_indices = @transform_4, window_bounds = array<i64: 8, 32>}, {pipeline_mode = #tpu.pipeline_mode<synchronous>, transform_indices = @transform_5, window_bounds = array<i64: 3, 4, 64>}, {pipeline_mode = #tpu.pipeline_mode<synchronous>, transform_indices = @transform_6, window_bounds = array<i64: 3, 3, 64>}, {pipeline_mode = #tpu.pipeline_mode<synchronous>, transform_indices = @transform_7, window_bounds = array<i64: 3, 64, 32>}, {pipeline_mode = #tpu.pipeline_mode<synchronous>, transform_indices = @transform_8, window_bounds = array<i64: 3, 1, 32>}, {pipeline_mode = #tpu.pipeline_mode<synchronous>, transform_indices = @transform_9, window_bounds = array<i64: 96, 8>}, {pipeline_mode = #tpu.pipeline_mode<synchronous>, transform_indices = @transform_10, window_bounds = array<i64: 1, 8>}, {pipeline_mode = #tpu.pipeline_mode<synchronous>, transform_indices = @transform_11, window_bounds = array<i64: 8, 3>}, {pipeline_mode = #tpu.pipeline_mode<synchronous>, transform_indices = @transform_12, window_bounds = array<i64: 1, 3>}, {pipeline_mode = #tpu.pipeline_mode<synchronous>, transform_indices = @transform_13, window_bounds = array<i64: 64, 64>}, {pipeline_mode = #tpu.pipeline_mode<synchronous>, transform_indices = @transform_14, window_bounds = array<i64: 3, 64>}, {pipeline_mode = #tpu.pipeline_mode<synchronous>, transform_indices = @transform_15, window_bounds = array<i64: 64, 32>}, {pipeline_mode = #tpu.pipeline_mode<synchronous>, transform_indices = @transform_16, window_bounds = array<i64: 3, 32>}, {transform_indices = @transform_17, window_bounds = array<i64: 8, 32>}]} {
    %c0_i32 = arith.constant 0 : i32
    %0 = arith.cmpi eq, %arg1, %c0_i32 : i32
    %1 = arith.extui %0 : i1 to i32
    %c0_i32_0 = arith.constant 0 : i32
    %2 = arith.cmpi ne, %1, %c0_i32_0 : i32
    scf.if %2 {
      %cst_94 = arith.constant 0.000000e+00 : f32
      %331 = vector.broadcast %cst_94 : f32 to vector<3x8x32xf32>
      %c0_95 = arith.constant 0 : index
      %c0_96 = arith.constant 0 : index
      %c0_97 = arith.constant 0 : index
      %332 = vector.load %arg20[%c0_95, %c0_96, %c0_97] : memref<3x8x32xf32, #tpu.memory_space<vmem>>, vector<3x8x32xf32>
      tpu.vector_store %arg20[%c0_95, %c0_96, %c0_97], %331 {strides = array<i32>} : memref<3x8x32xf32, #tpu.memory_space<vmem>>, vector<3x8x32xf32>,
    } else {
    }
    %c0 = arith.constant 0 : index
    %c0_1 = arith.constant 0 : index
    %3 = vector.load %arg4[%c0, %c0_1] : memref<8x4xf32, #tpu.memory_space<vmem>>, vector<8x4xf32>
    %c0_2 = arith.constant 0 : index
    %c0_3 = arith.constant 0 : index
    %4 = vector.load %arg5[%c0_2, %c0_3] : memref<8x4xf32, #tpu.memory_space<vmem>>, vector<8x4xf32>
    %5 = vector.extract_strided_slice %3 {offsets = [0, 0], sizes = [8, 3], strides = [1, 1]} : vector<8x4xf32> to vector<8x3xf32>
    %6 = vector.extract_strided_slice %4 {offsets = [0, 0], sizes = [8, 3], strides = [1, 1]} : vector<8x4xf32> to vector<8x3xf32>
    %7 = vector.shape_cast %6 : vector<8x3xf32> to vector<1x8x3xf32>
    %8 = vector.shape_cast %5 : vector<8x3xf32> to vector<8x1x3xf32>
    %9 = vector.broadcast %7 : vector<1x8x3xf32> to vector<8x8x3xf32>
    %10 = vector.broadcast %8 : vector<8x1x3xf32> to vector<8x8x3xf32>
    %11 = arith.subf %9, %10 : vector<8x8x3xf32>
    %12 = vector.extract_strided_slice %11 {offsets = [0, 0, 0], sizes = [8, 8, 1], strides = [1, 1, 1]} : vector<8x8x3xf32> to vector<8x8x1xf32>
    %13 = vector.extract_strided_slice %11 {offsets = [0, 0, 1], sizes = [8, 8, 1], strides = [1, 1, 1]} : vector<8x8x3xf32> to vector<8x8x1xf32>
    %14 = vector.extract_strided_slice %11 {offsets = [0, 0, 2], sizes = [8, 8, 1], strides = [1, 1, 1]} : vector<8x8x3xf32> to vector<8x8x1xf32>
    %15 = arith.mulf %12, %12 : vector<8x8x1xf32>
    %16 = arith.mulf %13, %13 : vector<8x8x1xf32>
    %17 = arith.addf %15, %16 : vector<8x8x1xf32>
    %18 = arith.mulf %14, %14 : vector<8x8x1xf32>
    %19 = arith.addf %17, %18 : vector<8x8x1xf32>
    %20 = math.sqrt %19 : vector<8x8x1xf32>
    %cst = arith.constant 9.99999993E-9 : f32
    %21 = vector.broadcast %cst : f32 to vector<8x8x1xf32>
    %22 = arith.addf %20, %21 : vector<8x8x1xf32>
    %cst_4 = arith.constant 1.000000e+00 : f32
    %23 = vector.broadcast %cst_4 : f32 to vector<8x8x1xf32>
    %24 = arith.divf %23, %22 : vector<8x8x1xf32>
    %cst_5 = arith.constant 2.500000e-01 : f32
    %25 = vector.broadcast %cst_5 : f32 to vector<8x8x1xf32>
    %26 = arith.mulf %20, %25 : vector<8x8x1xf32>
    %27 = arith.mulf %12, %24 : vector<8x8x1xf32>
    %28 = arith.mulf %13, %24 : vector<8x8x1xf32>
    %29 = arith.mulf %14, %24 : vector<8x8x1xf32>
    %30 = vector.extract_strided_slice %3 {offsets = [0, 3], sizes = [8, 1], strides = [1, 1]} : vector<8x4xf32> to vector<8x1xf32>
    %31 = vector.shape_cast %30 : vector<8x1xf32> to vector<8x1x1xf32>
    %32 = vector.extract_strided_slice %4 {offsets = [0, 3], sizes = [8, 1], strides = [1, 1]} : vector<8x4xf32> to vector<8x1xf32>
    %33 = vector.shape_cast %32 : vector<8x1xf32> to vector<1x8x1xf32>
    %34 = vector.broadcast %31 : vector<8x1x1xf32> to vector<8x8x1xf32>
    %35 = vector.broadcast %33 : vector<1x8x1xf32> to vector<8x8x1xf32>
    %36 = arith.cmpf oeq, %34, %35 : vector<8x8x1xf32>
    %37 = tpu.iota {dimensions = array<i32: 0>} : vector<8x8x1xi32>
    %c8_i32 = arith.constant 8 : i32
    %38 = arith.muli %arg0, %c8_i32 : i32
    %39 = vector.broadcast %38 : i32 to vector<8x8x1xi32>
    %40 = arith.addi %37, %39 : vector<8x8x1xi32>
    %41 = tpu.iota {dimensions = array<i32: 1>} : vector<8x8x1xi32>
    %c8_i32_6 = arith.constant 8 : i32
    %42 = arith.muli %arg1, %c8_i32_6 : i32
    %43 = vector.broadcast %42 : i32 to vector<8x8x1xi32>
    %44 = arith.addi %41, %43 : vector<8x8x1xi32>
    %cst_7 = arith.constant 1.600000e+01 : f32
    %45 = vector.broadcast %cst_7 : f32 to vector<8x8x1xf32>
    %46 = arith.cmpf ole, %19, %45 : vector<8x8x1xf32>
    %47 = arith.andi %36, %46 : vector<8x8x1xi1>
    %48 = arith.cmpi ne, %40, %44 : vector<8x8x1xi32>
    %49 = arith.andi %47, %48 : vector<8x8x1xi1>
    %cst_8 = arith.constant 1.000000e+00 : f32
    %cst_9 = arith.constant 0.000000e+00 : f32
    %50 = vector.broadcast %cst_8 : f32 to vector<8x8x1xf32>
    %51 = vector.broadcast %cst_9 : f32 to vector<8x8x1xf32>
    %52 = arith.select %49, %50, %51 : vector<8x8x1xi1>, vector<8x8x1xf32>
    %c0_10 = arith.constant 0 : index
    %c0_11 = arith.constant 0 : index
    %53 = vector.load %arg2[%c0_10, %c0_11] : memref<8x192xf32, #tpu.memory_space<vmem>>, vector<8x192xf32>
    %c0_12 = arith.constant 0 : index
    %c0_13 = arith.constant 0 : index
    %54 = vector.load %arg3[%c0_12, %c0_13] : memref<8x192xf32, #tpu.memory_space<vmem>>, vector<8x192xf32>
    %55 = vector.extract_strided_slice %53 {offsets = [0, 0], sizes = [8, 64], strides = [1, 1]} : vector<8x192xf32> to vector<8x64xf32>
    %56 = vector.extract_strided_slice %54 {offsets = [0, 0], sizes = [8, 64], strides = [1, 1]} : vector<8x192xf32> to vector<8x64xf32>
    %c0_14 = arith.constant 0 : index
    %c0_15 = arith.constant 0 : index
    %c0_16 = arith.constant 0 : index
    %57 = vector.load %arg7[%c0_14, %c0_15, %c0_16] : memref<3x4x64xf32, #tpu.memory_space<vmem>>, vector<1x4x64xf32>
    %58 = vector.shape_cast %57 : vector<1x4x64xf32> to vector<4x64xf32>
    %c0_17 = arith.constant 0 : index
    %c0_18 = arith.constant 0 : index
    %c0_19 = arith.constant 0 : index
    %59 = vector.load %arg8[%c0_17, %c0_18, %c0_19] : memref<3x3x64xf32, #tpu.memory_space<vmem>>, vector<1x3x64xf32>
    %60 = vector.shape_cast %59 : vector<1x3x64xf32> to vector<3x64xf32>
    %61 = vector.extract_strided_slice %58 {offsets = [0, 0], sizes = [1, 64], strides = [1, 1]} : vector<4x64xf32> to vector<1x64xf32>
    %62 = vector.shape_cast %61 : vector<1x64xf32> to vector<1x1x64xf32>
    %63 = vector.broadcast %27 : vector<8x8x1xf32> to vector<8x8x64xf32>
    %64 = vector.broadcast %62 : vector<1x1x64xf32> to vector<8x8x64xf32>
    %65 = arith.mulf %63, %64 : vector<8x8x64xf32>
    %66 = vector.extract_strided_slice %58 {offsets = [1, 0], sizes = [1, 64], strides = [1, 1]} : vector<4x64xf32> to vector<1x64xf32>
    %67 = vector.shape_cast %66 : vector<1x64xf32> to vector<1x1x64xf32>
    %68 = vector.broadcast %28 : vector<8x8x1xf32> to vector<8x8x64xf32>
    %69 = vector.broadcast %67 : vector<1x1x64xf32> to vector<8x8x64xf32>
    %70 = arith.mulf %68, %69 : vector<8x8x64xf32>
    %71 = arith.addf %65, %70 : vector<8x8x64xf32>
    %72 = vector.extract_strided_slice %58 {offsets = [2, 0], sizes = [1, 64], strides = [1, 1]} : vector<4x64xf32> to vector<1x64xf32>
    %73 = vector.shape_cast %72 : vector<1x64xf32> to vector<1x1x64xf32>
    %74 = vector.broadcast %29 : vector<8x8x1xf32> to vector<8x8x64xf32>
    %75 = vector.broadcast %73 : vector<1x1x64xf32> to vector<8x8x64xf32>
    %76 = arith.mulf %74, %75 : vector<8x8x64xf32>
    %77 = arith.addf %71, %76 : vector<8x8x64xf32>
    %78 = vector.extract_strided_slice %58 {offsets = [3, 0], sizes = [1, 64], strides = [1, 1]} : vector<4x64xf32> to vector<1x64xf32>
    %79 = vector.shape_cast %78 : vector<1x64xf32> to vector<1x1x64xf32>
    %80 = vector.broadcast %26 : vector<8x8x1xf32> to vector<8x8x64xf32>
    %81 = vector.broadcast %79 : vector<1x1x64xf32> to vector<8x8x64xf32>
    %82 = arith.mulf %80, %81 : vector<8x8x64xf32>
    %83 = arith.addf %77, %82 : vector<8x8x64xf32>
    %84 = vector.extract_strided_slice %60 {offsets = [0, 0], sizes = [1, 64], strides = [1, 1]} : vector<3x64xf32> to vector<1x64xf32>
    %85 = vector.shape_cast %84 : vector<1x64xf32> to vector<1x1x64xf32>
    %86 = vector.broadcast %85 : vector<1x1x64xf32> to vector<8x8x64xf32>
    %87 = arith.addf %83, %86 : vector<8x8x64xf32>
    %88 = vector.shape_cast %55 : vector<8x64xf32> to vector<8x1x64xf32>
    %89 = vector.shape_cast %56 : vector<8x64xf32> to vector<1x8x64xf32>
    %90 = vector.broadcast %88 : vector<8x1x64xf32> to vector<8x8x64xf32>
    %91 = vector.broadcast %89 : vector<1x8x64xf32> to vector<8x8x64xf32>
    %92 = arith.addf %90, %91 : vector<8x8x64xf32>
    %93 = arith.addf %92, %87 : vector<8x8x64xf32>
    %94 = vector.extract_strided_slice %60 {offsets = [1, 0], sizes = [1, 64], strides = [1, 1]} : vector<3x64xf32> to vector<1x64xf32>
    %95 = vector.shape_cast %94 : vector<1x64xf32> to vector<1x1x64xf32>
    %96 = vector.extract_strided_slice %60 {offsets = [2, 0], sizes = [1, 64], strides = [1, 1]} : vector<3x64xf32> to vector<1x64xf32>
    %97 = vector.shape_cast %96 : vector<1x64xf32> to vector<1x1x64xf32>
    %cst_20 = arith.constant dense<0.000000e+00> : vector<8x8xf32>
    %98 = vector.multi_reduction <add>, %93, %cst_20 [2] : vector<8x8x64xf32> to vector<8x8xf32>
    %99 = vector.shape_cast %98 : vector<8x8xf32> to vector<8x8x1xf32>
    %cst_21 = arith.constant 6.400000e+01 : f32
    %100 = vector.broadcast %cst_21 : f32 to vector<8x8x1xf32>
    %101 = arith.divf %99, %100 : vector<8x8x1xf32>
    %102 = vector.broadcast %101 : vector<8x8x1xf32> to vector<8x8x64xf32>
    %103 = arith.subf %93, %102 : vector<8x8x64xf32>
    %104 = arith.mulf %103, %103 : vector<8x8x64xf32>
    %cst_22 = arith.constant dense<0.000000e+00> : vector<8x8xf32>
    %105 = vector.multi_reduction <add>, %104, %cst_22 [2] : vector<8x8x64xf32> to vector<8x8xf32>
    %106 = vector.shape_cast %105 : vector<8x8xf32> to vector<8x8x1xf32>
    %cst_23 = arith.constant 6.400000e+01 : f32
    %107 = vector.broadcast %cst_23 : f32 to vector<8x8x1xf32>
    %108 = arith.divf %106, %107 : vector<8x8x1xf32>
    %109 = vector.broadcast %101 : vector<8x8x1xf32> to vector<8x8x64xf32>
    %110 = arith.subf %93, %109 : vector<8x8x64xf32>
    %cst_24 = arith.constant 9.99999974E-6 : f32
    %111 = vector.broadcast %cst_24 : f32 to vector<8x8x1xf32>
    %112 = arith.addf %108, %111 : vector<8x8x1xf32>
    %113 = math.rsqrt %112 : vector<8x8x1xf32>
    %114 = vector.broadcast %113 : vector<8x8x1xf32> to vector<8x8x64xf32>
    %115 = arith.mulf %110, %114 : vector<8x8x64xf32>
    %116 = vector.broadcast %95 : vector<1x1x64xf32> to vector<8x8x64xf32>
    %117 = arith.mulf %115, %116 : vector<8x8x64xf32>
    %118 = vector.broadcast %97 : vector<1x1x64xf32> to vector<8x8x64xf32>
    %119 = arith.addf %117, %118 : vector<8x8x64xf32>
    %cst_25 = arith.constant 0.000000e+00 : f32
    %120 = vector.broadcast %cst_25 : f32 to vector<8x8x64xf32>
    %121 = arith.subf %120, %119 : vector<8x8x64xf32>
    %122 = math.exp %121 : vector<8x8x64xf32>
    %cst_26 = arith.constant 1.000000e+00 : f32
    %123 = vector.broadcast %cst_26 : f32 to vector<8x8x64xf32>
    %124 = arith.addf %123, %122 : vector<8x8x64xf32>
    %125 = tpu.reciprocal %124 {approx = true} : vector<8x8x64xf32> -> vector<8x8x64xf32>
    %126 = arith.mulf %119, %125 : vector<8x8x64xf32>
    %127 = vector.shape_cast %126 : vector<8x8x64xf32> to vector<64x64xf32>
    %128 = arith.truncf %127 : vector<64x64xf32> to vector<64x64xbf16>
    %c0_27 = arith.constant 0 : index
    %c0_28 = arith.constant 0 : index
    %c0_29 = arith.constant 0 : index
    %129 = vector.load %arg9[%c0_27, %c0_28, %c0_29] : memref<3x64x32xbf16, #tpu.memory_space<vmem>>, vector<1x64x32xbf16>
    %130 = vector.shape_cast %129 : vector<1x64x32xbf16> to vector<64x32xbf16>
    %cst_30 = arith.constant dense<0.000000e+00> : vector<64x32xf32>
    %131 = tpu.matmul %128, %130, %cst_30 {dimension_numbers = #tpu.dot_dimension_numbers<[1], [0], [0], [1], [0, 0, 1, 1], [], []>} : vector<64x64xbf16>, vector<64x32xbf16>, vector<64x32xf32> -> vector<64x32xf32>
    %c0_31 = arith.constant 0 : index
    %c0_32 = arith.constant 0 : index
    %c0_33 = arith.constant 0 : index
    %132 = vector.load %arg10[%c0_31, %c0_32, %c0_33] : memref<3x1x32xf32, #tpu.memory_space<vmem>>, vector<1x1x32xf32>
    %133 = vector.shape_cast %132 : vector<1x1x32xf32> to vector<1x32xf32>
    %134 = vector.broadcast %133 : vector<1x32xf32> to vector<64x32xf32>
    %135 = arith.addf %131, %134 : vector<64x32xf32>
    %136 = vector.shape_cast %135 : vector<64x32xf32> to vector<8x8x32xf32>
    %137 = vector.broadcast %52 : vector<8x8x1xf32> to vector<8x8x32xf32>
    %138 = arith.mulf %136, %137 : vector<8x8x32xf32>
    %c0_34 = arith.constant 0 : index
    %c0_35 = arith.constant 0 : index
    %c0_36 = arith.constant 0 : index
    %139 = vector.load %arg20[%c0_34, %c0_35, %c0_36] : memref<3x8x32xf32, #tpu.memory_space<vmem>>, vector<1x8x32xf32>
    %140 = vector.shape_cast %139 : vector<1x8x32xf32> to vector<8x32xf32>
    %cst_37 = arith.constant dense<0.000000e+00> : vector<8x32xf32>
    %141 = vector.multi_reduction <add>, %138, %cst_37 [1] : vector<8x8x32xf32> to vector<8x32xf32>
    %142 = arith.addf %140, %141 : vector<8x32xf32>
    %c0_38 = arith.constant 0 : index
    %c0_39 = arith.constant 0 : index
    %c0_40 = arith.constant 0 : index
    %143 = vector.load %arg20[%c0_38, %c0_39, %c0_40] : memref<3x8x32xf32, #tpu.memory_space<vmem>>, vector<1x8x32xf32>
    %144 = vector.shape_cast %143 : vector<1x8x32xf32> to vector<8x32xf32>
    %145 = vector.shape_cast %142 : vector<8x32xf32> to vector<1x8x32xf32>
    tpu.vector_store %arg20[%c0_38, %c0_39, %c0_40], %145 {strides = array<i32>} : memref<3x8x32xf32, #tpu.memory_space<vmem>>, vector<1x8x32xf32>,
    %146 = vector.extract_strided_slice %53 {offsets = [0, 64], sizes = [8, 64], strides = [1, 1]} : vector<8x192xf32> to vector<8x64xf32>
    %147 = vector.extract_strided_slice %54 {offsets = [0, 64], sizes = [8, 64], strides = [1, 1]} : vector<8x192xf32> to vector<8x64xf32>
    %c1 = arith.constant 1 : index
    %c0_41 = arith.constant 0 : index
    %c0_42 = arith.constant 0 : index
    %148 = vector.load %arg7[%c1, %c0_41, %c0_42] : memref<3x4x64xf32, #tpu.memory_space<vmem>>, vector<1x4x64xf32>
    %149 = vector.shape_cast %148 : vector<1x4x64xf32> to vector<4x64xf32>
    %c1_43 = arith.constant 1 : index
    %c0_44 = arith.constant 0 : index
    %c0_45 = arith.constant 0 : index
    %150 = vector.load %arg8[%c1_43, %c0_44, %c0_45] : memref<3x3x64xf32, #tpu.memory_space<vmem>>, vector<1x3x64xf32>
    %151 = vector.shape_cast %150 : vector<1x3x64xf32> to vector<3x64xf32>
    %152 = vector.extract_strided_slice %149 {offsets = [0, 0], sizes = [1, 64], strides = [1, 1]} : vector<4x64xf32> to vector<1x64xf32>
    %153 = vector.shape_cast %152 : vector<1x64xf32> to vector<1x1x64xf32>
    %154 = vector.broadcast %27 : vector<8x8x1xf32> to vector<8x8x64xf32>
    %155 = vector.broadcast %153 : vector<1x1x64xf32> to vector<8x8x64xf32>
    %156 = arith.mulf %154, %155 : vector<8x8x64xf32>
    %157 = vector.extract_strided_slice %149 {offsets = [1, 0], sizes = [1, 64], strides = [1, 1]} : vector<4x64xf32> to vector<1x64xf32>
    %158 = vector.shape_cast %157 : vector<1x64xf32> to vector<1x1x64xf32>
    %159 = vector.broadcast %28 : vector<8x8x1xf32> to vector<8x8x64xf32>
    %160 = vector.broadcast %158 : vector<1x1x64xf32> to vector<8x8x64xf32>
    %161 = arith.mulf %159, %160 : vector<8x8x64xf32>
    %162 = arith.addf %156, %161 : vector<8x8x64xf32>
    %163 = vector.extract_strided_slice %149 {offsets = [2, 0], sizes = [1, 64], strides = [1, 1]} : vector<4x64xf32> to vector<1x64xf32>
    %164 = vector.shape_cast %163 : vector<1x64xf32> to vector<1x1x64xf32>
    %165 = vector.broadcast %29 : vector<8x8x1xf32> to vector<8x8x64xf32>
    %166 = vector.broadcast %164 : vector<1x1x64xf32> to vector<8x8x64xf32>
    %167 = arith.mulf %165, %166 : vector<8x8x64xf32>
    %168 = arith.addf %162, %167 : vector<8x8x64xf32>
    %169 = vector.extract_strided_slice %149 {offsets = [3, 0], sizes = [1, 64], strides = [1, 1]} : vector<4x64xf32> to vector<1x64xf32>
    %170 = vector.shape_cast %169 : vector<1x64xf32> to vector<1x1x64xf32>
    %171 = vector.broadcast %26 : vector<8x8x1xf32> to vector<8x8x64xf32>
    %172 = vector.broadcast %170 : vector<1x1x64xf32> to vector<8x8x64xf32>
    %173 = arith.mulf %171, %172 : vector<8x8x64xf32>
    %174 = arith.addf %168, %173 : vector<8x8x64xf32>
    %175 = vector.extract_strided_slice %151 {offsets = [0, 0], sizes = [1, 64], strides = [1, 1]} : vector<3x64xf32> to vector<1x64xf32>
    %176 = vector.shape_cast %175 : vector<1x64xf32> to vector<1x1x64xf32>
    %177 = vector.broadcast %176 : vector<1x1x64xf32> to vector<8x8x64xf32>
    %178 = arith.addf %174, %177 : vector<8x8x64xf32>
    %179 = vector.shape_cast %146 : vector<8x64xf32> to vector<8x1x64xf32>
    %180 = vector.shape_cast %147 : vector<8x64xf32> to vector<1x8x64xf32>
    %181 = vector.broadcast %179 : vector<8x1x64xf32> to vector<8x8x64xf32>
    %182 = vector.broadcast %180 : vector<1x8x64xf32> to vector<8x8x64xf32>
    %183 = arith.addf %181, %182 : vector<8x8x64xf32>
    %184 = arith.addf %183, %178 : vector<8x8x64xf32>
    %185 = vector.extract_strided_slice %151 {offsets = [1, 0], sizes = [1, 64], strides = [1, 1]} : vector<3x64xf32> to vector<1x64xf32>
    %186 = vector.shape_cast %185 : vector<1x64xf32> to vector<1x1x64xf32>
    %187 = vector.extract_strided_slice %151 {offsets = [2, 0], sizes = [1, 64], strides = [1, 1]} : vector<3x64xf32> to vector<1x64xf32>
    %188 = vector.shape_cast %187 : vector<1x64xf32> to vector<1x1x64xf32>
    %cst_46 = arith.constant dense<0.000000e+00> : vector<8x8xf32>
    %189 = vector.multi_reduction <add>, %184, %cst_46 [2] : vector<8x8x64xf32> to vector<8x8xf32>
    %190 = vector.shape_cast %189 : vector<8x8xf32> to vector<8x8x1xf32>
    %cst_47 = arith.constant 6.400000e+01 : f32
    %191 = vector.broadcast %cst_47 : f32 to vector<8x8x1xf32>
    %192 = arith.divf %190, %191 : vector<8x8x1xf32>
    %193 = vector.broadcast %192 : vector<8x8x1xf32> to vector<8x8x64xf32>
    %194 = arith.subf %184, %193 : vector<8x8x64xf32>
    %195 = arith.mulf %194, %194 : vector<8x8x64xf32>
    %cst_48 = arith.constant dense<0.000000e+00> : vector<8x8xf32>
    %196 = vector.multi_reduction <add>, %195, %cst_48 [2] : vector<8x8x64xf32> to vector<8x8xf32>
    %197 = vector.shape_cast %196 : vector<8x8xf32> to vector<8x8x1xf32>
    %cst_49 = arith.constant 6.400000e+01 : f32
    %198 = vector.broadcast %cst_49 : f32 to vector<8x8x1xf32>
    %199 = arith.divf %197, %198 : vector<8x8x1xf32>
    %200 = vector.broadcast %192 : vector<8x8x1xf32> to vector<8x8x64xf32>
    %201 = arith.subf %184, %200 : vector<8x8x64xf32>
    %cst_50 = arith.constant 9.99999974E-6 : f32
    %202 = vector.broadcast %cst_50 : f32 to vector<8x8x1xf32>
    %203 = arith.addf %199, %202 : vector<8x8x1xf32>
    %204 = math.rsqrt %203 : vector<8x8x1xf32>
    %205 = vector.broadcast %204 : vector<8x8x1xf32> to vector<8x8x64xf32>
    %206 = arith.mulf %201, %205 : vector<8x8x64xf32>
    %207 = vector.broadcast %186 : vector<1x1x64xf32> to vector<8x8x64xf32>
    %208 = arith.mulf %206, %207 : vector<8x8x64xf32>
    %209 = vector.broadcast %188 : vector<1x1x64xf32> to vector<8x8x64xf32>
    %210 = arith.addf %208, %209 : vector<8x8x64xf32>
    %cst_51 = arith.constant 0.000000e+00 : f32
    %211 = vector.broadcast %cst_51 : f32 to vector<8x8x64xf32>
    %212 = arith.subf %211, %210 : vector<8x8x64xf32>
    %213 = math.exp %212 : vector<8x8x64xf32>
    %cst_52 = arith.constant 1.000000e+00 : f32
    %214 = vector.broadcast %cst_52 : f32 to vector<8x8x64xf32>
    %215 = arith.addf %214, %213 : vector<8x8x64xf32>
    %216 = tpu.reciprocal %215 {approx = true} : vector<8x8x64xf32> -> vector<8x8x64xf32>
    %217 = arith.mulf %210, %216 : vector<8x8x64xf32>
    %218 = vector.shape_cast %217 : vector<8x8x64xf32> to vector<64x64xf32>
    %219 = arith.truncf %218 : vector<64x64xf32> to vector<64x64xbf16>
    %c1_53 = arith.constant 1 : index
    %c0_54 = arith.constant 0 : index
    %c0_55 = arith.constant 0 : index
    %220 = vector.load %arg9[%c1_53, %c0_54, %c0_55] : memref<3x64x32xbf16, #tpu.memory_space<vmem>>, vector<1x64x32xbf16>
    %221 = vector.shape_cast %220 : vector<1x64x32xbf16> to vector<64x32xbf16>
    %cst_56 = arith.constant dense<0.000000e+00> : vector<64x32xf32>
    %222 = tpu.matmul %219, %221, %cst_56 {dimension_numbers = #tpu.dot_dimension_numbers<[1], [0], [0], [1], [0, 0, 1, 1], [], []>} : vector<64x64xbf16>, vector<64x32xbf16>, vector<64x32xf32> -> vector<64x32xf32>
    %c1_57 = arith.constant 1 : index
    %c0_58 = arith.constant 0 : index
    %c0_59 = arith.constant 0 : index
    %223 = vector.load %arg10[%c1_57, %c0_58, %c0_59] : memref<3x1x32xf32, #tpu.memory_space<vmem>>, vector<1x1x32xf32>
    %224 = vector.shape_cast %223 : vector<1x1x32xf32> to vector<1x32xf32>
    %225 = vector.broadcast %224 : vector<1x32xf32> to vector<64x32xf32>
    %226 = arith.addf %222, %225 : vector<64x32xf32>
    %227 = vector.shape_cast %226 : vector<64x32xf32> to vector<8x8x32xf32>
    %228 = vector.broadcast %52 : vector<8x8x1xf32> to vector<8x8x32xf32>
    %229 = arith.mulf %227, %228 : vector<8x8x32xf32>
    %c1_60 = arith.constant 1 : index
    %c0_61 = arith.constant 0 : index
    %c0_62 = arith.constant 0 : index
    %230 = vector.load %arg20[%c1_60, %c0_61, %c0_62] : memref<3x8x32xf32, #tpu.memory_space<vmem>>, vector<1x8x32xf32>
    %231 = vector.shape_cast %230 : vector<1x8x32xf32> to vector<8x32xf32>
    %cst_63 = arith.constant dense<0.000000e+00> : vector<8x32xf32>
    %232 = vector.multi_reduction <add>, %229, %cst_63 [1] : vector<8x8x32xf32> to vector<8x32xf32>
    %233 = arith.addf %231, %232 : vector<8x32xf32>
    %c1_64 = arith.constant 1 : index
    %c0_65 = arith.constant 0 : index
    %c0_66 = arith.constant 0 : index
    %234 = vector.load %arg20[%c1_64, %c0_65, %c0_66] : memref<3x8x32xf32, #tpu.memory_space<vmem>>, vector<1x8x32xf32>
    %235 = vector.shape_cast %234 : vector<1x8x32xf32> to vector<8x32xf32>
    %236 = vector.shape_cast %233 : vector<8x32xf32> to vector<1x8x32xf32>
    tpu.vector_store %arg20[%c1_64, %c0_65, %c0_66], %236 {strides = array<i32>} : memref<3x8x32xf32, #tpu.memory_space<vmem>>, vector<1x8x32xf32>,
    %237 = vector.extract_strided_slice %53 {offsets = [0, 128], sizes = [8, 64], strides = [1, 1]} : vector<8x192xf32> to vector<8x64xf32>
    %238 = vector.extract_strided_slice %54 {offsets = [0, 128], sizes = [8, 64], strides = [1, 1]} : vector<8x192xf32> to vector<8x64xf32>
    %c2 = arith.constant 2 : index
    %c0_67 = arith.constant 0 : index
    %c0_68 = arith.constant 0 : index
    %239 = vector.load %arg7[%c2, %c0_67, %c0_68] : memref<3x4x64xf32, #tpu.memory_space<vmem>>, vector<1x4x64xf32>
    %240 = vector.shape_cast %239 : vector<1x4x64xf32> to vector<4x64xf32>
    %c2_69 = arith.constant 2 : index
    %c0_70 = arith.constant 0 : index
    %c0_71 = arith.constant 0 : index
    %241 = vector.load %arg8[%c2_69, %c0_70, %c0_71] : memref<3x3x64xf32, #tpu.memory_space<vmem>>, vector<1x3x64xf32>
    %242 = vector.shape_cast %241 : vector<1x3x64xf32> to vector<3x64xf32>
    %243 = vector.extract_strided_slice %240 {offsets = [0, 0], sizes = [1, 64], strides = [1, 1]} : vector<4x64xf32> to vector<1x64xf32>
    %244 = vector.shape_cast %243 : vector<1x64xf32> to vector<1x1x64xf32>
    %245 = vector.broadcast %27 : vector<8x8x1xf32> to vector<8x8x64xf32>
    %246 = vector.broadcast %244 : vector<1x1x64xf32> to vector<8x8x64xf32>
    %247 = arith.mulf %245, %246 : vector<8x8x64xf32>
    %248 = vector.extract_strided_slice %240 {offsets = [1, 0], sizes = [1, 64], strides = [1, 1]} : vector<4x64xf32> to vector<1x64xf32>
    %249 = vector.shape_cast %248 : vector<1x64xf32> to vector<1x1x64xf32>
    %250 = vector.broadcast %28 : vector<8x8x1xf32> to vector<8x8x64xf32>
    %251 = vector.broadcast %249 : vector<1x1x64xf32> to vector<8x8x64xf32>
    %252 = arith.mulf %250, %251 : vector<8x8x64xf32>
    %253 = arith.addf %247, %252 : vector<8x8x64xf32>
    %254 = vector.extract_strided_slice %240 {offsets = [2, 0], sizes = [1, 64], strides = [1, 1]} : vector<4x64xf32> to vector<1x64xf32>
    %255 = vector.shape_cast %254 : vector<1x64xf32> to vector<1x1x64xf32>
    %256 = vector.broadcast %29 : vector<8x8x1xf32> to vector<8x8x64xf32>
    %257 = vector.broadcast %255 : vector<1x1x64xf32> to vector<8x8x64xf32>
    %258 = arith.mulf %256, %257 : vector<8x8x64xf32>
    %259 = arith.addf %253, %258 : vector<8x8x64xf32>
    %260 = vector.extract_strided_slice %240 {offsets = [3, 0], sizes = [1, 64], strides = [1, 1]} : vector<4x64xf32> to vector<1x64xf32>
    %261 = vector.shape_cast %260 : vector<1x64xf32> to vector<1x1x64xf32>
    %262 = vector.broadcast %26 : vector<8x8x1xf32> to vector<8x8x64xf32>
    %263 = vector.broadcast %261 : vector<1x1x64xf32> to vector<8x8x64xf32>
    %264 = arith.mulf %262, %263 : vector<8x8x64xf32>
    %265 = arith.addf %259, %264 : vector<8x8x64xf32>
    %266 = vector.extract_strided_slice %242 {offsets = [0, 0], sizes = [1, 64], strides = [1, 1]} : vector<3x64xf32> to vector<1x64xf32>
    %267 = vector.shape_cast %266 : vector<1x64xf32> to vector<1x1x64xf32>
    %268 = vector.broadcast %267 : vector<1x1x64xf32> to vector<8x8x64xf32>
    %269 = arith.addf %265, %268 : vector<8x8x64xf32>
    %270 = vector.shape_cast %237 : vector<8x64xf32> to vector<8x1x64xf32>
    %271 = vector.shape_cast %238 : vector<8x64xf32> to vector<1x8x64xf32>
    %272 = vector.broadcast %270 : vector<8x1x64xf32> to vector<8x8x64xf32>
    %273 = vector.broadcast %271 : vector<1x8x64xf32> to vector<8x8x64xf32>
    %274 = arith.addf %272, %273 : vector<8x8x64xf32>
    %275 = arith.addf %274, %269 : vector<8x8x64xf32>
    %276 = vector.extract_strided_slice %242 {offsets = [1, 0], sizes = [1, 64], strides = [1, 1]} : vector<3x64xf32> to vector<1x64xf32>
    %277 = vector.shape_cast %276 : vector<1x64xf32> to vector<1x1x64xf32>
    %278 = vector.extract_strided_slice %242 {offsets = [2, 0], sizes = [1, 64], strides = [1, 1]} : vector<3x64xf32> to vector<1x64xf32>
    %279 = vector.shape_cast %278 : vector<1x64xf32> to vector<1x1x64xf32>
    %cst_72 = arith.constant dense<0.000000e+00> : vector<8x8xf32>
    %280 = vector.multi_reduction <add>, %275, %cst_72 [2] : vector<8x8x64xf32> to vector<8x8xf32>
    %281 = vector.shape_cast %280 : vector<8x8xf32> to vector<8x8x1xf32>
    %cst_73 = arith.constant 6.400000e+01 : f32
    %282 = vector.broadcast %cst_73 : f32 to vector<8x8x1xf32>
    %283 = arith.divf %281, %282 : vector<8x8x1xf32>
    %284 = vector.broadcast %283 : vector<8x8x1xf32> to vector<8x8x64xf32>
    %285 = arith.subf %275, %284 : vector<8x8x64xf32>
    %286 = arith.mulf %285, %285 : vector<8x8x64xf32>
    %cst_74 = arith.constant dense<0.000000e+00> : vector<8x8xf32>
    %287 = vector.multi_reduction <add>, %286, %cst_74 [2] : vector<8x8x64xf32> to vector<8x8xf32>
    %288 = vector.shape_cast %287 : vector<8x8xf32> to vector<8x8x1xf32>
    %cst_75 = arith.constant 6.400000e+01 : f32
    %289 = vector.broadcast %cst_75 : f32 to vector<8x8x1xf32>
    %290 = arith.divf %288, %289 : vector<8x8x1xf32>
    %291 = vector.broadcast %283 : vector<8x8x1xf32> to vector<8x8x64xf32>
    %292 = arith.subf %275, %291 : vector<8x8x64xf32>
    %cst_76 = arith.constant 9.99999974E-6 : f32
    %293 = vector.broadcast %cst_76 : f32 to vector<8x8x1xf32>
    %294 = arith.addf %290, %293 : vector<8x8x1xf32>
    %295 = math.rsqrt %294 : vector<8x8x1xf32>
    %296 = vector.broadcast %295 : vector<8x8x1xf32> to vector<8x8x64xf32>
    %297 = arith.mulf %292, %296 : vector<8x8x64xf32>
    %298 = vector.broadcast %277 : vector<1x1x64xf32> to vector<8x8x64xf32>
    %299 = arith.mulf %297, %298 : vector<8x8x64xf32>
    %300 = vector.broadcast %279 : vector<1x1x64xf32> to vector<8x8x64xf32>
    %301 = arith.addf %299, %300 : vector<8x8x64xf32>
    %cst_77 = arith.constant 0.000000e+00 : f32
    %302 = vector.broadcast %cst_77 : f32 to vector<8x8x64xf32>
    %303 = arith.subf %302, %301 : vector<8x8x64xf32>
    %304 = math.exp %303 : vector<8x8x64xf32>
    %cst_78 = arith.constant 1.000000e+00 : f32
    %305 = vector.broadcast %cst_78 : f32 to vector<8x8x64xf32>
    %306 = arith.addf %305, %304 : vector<8x8x64xf32>
    %307 = tpu.reciprocal %306 {approx = true} : vector<8x8x64xf32> -> vector<8x8x64xf32>
    %308 = arith.mulf %301, %307 : vector<8x8x64xf32>
    %309 = vector.shape_cast %308 : vector<8x8x64xf32> to vector<64x64xf32>
    %310 = arith.truncf %309 : vector<64x64xf32> to vector<64x64xbf16>
    %c2_79 = arith.constant 2 : index
    %c0_80 = arith.constant 0 : index
    %c0_81 = arith.constant 0 : index
    %311 = vector.load %arg9[%c2_79, %c0_80, %c0_81] : memref<3x64x32xbf16, #tpu.memory_space<vmem>>, vector<1x64x32xbf16>
    %312 = vector.shape_cast %311 : vector<1x64x32xbf16> to vector<64x32xbf16>
    %cst_82 = arith.constant dense<0.000000e+00> : vector<64x32xf32>
    %313 = tpu.matmul %310, %312, %cst_82 {dimension_numbers = #tpu.dot_dimension_numbers<[1], [0], [0], [1], [0, 0, 1, 1], [], []>} : vector<64x64xbf16>, vector<64x32xbf16>, vector<64x32xf32> -> vector<64x32xf32>
    %c2_83 = arith.constant 2 : index
    %c0_84 = arith.constant 0 : index
    %c0_85 = arith.constant 0 : index
    %314 = vector.load %arg10[%c2_83, %c0_84, %c0_85] : memref<3x1x32xf32, #tpu.memory_space<vmem>>, vector<1x1x32xf32>
    %315 = vector.shape_cast %314 : vector<1x1x32xf32> to vector<1x32xf32>
    %316 = vector.broadcast %315 : vector<1x32xf32> to vector<64x32xf32>
    %317 = arith.addf %313, %316 : vector<64x32xf32>
    %318 = vector.shape_cast %317 : vector<64x32xf32> to vector<8x8x32xf32>
    %319 = vector.broadcast %52 : vector<8x8x1xf32> to vector<8x8x32xf32>
    %320 = arith.mulf %318, %319 : vector<8x8x32xf32>
    %c2_86 = arith.constant 2 : index
    %c0_87 = arith.constant 0 : index
    %c0_88 = arith.constant 0 : index
    %321 = vector.load %arg20[%c2_86, %c0_87, %c0_88] : memref<3x8x32xf32, #tpu.memory_space<vmem>>, vector<1x8x32xf32>
    %322 = vector.shape_cast %321 : vector<1x8x32xf32> to vector<8x32xf32>
    %cst_89 = arith.constant dense<0.000000e+00> : vector<8x32xf32>
    %323 = vector.multi_reduction <add>, %320, %cst_89 [1] : vector<8x8x32xf32> to vector<8x32xf32>
    %324 = arith.addf %322, %323 : vector<8x32xf32>
    %c2_90 = arith.constant 2 : index
    %c0_91 = arith.constant 0 : index
    %c0_92 = arith.constant 0 : index
    %325 = vector.load %arg20[%c2_90, %c0_91, %c0_92] : memref<3x8x32xf32, #tpu.memory_space<vmem>>, vector<1x8x32xf32>
    %326 = vector.shape_cast %325 : vector<1x8x32xf32> to vector<8x32xf32>
    %327 = vector.shape_cast %324 : vector<8x32xf32> to vector<1x8x32xf32>
    tpu.vector_store %arg20[%c2_90, %c0_91, %c0_92], %327 {strides = array<i32>} : memref<3x8x32xf32, #tpu.memory_space<vmem>>, vector<1x8x32xf32>,
    %c1_i32 = arith.constant 1 : i32
    %328 = arith.cmpi eq, %arg1, %c1_i32 : i32
    %329 = arith.extui %328 : i1 to i32
    %c0_i32_93 = arith.constant 0 : i32
    %330 = arith.cmpi ne, %329, %c0_i32_93 : i32
    scf.if %330 {
      %c0_94 = arith.constant 0 : index
      %c0_95 = arith.constant 0 : index
      %331 = vector.load %arg6[%c0_94, %c0_95] : memref<8x32xf32, #tpu.memory_space<vmem>>, vector<8x32xf32>
      %c0_96 = arith.constant 0 : index
      %c0_97 = arith.constant 0 : index
      %c0_98 = arith.constant 0 : index
      %332 = vector.load %arg20[%c0_96, %c0_97, %c0_98] : memref<3x8x32xf32, #tpu.memory_space<vmem>>, vector<1x8x32xf32>
      %333 = vector.shape_cast %332 : vector<1x8x32xf32> to vector<8x32xf32>
      %c1_99 = arith.constant 1 : index
      %c0_100 = arith.constant 0 : index
      %c0_101 = arith.constant 0 : index
      %334 = vector.load %arg20[%c1_99, %c0_100, %c0_101] : memref<3x8x32xf32, #tpu.memory_space<vmem>>, vector<1x8x32xf32>
      %335 = vector.shape_cast %334 : vector<1x8x32xf32> to vector<8x32xf32>
      %c2_102 = arith.constant 2 : index
      %c0_103 = arith.constant 0 : index
      %c0_104 = arith.constant 0 : index
      %336 = vector.load %arg20[%c2_102, %c0_103, %c0_104] : memref<3x8x32xf32, #tpu.memory_space<vmem>>, vector<1x8x32xf32>
      %337 = vector.shape_cast %336 : vector<1x8x32xf32> to vector<8x32xf32>
      %338 = tpu.concatenate %333, %335, %337 in 1 : vector<8x32xf32>, vector<8x32xf32>, vector<8x32xf32> -> vector<8x96xf32>
      %339 = arith.truncf %338 : vector<8x96xf32> to vector<8x96xbf16>
      %c0_105 = arith.constant 0 : index
      %c0_106 = arith.constant 0 : index
      %340 = vector.load %arg11[%c0_105, %c0_106] : memref<96x8xbf16, #tpu.memory_space<vmem>>, vector<96x8xbf16>
      %cst_107 = arith.constant dense<0.000000e+00> : vector<8x8xf32>
      %341 = tpu.matmul %339, %340, %cst_107 {dimension_numbers = #tpu.dot_dimension_numbers<[1], [0], [0], [1], [0, 0, 1, 1], [], []>} : vector<8x96xbf16>, vector<96x8xbf16>, vector<8x8xf32> -> vector<8x8xf32>
      %c0_108 = arith.constant 0 : index
      %c0_109 = arith.constant 0 : index
      %342 = vector.load %arg12[%c0_108, %c0_109] : memref<1x8xf32, #tpu.memory_space<vmem>>, vector<1x8xf32>
      %343 = vector.broadcast %342 : vector<1x8xf32> to vector<8x8xf32>
      %344 = arith.addf %341, %343 : vector<8x8xf32>
      %cst_110 = arith.constant 0.000000e+00 : f32
      %345 = vector.broadcast %cst_110 : f32 to vector<8x8xf32>
      %346 = arith.subf %345, %344 : vector<8x8xf32>
      %347 = math.exp %346 : vector<8x8xf32>
      %cst_111 = arith.constant 1.000000e+00 : f32
      %348 = vector.broadcast %cst_111 : f32 to vector<8x8xf32>
      %349 = arith.addf %348, %347 : vector<8x8xf32>
      %350 = tpu.reciprocal %349 {approx = true} : vector<8x8xf32> -> vector<8x8xf32>
      %351 = arith.mulf %344, %350 : vector<8x8xf32>
      %352 = arith.truncf %351 : vector<8x8xf32> to vector<8x8xbf16>
      %c0_112 = arith.constant 0 : index
      %c0_113 = arith.constant 0 : index
      %353 = vector.load %arg13[%c0_112, %c0_113] : memref<8x3xbf16, #tpu.memory_space<vmem>>, vector<8x3xbf16>
      %cst_114 = arith.constant dense<0.000000e+00> : vector<8x3xf32>
      %354 = tpu.matmul %352, %353, %cst_114 {dimension_numbers = #tpu.dot_dimension_numbers<[1], [0], [0], [1], [0, 0, 1, 1], [], []>} : vector<8x8xbf16>, vector<8x3xbf16>, vector<8x3xf32> -> vector<8x3xf32>
      %c0_115 = arith.constant 0 : index
      %c0_116 = arith.constant 0 : index
      %355 = vector.load %arg14[%c0_115, %c0_116] : memref<1x3xf32, #tpu.memory_space<vmem>>, vector<1x3xf32>
      %356 = vector.broadcast %355 : vector<1x3xf32> to vector<8x3xf32>
      %357 = arith.addf %354, %356 : vector<8x3xf32>
      %cst_117 = arith.constant dense<0xFF800000> : vector<8xf32>
      %358 = vector.multi_reduction <maximumf>, %357, %cst_117 [1] : vector<8x3xf32> to vector<8xf32>
      %359 = vector.shape_cast %358 : vector<8xf32> to vector<8x1xf32>
      %360 = vector.broadcast %359 : vector<8x1xf32> to vector<8x3xf32>
      %361 = arith.subf %357, %360 : vector<8x3xf32>
      %362 = math.exp %361 : vector<8x3xf32>
      %cst_118 = arith.constant dense<0.000000e+00> : vector<8xf32>
      %363 = vector.multi_reduction <add>, %362, %cst_118 [1] : vector<8x3xf32> to vector<8xf32>
      %364 = vector.shape_cast %363 : vector<8xf32> to vector<8x1xf32>
      %365 = vector.broadcast %364 : vector<8x1xf32> to vector<8x3xf32>
      %366 = arith.divf %362, %365 : vector<8x3xf32>
      %367 = vector.extract_strided_slice %338 {offsets = [0, 0], sizes = [8, 32], strides = [1, 1]} : vector<8x96xf32> to vector<8x32xf32>
      %368 = vector.extract_strided_slice %366 {offsets = [0, 0], sizes = [8, 1], strides = [1, 1]} : vector<8x3xf32> to vector<8x1xf32>
      %369 = vector.broadcast %368 : vector<8x1xf32> to vector<8x32xf32>
      %370 = arith.mulf %367, %369 : vector<8x32xf32>
      %371 = vector.extract_strided_slice %338 {offsets = [0, 32], sizes = [8, 32], strides = [1, 1]} : vector<8x96xf32> to vector<8x32xf32>
      %372 = vector.extract_strided_slice %366 {offsets = [0, 1], sizes = [8, 1], strides = [1, 1]} : vector<8x3xf32> to vector<8x1xf32>
      %373 = vector.broadcast %372 : vector<8x1xf32> to vector<8x32xf32>
      %374 = arith.mulf %371, %373 : vector<8x32xf32>
      %375 = arith.addf %370, %374 : vector<8x32xf32>
      %376 = vector.extract_strided_slice %338 {offsets = [0, 64], sizes = [8, 32], strides = [1, 1]} : vector<8x96xf32> to vector<8x32xf32>
      %377 = vector.extract_strided_slice %366 {offsets = [0, 2], sizes = [8, 1], strides = [1, 1]} : vector<8x3xf32> to vector<8x1xf32>
      %378 = vector.broadcast %377 : vector<8x1xf32> to vector<8x32xf32>
      %379 = arith.mulf %376, %378 : vector<8x32xf32>
      %380 = arith.addf %375, %379 : vector<8x32xf32>
      %c0_119 = arith.constant 0 : index
      %c0_120 = arith.constant 0 : index
      %381 = vector.load %arg16[%c0_119, %c0_120] : memref<3x64xf32, #tpu.memory_space<vmem>>, vector<3x64xf32>
      %382 = tpu.concatenate %331, %380 in 1 : vector<8x32xf32>, vector<8x32xf32> -> vector<8x64xf32>
      %383 = arith.truncf %382 : vector<8x64xf32> to vector<8x64xbf16>
      %c0_121 = arith.constant 0 : index
      %c0_122 = arith.constant 0 : index
      %384 = vector.load %arg15[%c0_121, %c0_122] : memref<64x64xbf16, #tpu.memory_space<vmem>>, vector<64x64xbf16>
      %cst_123 = arith.constant dense<0.000000e+00> : vector<8x64xf32>
      %385 = tpu.matmul %383, %384, %cst_123 {dimension_numbers = #tpu.dot_dimension_numbers<[1], [0], [0], [1], [0, 0, 1, 1], [], []>} : vector<8x64xbf16>, vector<64x64xbf16>, vector<8x64xf32> -> vector<8x64xf32>
      %386 = vector.extract_strided_slice %381 {offsets = [0, 0], sizes = [1, 64], strides = [1, 1]} : vector<3x64xf32> to vector<1x64xf32>
      %387 = vector.broadcast %386 : vector<1x64xf32> to vector<8x64xf32>
      %388 = arith.addf %385, %387 : vector<8x64xf32>
      %389 = vector.extract_strided_slice %381 {offsets = [1, 0], sizes = [1, 64], strides = [1, 1]} : vector<3x64xf32> to vector<1x64xf32>
      %390 = vector.extract_strided_slice %381 {offsets = [2, 0], sizes = [1, 64], strides = [1, 1]} : vector<3x64xf32> to vector<1x64xf32>
      %cst_124 = arith.constant dense<0.000000e+00> : vector<8xf32>
      %391 = vector.multi_reduction <add>, %388, %cst_124 [1] : vector<8x64xf32> to vector<8xf32>
      %392 = vector.shape_cast %391 : vector<8xf32> to vector<8x1xf32>
      %cst_125 = arith.constant 6.400000e+01 : f32
      %393 = vector.broadcast %cst_125 : f32 to vector<8x1xf32>
      %394 = arith.divf %392, %393 : vector<8x1xf32>
      %395 = vector.broadcast %394 : vector<8x1xf32> to vector<8x64xf32>
      %396 = arith.subf %388, %395 : vector<8x64xf32>
      %397 = arith.mulf %396, %396 : vector<8x64xf32>
      %cst_126 = arith.constant dense<0.000000e+00> : vector<8xf32>
      %398 = vector.multi_reduction <add>, %397, %cst_126 [1] : vector<8x64xf32> to vector<8xf32>
      %399 = vector.shape_cast %398 : vector<8xf32> to vector<8x1xf32>
      %cst_127 = arith.constant 6.400000e+01 : f32
      %400 = vector.broadcast %cst_127 : f32 to vector<8x1xf32>
      %401 = arith.divf %399, %400 : vector<8x1xf32>
      %402 = vector.broadcast %394 : vector<8x1xf32> to vector<8x64xf32>
      %403 = arith.subf %388, %402 : vector<8x64xf32>
      %cst_128 = arith.constant 9.99999974E-6 : f32
      %404 = vector.broadcast %cst_128 : f32 to vector<8x1xf32>
      %405 = arith.addf %401, %404 : vector<8x1xf32>
      %406 = math.rsqrt %405 : vector<8x1xf32>
      %407 = vector.broadcast %406 : vector<8x1xf32> to vector<8x64xf32>
      %408 = arith.mulf %403, %407 : vector<8x64xf32>
      %409 = vector.broadcast %389 : vector<1x64xf32> to vector<8x64xf32>
      %410 = arith.mulf %408, %409 : vector<8x64xf32>
      %411 = vector.broadcast %390 : vector<1x64xf32> to vector<8x64xf32>
      %412 = arith.addf %410, %411 : vector<8x64xf32>
      %cst_129 = arith.constant 0.000000e+00 : f32
      %413 = vector.broadcast %cst_129 : f32 to vector<8x64xf32>
      %414 = arith.subf %413, %412 : vector<8x64xf32>
      %415 = math.exp %414 : vector<8x64xf32>
      %cst_130 = arith.constant 1.000000e+00 : f32
      %416 = vector.broadcast %cst_130 : f32 to vector<8x64xf32>
      %417 = arith.addf %416, %415 : vector<8x64xf32>
      %418 = tpu.reciprocal %417 {approx = true} : vector<8x64xf32> -> vector<8x64xf32>
      %419 = arith.mulf %412, %418 : vector<8x64xf32>
      %c0_131 = arith.constant 0 : index
      %c0_132 = arith.constant 0 : index
      %420 = vector.load %arg18[%c0_131, %c0_132] : memref<3x32xf32, #tpu.memory_space<vmem>>, vector<3x32xf32>
      %421 = arith.truncf %419 : vector<8x64xf32> to vector<8x64xbf16>
      %c0_133 = arith.constant 0 : index
      %c0_134 = arith.constant 0 : index
      %422 = vector.load %arg17[%c0_133, %c0_134] : memref<64x32xbf16, #tpu.memory_space<vmem>>, vector<64x32xbf16>
      %cst_135 = arith.constant dense<0.000000e+00> : vector<8x32xf32>
      %423 = tpu.matmul %421, %422, %cst_135 {dimension_numbers = #tpu.dot_dimension_numbers<[1], [0], [0], [1], [0, 0, 1, 1], [], []>} : vector<8x64xbf16>, vector<64x32xbf16>, vector<8x32xf32> -> vector<8x32xf32>
      %424 = vector.extract_strided_slice %420 {offsets = [0, 0], sizes = [1, 32], strides = [1, 1]} : vector<3x32xf32> to vector<1x32xf32>
      %425 = vector.broadcast %424 : vector<1x32xf32> to vector<8x32xf32>
      %426 = arith.addf %423, %425 : vector<8x32xf32>
      %427 = arith.addf %426, %331 : vector<8x32xf32>
      %428 = vector.extract_strided_slice %420 {offsets = [1, 0], sizes = [1, 32], strides = [1, 1]} : vector<3x32xf32> to vector<1x32xf32>
      %429 = vector.extract_strided_slice %420 {offsets = [2, 0], sizes = [1, 32], strides = [1, 1]} : vector<3x32xf32> to vector<1x32xf32>
      %cst_136 = arith.constant dense<0.000000e+00> : vector<8xf32>
      %430 = vector.multi_reduction <add>, %427, %cst_136 [1] : vector<8x32xf32> to vector<8xf32>
      %431 = vector.shape_cast %430 : vector<8xf32> to vector<8x1xf32>
      %cst_137 = arith.constant 3.200000e+01 : f32
      %432 = vector.broadcast %cst_137 : f32 to vector<8x1xf32>
      %433 = arith.divf %431, %432 : vector<8x1xf32>
      %434 = vector.broadcast %433 : vector<8x1xf32> to vector<8x32xf32>
      %435 = arith.subf %427, %434 : vector<8x32xf32>
      %436 = arith.mulf %435, %435 : vector<8x32xf32>
      %cst_138 = arith.constant dense<0.000000e+00> : vector<8xf32>
      %437 = vector.multi_reduction <add>, %436, %cst_138 [1] : vector<8x32xf32> to vector<8xf32>
      %438 = vector.shape_cast %437 : vector<8xf32> to vector<8x1xf32>
      %cst_139 = arith.constant 3.200000e+01 : f32
      %439 = vector.broadcast %cst_139 : f32 to vector<8x1xf32>
      %440 = arith.divf %438, %439 : vector<8x1xf32>
      %441 = vector.broadcast %433 : vector<8x1xf32> to vector<8x32xf32>
      %442 = arith.subf %427, %441 : vector<8x32xf32>
      %cst_140 = arith.constant 9.99999974E-6 : f32
      %443 = vector.broadcast %cst_140 : f32 to vector<8x1xf32>
      %444 = arith.addf %440, %443 : vector<8x1xf32>
      %445 = math.rsqrt %444 : vector<8x1xf32>
      %446 = vector.broadcast %445 : vector<8x1xf32> to vector<8x32xf32>
      %447 = arith.mulf %442, %446 : vector<8x32xf32>
      %448 = vector.broadcast %428 : vector<1x32xf32> to vector<8x32xf32>
      %449 = arith.mulf %447, %448 : vector<8x32xf32>
      %450 = vector.broadcast %429 : vector<1x32xf32> to vector<8x32xf32>
      %451 = arith.addf %449, %450 : vector<8x32xf32>
      %c0_141 = arith.constant 0 : index
      %c0_142 = arith.constant 0 : index
      %452 = vector.load %arg19[%c0_141, %c0_142] : memref<8x32xf32, #tpu.memory_space<vmem>>, vector<8x32xf32>
      tpu.vector_store %arg19[%c0_141, %c0_142], %451 {strides = array<i32>} : memref<8x32xf32, #tpu.memory_space<vmem>>, vector<8x32xf32>,
    } else {
    }
    return
  }
  func.func @transform_0(%arg0: i32, %arg1: i32) -> (i32, i32) {
    %c0_i32 = arith.constant 0 : i32
    %c0_i32_0 = arith.constant 0 : i32
    return %arg0, %c0_i32 : i32, i32
  }
  func.func @transform_1(%arg0: i32, %arg1: i32) -> (i32, i32) {
    %c0_i32 = arith.constant 0 : i32
    %c0_i32_0 = arith.constant 0 : i32
    return %arg1, %c0_i32 : i32, i32
  }
  func.func @transform_2(%arg0: i32, %arg1: i32) -> (i32, i32) {
    %c0_i32 = arith.constant 0 : i32
    %c0_i32_0 = arith.constant 0 : i32
    return %arg0, %c0_i32 : i32, i32
  }
  func.func @transform_3(%arg0: i32, %arg1: i32) -> (i32, i32) {
    %c0_i32 = arith.constant 0 : i32
    %c0_i32_0 = arith.constant 0 : i32
    return %arg1, %c0_i32 : i32, i32
  }
  func.func @transform_4(%arg0: i32, %arg1: i32) -> (i32, i32) {
    %c0_i32 = arith.constant 0 : i32
    %c0_i32_0 = arith.constant 0 : i32
    return %arg0, %c0_i32 : i32, i32
  }
  func.func @transform_5(%arg0: i32, %arg1: i32) -> (i32, i32, i32) {
    %c0_i32 = arith.constant 0 : i32
    %c0_i32_0 = arith.constant 0 : i32
    %c0_i32_1 = arith.constant 0 : i32
    %c0_i32_2 = arith.constant 0 : i32
    return %c0_i32, %c0_i32_0, %c0_i32_1 : i32, i32, i32
  }
  func.func @transform_6(%arg0: i32, %arg1: i32) -> (i32, i32, i32) {
    %c0_i32 = arith.constant 0 : i32
    %c0_i32_0 = arith.constant 0 : i32
    %c0_i32_1 = arith.constant 0 : i32
    %c0_i32_2 = arith.constant 0 : i32
    return %c0_i32, %c0_i32_0, %c0_i32_1 : i32, i32, i32
  }
  func.func @transform_7(%arg0: i32, %arg1: i32) -> (i32, i32, i32) {
    %c0_i32 = arith.constant 0 : i32
    %c0_i32_0 = arith.constant 0 : i32
    %c0_i32_1 = arith.constant 0 : i32
    %c0_i32_2 = arith.constant 0 : i32
    return %c0_i32, %c0_i32_0, %c0_i32_1 : i32, i32, i32
  }
  func.func @transform_8(%arg0: i32, %arg1: i32) -> (i32, i32, i32) {
    %c0_i32 = arith.constant 0 : i32
    %c0_i32_0 = arith.constant 0 : i32
    %c0_i32_1 = arith.constant 0 : i32
    %c0_i32_2 = arith.constant 0 : i32
    return %c0_i32, %c0_i32_0, %c0_i32_1 : i32, i32, i32
  }
  func.func @transform_9(%arg0: i32, %arg1: i32) -> (i32, i32) {
    %c0_i32 = arith.constant 0 : i32
    %c0_i32_0 = arith.constant 0 : i32
    %c0_i32_1 = arith.constant 0 : i32
    return %c0_i32, %c0_i32_0 : i32, i32
  }
  func.func @transform_10(%arg0: i32, %arg1: i32) -> (i32, i32) {
    %c0_i32 = arith.constant 0 : i32
    %c0_i32_0 = arith.constant 0 : i32
    %c0_i32_1 = arith.constant 0 : i32
    return %c0_i32, %c0_i32_0 : i32, i32
  }
  func.func @transform_11(%arg0: i32, %arg1: i32) -> (i32, i32) {
    %c0_i32 = arith.constant 0 : i32
    %c0_i32_0 = arith.constant 0 : i32
    %c0_i32_1 = arith.constant 0 : i32
    return %c0_i32, %c0_i32_0 : i32, i32
  }
  func.func @transform_12(%arg0: i32, %arg1: i32) -> (i32, i32) {
    %c0_i32 = arith.constant 0 : i32
    %c0_i32_0 = arith.constant 0 : i32
    %c0_i32_1 = arith.constant 0 : i32
    return %c0_i32, %c0_i32_0 : i32, i32
  }
  func.func @transform_13(%arg0: i32, %arg1: i32) -> (i32, i32) {
    %c0_i32 = arith.constant 0 : i32
    %c0_i32_0 = arith.constant 0 : i32
    %c0_i32_1 = arith.constant 0 : i32
    return %c0_i32, %c0_i32_0 : i32, i32
  }
  func.func @transform_14(%arg0: i32, %arg1: i32) -> (i32, i32) {
    %c0_i32 = arith.constant 0 : i32
    %c0_i32_0 = arith.constant 0 : i32
    %c0_i32_1 = arith.constant 0 : i32
    return %c0_i32, %c0_i32_0 : i32, i32
  }
  func.func @transform_15(%arg0: i32, %arg1: i32) -> (i32, i32) {
    %c0_i32 = arith.constant 0 : i32
    %c0_i32_0 = arith.constant 0 : i32
    %c0_i32_1 = arith.constant 0 : i32
    return %c0_i32, %c0_i32_0 : i32, i32
  }
  func.func @transform_16(%arg0: i32, %arg1: i32) -> (i32, i32) {
    %c0_i32 = arith.constant 0 : i32
    %c0_i32_0 = arith.constant 0 : i32
    %c0_i32_1 = arith.constant 0 : i32
    return %c0_i32, %c0_i32_0 : i32, i32
  }
  func.func @transform_17(%arg0: i32, %arg1: i32) -> (i32, i32) {
    %c0_i32 = arith.constant 0 : i32
    %c0_i32_0 = arith.constant 0 : i32
    return %arg0, %c0_i32 : i32, i32
  }
}

module attributes {stable_mosaic.version = 11 : i64} {
  func.func @_pool_heads_kernel(%arg0: i32, %arg1: memref<16x32xf32, #tpu.memory_space<vmem>>, %arg2: memref<2x16xf32, #tpu.memory_space<vmem>>, %arg3: memref<16x2xf32, #tpu.memory_space<vmem>>, %arg4: memref<32x16xf32, #tpu.memory_space<vmem>>, %arg5: memref<1x16xf32, #tpu.memory_space<vmem>>, %arg6: memref<16x1xf32, #tpu.memory_space<vmem>>, %arg7: memref<1x1xf32, #tpu.memory_space<vmem>>, %arg8: memref<96x32xf32, #tpu.memory_space<vmem>>, %arg9: memref<3x32xf32, #tpu.memory_space<vmem>>, %arg10: memref<32x56xf32, #tpu.memory_space<vmem>>, %arg11: memref<1x56xf32, #tpu.memory_space<vmem>>, %arg12: memref<56x14xf32, #tpu.memory_space<vmem>>, %arg13: memref<1x14xf32, #tpu.memory_space<vmem>>, %arg14: memref<46x32xf32, #tpu.memory_space<vmem>>, %arg15: memref<3x32xf32, #tpu.memory_space<vmem>>, %arg16: memref<32x16xf32, #tpu.memory_space<vmem>>, %arg17: memref<3x16xf32, #tpu.memory_space<vmem>>, %arg18: memref<16x16xf32, #tpu.memory_space<vmem>>, %arg19: memref<1x16xf32, #tpu.memory_space<vmem>>, %arg20: memref<16x8xf32, #tpu.memory_space<vmem>>, %arg21: memref<1x8xf32, #tpu.memory_space<vmem>>, %arg22: memref<8x3xf32, #tpu.memory_space<vmem>>, %arg23: memref<1x3xf32, #tpu.memory_space<vmem>>, %arg24: memref<2x16xf32, #tpu.memory_space<vmem>>, %arg25: memref<2x3xf32, #tpu.memory_space<vmem>>, %arg26: memref<2x14xf32, #tpu.memory_space<vmem>>) attributes {dimension_semantics = [#tpu.dimension_semantics<arbitrary>], iteration_bounds = array<i64: 1>, scalar_prefetch = 0 : i64, scratch_operands = 0 : i64, tpu.core_type = #tpu.core_type<tc>, window_params = [{pipeline_mode = #tpu.pipeline_mode<synchronous>, transform_indices = @transform_0, window_bounds = array<i64: 16, 32>}, {pipeline_mode = #tpu.pipeline_mode<synchronous>, transform_indices = @transform_1, window_bounds = array<i64: 2, 16>}, {pipeline_mode = #tpu.pipeline_mode<synchronous>, transform_indices = @transform_2, window_bounds = array<i64: 16, 2>}, {pipeline_mode = #tpu.pipeline_mode<synchronous>, transform_indices = @transform_3, window_bounds = array<i64: 32, 16>}, {pipeline_mode = #tpu.pipeline_mode<synchronous>, transform_indices = @transform_4, window_bounds = array<i64: 1, 16>}, {pipeline_mode = #tpu.pipeline_mode<synchronous>, transform_indices = @transform_5, window_bounds = array<i64: 16, 1>}, {pipeline_mode = #tpu.pipeline_mode<synchronous>, transform_indices = @transform_6, window_bounds = array<i64: 1, 1>}, {pipeline_mode = #tpu.pipeline_mode<synchronous>, transform_indices = @transform_7, window_bounds = array<i64: 96, 32>}, {pipeline_mode = #tpu.pipeline_mode<synchronous>, transform_indices = @transform_8, window_bounds = array<i64: 3, 32>}, {pipeline_mode = #tpu.pipeline_mode<synchronous>, transform_indices = @transform_9, window_bounds = array<i64: 32, 56>}, {pipeline_mode = #tpu.pipeline_mode<synchronous>, transform_indices = @transform_10, window_bounds = array<i64: 1, 56>}, {pipeline_mode = #tpu.pipeline_mode<synchronous>, transform_indices = @transform_11, window_bounds = array<i64: 56, 14>}, {pipeline_mode = #tpu.pipeline_mode<synchronous>, transform_indices = @transform_12, window_bounds = array<i64: 1, 14>}, {pipeline_mode = #tpu.pipeline_mode<synchronous>, transform_indices = @transform_13, window_bounds = array<i64: 46, 32>}, {pipeline_mode = #tpu.pipeline_mode<synchronous>, transform_indices = @transform_14, window_bounds = array<i64: 3, 32>}, {pipeline_mode = #tpu.pipeline_mode<synchronous>, transform_indices = @transform_15, window_bounds = array<i64: 32, 16>}, {pipeline_mode = #tpu.pipeline_mode<synchronous>, transform_indices = @transform_16, window_bounds = array<i64: 3, 16>}, {pipeline_mode = #tpu.pipeline_mode<synchronous>, transform_indices = @transform_17, window_bounds = array<i64: 16, 16>}, {pipeline_mode = #tpu.pipeline_mode<synchronous>, transform_indices = @transform_18, window_bounds = array<i64: 1, 16>}, {pipeline_mode = #tpu.pipeline_mode<synchronous>, transform_indices = @transform_19, window_bounds = array<i64: 16, 8>}, {pipeline_mode = #tpu.pipeline_mode<synchronous>, transform_indices = @transform_20, window_bounds = array<i64: 1, 8>}, {pipeline_mode = #tpu.pipeline_mode<synchronous>, transform_indices = @transform_21, window_bounds = array<i64: 8, 3>}, {pipeline_mode = #tpu.pipeline_mode<synchronous>, transform_indices = @transform_22, window_bounds = array<i64: 1, 3>}, {pipeline_mode = #tpu.pipeline_mode<synchronous>, transform_indices = @transform_23, window_bounds = array<i64: 2, 16>}, {pipeline_mode = #tpu.pipeline_mode<synchronous>, transform_indices = @transform_24, window_bounds = array<i64: 2, 3>}, {pipeline_mode = #tpu.pipeline_mode<synchronous>, transform_indices = @transform_25, window_bounds = array<i64: 2, 14>}]} {
    %c0 = arith.constant 0 : index
    %c0_0 = arith.constant 0 : index
    %0 = vector.load %arg1[%c0, %c0_0] : memref<16x32xf32, #tpu.memory_space<vmem>>, vector<16x32xf32>
    %c0_1 = arith.constant 0 : index
    %c0_2 = arith.constant 0 : index
    %1 = vector.load %arg2[%c0_1, %c0_2] : memref<2x16xf32, #tpu.memory_space<vmem>>, vector<2x16xf32>
    %c0_3 = arith.constant 0 : index
    %c0_4 = arith.constant 0 : index
    %2 = vector.load %arg3[%c0_3, %c0_4] : memref<16x2xf32, #tpu.memory_space<vmem>>, vector<16x2xf32>
    %c0_5 = arith.constant 0 : index
    %c0_6 = arith.constant 0 : index
    %3 = vector.load %arg4[%c0_5, %c0_6] : memref<32x16xf32, #tpu.memory_space<vmem>>, vector<32x16xf32>
    %cst = arith.constant dense<0.000000e+00> : vector<16x16xf32>
    %4 = tpu.matmul %0, %3, %cst {dimension_numbers = #tpu.dot_dimension_numbers<[1], [0], [0], [1], [0, 0, 1, 1], [], []>} : vector<16x32xf32>, vector<32x16xf32>, vector<16x16xf32> -> vector<16x16xf32>
    %c0_7 = arith.constant 0 : index
    %c0_8 = arith.constant 0 : index
    %5 = vector.load %arg5[%c0_7, %c0_8] : memref<1x16xf32, #tpu.memory_space<vmem>>, vector<1x16xf32>
    %6 = vector.broadcast %5 : vector<1x16xf32> to vector<16x16xf32>
    %7 = arith.addf %4, %6 : vector<16x16xf32>
    %cst_9 = arith.constant 0.000000e+00 : f32
    %8 = vector.broadcast %cst_9 : f32 to vector<16x16xf32>
    %9 = arith.subf %8, %7 : vector<16x16xf32>
    %10 = math.exp %9 : vector<16x16xf32>
    %cst_10 = arith.constant 1.000000e+00 : f32
    %11 = vector.broadcast %cst_10 : f32 to vector<16x16xf32>
    %12 = arith.addf %11, %10 : vector<16x16xf32>
    %13 = tpu.reciprocal %12 {approx = true} : vector<16x16xf32> -> vector<16x16xf32>
    %14 = arith.mulf %7, %13 : vector<16x16xf32>
    %c0_11 = arith.constant 0 : index
    %c0_12 = arith.constant 0 : index
    %15 = vector.load %arg6[%c0_11, %c0_12] : memref<16x1xf32, #tpu.memory_space<vmem>>, vector<16x1xf32>
    %cst_13 = arith.constant dense<0.000000e+00> : vector<16x1xf32>
    %16 = tpu.matmul %14, %15, %cst_13 {dimension_numbers = #tpu.dot_dimension_numbers<[1], [0], [0], [1], [0, 0, 1, 1], [], []>} : vector<16x16xf32>, vector<16x1xf32>, vector<16x1xf32> -> vector<16x1xf32>
    %c0_14 = arith.constant 0 : index
    %c0_15 = arith.constant 0 : index
    %17 = vector.load %arg7[%c0_14, %c0_15] : memref<1x1xf32, #tpu.memory_space<vmem>>, vector<1x1xf32>
    %18 = vector.broadcast %17 : vector<1x1xf32> to vector<16x1xf32>
    %19 = arith.addf %16, %18 : vector<16x1xf32>
    %cst_16 = arith.constant dense<0.000000e+00> : vector<16xf32>
    %20 = vector.multi_reduction <add>, %2, %cst_16 [1] : vector<16x2xf32> to vector<16xf32>
    %21 = vector.shape_cast %20 : vector<16xf32> to vector<16x1xf32>
    %cst_17 = arith.constant 5.000000e-01 : f32
    %22 = vector.broadcast %cst_17 : f32 to vector<16x1xf32>
    %23 = arith.cmpf ogt, %21, %22 : vector<16x1xf32>
    %cst_18 = arith.constant -1.000000e+30 : f32
    %24 = vector.broadcast %cst_18 : f32 to vector<16x1xf32>
    %25 = arith.select %23, %19, %24 : vector<16x1xi1>, vector<16x1xf32>
    %cst_19 = arith.constant dense<0xFF800000> : vector<1xf32>
    %26 = vector.multi_reduction <maximumf>, %25, %cst_19 [0] : vector<16x1xf32> to vector<1xf32>
    %27 = vector.shape_cast %26 : vector<1xf32> to vector<1x1xf32>
    %28 = vector.broadcast %27 : vector<1x1xf32> to vector<16x1xf32>
    %29 = arith.subf %25, %28 : vector<16x1xf32>
    %30 = math.exp %29 : vector<16x1xf32>
    %cst_20 = arith.constant dense<0.000000e+00> : vector<1xf32>
    %31 = vector.multi_reduction <add>, %30, %cst_20 [0] : vector<16x1xf32> to vector<1xf32>
    %32 = vector.shape_cast %31 : vector<1xf32> to vector<1x1xf32>
    %33 = vector.broadcast %32 : vector<1x1xf32> to vector<16x1xf32>
    %34 = arith.divf %30, %33 : vector<16x1xf32>
    %cst_21 = arith.constant dense<0.000000e+00> : vector<2xf32>
    %35 = vector.multi_reduction <add>, %1, %cst_21 [1] : vector<2x16xf32> to vector<2xf32>
    %36 = vector.shape_cast %35 : vector<2xf32> to vector<2x1xf32>
    %cst_22 = arith.constant dense<0.000000e+00> : vector<2x32xf32>
    %37 = tpu.matmul %1, %0, %cst_22 {dimension_numbers = #tpu.dot_dimension_numbers<[1], [0], [0], [1], [0, 0, 1, 1], [], []>} : vector<2x16xf32>, vector<16x32xf32>, vector<2x32xf32> -> vector<2x32xf32>
    %cst_23 = arith.constant 1.000000e+00 : f32
    %38 = vector.broadcast %cst_23 : f32 to vector<2x1xf32>
    %39 = arith.maximumf %36, %38 : vector<2x1xf32>
    %40 = vector.broadcast %39 : vector<2x1xf32> to vector<2x32xf32>
    %41 = arith.divf %37, %40 : vector<2x32xf32>
    %42 = vector.broadcast %34 : vector<16x1xf32> to vector<16x32xf32>
    %43 = arith.mulf %0, %42 : vector<16x32xf32>
    %cst_24 = arith.constant dense<0.000000e+00> : vector<2x32xf32>
    %44 = tpu.matmul %1, %43, %cst_24 {dimension_numbers = #tpu.dot_dimension_numbers<[1], [0], [0], [1], [0, 0, 1, 1], [], []>} : vector<2x16xf32>, vector<16x32xf32>, vector<2x32xf32> -> vector<2x32xf32>
    %45 = vector.extract_strided_slice %2 {offsets = [0, 0], sizes = [16, 1], strides = [1, 1]} : vector<16x2xf32> to vector<16x1xf32>
    %cst_25 = arith.constant 5.000000e-01 : f32
    %46 = vector.broadcast %cst_25 : f32 to vector<16x1xf32>
    %47 = arith.cmpf ogt, %45, %46 : vector<16x1xf32>
    %cst_26 = arith.constant -1.000000e+30 : f32
    %48 = vector.shape_cast %47 : vector<16x1xi1> to vector<16x1xi1>
    %49 = vector.broadcast %48 : vector<16x1xi1> to vector<16x32xi1>
    %50 = vector.broadcast %cst_26 : f32 to vector<16x32xf32>
    %51 = arith.select %49, %0, %50 : vector<16x32xi1>, vector<16x32xf32>
    %cst_27 = arith.constant dense<0xFF800000> : vector<32xf32>
    %52 = vector.multi_reduction <maximumf>, %51, %cst_27 [0] : vector<16x32xf32> to vector<32xf32>
    %53 = vector.shape_cast %52 : vector<32xf32> to vector<1x32xf32>
    %54 = vector.extract_strided_slice %2 {offsets = [0, 1], sizes = [16, 1], strides = [1, 1]} : vector<16x2xf32> to vector<16x1xf32>
    %cst_28 = arith.constant 5.000000e-01 : f32
    %55 = vector.broadcast %cst_28 : f32 to vector<16x1xf32>
    %56 = arith.cmpf ogt, %54, %55 : vector<16x1xf32>
    %cst_29 = arith.constant -1.000000e+30 : f32
    %57 = vector.shape_cast %56 : vector<16x1xi1> to vector<16x1xi1>
    %58 = vector.broadcast %57 : vector<16x1xi1> to vector<16x32xi1>
    %59 = vector.broadcast %cst_29 : f32 to vector<16x32xf32>
    %60 = arith.select %58, %0, %59 : vector<16x32xi1>, vector<16x32xf32>
    %cst_30 = arith.constant dense<0xFF800000> : vector<32xf32>
    %61 = vector.multi_reduction <maximumf>, %60, %cst_30 [0] : vector<16x32xf32> to vector<32xf32>
    %62 = vector.shape_cast %61 : vector<32xf32> to vector<1x32xf32>
    %63 = tpu.concatenate %53, %62 in 0 : vector<1x32xf32>, vector<1x32xf32> -> vector<2x32xf32>
    %cst_31 = arith.constant 5.000000e-01 : f32
    %64 = vector.broadcast %cst_31 : f32 to vector<2x1xf32>
    %65 = arith.cmpf ogt, %36, %64 : vector<2x1xf32>
    %cst_32 = arith.constant 0.000000e+00 : f32
    %66 = vector.shape_cast %65 : vector<2x1xi1> to vector<2x1xi1>
    %67 = vector.broadcast %66 : vector<2x1xi1> to vector<2x32xi1>
    %68 = vector.broadcast %cst_32 : f32 to vector<2x32xf32>
    %69 = arith.select %67, %63, %68 : vector<2x32xi1>, vector<2x32xf32>
    %70 = tpu.concatenate %41, %69, %44 in 1 : vector<2x32xf32>, vector<2x32xf32>, vector<2x32xf32> -> vector<2x96xf32>
    %c0_33 = arith.constant 0 : index
    %c0_34 = arith.constant 0 : index
    %71 = vector.load %arg9[%c0_33, %c0_34] : memref<3x32xf32, #tpu.memory_space<vmem>>, vector<3x32xf32>
    %c0_35 = arith.constant 0 : index
    %c0_36 = arith.constant 0 : index
    %72 = vector.load %arg8[%c0_35, %c0_36] : memref<96x32xf32, #tpu.memory_space<vmem>>, vector<96x32xf32>
    %cst_37 = arith.constant dense<0.000000e+00> : vector<2x32xf32>
    %73 = tpu.matmul %70, %72, %cst_37 {dimension_numbers = #tpu.dot_dimension_numbers<[1], [0], [0], [1], [0, 0, 1, 1], [], []>} : vector<2x96xf32>, vector<96x32xf32>, vector<2x32xf32> -> vector<2x32xf32>
    %74 = vector.extract_strided_slice %71 {offsets = [0, 0], sizes = [1, 32], strides = [1, 1]} : vector<3x32xf32> to vector<1x32xf32>
    %75 = vector.broadcast %74 : vector<1x32xf32> to vector<2x32xf32>
    %76 = arith.addf %73, %75 : vector<2x32xf32>
    %77 = vector.extract_strided_slice %71 {offsets = [1, 0], sizes = [1, 32], strides = [1, 1]} : vector<3x32xf32> to vector<1x32xf32>
    %78 = vector.extract_strided_slice %71 {offsets = [2, 0], sizes = [1, 32], strides = [1, 1]} : vector<3x32xf32> to vector<1x32xf32>
    %cst_38 = arith.constant dense<0.000000e+00> : vector<2xf32>
    %79 = vector.multi_reduction <add>, %76, %cst_38 [1] : vector<2x32xf32> to vector<2xf32>
    %80 = vector.shape_cast %79 : vector<2xf32> to vector<2x1xf32>
    %cst_39 = arith.constant 3.200000e+01 : f32
    %81 = vector.broadcast %cst_39 : f32 to vector<2x1xf32>
    %82 = arith.divf %80, %81 : vector<2x1xf32>
    %83 = vector.broadcast %82 : vector<2x1xf32> to vector<2x32xf32>
    %84 = arith.subf %76, %83 : vector<2x32xf32>
    %85 = arith.mulf %84, %84 : vector<2x32xf32>
    %cst_40 = arith.constant dense<0.000000e+00> : vector<2xf32>
    %86 = vector.multi_reduction <add>, %85, %cst_40 [1] : vector<2x32xf32> to vector<2xf32>
    %87 = vector.shape_cast %86 : vector<2xf32> to vector<2x1xf32>
    %cst_41 = arith.constant 3.200000e+01 : f32
    %88 = vector.broadcast %cst_41 : f32 to vector<2x1xf32>
    %89 = arith.divf %87, %88 : vector<2x1xf32>
    %90 = vector.broadcast %82 : vector<2x1xf32> to vector<2x32xf32>
    %91 = arith.subf %76, %90 : vector<2x32xf32>
    %cst_42 = arith.constant 9.99999974E-6 : f32
    %92 = vector.broadcast %cst_42 : f32 to vector<2x1xf32>
    %93 = arith.addf %89, %92 : vector<2x1xf32>
    %94 = math.rsqrt %93 : vector<2x1xf32>
    %95 = vector.broadcast %94 : vector<2x1xf32> to vector<2x32xf32>
    %96 = arith.mulf %91, %95 : vector<2x32xf32>
    %97 = vector.broadcast %77 : vector<1x32xf32> to vector<2x32xf32>
    %98 = arith.mulf %96, %97 : vector<2x32xf32>
    %99 = vector.broadcast %78 : vector<1x32xf32> to vector<2x32xf32>
    %100 = arith.addf %98, %99 : vector<2x32xf32>
    %cst_43 = arith.constant 0.000000e+00 : f32
    %101 = vector.broadcast %cst_43 : f32 to vector<2x32xf32>
    %102 = arith.subf %101, %100 : vector<2x32xf32>
    %103 = math.exp %102 : vector<2x32xf32>
    %cst_44 = arith.constant 1.000000e+00 : f32
    %104 = vector.broadcast %cst_44 : f32 to vector<2x32xf32>
    %105 = arith.addf %104, %103 : vector<2x32xf32>
    %106 = tpu.reciprocal %105 {approx = true} : vector<2x32xf32> -> vector<2x32xf32>
    %107 = arith.mulf %100, %106 : vector<2x32xf32>
    %c0_45 = arith.constant 0 : index
    %c0_46 = arith.constant 0 : index
    %108 = vector.load %arg10[%c0_45, %c0_46] : memref<32x56xf32, #tpu.memory_space<vmem>>, vector<32x56xf32>
    %cst_47 = arith.constant dense<0.000000e+00> : vector<2x56xf32>
    %109 = tpu.matmul %107, %108, %cst_47 {dimension_numbers = #tpu.dot_dimension_numbers<[1], [0], [0], [1], [0, 0, 1, 1], [], []>} : vector<2x32xf32>, vector<32x56xf32>, vector<2x56xf32> -> vector<2x56xf32>
    %c0_48 = arith.constant 0 : index
    %c0_49 = arith.constant 0 : index
    %110 = vector.load %arg11[%c0_48, %c0_49] : memref<1x56xf32, #tpu.memory_space<vmem>>, vector<1x56xf32>
    %111 = vector.broadcast %110 : vector<1x56xf32> to vector<2x56xf32>
    %112 = arith.addf %109, %111 : vector<2x56xf32>
    %cst_50 = arith.constant 0.000000e+00 : f32
    %113 = vector.broadcast %cst_50 : f32 to vector<2x56xf32>
    %114 = arith.subf %113, %112 : vector<2x56xf32>
    %115 = math.exp %114 : vector<2x56xf32>
    %cst_51 = arith.constant 1.000000e+00 : f32
    %116 = vector.broadcast %cst_51 : f32 to vector<2x56xf32>
    %117 = arith.addf %116, %115 : vector<2x56xf32>
    %118 = tpu.reciprocal %117 {approx = true} : vector<2x56xf32> -> vector<2x56xf32>
    %119 = arith.mulf %112, %118 : vector<2x56xf32>
    %c0_52 = arith.constant 0 : index
    %c0_53 = arith.constant 0 : index
    %120 = vector.load %arg12[%c0_52, %c0_53] : memref<56x14xf32, #tpu.memory_space<vmem>>, vector<56x14xf32>
    %cst_54 = arith.constant dense<0.000000e+00> : vector<2x14xf32>
    %121 = tpu.matmul %119, %120, %cst_54 {dimension_numbers = #tpu.dot_dimension_numbers<[1], [0], [0], [1], [0, 0, 1, 1], [], []>} : vector<2x56xf32>, vector<56x14xf32>, vector<2x14xf32> -> vector<2x14xf32>
    %c0_55 = arith.constant 0 : index
    %c0_56 = arith.constant 0 : index
    %122 = vector.load %arg13[%c0_55, %c0_56] : memref<1x14xf32, #tpu.memory_space<vmem>>, vector<1x14xf32>
    %123 = vector.broadcast %122 : vector<1x14xf32> to vector<2x14xf32>
    %124 = arith.addf %121, %123 : vector<2x14xf32>
    %125 = vector.extract_strided_slice %124 {offsets = [0, 0], sizes = [2, 1], strides = [1, 1]} : vector<2x14xf32> to vector<2x1xf32>
    %126 = math.tanh %125 : vector<2x1xf32>
    %127 = vector.extract_strided_slice %124 {offsets = [0, 1], sizes = [2, 4], strides = [1, 1]} : vector<2x14xf32> to vector<2x4xf32>
    %cst_57 = arith.constant 0.000000e+00 : f32
    %128 = vector.broadcast %cst_57 : f32 to vector<2x4xf32>
    %129 = arith.subf %128, %127 : vector<2x4xf32>
    %130 = math.exp %129 : vector<2x4xf32>
    %cst_58 = arith.constant 1.000000e+00 : f32
    %131 = vector.broadcast %cst_58 : f32 to vector<2x4xf32>
    %132 = arith.addf %131, %130 : vector<2x4xf32>
    %cst_59 = arith.constant 1.000000e+00 : f32
    %133 = vector.broadcast %cst_59 : f32 to vector<2x4xf32>
    %134 = arith.divf %133, %132 : vector<2x4xf32>
    %135 = vector.extract_strided_slice %124 {offsets = [0, 5], sizes = [2, 1], strides = [1, 1]} : vector<2x14xf32> to vector<2x1xf32>
    %cst_60 = arith.constant 0.000000e+00 : f32
    %136 = vector.broadcast %cst_60 : f32 to vector<2x1xf32>
    %137 = arith.maximumf %135, %136 : vector<2x1xf32>
    %138 = math.absf %135 : vector<2x1xf32>
    %cst_61 = arith.constant 0.000000e+00 : f32
    %139 = vector.broadcast %cst_61 : f32 to vector<2x1xf32>
    %140 = arith.subf %139, %138 : vector<2x1xf32>
    %141 = math.exp %140 : vector<2x1xf32>
    %cst_62 = arith.constant 1.000000e+00 : f32
    %142 = vector.broadcast %cst_62 : f32 to vector<2x1xf32>
    %143 = arith.addf %142, %141 : vector<2x1xf32>
    %144 = math.log %143 : vector<2x1xf32>
    %145 = arith.addf %137, %144 : vector<2x1xf32>
    %146 = vector.extract_strided_slice %124 {offsets = [0, 6], sizes = [2, 8], strides = [1, 1]} : vector<2x14xf32> to vector<2x8xf32>
    %147 = tpu.concatenate %126, %134, %145, %146 in 1 : vector<2x1xf32>, vector<2x4xf32>, vector<2x1xf32>, vector<2x8xf32> -> vector<2x14xf32>
    %c0_63 = arith.constant 0 : index
    %c0_64 = arith.constant 0 : index
    %148 = vector.load %arg26[%c0_63, %c0_64] : memref<2x14xf32, #tpu.memory_space<vmem>>, vector<2x14xf32>
    tpu.vector_store %arg26[%c0_63, %c0_64], %147 {strides = array<i32>} : memref<2x14xf32, #tpu.memory_space<vmem>>, vector<2x14xf32>,
    %149 = tpu.concatenate %107, %147 in 1 : vector<2x32xf32>, vector<2x14xf32> -> vector<2x46xf32>
    %c0_65 = arith.constant 0 : index
    %c0_66 = arith.constant 0 : index
    %150 = vector.load %arg15[%c0_65, %c0_66] : memref<3x32xf32, #tpu.memory_space<vmem>>, vector<3x32xf32>
    %c0_67 = arith.constant 0 : index
    %c0_68 = arith.constant 0 : index
    %151 = vector.load %arg14[%c0_67, %c0_68] : memref<46x32xf32, #tpu.memory_space<vmem>>, vector<46x32xf32>
    %cst_69 = arith.constant dense<0.000000e+00> : vector<2x32xf32>
    %152 = tpu.matmul %149, %151, %cst_69 {dimension_numbers = #tpu.dot_dimension_numbers<[1], [0], [0], [1], [0, 0, 1, 1], [], []>} : vector<2x46xf32>, vector<46x32xf32>, vector<2x32xf32> -> vector<2x32xf32>
    %153 = vector.extract_strided_slice %150 {offsets = [0, 0], sizes = [1, 32], strides = [1, 1]} : vector<3x32xf32> to vector<1x32xf32>
    %154 = vector.broadcast %153 : vector<1x32xf32> to vector<2x32xf32>
    %155 = arith.addf %152, %154 : vector<2x32xf32>
    %156 = vector.extract_strided_slice %150 {offsets = [1, 0], sizes = [1, 32], strides = [1, 1]} : vector<3x32xf32> to vector<1x32xf32>
    %157 = vector.extract_strided_slice %150 {offsets = [2, 0], sizes = [1, 32], strides = [1, 1]} : vector<3x32xf32> to vector<1x32xf32>
    %cst_70 = arith.constant dense<0.000000e+00> : vector<2xf32>
    %158 = vector.multi_reduction <add>, %155, %cst_70 [1] : vector<2x32xf32> to vector<2xf32>
    %159 = vector.shape_cast %158 : vector<2xf32> to vector<2x1xf32>
    %cst_71 = arith.constant 3.200000e+01 : f32
    %160 = vector.broadcast %cst_71 : f32 to vector<2x1xf32>
    %161 = arith.divf %159, %160 : vector<2x1xf32>
    %162 = vector.broadcast %161 : vector<2x1xf32> to vector<2x32xf32>
    %163 = arith.subf %155, %162 : vector<2x32xf32>
    %164 = arith.mulf %163, %163 : vector<2x32xf32>
    %cst_72 = arith.constant dense<0.000000e+00> : vector<2xf32>
    %165 = vector.multi_reduction <add>, %164, %cst_72 [1] : vector<2x32xf32> to vector<2xf32>
    %166 = vector.shape_cast %165 : vector<2xf32> to vector<2x1xf32>
    %cst_73 = arith.constant 3.200000e+01 : f32
    %167 = vector.broadcast %cst_73 : f32 to vector<2x1xf32>
    %168 = arith.divf %166, %167 : vector<2x1xf32>
    %169 = vector.broadcast %161 : vector<2x1xf32> to vector<2x32xf32>
    %170 = arith.subf %155, %169 : vector<2x32xf32>
    %cst_74 = arith.constant 9.99999974E-6 : f32
    %171 = vector.broadcast %cst_74 : f32 to vector<2x1xf32>
    %172 = arith.addf %168, %171 : vector<2x1xf32>
    %173 = math.rsqrt %172 : vector<2x1xf32>
    %174 = vector.broadcast %173 : vector<2x1xf32> to vector<2x32xf32>
    %175 = arith.mulf %170, %174 : vector<2x32xf32>
    %176 = vector.broadcast %156 : vector<1x32xf32> to vector<2x32xf32>
    %177 = arith.mulf %175, %176 : vector<2x32xf32>
    %178 = vector.broadcast %157 : vector<1x32xf32> to vector<2x32xf32>
    %179 = arith.addf %177, %178 : vector<2x32xf32>
    %cst_75 = arith.constant 0.000000e+00 : f32
    %180 = vector.broadcast %cst_75 : f32 to vector<2x32xf32>
    %181 = arith.subf %180, %179 : vector<2x32xf32>
    %182 = math.exp %181 : vector<2x32xf32>
    %cst_76 = arith.constant 1.000000e+00 : f32
    %183 = vector.broadcast %cst_76 : f32 to vector<2x32xf32>
    %184 = arith.addf %183, %182 : vector<2x32xf32>
    %185 = tpu.reciprocal %184 {approx = true} : vector<2x32xf32> -> vector<2x32xf32>
    %186 = arith.mulf %179, %185 : vector<2x32xf32>
    %c0_77 = arith.constant 0 : index
    %c0_78 = arith.constant 0 : index
    %187 = vector.load %arg17[%c0_77, %c0_78] : memref<3x16xf32, #tpu.memory_space<vmem>>, vector<3x16xf32>
    %c0_79 = arith.constant 0 : index
    %c0_80 = arith.constant 0 : index
    %188 = vector.load %arg16[%c0_79, %c0_80] : memref<32x16xf32, #tpu.memory_space<vmem>>, vector<32x16xf32>
    %cst_81 = arith.constant dense<0.000000e+00> : vector<2x16xf32>
    %189 = tpu.matmul %186, %188, %cst_81 {dimension_numbers = #tpu.dot_dimension_numbers<[1], [0], [0], [1], [0, 0, 1, 1], [], []>} : vector<2x32xf32>, vector<32x16xf32>, vector<2x16xf32> -> vector<2x16xf32>
    %190 = vector.extract_strided_slice %187 {offsets = [0, 0], sizes = [1, 16], strides = [1, 1]} : vector<3x16xf32> to vector<1x16xf32>
    %191 = vector.broadcast %190 : vector<1x16xf32> to vector<2x16xf32>
    %192 = arith.addf %189, %191 : vector<2x16xf32>
    %193 = vector.extract_strided_slice %187 {offsets = [1, 0], sizes = [1, 16], strides = [1, 1]} : vector<3x16xf32> to vector<1x16xf32>
    %194 = vector.extract_strided_slice %187 {offsets = [2, 0], sizes = [1, 16], strides = [1, 1]} : vector<3x16xf32> to vector<1x16xf32>
    %cst_82 = arith.constant dense<0.000000e+00> : vector<2xf32>
    %195 = vector.multi_reduction <add>, %192, %cst_82 [1] : vector<2x16xf32> to vector<2xf32>
    %196 = vector.shape_cast %195 : vector<2xf32> to vector<2x1xf32>
    %cst_83 = arith.constant 1.600000e+01 : f32
    %197 = vector.broadcast %cst_83 : f32 to vector<2x1xf32>
    %198 = arith.divf %196, %197 : vector<2x1xf32>
    %199 = vector.broadcast %198 : vector<2x1xf32> to vector<2x16xf32>
    %200 = arith.subf %192, %199 : vector<2x16xf32>
    %201 = arith.mulf %200, %200 : vector<2x16xf32>
    %cst_84 = arith.constant dense<0.000000e+00> : vector<2xf32>
    %202 = vector.multi_reduction <add>, %201, %cst_84 [1] : vector<2x16xf32> to vector<2xf32>
    %203 = vector.shape_cast %202 : vector<2xf32> to vector<2x1xf32>
    %cst_85 = arith.constant 1.600000e+01 : f32
    %204 = vector.broadcast %cst_85 : f32 to vector<2x1xf32>
    %205 = arith.divf %203, %204 : vector<2x1xf32>
    %206 = vector.broadcast %198 : vector<2x1xf32> to vector<2x16xf32>
    %207 = arith.subf %192, %206 : vector<2x16xf32>
    %cst_86 = arith.constant 9.99999974E-6 : f32
    %208 = vector.broadcast %cst_86 : f32 to vector<2x1xf32>
    %209 = arith.addf %205, %208 : vector<2x1xf32>
    %210 = math.rsqrt %209 : vector<2x1xf32>
    %211 = vector.broadcast %210 : vector<2x1xf32> to vector<2x16xf32>
    %212 = arith.mulf %207, %211 : vector<2x16xf32>
    %213 = vector.broadcast %193 : vector<1x16xf32> to vector<2x16xf32>
    %214 = arith.mulf %212, %213 : vector<2x16xf32>
    %215 = vector.broadcast %194 : vector<1x16xf32> to vector<2x16xf32>
    %216 = arith.addf %214, %215 : vector<2x16xf32>
    %cst_87 = arith.constant 0.000000e+00 : f32
    %217 = vector.broadcast %cst_87 : f32 to vector<2x16xf32>
    %218 = arith.subf %217, %216 : vector<2x16xf32>
    %219 = math.exp %218 : vector<2x16xf32>
    %cst_88 = arith.constant 1.000000e+00 : f32
    %220 = vector.broadcast %cst_88 : f32 to vector<2x16xf32>
    %221 = arith.addf %220, %219 : vector<2x16xf32>
    %222 = tpu.reciprocal %221 {approx = true} : vector<2x16xf32> -> vector<2x16xf32>
    %223 = arith.mulf %216, %222 : vector<2x16xf32>
    %c0_89 = arith.constant 0 : index
    %c0_90 = arith.constant 0 : index
    %224 = vector.load %arg18[%c0_89, %c0_90] : memref<16x16xf32, #tpu.memory_space<vmem>>, vector<16x16xf32>
    %cst_91 = arith.constant dense<0.000000e+00> : vector<2x16xf32>
    %225 = tpu.matmul %223, %224, %cst_91 {dimension_numbers = #tpu.dot_dimension_numbers<[1], [0], [0], [1], [0, 0, 1, 1], [], []>} : vector<2x16xf32>, vector<16x16xf32>, vector<2x16xf32> -> vector<2x16xf32>
    %c0_92 = arith.constant 0 : index
    %c0_93 = arith.constant 0 : index
    %226 = vector.load %arg19[%c0_92, %c0_93] : memref<1x16xf32, #tpu.memory_space<vmem>>, vector<1x16xf32>
    %227 = vector.broadcast %226 : vector<1x16xf32> to vector<2x16xf32>
    %228 = arith.addf %225, %227 : vector<2x16xf32>
    %c0_94 = arith.constant 0 : index
    %c0_95 = arith.constant 0 : index
    %229 = vector.load %arg24[%c0_94, %c0_95] : memref<2x16xf32, #tpu.memory_space<vmem>>, vector<2x16xf32>
    tpu.vector_store %arg24[%c0_94, %c0_95], %228 {strides = array<i32>} : memref<2x16xf32, #tpu.memory_space<vmem>>, vector<2x16xf32>,
    %c0_96 = arith.constant 0 : index
    %c0_97 = arith.constant 0 : index
    %230 = vector.load %arg20[%c0_96, %c0_97] : memref<16x8xf32, #tpu.memory_space<vmem>>, vector<16x8xf32>
    %cst_98 = arith.constant dense<0.000000e+00> : vector<2x8xf32>
    %231 = tpu.matmul %228, %230, %cst_98 {dimension_numbers = #tpu.dot_dimension_numbers<[1], [0], [0], [1], [0, 0, 1, 1], [], []>} : vector<2x16xf32>, vector<16x8xf32>, vector<2x8xf32> -> vector<2x8xf32>
    %c0_99 = arith.constant 0 : index
    %c0_100 = arith.constant 0 : index
    %232 = vector.load %arg21[%c0_99, %c0_100] : memref<1x8xf32, #tpu.memory_space<vmem>>, vector<1x8xf32>
    %233 = vector.broadcast %232 : vector<1x8xf32> to vector<2x8xf32>
    %234 = arith.addf %231, %233 : vector<2x8xf32>
    %cst_101 = arith.constant 0.000000e+00 : f32
    %235 = vector.broadcast %cst_101 : f32 to vector<2x8xf32>
    %236 = arith.subf %235, %234 : vector<2x8xf32>
    %237 = math.exp %236 : vector<2x8xf32>
    %cst_102 = arith.constant 1.000000e+00 : f32
    %238 = vector.broadcast %cst_102 : f32 to vector<2x8xf32>
    %239 = arith.addf %238, %237 : vector<2x8xf32>
    %240 = tpu.reciprocal %239 {approx = true} : vector<2x8xf32> -> vector<2x8xf32>
    %241 = arith.mulf %234, %240 : vector<2x8xf32>
    %c0_103 = arith.constant 0 : index
    %c0_104 = arith.constant 0 : index
    %242 = vector.load %arg22[%c0_103, %c0_104] : memref<8x3xf32, #tpu.memory_space<vmem>>, vector<8x3xf32>
    %cst_105 = arith.constant dense<0.000000e+00> : vector<2x3xf32>
    %243 = tpu.matmul %241, %242, %cst_105 {dimension_numbers = #tpu.dot_dimension_numbers<[1], [0], [0], [1], [0, 0, 1, 1], [], []>} : vector<2x8xf32>, vector<8x3xf32>, vector<2x3xf32> -> vector<2x3xf32>
    %c0_106 = arith.constant 0 : index
    %c0_107 = arith.constant 0 : index
    %244 = vector.load %arg23[%c0_106, %c0_107] : memref<1x3xf32, #tpu.memory_space<vmem>>, vector<1x3xf32>
    %245 = vector.broadcast %244 : vector<1x3xf32> to vector<2x3xf32>
    %246 = arith.addf %243, %245 : vector<2x3xf32>
    %c0_108 = arith.constant 0 : index
    %c0_109 = arith.constant 0 : index
    %247 = vector.load %arg25[%c0_108, %c0_109] : memref<2x3xf32, #tpu.memory_space<vmem>>, vector<2x3xf32>
    tpu.vector_store %arg25[%c0_108, %c0_109], %246 {strides = array<i32>} : memref<2x3xf32, #tpu.memory_space<vmem>>, vector<2x3xf32>,
    return
  }
  func.func @transform_0(%arg0: i32) -> (i32, i32) {
    %c0_i32 = arith.constant 0 : i32
    %c0_i32_0 = arith.constant 0 : i32
    %c0_i32_1 = arith.constant 0 : i32
    return %c0_i32, %c0_i32_0 : i32, i32
  }
  func.func @transform_1(%arg0: i32) -> (i32, i32) {
    %c0_i32 = arith.constant 0 : i32
    %c0_i32_0 = arith.constant 0 : i32
    %c0_i32_1 = arith.constant 0 : i32
    return %c0_i32, %c0_i32_0 : i32, i32
  }
  func.func @transform_2(%arg0: i32) -> (i32, i32) {
    %c0_i32 = arith.constant 0 : i32
    %c0_i32_0 = arith.constant 0 : i32
    %c0_i32_1 = arith.constant 0 : i32
    return %c0_i32, %c0_i32_0 : i32, i32
  }
  func.func @transform_3(%arg0: i32) -> (i32, i32) {
    %c0_i32 = arith.constant 0 : i32
    %c0_i32_0 = arith.constant 0 : i32
    %c0_i32_1 = arith.constant 0 : i32
    return %c0_i32, %c0_i32_0 : i32, i32
  }
  func.func @transform_4(%arg0: i32) -> (i32, i32) {
    %c0_i32 = arith.constant 0 : i32
    %c0_i32_0 = arith.constant 0 : i32
    %c0_i32_1 = arith.constant 0 : i32
    return %c0_i32, %c0_i32_0 : i32, i32
  }
  func.func @transform_5(%arg0: i32) -> (i32, i32) {
    %c0_i32 = arith.constant 0 : i32
    %c0_i32_0 = arith.constant 0 : i32
    %c0_i32_1 = arith.constant 0 : i32
    return %c0_i32, %c0_i32_0 : i32, i32
  }
  func.func @transform_6(%arg0: i32) -> (i32, i32) {
    %c0_i32 = arith.constant 0 : i32
    %c0_i32_0 = arith.constant 0 : i32
    %c0_i32_1 = arith.constant 0 : i32
    return %c0_i32, %c0_i32_0 : i32, i32
  }
  func.func @transform_7(%arg0: i32) -> (i32, i32) {
    %c0_i32 = arith.constant 0 : i32
    %c0_i32_0 = arith.constant 0 : i32
    %c0_i32_1 = arith.constant 0 : i32
    return %c0_i32, %c0_i32_0 : i32, i32
  }
  func.func @transform_8(%arg0: i32) -> (i32, i32) {
    %c0_i32 = arith.constant 0 : i32
    %c0_i32_0 = arith.constant 0 : i32
    %c0_i32_1 = arith.constant 0 : i32
    return %c0_i32, %c0_i32_0 : i32, i32
  }
  func.func @transform_9(%arg0: i32) -> (i32, i32) {
    %c0_i32 = arith.constant 0 : i32
    %c0_i32_0 = arith.constant 0 : i32
    %c0_i32_1 = arith.constant 0 : i32
    return %c0_i32, %c0_i32_0 : i32, i32
  }
  func.func @transform_10(%arg0: i32) -> (i32, i32) {
    %c0_i32 = arith.constant 0 : i32
    %c0_i32_0 = arith.constant 0 : i32
    %c0_i32_1 = arith.constant 0 : i32
    return %c0_i32, %c0_i32_0 : i32, i32
  }
  func.func @transform_11(%arg0: i32) -> (i32, i32) {
    %c0_i32 = arith.constant 0 : i32
    %c0_i32_0 = arith.constant 0 : i32
    %c0_i32_1 = arith.constant 0 : i32
    return %c0_i32, %c0_i32_0 : i32, i32
  }
  func.func @transform_12(%arg0: i32) -> (i32, i32) {
    %c0_i32 = arith.constant 0 : i32
    %c0_i32_0 = arith.constant 0 : i32
    %c0_i32_1 = arith.constant 0 : i32
    return %c0_i32, %c0_i32_0 : i32, i32
  }
  func.func @transform_13(%arg0: i32) -> (i32, i32) {
    %c0_i32 = arith.constant 0 : i32
    %c0_i32_0 = arith.constant 0 : i32
    %c0_i32_1 = arith.constant 0 : i32
    return %c0_i32, %c0_i32_0 : i32, i32
  }
  func.func @transform_14(%arg0: i32) -> (i32, i32) {
    %c0_i32 = arith.constant 0 : i32
    %c0_i32_0 = arith.constant 0 : i32
    %c0_i32_1 = arith.constant 0 : i32
    return %c0_i32, %c0_i32_0 : i32, i32
  }
  func.func @transform_15(%arg0: i32) -> (i32, i32) {
    %c0_i32 = arith.constant 0 : i32
    %c0_i32_0 = arith.constant 0 : i32
    %c0_i32_1 = arith.constant 0 : i32
    return %c0_i32, %c0_i32_0 : i32, i32
  }
  func.func @transform_16(%arg0: i32) -> (i32, i32) {
    %c0_i32 = arith.constant 0 : i32
    %c0_i32_0 = arith.constant 0 : i32
    %c0_i32_1 = arith.constant 0 : i32
    return %c0_i32, %c0_i32_0 : i32, i32
  }
  func.func @transform_17(%arg0: i32) -> (i32, i32) {
    %c0_i32 = arith.constant 0 : i32
    %c0_i32_0 = arith.constant 0 : i32
    %c0_i32_1 = arith.constant 0 : i32
    return %c0_i32, %c0_i32_0 : i32, i32
  }
  func.func @transform_18(%arg0: i32) -> (i32, i32) {
    %c0_i32 = arith.constant 0 : i32
    %c0_i32_0 = arith.constant 0 : i32
    %c0_i32_1 = arith.constant 0 : i32
    return %c0_i32, %c0_i32_0 : i32, i32
  }
  func.func @transform_19(%arg0: i32) -> (i32, i32) {
    %c0_i32 = arith.constant 0 : i32
    %c0_i32_0 = arith.constant 0 : i32
    %c0_i32_1 = arith.constant 0 : i32
    return %c0_i32, %c0_i32_0 : i32, i32
  }
  func.func @transform_20(%arg0: i32) -> (i32, i32) {
    %c0_i32 = arith.constant 0 : i32
    %c0_i32_0 = arith.constant 0 : i32
    %c0_i32_1 = arith.constant 0 : i32
    return %c0_i32, %c0_i32_0 : i32, i32
  }
  func.func @transform_21(%arg0: i32) -> (i32, i32) {
    %c0_i32 = arith.constant 0 : i32
    %c0_i32_0 = arith.constant 0 : i32
    %c0_i32_1 = arith.constant 0 : i32
    return %c0_i32, %c0_i32_0 : i32, i32
  }
  func.func @transform_22(%arg0: i32) -> (i32, i32) {
    %c0_i32 = arith.constant 0 : i32
    %c0_i32_0 = arith.constant 0 : i32
    %c0_i32_1 = arith.constant 0 : i32
    return %c0_i32, %c0_i32_0 : i32, i32
  }
  func.func @transform_23(%arg0: i32) -> (i32, i32) {
    %c0_i32 = arith.constant 0 : i32
    %c0_i32_0 = arith.constant 0 : i32
    %c0_i32_1 = arith.constant 0 : i32
    return %c0_i32, %c0_i32_0 : i32, i32
  }
  func.func @transform_24(%arg0: i32) -> (i32, i32) {
    %c0_i32 = arith.constant 0 : i32
    %c0_i32_0 = arith.constant 0 : i32
    %c0_i32_1 = arith.constant 0 : i32
    return %c0_i32, %c0_i32_0 : i32, i32
  }
  func.func @transform_25(%arg0: i32) -> (i32, i32) {
    %c0_i32 = arith.constant 0 : i32
    %c0_i32_0 = arith.constant 0 : i32
    %c0_i32_1 = arith.constant 0 : i32
    return %c0_i32, %c0_i32_0 : i32, i32
  }
}

</mosaic_0001>

<llo_original>
// kernel: forward.7
$region0: #{forward.7}
  #allocation0 [shape = 'u32[]', space=smem, size = 0x4, offset = 0x4, fixed_abs, tag = 'smem constant byte address 0x4 - core index']
  #allocation1 [shape = 'u32[144,128]{1,0:T(1,128)}', space=vmem, size = 0x12000, scoped, tag = 'internal scratch']
  %s0 = inlined_call_operand.hbm [shape: f32[16,32], index: 0, kind: input, shape index: {}]
  %s1 = inlined_call_operand.hbm [shape: f32[16,4], index: 1, kind: input, shape index: {}]
  %s2 = inlined_call_operand.hbm [shape: f32[3,16], index: 2, kind: input, shape index: {}]
  %s3 = inlined_call_operand.hbm [shape: f32[1,16], index: 3, kind: input, shape index: {}]
  %s4 = inlined_call_operand.hbm [shape: f32[16,32], index: 4, kind: input, shape index: {}]
  %s5 = inlined_call_operand.hbm [shape: f32[1,32], index: 5, kind: input, shape index: {}]
  %s6 = inlined_call_operand.hbm [shape: bf16[32,384], index: 6, kind: input, shape index: {}]
  %s7 = inlined_call_operand.hbm [shape: f32[16,32], index: 7, kind: output, shape index: {0}]
  %s8 = inlined_call_operand.hbm [shape: f32[16,192], index: 8, kind: output, shape index: {1}]
  %s9 = inlined_call_operand.hbm [shape: f32[16,192], index: 9, kind: output, shape index: {2}]
  %10 = xla_tuple %s7, %s8, %s9
  %s11 = sld [smem:[#allocation0]]
  $region105: #{forward.7} parent=0
    _
  %s13 = ssub.s32 1, %s11
  %s14 = scalar_select 0, %s13, %s11
  $region1: #{forward.7} parent=0
    #allocation2 [shape = 'u8[8192]{0}', space=vmem, size = 0x2000, scoped, tag = 'input window, operand 0']
    #allocation3 [shape = 's32[2]{0}', space=sflag, size = 0x8, scoped, tag = 'scoped memory for forward.7']
    #allocation4 [shape = 's32[2]{0}', space=sflag, size = 0x8, scoped, tag = 'scoped memory for forward.7']
    #allocation5 [shape = 'u8[8192]{0}', space=vmem, size = 0x2000, scoped, tag = 'input window, operand 1']
    #allocation6 [shape = 's32[2]{0}', space=sflag, size = 0x8, scoped, tag = 'scoped memory for forward.7']
    #allocation7 [shape = 'u8[2048]{0}', space=vmem, size = 0x800, scoped, tag = 'input window, operand 2, single buffered']
    #allocation8 [shape = 'u8[512]{0}', space=vmem, size = 0x400, scoped, tag = 'input window, operand 3, single buffered']
    #allocation9 [shape = 's32[1]{0}', space=sflag, size = 0x4, scoped, tag = 'scoped memory for forward.7']
    #allocation10 [shape = 'u8[8192]{0}', space=vmem, size = 0x2000, scoped, tag = 'input window, operand 4, single buffered']
    #allocation11 [shape = 'u8[512]{0}', space=vmem, size = 0x400, scoped, tag = 'input window, operand 5, single buffered']
    #allocation12 [shape = 's32[1]{0}', space=sflag, size = 0x4, scoped, tag = 'scoped memory for forward.7']
    #allocation13 [shape = 'u8[24576]{0}', space=vmem, size = 0x6000, scoped, tag = 'input window, operand 6, single buffered']
    #allocation14 [shape = 'u8[8192]{0}', space=vmem, size = 0x2000, scoped, tag = 'output window, operand 0']
    #allocation15 [shape = 'u8[16384]{0}', space=vmem, size = 0x4000, scoped, tag = 'output window, operand 1']
    #allocation16 [shape = 's32[2]{0}', space=sflag, size = 0x8, scoped, tag = 'scoped memory for forward.7']
    #allocation17 [shape = 'u8[16384]{0}', space=vmem, size = 0x4000, scoped, tag = 'output window, operand 2']
    %15 = vsyncpa [#allocation3], 0
    %s16 = scalar_lea.sflag [#allocation3], 1
    %17 = vsyncpa %s16, 0
    %18 = vsyncpa [#allocation6], 0
    %s19 = scalar_lea.sflag [#allocation6], 1
    %20 = vsyncpa %s19, 0
    %21 = vsyncpa [#allocation9], 0
    %22 = vsyncpa [#allocation12], 0
    %23 = vsyncpa [#allocation4], 0
    %s24 = scalar_lea.sflag [#allocation4], 1
    %25 = vsyncpa %s24, 0
    %26 = vsyncpa [#allocation16], 0
    %s27 = scalar_lea.sflag [#allocation16], 1
    %28 = vsyncpa %s27, 0
    loop: start=0, step=1, limit=4
    $region2: #{forward.7} parent=1 // loop_pre_header
      _
    $region3: #{forward.7} parent=1 // loop_header
      %s30 = sphi 0, %s34
      %p31 = scmp.ge.s32.totalorder %s30, 4
      %s40 = sphi 0, %s42
      %s43 = sphi 0, %s40
      %s44 = sphi 0, %s43
      %s60 = sphi 0, %s44
      %s66 = sphi 0, %s68
      %s69 = sphi 0, %s66
      %s70 = sphi 0, %s69
      %s86 = sphi 0, %s70
      %s90 = sphi 0, %s90
      %s92 = sphi 0, %s90
      %s93 = sphi 0, %s92
      %s107 = sphi 0, %s93
      %s111 = sphi 0, %s111
      %s113 = sphi 0, %s111
      %s114 = sphi 0, %s113
      %s128 = sphi 0, %s114
      %s132 = sphi 0, %s132
      %s134 = sphi 0, %s132
      %s135 = sphi 0, %s134
      %s149 = sphi 0, %s135
      %s153 = sphi 0, %s153
      %s155 = sphi 0, %s153
      %s156 = sphi 0, %s155
      %s170 = sphi 0, %s156
      %s174 = sphi 0, %s174
      %s176 = sphi 0, %s174
      %s177 = sphi 0, %s176
      %s191 = sphi 0, %s177
      %s197 = sphi 0, %s199
      %s200 = sphi 0, %s197
      %s201 = sphi 0, %s200
      %s217 = sphi 0, %s201
      %s223 = sphi 0, %s225
      %s226 = sphi 0, %s223
      %s227 = sphi 0, %s226
      %s243 = sphi 0, %s227
      %s249 = sphi 0, %s251
      %s252 = sphi 0, %s249
      %s253 = sphi 0, %s252
      %s269 = sphi 0, %s253
    $region4: #{forward.7} parent=1 // loop_header_branch
      %33 = sbr.rel (%p31) target = $region8
    $region5: #{forward.7} parent=1 // loop_body
      %s35 = ssub.s32 %s30, 1
      %s36 = ssub.s32 %s30, 2
      %s37 = sadd.s32 %s30, 1
      %s38 = ssub.s32 %s30, %s37
      %p39 = scmp.eq.s32.totalorder %s38, 0
      %s41 = sadd.s32 %s40, 1
      %s42 = scalar_select %p39, %s40, %s41
      %p45 = pneg %p39
      %p46 = scmp.eq.s32.totalorder %s30, 1
      %p47 = por %p45, %p46
      %p48 = scmp.ne.s32.totalorder %s40, %s43
      %p49 = scmp.eq.s32.totalorder %s30, 0
      %p50 = por %p48, %p49
      %p51 = scmp.ne.s32.totalorder %s40, %s43
      %p52 = scmp.eq.s32.totalorder %s35, 1
      %p53 = por %p51, %p52
      %p54 = scmp.ne.s32.totalorder %s43, %s44
      %p55 = scmp.eq.s32.totalorder %s35, 0
      %p56 = por %p54, %p55
      %p57 = scmp.ne.s32.totalorder %s43, %s44
      %p58 = scmp.eq.s32.totalorder %s36, 1
      %p59 = por %p57, %p58
      %p61 = scmp.ne.s32.totalorder %s44, %s60
      %p62 = scmp.eq.s32.totalorder %s36, 0
      %p63 = por %p61, %p62
      %s64 = ssub.s32 %s30, %s37
      %p65 = scmp.eq.s32.totalorder %s64, 0
      %s67 = sadd.s32 %s66, 1
      %s68 = scalar_select %p65, %s66, %s67
      %p71 = pneg %p65
      %p72 = scmp.eq.s32.totalorder %s30, 1
      %p73 = por %p71, %p72
      %p74 = scmp.ne.s32.totalorder %s66, %s69
      %p75 = scmp.eq.s32.totalorder %s30, 0
      %p76 = por %p74, %p75
      %p77 = scmp.ne.s32.totalorder %s66, %s69
      %p78 = scmp.eq.s32.totalorder %s35, 1
      %p79 = por %p77, %p78
      %p80 = scmp.ne.s32.totalorder %s69, %s70
      %p81 = scmp.eq.s32.totalorder %s35, 0
      %p82 = por %p80, %p81
      %p83 = scmp.ne.s32.totalorder %s69, %s70
      %p84 = scmp.eq.s32.totalorder %s36, 1
      %p85 = por %p83, %p84
      %p87 = scmp.ne.s32.totalorder %s70, %s86
      %p88 = scmp.eq.s32.totalorder %s36, 0
      %p89 = por %p87, %p88
      %s91 = sadd.s32 %s90, 1
      %p94 = scmp.eq.s32.totalorder %s30, 1
      %p95 = scmp.ne.s32.totalorder %s90, %s92
      %p96 = scmp.eq.s32.totalorder %s30, 0
      %p97 = por %p95, %p96
      %p98 = scmp.ne.s32.totalorder %s90, %s92
      %p99 = scmp.eq.s32.totalorder %s35, 1
      %p100 = por %p98, %p99
      %p101 = scmp.ne.s32.totalorder %s92, %s93
      %p102 = scmp.eq.s32.totalorder %s35, 0
      %p103 = por %p101, %p102
      %p104 = scmp.ne.s32.totalorder %s92, %s93
      %p105 = scmp.eq.s32.totalorder %s36, 1
      %p106 = por %p104, %p105
      %p108 = scmp.ne.s32.totalorder %s93, %s107
      %p109 = scmp.eq.s32.totalorder %s36, 0
      %p110 = por %p108, %p109
      %s112 = sadd.s32 %s111, 1
      %p115 = scmp.eq.s32.totalorder %s30, 1
      %p116 = scmp.ne.s32.totalorder %s111, %s113
      %p117 = scmp.eq.s32.totalorder %s30, 0
      %p118 = por %p116, %p117
      %p119 = scmp.ne.s32.totalorder %s111, %s113
      %p120 = scmp.eq.s32.totalorder %s35, 1
      %p121 = por %p119, %p120
      %p122 = scmp.ne.s32.totalorder %s113, %s114
      %p123 = scmp.eq.s32.totalorder %s35, 0
      %p124 = por %p122, %p123
      %p125 = scmp.ne.s32.totalorder %s113, %s114
      %p126 = scmp.eq.s32.totalorder %s36, 1
      %p127 = por %p125, %p126
      %p129 = scmp.ne.s32.totalorder %s114, %s128
      %p130 = scmp.eq.s32.totalorder %s36, 0
      %p131 = por %p129, %p130
      %s133 = sadd.s32 %s132, 1
      %p136 = scmp.eq.s32.totalorder %s30, 1
      %p137 = scmp.ne.s32.totalorder %s132, %s134
      %p138 = scmp.eq.s32.totalorder %s30, 0
      %p139 = por %p137, %p138
      %p140 = scmp.ne.s32.totalorder %s132, %s134
      %p141 = scmp.eq.s32.totalorder %s35, 1
      %p142 = por %p140, %p141
      %p143 = scmp.ne.s32.totalorder %s134, %s135
      %p144 = scmp.eq.s32.totalorder %s35, 0
      %p145 = por %p143, %p144
      %p146 = scmp.ne.s32.totalorder %s134, %s135
      %p147 = scmp.eq.s32.totalorder %s36, 1
      %p148 = por %p146, %p147
      %p150 = scmp.ne.s32.totalorder %s135, %s149
      %p151 = scmp.eq.s32.totalorder %s36, 0
      %p152 = por %p150, %p151
      %s154 = sadd.s32 %s153, 1
      %p157 = scmp.eq.s32.totalorder %s30, 1
      %p158 = scmp.ne.s32.totalorder %s153, %s155
      %p159 = scmp.eq.s32.totalorder %s30, 0
      %p160 = por %p158, %p159
      %p161 = scmp.ne.s32.totalorder %s153, %s155
      %p162 = scmp.eq.s32.totalorder %s35, 1
      %p163 = por %p161, %p162
      %p164 = scmp.ne.s32.totalorder %s155, %s156
      %p165 = scmp.eq.s32.totalorder %s35, 0
      %p166 = por %p164, %p165
      %p167 = scmp.ne.s32.totalorder %s155, %s156
      %p168 = scmp.eq.s32.totalorder %s36, 1
      %p169 = por %p167, %p168
      %p171 = scmp.ne.s32.totalorder %s156, %s170
      %p172 = scmp.eq.s32.totalorder %s36, 0
      %p173 = por %p171, %p172
      %s175 = sadd.s32 %s174, 1
      %p178 = scmp.eq.s32.totalorder %s30, 1
      %p179 = scmp.ne.s32.totalorder %s174, %s176
      %p180 = scmp.eq.s32.totalorder %s30, 0
      %p181 = por %p179, %p180
      %p182 = scmp.ne.s32.totalorder %s174, %s176
      %p183 = scmp.eq.s32.totalorder %s35, 1
      %p184 = por %p182, %p183
      %p185 = scmp.ne.s32.totalorder %s176, %s177
      %p186 = scmp.eq.s32.totalorder %s35, 0
      %p187 = por %p185, %p186
      %p188 = scmp.ne.s32.totalorder %s176, %s177
      %p189 = scmp.eq.s32.totalorder %s36, 1
      %p190 = por %p188, %p189
      %p192 = scmp.ne.s32.totalorder %s177, %s191
      %p193 = scmp.eq.s32.totalorder %s36, 0
      %p194 = por %p192, %p193
      %s195 = ssub.s32 %s30, %s37
      %p196 = scmp.eq.s32.totalorder %s195, 0
      %s198 = sadd.s32 %s197, 1
      %s199 = scalar_select %p196, %s197, %s198
      %p202 = pneg %p196
      %p203 = scmp.eq.s32.totalorder %s30, 1
      %p204 = por %p202, %p203
      %p205 = scmp.ne.s32.totalorder %s197, %s200
      %p206 = scmp.eq.s32.totalorder %s30, 0
      %p207 = por %p205, %p206
      %p208 = scmp.ne.s32.totalorder %s197, %s200
      %p209 = scmp.eq.s32.totalorder %s35, 1
      %p210 = por %p208, %p209
      %p211 = scmp.ne.s32.totalorder %s200, %s201
      %p212 = scmp.eq.s32.totalorder %s35, 0
      %p213 = por %p211, %p212
      %p214 = scmp.ne.s32.totalorder %s200, %s201
      %p215 = scmp.eq.s32.totalorder %s36, 1
      %p216 = por %p214, %p215
      %p218 = scmp.ne.s32.totalorder %s201, %s217
      %p219 = scmp.eq.s32.totalorder %s36, 0
      %p220 = por %p218, %p219
      %s221 = ssub.s32 %s30, %s37
      %p222 = scmp.eq.s32.totalorder %s221, 0
      %s224 = sadd.s32 %s223, 1
      %s225 = scalar_select %p222, %s223, %s224
      %p228 = pneg %p222
      %p229 = scmp.eq.s32.totalorder %s30, 1
      %p230 = por %p228, %p229
      %p231 = scmp.ne.s32.totalorder %s223, %s226
      %p232 = scmp.eq.s32.totalorder %s30, 0
      %p233 = por %p231, %p232
      %p234 = scmp.ne.s32.totalorder %s223, %s226
      %p235 = scmp.eq.s32.totalorder %s35, 1
      %p236 = por %p234, %p235
      %p237 = scmp.ne.s32.totalorder %s226, %s227
      %p238 = scmp.eq.s32.totalorder %s35, 0
      %p239 = por %p237, %p238
      %p240 = scmp.ne.s32.totalorder %s226, %s227
      %p241 = scmp.eq.s32.totalorder %s36, 1
      %p242 = por %p240, %p241
      %p244 = scmp.ne.s32.totalorder %s227, %s243
      %p245 = scmp.eq.s32.totalorder %s36, 0
      %p246 = por %p244, %p245
      %s247 = ssub.s32 %s30, %s37
      %p248 = scmp.eq.s32.totalorder %s247, 0
      %s250 = sadd.s32 %s249, 1
      %s251 = scalar_select %p248, %s249, %s250
      %p254 = pneg %p248
      %p255 = scmp.eq.s32.totalorder %s30, 1
      %p256 = por %p254, %p255
      %p257 = scmp.ne.s32.totalorder %s249, %s252
      %p258 = scmp.eq.s32.totalorder %s30, 0
      %p259 = por %p257, %p258
      %p260 = scmp.ne.s32.totalorder %s249, %s252
      %p261 = scmp.eq.s32.totalorder %s35, 1
      %p262 = por %p260, %p261
      %p263 = scmp.ne.s32.totalorder %s252, %s253
      %p264 = scmp.eq.s32.totalorder %s35, 0
      %p265 = por %p263, %p264
      %p266 = scmp.ne.s32.totalorder %s252, %s253
      %p267 = scmp.eq.s32.totalorder %s36, 1
      %p268 = por %p266, %p267
      %p270 = scmp.ne.s32.totalorder %s253, %s269
      %p271 = scmp.eq.s32.totalorder %s36, 0
      %p272 = por %p270, %p271
      %p273 = scmp.le.s32.totalorder 1, %s30
      %p274 = scmp.lt.s32.totalorder %s30, 3
      %p275 = pnand %p273, %p274
      %p276 = pneg %p275
      // Predicated region
      $region9: #{forward.7} parent=5 // pred_check
        _
      $region10: #{forward.7} parent=5 // pred_check_branch
        %278 = sbr.rel (%p275) target = $region12
      $region11: #{forward.7} parent=5 // pred_region
        %s279 = ssub.s32 %s30, 1
        // Predicated region
        $region13: #{forward.7} parent=11 // pred_check
          %p280 = pneg %p103
        $region14: #{forward.7} parent=11 // pred_check_branch
          %282 = sbr.rel (%p280) target = $region16
        $region15: #{forward.7} parent=11 // pred_region
          %s284 = ssub.s32 64, 64
          %285 = vsyncadd [#allocation6], %s284
          %s287 = sshll.u32 [#allocation7], 4
          %s288 = int_to_ptr.vmem [resolvable:$true] %s287
          %290 = dma.hbm_to_vmem [thread:$0]  %s2, 64, %s288, [#allocation6]
        $region16: #{forward.7} parent=11 // pred_fallthru
          _
        // Predicated region
        $region17: #{forward.7} parent=11 // pred_check
          %p291 = pneg %p124
        $region18: #{forward.7} parent=11 // pred_check_branch
          %293 = sbr.rel (%p291) target = $region20
        $region19: #{forward.7} parent=11 // pred_region
          %s295 = ssub.s32 16, 16
          %296 = vsyncadd [#allocation9], %s295
          %s298 = sshll.u32 [#allocation8], 4
          %s299 = int_to_ptr.vmem [resolvable:$true] %s298
          %301 = dma.hbm_to_vmem [thread:$0]  %s3, 16, %s299, [#allocation9]
        $region20: #{forward.7} parent=11 // pred_fallthru
          _
        // Predicated region
        $region21: #{forward.7} parent=11 // pred_check
          %p302 = pneg %p145
        $region22: #{forward.7} parent=11 // pred_check_branch
          %304 = sbr.rel (%p302) target = $region24
        $region23: #{forward.7} parent=11 // pred_region
          %s306 = ssub.s32 256, 256
          %307 = vsyncadd [#allocation9], %s306
          %s308 = sshll.u32 [#allocation10], 4
          %s309 = int_to_ptr.vmem [resolvable:$true] %s308
          %314 = dma.hbm_to_vmem [thread:$0]  %s4, 256, %s309, [#allocation9], 128, 128, 8
        $region24: #{forward.7} parent=11 // pred_fallthru
          _
        // Predicated region
        $region25: #{forward.7} parent=11 // pred_check
          %p315 = pneg %p166
        $region26: #{forward.7} parent=11 // pred_check_branch
          %317 = sbr.rel (%p315) target = $region28
        $region27: #{forward.7} parent=11 // pred_region
          %s319 = ssub.s32 16, 16
          %320 = vsyncadd [#allocation12], %s319
          %s322 = sshll.u32 [#allocation11], 4
          %s323 = int_to_ptr.vmem [resolvable:$true] %s322
          %325 = dma.hbm_to_vmem [thread:$0]  %s5, 16, %s323, [#allocation12]
        $region28: #{forward.7} parent=11 // pred_fallthru
          _
        // Predicated region
        $region29: #{forward.7} parent=11 // pred_check
          %p326 = pneg %p187
        $region30: #{forward.7} parent=11 // pred_check_branch
          %328 = sbr.rel (%p326) target = $region32
        $region31: #{forward.7} parent=11 // pred_region
          %s330 = ssub.s32 768, 768
          %331 = vsyncadd [#allocation12], %s330
          %s332 = sshll.u32 [#allocation13], 4
          %s333 = int_to_ptr.vmem [resolvable:$true] %s332
          %338 = dma.hbm_to_vmem [thread:$0]  %s6, 768, %s333, [#allocation12], 192, 192, 12
        $region32: #{forward.7} parent=11 // pred_fallthru
          _
      $region12: #{forward.7} parent=5 // pred_fallthru
        _
      %p339 = scmp.lt.s32.totalorder %s30, 2
      // Predicated region
      $region33: #{forward.7} parent=5 // pred_check
        %p340 = pneg %p339
      $region34: #{forward.7} parent=5 // pred_check_branch
        %342 = sbr.rel (%p340) target = $region36
      $region35: #{forward.7} parent=5 // pred_region
        // Predicated region
        $region37: #{forward.7} parent=35 // pred_check
          %p343 = pneg %p50
        $region38: #{forward.7} parent=35 // pred_check_branch
          %345 = sbr.rel (%p343) target = $region40
        $region39: #{forward.7} parent=35 // pred_region
          %s346 = sand.u32 %s40, 1
          %s347 = scalar_lea.sflag [#allocation3], %s346
          %s348 = sand.u32 %s40, 1
          %s349 = smul.addr %s348, 8
          %s350 = scalar_lea.vmem [#allocation2], %s349
          %s352 = ssub.s32 128, 128
          %353 = vsyncadd %s347, %s352
          %s354 = smul.addr %s30, 128
          %s355 = scalar_lea.hbm %s0, %s354
          %s357 = sshll.u32 %s350, 4
          %s358 = int_to_ptr.vmem [resolvable:$true] %s357
          %360 = dma.hbm_to_vmem [thread:$0]  %s355, 128, %s358, %s347
        $region40: #{forward.7} parent=35 // pred_fallthru
          _
        // Predicated region
        $region41: #{forward.7} parent=35 // pred_check
          %p361 = pneg %p76
        $region42: #{forward.7} parent=35 // pred_check_branch
          %363 = sbr.rel (%p361) target = $region44
        $region43: #{forward.7} parent=35 // pred_region
          %s364 = sand.u32 %s30, 1
          %s365 = scalar_lea.sflag [#allocation6], %s364
          %s366 = sand.u32 %s66, 1
          %s367 = smul.addr %s366, 8
          %s368 = scalar_lea.vmem [#allocation5], %s367
          %s370 = ssub.s32 128, 128
          %371 = vsyncadd %s365, %s370
          %s372 = smul.addr %s30, 128
          %s373 = scalar_lea.hbm %s1, %s372
          %s375 = sshll.u32 %s368, 4
          %s376 = int_to_ptr.vmem [resolvable:$true] %s375
          %378 = dma.hbm_to_vmem [thread:$0]  %s373, 128, %s376, %s365
        $region44: #{forward.7} parent=35 // pred_fallthru
          _
      $region36: #{forward.7} parent=5 // pred_fallthru
        _
      %p379 = scmp.le.s32.totalorder 1, %s30
      %p380 = scmp.lt.s32.totalorder %s30, 3
      %p381 = pnand %p379, %p380
      %p382 = pneg %p381
      // Predicated region
      $region45: #{forward.7} parent=5 // pred_check
        _
      $region46: #{forward.7} parent=5 // pred_check_branch
        %384 = sbr.rel (%p381) target = $region48
      $region47: #{forward.7} parent=5 // pred_region
        %s385 = ssub.s32 %s30, 1
        %s386 = sand.u32 %s43, 1
        %s387 = scalar_lea.sflag [#allocation3], %s386
        %s388 = sand.u32 %s43, 1
        %s389 = smul.addr %s388, 8
        %s390 = scalar_lea.vmem [#allocation2], %s389
        // Predicated region
        $region49: #{forward.7} parent=47 // pred_check
          %p391 = pneg %p56
        $region50: #{forward.7} parent=47 // pred_check_branch
          %393 = sbr.rel (%p391) target = $region52
        $region51: #{forward.7} parent=47 // pred_region
          %394 = dma.done %s387, 128
        $region52: #{forward.7} parent=47 // pred_fallthru
          _
        %s395 = sand.u32 %s35, 1
        %s396 = scalar_lea.sflag [#allocation6], %s395
        %s397 = sand.u32 %s69, 1
        %s398 = smul.addr %s397, 8
        %s399 = scalar_lea.vmem [#allocation5], %s398
        // Predicated region
        $region53: #{forward.7} parent=47 // pred_check
          %p400 = pneg %p82
        $region54: #{forward.7} parent=47 // pred_check_branch
          %402 = sbr.rel (%p400) target = $region56
        $region55: #{forward.7} parent=47 // pred_region
          %403 = dma.done %s396, 128
        $region56: #{forward.7} parent=47 // pred_fallthru
          _
        // Predicated region
        $region57: #{forward.7} parent=47 // pred_check
          %p404 = pneg %p103
        $region58: #{forward.7} parent=47 // pred_check_branch
          %406 = sbr.rel (%p404) target = $region60
        $region59: #{forward.7} parent=47 // pred_region
          %407 = dma.done [#allocation6], 64
        $region60: #{forward.7} parent=47 // pred_fallthru
          _
        // Predicated region
        $region61: #{forward.7} parent=47 // pred_check
          %p408 = pneg %p124
        $region62: #{forward.7} parent=47 // pred_check_branch
          %410 = sbr.rel (%p408) target = $region64
        $region63: #{forward.7} parent=47 // pred_region
          %411 = dma.done [#allocation9], 16
        $region64: #{forward.7} parent=47 // pred_fallthru
          _
        // Predicated region
        $region65: #{forward.7} parent=47 // pred_check
          %p412 = pneg %p145
        $region66: #{forward.7} parent=47 // pred_check_branch
          %414 = sbr.rel (%p412) target = $region68
        $region67: #{forward.7} parent=47 // pred_region
          %415 = dma.done [#allocation9], 256
        $region68: #{forward.7} parent=47 // pred_fallthru
          _
        // Predicated region
        $region69: #{forward.7} parent=47 // pred_check
          %p416 = pneg %p166
        $region70: #{forward.7} parent=47 // pred_check_branch
          %418 = sbr.rel (%p416) target = $region72
        $region71: #{forward.7} parent=47 // pred_region
          %419 = dma.done [#allocation12], 16
        $region72: #{forward.7} parent=47 // pred_fallthru
          _
        // Predicated region
        $region73: #{forward.7} parent=47 // pred_check
          %p420 = pneg %p187
        $region74: #{forward.7} parent=47 // pred_check_branch
          %422 = sbr.rel (%p420) target = $region76
        $region75: #{forward.7} parent=47 // pred_region
          %423 = dma.done [#allocation12], 768
        $region76: #{forward.7} parent=47 // pred_fallthru
          _
        %s424 = sand.u32 %s43, 1
        %s425 = scalar_lea.sflag [#allocation3], %s424
        %s426 = sand.u32 %s43, 1
        %s427 = smul.addr %s426, 8
        %s428 = scalar_lea.vmem [#allocation2], %s427
        %p429 = pneg %p56
        %p430 = pneg %p53
        %s431 = sand.u32 %s35, 1
        %s432 = scalar_lea.sflag [#allocation6], %s431
        %s433 = sand.u32 %s69, 1
        %s434 = smul.addr %s433, 8
        %s435 = scalar_lea.vmem [#allocation5], %s434
        %p436 = pneg %p82
        %p437 = pneg %p79
        %p438 = pneg %p103
        %p439 = pneg %p100
        %p440 = pneg %p124
        %p441 = pneg %p121
        %p442 = pneg %p145
        %p443 = pneg %p142
        %p444 = pneg %p166
        %p445 = pneg %p163
        %p446 = pneg %p187
        %p447 = pneg %p184
        %p448 = pneg %p213
        %p449 = pneg %p210
        %s450 = sand.u32 %s200, 1
        %s451 = scalar_lea.sflag [#allocation4], %s450
        %s452 = sand.u32 %s200, 1
        %s453 = smul.addr %s452, 8
        %s454 = scalar_lea.vmem [#allocation14], %s453
        %p455 = pneg %p239
        %p456 = pneg %p236
        %s457 = sand.u32 %s35, 1
        %s458 = scalar_lea.sflag [#allocation16], %s457
        %s459 = sand.u32 %s226, 1
        %s460 = smul.addr %s459, 16
        %s461 = scalar_lea.vmem [#allocation15], %s460
        %p462 = pneg %p265
        %p463 = pneg %p262
        %s464 = sand.u32 %s35, 1
        %s465 = scalar_lea.sflag [#allocation16], %s464
        %s466 = sand.u32 %s252, 1
        %s467 = smul.addr %s466, 16
        %s468 = scalar_lea.vmem [#allocation17], %s467
        %v470 = vld [vmem:[%s390] sm:$0xff]
        %v471 = vld [vmem:[%s399] sm:$0xff]
        %v472 = vld [vmem:[#allocation7] sm:$0x7]
        %v473 = vld [vmem:[#allocation8] sm:$0x1]
        %v475 = vlaneseq
        %v476 = vshrl.u32 %v475, 7
        %v477 = vsub.s32 0, %v476
        %v478 = vrot.slane %v473, %v477
        %vm480 = vcmask 23552
        %v482 = vsel %vm480, %v471, 0
        %vm484 = vcmask 1042432
        %v486 = vsel %vm484, %v472, 0
        %488 = vmatprep.subr.mxu0 0.0
        %489 = vmatpush1.msra.mxu0 %v486
        %490 = vmatprep.subr.mxu0 0.0
        %491 = vmatpush1.msra.mxu0 0.0
        %492 = vmatprep.subr.mxu0 0.0
        %493 = vmatpush1.msra.mxu0 0.0
        %494 = vmatprep.subr.mxu0 0.0
        %495 = vmatpush1.msra.mxu0 0.0
        %496 = vmatprep.subr.mxu0 0.0
        %497 = vmatpush1.msra.mxu0 0.0
        %498 = vmatprep.subr.mxu0 0.0
        %499 = vmatpush1.msra.mxu0 0.0
        %500 = vmatprep.subr.mxu0 0.0
        %501 = vmatpush1.msra.mxu0 0.0
        %502 = vmatprep.subr.mxu0 0.0
        %503 = vmatpush1.msra.mxu0 0.0
        %504 = vmatprep.subr.mxu0 0.0
        %505 = vmatpush1.msra.mxu0 0.0
        %506 = vmatprep.subr.mxu0 0.0
        %507 = vmatpush1.msra.mxu0 0.0
        %508 = vmatprep.subr.mxu0 0.0
        %509 = vmatpush1.msra.mxu0 0.0
        %510 = vmatprep.subr.mxu0 0.0
        %511 = vmatpush1.msra.mxu0 0.0
        %512 = vmatprep.subr.mxu0 0.0
        %513 = vmatpush1.msra.mxu0 0.0
        %514 = vmatprep.subr.mxu0 0.0
        %515 = vmatpush1.msra.mxu0 0.0
        %516 = vmatprep.subr.mxu0 0.0
        %517 = vmatpush1.msra.mxu0 0.0
        %518 = vmatprep.subr.mxu0 0.0
        %519 = vmatpush1.msra.mxu0 0.0
        %520 = vmatprep.subr.mxu0 0.0
        %521 = vmatpush1.msra.mxu0 0.0
        %522 = vmatprep.subr.mxu0 0.0
        %523 = vmatpush1.msra.mxu0 0.0
        %524 = vmatprep.subr.mxu0 0.0
        %525 = vmatpush1.msra.mxu0 0.0
        %526 = vmatprep.subr.mxu0 0.0
        %527 = vmatpush1.msra.mxu0 0.0
        %528 = vmatprep.subr.mxu0 0.0
        %529 = vmatpush1.msra.mxu0 0.0
        %530 = vmatprep.subr.mxu0 0.0
        %531 = vmatpush1.msra.mxu0 0.0
        %532 = vmatprep.subr.mxu0 0.0
        %533 = vmatpush1.msra.mxu0 0.0
        %534 = vmatprep.subr.mxu0 0.0
        %535 = vmatpush1.msra.mxu0 0.0
        %536 = vmatprep.subr.mxu0 0.0
        %537 = vmatpush1.msra.mxu0 0.0
        %538 = vmatprep.subr.mxu0 0.0
        %539 = vmatpush1.msra.mxu0 0.0
        %540 = vmatprep.subr.mxu0 0.0
        %541 = vmatpush1.msra.mxu0 0.0
        %542 = vmatprep.subr.mxu0 0.0
        %543 = vmatpush1.msra.mxu0 0.0
        %544 = vmatprep.subr.mxu0 0.0
        %545 = vmatpush1.msra.mxu0 0.0
        %546 = vmatprep.subr.mxu0 0.0
        %547 = vmatpush1.msra.mxu0 0.0
        %548 = vmatprep.subr.mxu0 0.0
        %549 = vmatpush1.msra.mxu0 0.0
        %550 = vmatprep.subr.mxu0 0.0
        %551 = vmatpush1.msra.mxu0 0.0
        %552 = vmatprep.mubr.f32.mxu0 0.0
        %553 = vmatmul.mubr.f32.gmra.mrb[0].mxu0 %v482
        %v554 = vpop.f32.mrb[0].mxu0
        %v555 = vadd.f32 %v478, %v554
        %v556 = vpop.f32.mrb[0].mxu0
        %557 = vdwg.mxu0
        %v558 = vsub.f32 0.0, %v555
        %v559 = vmul.f32 %v558, 1.442695
        %v560 = vpow.pop %v559
        %v561 = vadd.f32 %v560, 1.0
        %v562 = vrcp.pop %v561
        %v563 = vmul.f32 %v555, %v562
        %v564 = vld [vmem:[#allocation10] sm:$0xff]
        %v565 = vld [vmem:[#allocation10 + $0x8] sm:$0xff]
        %v566 = vld [vmem:[#allocation11] sm:$0x1]
        %v568 = vlaneseq
        %v569 = vshrl.u32 %v568, 7
        %v570 = vsub.s32 0, %v569
        %v571 = vrot.slane %v566, %v570
        %vm573 = vcmask 130048
        %v575 = vsel %vm573, %v563, 0
        %577 = vmatprep.subr.mxu0 0.0
        %578 = vmatpush1.msra.mxu0 %v564
        %579 = vmatprep.subr.mxu0 0.0
        %580 = vmatpush1.msra.mxu0 %v565
        %581 = vmatprep.subr.mxu0 0.0
        %582 = vmatpush1.msra.mxu0 0.0
        %583 = vmatprep.subr.mxu0 0.0
        %584 = vmatpush1.msra.mxu0 0.0
        %585 = vmatprep.subr.mxu0 0.0
        %586 = vmatpush1.msra.mxu0 0.0
        %587 = vmatprep.subr.mxu0 0.0
        %588 = vmatpush1.msra.mxu0 0.0
        %589 = vmatprep.subr.mxu0 0.0
        %590 = vmatpush1.msra.mxu0 0.0
        %591 = vmatprep.subr.mxu0 0.0
        %592 = vmatpush1.msra.mxu0 0.0
        %593 = vmatprep.subr.mxu0 0.0
        %594 = vmatpush1.msra.mxu0 0.0
        %595 = vmatprep.subr.mxu0 0.0
        %596 = vmatpush1.msra.mxu0 0.0
        %597 = vmatprep.subr.mxu0 0.0
        %598 = vmatpush1.msra.mxu0 0.0
        %599 = vmatprep.subr.mxu0 0.0
        %600 = vmatpush1.msra.mxu0 0.0
        %601 = vmatprep.subr.mxu0 0.0
        %602 = vmatpush1.msra.mxu0 0.0
        %603 = vmatprep.subr.mxu0 0.0
        %604 = vmatpush1.msra.mxu0 0.0
        %605 = vmatprep.subr.mxu0 0.0
        %606 = vmatpush1.msra.mxu0 0.0
        %607 = vmatprep.subr.mxu0 0.0
        %608 = vmatpush1.msra.mxu0 0.0
        %609 = vmatprep.subr.mxu0 0.0
        %610 = vmatpush1.msra.mxu0 0.0
        %611 = vmatprep.subr.mxu0 0.0
        %612 = vmatpush1.msra.mxu0 0.0
        %613 = vmatprep.subr.mxu0 0.0
        %614 = vmatpush1.msra.mxu0 0.0
        %615 = vmatprep.subr.mxu0 0.0
        %616 = vmatpush1.msra.mxu0 0.0
        %617 = vmatprep.subr.mxu0 0.0
        %618 = vmatpush1.msra.mxu0 0.0
        %619 = vmatprep.subr.mxu0 0.0
        %620 = vmatpush1.msra.mxu0 0.0
        %621 = vmatprep.subr.mxu0 0.0
        %622 = vmatpush1.msra.mxu0 0.0
        %623 = vmatprep.subr.mxu0 0.0
        %624 = vmatpush1.msra.mxu0 0.0
        %625 = vmatprep.subr.mxu0 0.0
        %626 = vmatpush1.msra.mxu0 0.0
        %627 = vmatprep.subr.mxu0 0.0
        %628 = vmatpush1.msra.mxu0 0.0
        %629 = vmatprep.subr.mxu0 0.0
        %630 = vmatpush1.msra.mxu0 0.0
        %631 = vmatprep.subr.mxu0 0.0
        %632 = vmatpush1.msra.mxu0 0.0
        %633 = vmatprep.subr.mxu0 0.0
        %634 = vmatpush1.msra.mxu0 0.0
        %635 = vmatprep.subr.mxu0 0.0
        %636 = vmatpush1.msra.mxu0 0.0
        %637 = vmatprep.subr.mxu0 0.0
        %638 = vmatpush1.msra.mxu0 0.0
        %639 = vmatprep.subr.mxu0 0.0
        %640 = vmatpush1.msra.mxu0 0.0
        %641 = vmatprep.mubr.f32.mxu0 0.0
        %642 = vmatmul.mubr.f32.gmra.mrb[0].mxu0 %v575
        %v643 = vpop.f32.mrb[0].mxu0
        %v644 = vadd.f32 %v571, %v643
        %v645 = vpop.f32.mrb[0].mxu0
        %646 = vdwg.mxu0
        %v647 = vadd.f32 %v470, %v644
        %vm648 = vcmask 261120
        %649 = vst.msk [vmem:[%s454] sm:$0xff] %vm648, %v647
        %v650 = vpack.c.bf16 %v647, %v647
        %v651 = vld [vmem:[#allocation13] sm:$0xff]
        %v652 = vld [vmem:[#allocation13 + $0x8] sm:$0xf]
        %v653 = vld [vmem:[#allocation13 + $0xc] sm:$0xff]
        %v654 = vld [vmem:[#allocation13 + $0x14] sm:$0xf]
        %v655 = vld [vmem:[#allocation13 + $0x18] sm:$0xff]
        %v656 = vld [vmem:[#allocation13 + $0x20] sm:$0xf]
        %v657 = vld [vmem:[#allocation13 + $0x24] sm:$0xff]
        %v658 = vld [vmem:[#allocation13 + $0x2c] sm:$0xf]
        %v667 = vunpack.c.l.b16 %v651
        %v668 = vunpack.c.h.b16 %v651
        %v669 = vunpack.c.l.b16 %v652
        %v670 = vunpack.c.l.b16 %v653
        %v671 = vunpack.c.h.b16 %v653
        %v672 = vunpack.c.l.b16 %v654
        %v673 = vunpack.c.l.b16 %v655
        %v674 = vunpack.c.h.b16 %v655
        %v675 = vunpack.c.l.b16 %v656
        %v676 = vunpack.c.l.b16 %v657
        %v677 = vunpack.c.h.b16 %v657
        %v678 = vunpack.c.l.b16 %v658
        %v679 = vpack.c.b16 %v670, %v667
        %v680 = vpack.c.b16 %v671, %v668
        %v681 = vpack.c.b16 %v672, %v669
        %v682 = vpack.c.b16 %v676, %v673
        %v683 = vpack.c.b16 %v677, %v674
        %v684 = vpack.c.b16 %v678, %v675
        %v692 = vsel %vm648, %v650, 0
        %694 = vmatprep.subr.bf16.mxu0 %v680
        %695 = vmatpush1.bf16.msra.mxu0 %v679
        %696 = vmatprep.subr.bf16.mxu0 %v683
        %697 = vmatpush1.bf16.msra.mxu0 %v682
        %698 = vmatprep.subr.bf16.mxu0 0
        %699 = vmatpush1.bf16.msra.mxu0 0
        %700 = vmatprep.subr.bf16.mxu0 0
        %701 = vmatpush1.bf16.msra.mxu0 0
        %702 = vmatprep.subr.bf16.mxu0 0
        %703 = vmatpush1.bf16.msra.mxu0 0
        %704 = vmatprep.subr.bf16.mxu0 0
        %705 = vmatpush1.bf16.msra.mxu0 0
        %706 = vmatprep.subr.bf16.mxu0 0
        %707 = vmatpush1.bf16.msra.mxu0 0
        %708 = vmatprep.subr.bf16.mxu0 0
        %709 = vmatpush1.bf16.msra.mxu0 0
        %710 = vmatprep.subr.bf16.mxu0 0
        %711 = vmatpush1.bf16.msra.mxu0 0
        %712 = vmatprep.subr.bf16.mxu0 0
        %713 = vmatpush1.bf16.msra.mxu0 0
        %714 = vmatprep.subr.bf16.mxu0 0
        %715 = vmatpush1.bf16.msra.mxu0 0
        %716 = vmatprep.subr.bf16.mxu0 0
        %717 = vmatpush1.bf16.msra.mxu0 0
        %718 = vmatprep.subr.bf16.mxu0 0
        %719 = vmatpush1.bf16.msra.mxu0 0
        %720 = vmatprep.subr.bf16.mxu0 0
        %721 = vmatpush1.bf16.msra.mxu0 0
        %722 = vmatprep.subr.bf16.mxu0 0
        %723 = vmatpush1.bf16.msra.mxu0 0
        %724 = vmatprep.subr.bf16.mxu0 0
        %725 = vmatpush1.bf16.msra.mxu0 0
        %726 = vmatprep.mubr.bf16.mxu0 0
        %727 = vmatmul.mubr.bf16.gmra.mrb[0].mxu0 %v692
        %v728 = vpop.f32.mrb[0].mxu0
        %v729 = vadd.f32 0.0, %v728
        %v730 = vpop.f32.mrb[0].mxu0
        %v731 = vadd.f32 0.0, %v730
        %v732 = vpop.f32.mrb[0].mxu0
        %v733 = vpop.f32.mrb[0].mxu0
        %734 = vdwg.mxu0
        %735 = vmatprep.subr.bf16.mxu0 0
        %736 = vmatpush1.bf16.msra.mxu0 %v681
        %737 = vmatprep.subr.bf16.mxu0 0
        %738 = vmatpush1.bf16.msra.mxu0 %v684
        %739 = vmatprep.subr.bf16.mxu0 0
        %740 = vmatpush1.bf16.msra.mxu0 0
        %741 = vmatprep.subr.bf16.mxu0 0
        %742 = vmatpush1.bf16.msra.mxu0 0
        %743 = vmatprep.subr.bf16.mxu0 0
        %744 = vmatpush1.bf16.msra.mxu0 0
        %745 = vmatprep.subr.bf16.mxu0 0
        %746 = vmatpush1.bf16.msra.mxu0 0
        %747 = vmatprep.subr.bf16.mxu0 0
        %748 = vmatpush1.bf16.msra.mxu0 0
        %749 = vmatprep.subr.bf16.mxu0 0
        %750 = vmatpush1.bf16.msra.mxu0 0
        %751 = vmatprep.subr.bf16.mxu0 0
        %752 = vmatpush1.bf16.msra.mxu0 0
        %753 = vmatprep.subr.bf16.mxu0 0
        %754 = vmatpush1.bf16.msra.mxu0 0
        %755 = vmatprep.subr.bf16.mxu0 0
        %756 = vmatpush1.bf16.msra.mxu0 0
        %757 = vmatprep.subr.bf16.mxu0 0
        %758 = vmatpush1.bf16.msra.mxu0 0
        %759 = vmatprep.subr.bf16.mxu0 0
        %760 = vmatpush1.bf16.msra.mxu0 0
        %761 = vmatprep.subr.bf16.mxu0 0
        %762 = vmatpush1.bf16.msra.mxu0 0
        %763 = vmatprep.subr.bf16.mxu0 0
        %764 = vmatpush1.bf16.msra.mxu0 0
        %765 = vmatprep.subr.bf16.mxu0 0
        %766 = vmatpush1.bf16.msra.mxu0 0
        %767 = vmatprep.mubr.bf16.mxu0 0
        %768 = vmatmul.mubr.bf16.gmra.mrb[0].mxu0 %v692
        %v769 = vpop.f32.mrb[0].mxu0
        %v770 = vadd.f32 0.0, %v769
        %v771 = vpop.f32.mrb[0].mxu0
        %v772 = vpop.f32.mrb[0].mxu0
        %v773 = vpop.f32.mrb[0].mxu0
        %774 = vdwg.mxu0
        %775 = vst [vmem:[%s461] sm:$0xff] %v729
        %vm776 = vcmask 523264
        %777 = vst.msk [vmem:[%s461 + $0x8] sm:$0xff] %vm776, %v731
        %780 = vrot.lane.b32.xlu0 %v731, 64
        %v781 = vpop.permute.xlu0 %780
        %782 = vrot.lane.b32.xlu0 %v770, 64
        %v783 = vpop.permute.xlu0 %782
        %v784 = vsel %vm776, %v781, %v783
        %787 = vst [vmem:[%s468] sm:$0xff] %v784
        %788 = vst.msk [vmem:[%s468 + $0x8] sm:$0xff] %vm776, %v783
        %s789 = sand.u32 %s200, 1
        %s790 = scalar_lea.sflag [#allocation4], %s789
        %s791 = sand.u32 %s200, 1
        %s792 = smul.addr %s791, 8
        %s793 = scalar_lea.vmem [#allocation14], %s792
        %s794 = sand.u32 %s35, 1
        %s795 = scalar_lea.sflag [#allocation16], %s794
        %s796 = sand.u32 %s226, 1
        %s797 = smul.addr %s796, 16
        %s798 = scalar_lea.vmem [#allocation15], %s797
        %s799 = sand.u32 %s35, 1
        %s800 = scalar_lea.sflag [#allocation16], %s799
        %s801 = sand.u32 %s252, 1
        %s802 = smul.addr %s801, 16
        %s803 = scalar_lea.vmem [#allocation17], %s802
        // Predicated region
        $region77: #{forward.7} parent=47 // pred_check
          %p804 = pneg %p210
        $region78: #{forward.7} parent=47 // pred_check_branch
          %806 = sbr.rel (%p804) target = $region80
        $region79: #{forward.7} parent=47 // pred_region
          %s808 = ssub.s32 128, 128
          %809 = vsyncadd %s790, %s808
          %s810 = smul.addr %s35, 128
          %s811 = scalar_lea.hbm %s7, %s810
          %s813 = sshll.u32 %s793, 4
          %s814 = int_to_ptr.vmem [resolvable:$true] %s813
          %816 = dma.vmem_to_hbm [thread:$0]  %s814, 128, %s811, %s790
        $region80: #{forward.7} parent=47 // pred_fallthru
          _
        // Predicated region
        $region81: #{forward.7} parent=47 // pred_check
          %p817 = pneg %p236
        $region82: #{forward.7} parent=47 // pred_check_branch
          %819 = sbr.rel (%p817) target = $region84
        $region83: #{forward.7} parent=47 // pred_region
          %s821 = ssub.s32 256, 256
          %822 = vsyncadd %s795, %s821
          %s823 = smul.addr %s35, 2
          %s824 = smul.addr %s823, 128
          %s825 = scalar_lea.hbm %s8, %s824
          %s827 = sshll.u32 %s798, 4
          %s828 = int_to_ptr.vmem [resolvable:$true] %s827
          %830 = dma.vmem_to_hbm [thread:$0]  %s828, 256, %s825, %s795
        $region84: #{forward.7} parent=47 // pred_fallthru
          _
        // Predicated region
        $region85: #{forward.7} parent=47 // pred_check
          %p831 = pneg %p262
        $region86: #{forward.7} parent=47 // pred_check_branch
          %833 = sbr.rel (%p831) target = $region88
        $region87: #{forward.7} parent=47 // pred_region
          %s835 = ssub.s32 256, 256
          %836 = vsyncadd %s800, %s835
          %s837 = smul.addr %s35, 2
          %s838 = smul.addr %s837, 128
          %s839 = scalar_lea.hbm %s9, %s838
          %s841 = sshll.u32 %s803, 4
          %s842 = int_to_ptr.vmem [resolvable:$true] %s841
          %844 = dma.vmem_to_hbm [thread:$0]  %s842, 256, %s839, %s800
        $region88: #{forward.7} parent=47 // pred_fallthru
          _
      $region48: #{forward.7} parent=5 // pred_fallthru
        _
      %p845 = scmp.le.s32.totalorder 2, %s30
      // Predicated region
      $region89: #{forward.7} parent=5 // pred_check
        %p846 = pneg %p845
      $region90: #{forward.7} parent=5 // pred_check_branch
        %848 = sbr.rel (%p846) target = $region92
      $region91: #{forward.7} parent=5 // pred_region
        %s849 = ssub.s32 %s30, 2
        // Predicated region
        $region93: #{forward.7} parent=91 // pred_check
          %p850 = pneg %p216
        $region94: #{forward.7} parent=91 // pred_check_branch
          %852 = sbr.rel (%p850) target = $region96
        $region95: #{forward.7} parent=91 // pred_region
          %s853 = sand.u32 %s201, 1
          %s854 = scalar_lea.sflag [#allocation4], %s853
          %s855 = sand.u32 %s201, 1
          %s856 = smul.addr %s855, 8
          %s857 = scalar_lea.vmem [#allocation14], %s856
          %858 = dma.done %s854, 128
        $region96: #{forward.7} parent=91 // pred_fallthru
          _
        // Predicated region
        $region97: #{forward.7} parent=91 // pred_check
          %p859 = pneg %p242
        $region98: #{forward.7} parent=91 // pred_check_branch
          %861 = sbr.rel (%p859) target = $region100
        $region99: #{forward.7} parent=91 // pred_region
          %s862 = sand.u32 %s36, 1
          %s863 = scalar_lea.sflag [#allocation16], %s862
          %s864 = sand.u32 %s227, 1
          %s865 = smul.addr %s864, 16
          %s866 = scalar_lea.vmem [#allocation15], %s865
          %867 = dma.done %s863, 256
        $region100: #{forward.7} parent=91 // pred_fallthru
          _
        // Predicated region
        $region101: #{forward.7} parent=91 // pred_check
          %p868 = pneg %p268
        $region102: #{forward.7} parent=91 // pred_check_branch
          %870 = sbr.rel (%p868) target = $region104
        $region103: #{forward.7} parent=91 // pred_region
          %s871 = sand.u32 %s36, 1
          %s872 = scalar_lea.sflag [#allocation16], %s871
          %s873 = sand.u32 %s253, 1
          %s874 = smul.addr %s873, 16
          %s875 = scalar_lea.vmem [#allocation17], %s874
          %876 = dma.done %s872, 256
        $region104: #{forward.7} parent=91 // pred_fallthru
          _
      $region92: #{forward.7} parent=5 // pred_fallthru
        _
    $region6: #{forward.7} parent=1 // loop_footer
      %s34 = sadd.s32 1, %s30
    $region7: #{forward.7} parent=1 // loop_footer_branch
      %29 = sbr.rel target = $region3
    $region8: #{forward.7} parent=1 // loop_exit
      _
    %877 = vsyncpa [#allocation3], 1
    %s878 = scalar_lea.sflag [#allocation3], 1
    %879 = vsyncpa %s878, 1
    %880 = vsyncpa [#allocation6], 1
    %s881 = scalar_lea.sflag [#allocation6], 1
    %882 = vsyncpa %s881, 1
    %883 = vsyncpa [#allocation9], 1
    %884 = vsyncpa [#allocation12], 1
    %885 = vsyncpa [#allocation4], 1
    %s886 = scalar_lea.sflag [#allocation4], 1
    %887 = vsyncpa %s886, 1
    %888 = vsyncpa [#allocation16], 1
    %s889 = scalar_lea.sflag [#allocation16], 1
    %890 = vsyncpa %s889, 1

// kernel: forward.5
$region0: #{forward.5}
  #allocation0 [shape = 'u32[]', space=smem, size = 0x4, offset = 0x4, fixed_abs, tag = 'smem constant byte address 0x4 - core index']
  #allocation1 [shape = 'u32[144,128]{1,0:T(1,128)}', space=vmem, size = 0x12000, scoped, tag = 'internal scratch']
  %s0 = inlined_call_operand.hbm [shape: f32[16,8], index: 0, kind: input, shape index: {}]
  %s1 = inlined_call_operand.hbm [shape: bf16[8,32], index: 1, kind: input, shape index: {}]
  %s2 = inlined_call_operand.hbm [shape: f32[3,32], index: 2, kind: input, shape index: {}]
  %s3 = inlined_call_operand.hbm [shape: f32[16,4], index: 3, kind: input, shape index: {}]
  %s4 = inlined_call_operand.hbm [shape: f32[3,16], index: 4, kind: input, shape index: {}]
  %s5 = inlined_call_operand.hbm [shape: f32[1,16], index: 5, kind: input, shape index: {}]
  %s6 = inlined_call_operand.hbm [shape: f32[16,32], index: 6, kind: input, shape index: {}]
  %s7 = inlined_call_operand.hbm [shape: f32[1,32], index: 7, kind: input, shape index: {}]
  %s8 = inlined_call_operand.hbm [shape: bf16[32,384], index: 8, kind: input, shape index: {}]
  %s9 = inlined_call_operand.hbm [shape: f32[16,32], index: 9, kind: output, shape index: {0}]
  %s10 = inlined_call_operand.hbm [shape: f32[16,192], index: 10, kind: output, shape index: {1}]
  %s11 = inlined_call_operand.hbm [shape: f32[16,192], index: 11, kind: output, shape index: {2}]
  %12 = xla_tuple %s9, %s10, %s11
  %s13 = sld [smem:[#allocation0]]
  $region121: #{forward.5} parent=0
    _
  %s15 = ssub.s32 1, %s13
  %s16 = scalar_select 0, %s15, %s13
  $region1: #{forward.5} parent=0
    #allocation2 [shape = 'u8[8192]{0}', space=vmem, size = 0x2000, scoped, tag = 'input window, operand 0']
    #allocation3 [shape = 's32[2]{0}', space=sflag, size = 0x8, scoped, tag = 'scoped memory for forward.5']
    #allocation4 [shape = 's32[2]{0}', space=sflag, size = 0x8, scoped, tag = 'scoped memory for forward.5']
    #allocation5 [shape = 'u8[2048]{0}', space=vmem, size = 0x800, scoped, tag = 'input window, operand 1, single buffered']
    #allocation6 [shape = 's32[1]{0}', space=sflag, size = 0x4, scoped, tag = 'scoped memory for forward.5']
    #allocation7 [shape = 'u8[2048]{0}', space=vmem, size = 0x800, scoped, tag = 'input window, operand 2, single buffered']
    #allocation8 [shape = 'u8[8192]{0}', space=vmem, size = 0x2000, scoped, tag = 'input window, operand 3']
    #allocation9 [shape = 's32[2]{0}', space=sflag, size = 0x8, scoped, tag = 'scoped memory for forward.5']
    #allocation10 [shape = 'u8[2048]{0}', space=vmem, size = 0x800, scoped, tag = 'input window, operand 4, single buffered']
    #allocation11 [shape = 'u8[512]{0}', space=vmem, size = 0x400, scoped, tag = 'input window, operand 5, single buffered']
    #allocation12 [shape = 's32[1]{0}', space=sflag, size = 0x4, scoped, tag = 'scoped memory for forward.5']
    #allocation13 [shape = 'u8[8192]{0}', space=vmem, size = 0x2000, scoped, tag = 'input window, operand 6, single buffered']
    #allocation14 [shape = 'u8[512]{0}', space=vmem, size = 0x400, scoped, tag = 'input window, operand 7, single buffered']
    #allocation15 [shape = 's32[1]{0}', space=sflag, size = 0x4, scoped, tag = 'scoped memory for forward.5']
    #allocation16 [shape = 'u8[24576]{0}', space=vmem, size = 0x6000, scoped, tag = 'input window, operand 8, single buffered']
    #allocation17 [shape = 'u8[8192]{0}', space=vmem, size = 0x2000, scoped, tag = 'output window, operand 0']
    #allocation18 [shape = 'u8[16384]{0}', space=vmem, size = 0x4000, scoped, tag = 'output window, operand 1']
    #allocation19 [shape = 's32[2]{0}', space=sflag, size = 0x8, scoped, tag = 'scoped memory for forward.5']
    #allocation20 [shape = 'u8[16384]{0}', space=vmem, size = 0x4000, scoped, tag = 'output window, operand 2']
    %17 = vsyncpa [#allocation3], 0
    %s18 = scalar_lea.sflag [#allocation3], 1
    %19 = vsyncpa %s18, 0
    %20 = vsyncpa [#allocation6], 0
    %21 = vsyncpa [#allocation9], 0
    %s22 = scalar_lea.sflag [#allocation9], 1
    %23 = vsyncpa %s22, 0
    %24 = vsyncpa [#allocation12], 0
    %25 = vsyncpa [#allocation15], 0
    %26 = vsyncpa [#allocation4], 0
    %s27 = scalar_lea.sflag [#allocation4], 1
    %28 = vsyncpa %s27, 0
    %29 = vsyncpa [#allocation19], 0
    %s30 = scalar_lea.sflag [#allocation19], 1
    %31 = vsyncpa %s30, 0
    loop: start=0, step=1, limit=4
    $region2: #{forward.5} parent=1 // loop_pre_header
      _
    $region3: #{forward.5} parent=1 // loop_header
      %s33 = sphi 0, %s37
      %p34 = scmp.ge.s32.totalorder %s33, 4
      %s43 = sphi 0, %s45
      %s46 = sphi 0, %s43
      %s47 = sphi 0, %s46
      %s63 = sphi 0, %s47
      %s67 = sphi 0, %s67
      %s69 = sphi 0, %s67
      %s70 = sphi 0, %s69
      %s84 = sphi 0, %s70
      %s88 = sphi 0, %s88
      %s90 = sphi 0, %s88
      %s91 = sphi 0, %s90
      %s105 = sphi 0, %s91
      %s111 = sphi 0, %s113
      %s114 = sphi 0, %s111
      %s115 = sphi 0, %s114
      %s131 = sphi 0, %s115
      %s135 = sphi 0, %s135
      %s137 = sphi 0, %s135
      %s138 = sphi 0, %s137
      %s152 = sphi 0, %s138
      %s156 = sphi 0, %s156
      %s158 = sphi 0, %s156
      %s159 = sphi 0, %s158
      %s173 = sphi 0, %s159
      %s177 = sphi 0, %s177
      %s179 = sphi 0, %s177
      %s180 = sphi 0, %s179
      %s194 = sphi 0, %s180
      %s198 = sphi 0, %s198
      %s200 = sphi 0, %s198
      %s201 = sphi 0, %s200
      %s215 = sphi 0, %s201
      %s219 = sphi 0, %s219
      %s221 = sphi 0, %s219
      %s222 = sphi 0, %s221
      %s236 = sphi 0, %s222
      %s242 = sphi 0, %s244
      %s245 = sphi 0, %s242
      %s246 = sphi 0, %s245
      %s262 = sphi 0, %s246
      %s268 = sphi 0, %s270
      %s271 = sphi 0, %s268
      %s272 = sphi 0, %s271
      %s288 = sphi 0, %s272
      %s294 = sphi 0, %s296
      %s297 = sphi 0, %s294
      %s298 = sphi 0, %s297
      %s314 = sphi 0, %s298
    $region4: #{forward.5} parent=1 // loop_header_branch
      %36 = sbr.rel (%p34) target = $region8
    $region5: #{forward.5} parent=1 // loop_body
      %s38 = ssub.s32 %s33, 1
      %s39 = ssub.s32 %s33, 2
      %s40 = sadd.s32 %s33, 1
      %s41 = ssub.s32 %s33, %s40
      %p42 = scmp.eq.s32.totalorder %s41, 0
      %s44 = sadd.s32 %s43, 1
      %s45 = scalar_select %p42, %s43, %s44
      %p48 = pneg %p42
      %p49 = scmp.eq.s32.totalorder %s33, 1
      %p50 = por %p48, %p49
      %p51 = scmp.ne.s32.totalorder %s43, %s46
      %p52 = scmp.eq.s32.totalorder %s33, 0
      %p53 = por %p51, %p52
      %p54 = scmp.ne.s32.totalorder %s43, %s46
      %p55 = scmp.eq.s32.totalorder %s38, 1
      %p56 = por %p54, %p55
      %p57 = scmp.ne.s32.totalorder %s46, %s47
      %p58 = scmp.eq.s32.totalorder %s38, 0
      %p59 = por %p57, %p58
      %p60 = scmp.ne.s32.totalorder %s46, %s47
      %p61 = scmp.eq.s32.totalorder %s39, 1
      %p62 = por %p60, %p61
      %p64 = scmp.ne.s32.totalorder %s47, %s63
      %p65 = scmp.eq.s32.totalorder %s39, 0
      %p66 = por %p64, %p65
      %s68 = sadd.s32 %s67, 1
      %p71 = scmp.eq.s32.totalorder %s33, 1
      %p72 = scmp.ne.s32.totalorder %s67, %s69
      %p73 = scmp.eq.s32.totalorder %s33, 0
      %p74 = por %p72, %p73
      %p75 = scmp.ne.s32.totalorder %s67, %s69
      %p76 = scmp.eq.s32.totalorder %s38, 1
      %p77 = por %p75, %p76
      %p78 = scmp.ne.s32.totalorder %s69, %s70
      %p79 = scmp.eq.s32.totalorder %s38, 0
      %p80 = por %p78, %p79
      %p81 = scmp.ne.s32.totalorder %s69, %s70
      %p82 = scmp.eq.s32.totalorder %s39, 1
      %p83 = por %p81, %p82
      %p85 = scmp.ne.s32.totalorder %s70, %s84
      %p86 = scmp.eq.s32.totalorder %s39, 0
      %p87 = por %p85, %p86
      %s89 = sadd.s32 %s88, 1
      %p92 = scmp.eq.s32.totalorder %s33, 1
      %p93 = scmp.ne.s32.totalorder %s88, %s90
      %p94 = scmp.eq.s32.totalorder %s33, 0
      %p95 = por %p93, %p94
      %p96 = scmp.ne.s32.totalorder %s88, %s90
      %p97 = scmp.eq.s32.totalorder %s38, 1
      %p98 = por %p96, %p97
      %p99 = scmp.ne.s32.totalorder %s90, %s91
      %p100 = scmp.eq.s32.totalorder %s38, 0
      %p101 = por %p99, %p100
      %p102 = scmp.ne.s32.totalorder %s90, %s91
      %p103 = scmp.eq.s32.totalorder %s39, 1
      %p104 = por %p102, %p103
      %p106 = scmp.ne.s32.totalorder %s91, %s105
      %p107 = scmp.eq.s32.totalorder %s39, 0
      %p108 = por %p106, %p107
      %s109 = ssub.s32 %s33, %s40
      %p110 = scmp.eq.s32.totalorder %s109, 0
      %s112 = sadd.s32 %s111, 1
      %s113 = scalar_select %p110, %s111, %s112
      %p116 = pneg %p110
      %p117 = scmp.eq.s32.totalorder %s33, 1
      %p118 = por %p116, %p117
      %p119 = scmp.ne.s32.totalorder %s111, %s114
      %p120 = scmp.eq.s32.totalorder %s33, 0
      %p121 = por %p119, %p120
      %p122 = scmp.ne.s32.totalorder %s111, %s114
      %p123 = scmp.eq.s32.totalorder %s38, 1
      %p124 = por %p122, %p123
      %p125 = scmp.ne.s32.totalorder %s114, %s115
      %p126 = scmp.eq.s32.totalorder %s38, 0
      %p127 = por %p125, %p126
      %p128 = scmp.ne.s32.totalorder %s114, %s115
      %p129 = scmp.eq.s32.totalorder %s39, 1
      %p130 = por %p128, %p129
      %p132 = scmp.ne.s32.totalorder %s115, %s131
      %p133 = scmp.eq.s32.totalorder %s39, 0
      %p134 = por %p132, %p133
      %s136 = sadd.s32 %s135, 1
      %p139 = scmp.eq.s32.totalorder %s33, 1
      %p140 = scmp.ne.s32.totalorder %s135, %s137
      %p141 = scmp.eq.s32.totalorder %s33, 0
      %p142 = por %p140, %p141
      %p143 = scmp.ne.s32.totalorder %s135, %s137
      %p144 = scmp.eq.s32.totalorder %s38, 1
      %p145 = por %p143, %p144
      %p146 = scmp.ne.s32.totalorder %s137, %s138
      %p147 = scmp.eq.s32.totalorder %s38, 0
      %p148 = por %p146, %p147
      %p149 = scmp.ne.s32.totalorder %s137, %s138
      %p150 = scmp.eq.s32.totalorder %s39, 1
      %p151 = por %p149, %p150
      %p153 = scmp.ne.s32.totalorder %s138, %s152
      %p154 = scmp.eq.s32.totalorder %s39, 0
      %p155 = por %p153, %p154
      %s157 = sadd.s32 %s156, 1
      %p160 = scmp.eq.s32.totalorder %s33, 1
      %p161 = scmp.ne.s32.totalorder %s156, %s158
      %p162 = scmp.eq.s32.totalorder %s33, 0
      %p163 = por %p161, %p162
      %p164 = scmp.ne.s32.totalorder %s156, %s158
      %p165 = scmp.eq.s32.totalorder %s38, 1
      %p166 = por %p164, %p165
      %p167 = scmp.ne.s32.totalorder %s158, %s159
      %p168 = scmp.eq.s32.totalorder %s38, 0
      %p169 = por %p167, %p168
      %p170 = scmp.ne.s32.totalorder %s158, %s159
      %p171 = scmp.eq.s32.totalorder %s39, 1
      %p172 = por %p170, %p171
      %p174 = scmp.ne.s32.totalorder %s159, %s173
      %p175 = scmp.eq.s32.totalorder %s39, 0
      %p176 = por %p174, %p175
      %s178 = sadd.s32 %s177, 1
      %p181 = scmp.eq.s32.totalorder %s33, 1
      %p182 = scmp.ne.s32.totalorder %s177, %s179
      %p183 = scmp.eq.s32.totalorder %s33, 0
      %p184 = por %p182, %p183
      %p185 = scmp.ne.s32.totalorder %s177, %s179
      %p186 = scmp.eq.s32.totalorder %s38, 1
      %p187 = por %p185, %p186
      %p188 = scmp.ne.s32.totalorder %s179, %s180
      %p189 = scmp.eq.s32.totalorder %s38, 0
      %p190 = por %p188, %p189
      %p191 = scmp.ne.s32.totalorder %s179, %s180
      %p192 = scmp.eq.s32.totalorder %s39, 1
      %p193 = por %p191, %p192
      %p195 = scmp.ne.s32.totalorder %s180, %s194
      %p196 = scmp.eq.s32.totalorder %s39, 0
      %p197 = por %p195, %p196
      %s199 = sadd.s32 %s198, 1
      %p202 = scmp.eq.s32.totalorder %s33, 1
      %p203 = scmp.ne.s32.totalorder %s198, %s200
      %p204 = scmp.eq.s32.totalorder %s33, 0
      %p205 = por %p203, %p204
      %p206 = scmp.ne.s32.totalorder %s198, %s200
      %p207 = scmp.eq.s32.totalorder %s38, 1
      %p208 = por %p206, %p207
      %p209 = scmp.ne.s32.totalorder %s200, %s201
      %p210 = scmp.eq.s32.totalorder %s38, 0
      %p211 = por %p209, %p210
      %p212 = scmp.ne.s32.totalorder %s200, %s201
      %p213 = scmp.eq.s32.totalorder %s39, 1
      %p214 = por %p212, %p213
      %p216 = scmp.ne.s32.totalorder %s201, %s215
      %p217 = scmp.eq.s32.totalorder %s39, 0
      %p218 = por %p216, %p217
      %s220 = sadd.s32 %s219, 1
      %p223 = scmp.eq.s32.totalorder %s33, 1
      %p224 = scmp.ne.s32.totalorder %s219, %s221
      %p225 = scmp.eq.s32.totalorder %s33, 0
      %p226 = por %p224, %p225
      %p227 = scmp.ne.s32.totalorder %s219, %s221
      %p228 = scmp.eq.s32.totalorder %s38, 1
      %p229 = por %p227, %p228
      %p230 = scmp.ne.s32.totalorder %s221, %s222
      %p231 = scmp.eq.s32.totalorder %s38, 0
      %p232 = por %p230, %p231
      %p233 = scmp.ne.s32.totalorder %s221, %s222
      %p234 = scmp.eq.s32.totalorder %s39, 1
      %p235 = por %p233, %p234
      %p237 = scmp.ne.s32.totalorder %s222, %s236
      %p238 = scmp.eq.s32.totalorder %s39, 0
      %p239 = por %p237, %p238
      %s240 = ssub.s32 %s33, %s40
      %p241 = scmp.eq.s32.totalorder %s240, 0
      %s243 = sadd.s32 %s242, 1
      %s244 = scalar_select %p241, %s242, %s243
      %p247 = pneg %p241
      %p248 = scmp.eq.s32.totalorder %s33, 1
      %p249 = por %p247, %p248
      %p250 = scmp.ne.s32.totalorder %s242, %s245
      %p251 = scmp.eq.s32.totalorder %s33, 0
      %p252 = por %p250, %p251
      %p253 = scmp.ne.s32.totalorder %s242, %s245
      %p254 = scmp.eq.s32.totalorder %s38, 1
      %p255 = por %p253, %p254
      %p256 = scmp.ne.s32.totalorder %s245, %s246
      %p257 = scmp.eq.s32.totalorder %s38, 0
      %p258 = por %p256, %p257
      %p259 = scmp.ne.s32.totalorder %s245, %s246
      %p260 = scmp.eq.s32.totalorder %s39, 1
      %p261 = por %p259, %p260
      %p263 = scmp.ne.s32.totalorder %s246, %s262
      %p264 = scmp.eq.s32.totalorder %s39, 0
      %p265 = por %p263, %p264
      %s266 = ssub.s32 %s33, %s40
      %p267 = scmp.eq.s32.totalorder %s266, 0
      %s269 = sadd.s32 %s268, 1
      %s270 = scalar_select %p267, %s268, %s269
      %p273 = pneg %p267
      %p274 = scmp.eq.s32.totalorder %s33, 1
      %p275 = por %p273, %p274
      %p276 = scmp.ne.s32.totalorder %s268, %s271
      %p277 = scmp.eq.s32.totalorder %s33, 0
      %p278 = por %p276, %p277
      %p279 = scmp.ne.s32.totalorder %s268, %s271
      %p280 = scmp.eq.s32.totalorder %s38, 1
      %p281 = por %p279, %p280
      %p282 = scmp.ne.s32.totalorder %s271, %s272
      %p283 = scmp.eq.s32.totalorder %s38, 0
      %p284 = por %p282, %p283
      %p285 = scmp.ne.s32.totalorder %s271, %s272
      %p286 = scmp.eq.s32.totalorder %s39, 1
      %p287 = por %p285, %p286
      %p289 = scmp.ne.s32.totalorder %s272, %s288
      %p290 = scmp.eq.s32.totalorder %s39, 0
      %p291 = por %p289, %p290
      %s292 = ssub.s32 %s33, %s40
      %p293 = scmp.eq.s32.totalorder %s292, 0
      %s295 = sadd.s32 %s294, 1
      %s296 = scalar_select %p293, %s294, %s295
      %p299 = pneg %p293
      %p300 = scmp.eq.s32.totalorder %s33, 1
      %p301 = por %p299, %p300
      %p302 = scmp.ne.s32.totalorder %s294, %s297
      %p303 = scmp.eq.s32.totalorder %s33, 0
      %p304 = por %p302, %p303
      %p305 = scmp.ne.s32.totalorder %s294, %s297
      %p306 = scmp.eq.s32.totalorder %s38, 1
      %p307 = por %p305, %p306
      %p308 = scmp.ne.s32.totalorder %s297, %s298
      %p309 = scmp.eq.s32.totalorder %s38, 0
      %p310 = por %p308, %p309
      %p311 = scmp.ne.s32.totalorder %s297, %s298
      %p312 = scmp.eq.s32.totalorder %s39, 1
      %p313 = por %p311, %p312
      %p315 = scmp.ne.s32.totalorder %s298, %s314
      %p316 = scmp.eq.s32.totalorder %s39, 0
      %p317 = por %p315, %p316
      %p318 = scmp.le.s32.totalorder 1, %s33
      %p319 = scmp.lt.s32.totalorder %s33, 3
      %p320 = pnand %p318, %p319
      %p321 = pneg %p320
      // Predicated region
      $region9: #{forward.5} parent=5 // pred_check
        _
      $region10: #{forward.5} parent=5 // pred_check_branch
        %323 = sbr.rel (%p320) target = $region12
      $region11: #{forward.5} parent=5 // pred_region
        %s324 = ssub.s32 %s33, 1
        // Predicated region
        $region13: #{forward.5} parent=11 // pred_check
          %p325 = pneg %p80
        $region14: #{forward.5} parent=11 // pred_check_branch
          %327 = sbr.rel (%p325) target = $region16
        $region15: #{forward.5} parent=11 // pred_region
          %s329 = ssub.s32 64, 64
          %330 = vsyncadd [#allocation6], %s329
          %s332 = sshll.u32 [#allocation5], 4
          %s333 = int_to_ptr.vmem [resolvable:$true] %s332
          %335 = dma.hbm_to_vmem [thread:$0]  %s1, 64, %s333, [#allocation6]
        $region16: #{forward.5} parent=11 // pred_fallthru
          _
        // Predicated region
        $region17: #{forward.5} parent=11 // pred_check
          %p336 = pneg %p101
        $region18: #{forward.5} parent=11 // pred_check_branch
          %338 = sbr.rel (%p336) target = $region20
        $region19: #{forward.5} parent=11 // pred_region
          %s340 = ssub.s32 64, 64
          %341 = vsyncadd [#allocation6], %s340
          %s343 = sshll.u32 [#allocation7], 4
          %s344 = int_to_ptr.vmem [resolvable:$true] %s343
          %346 = dma.hbm_to_vmem [thread:$0]  %s2, 64, %s344, [#allocation6]
        $region20: #{forward.5} parent=11 // pred_fallthru
          _
        // Predicated region
        $region21: #{forward.5} parent=11 // pred_check
          %p347 = pneg %p148
        $region22: #{forward.5} parent=11 // pred_check_branch
          %349 = sbr.rel (%p347) target = $region24
        $region23: #{forward.5} parent=11 // pred_region
          %s351 = ssub.s32 64, 64
          %352 = vsyncadd [#allocation9], %s351
          %s354 = sshll.u32 [#allocation10], 4
          %s355 = int_to_ptr.vmem [resolvable:$true] %s354
          %357 = dma.hbm_to_vmem [thread:$0]  %s4, 64, %s355, [#allocation9]
        $region24: #{forward.5} parent=11 // pred_fallthru
          _
        // Predicated region
        $region25: #{forward.5} parent=11 // pred_check
          %p358 = pneg %p169
        $region26: #{forward.5} parent=11 // pred_check_branch
          %360 = sbr.rel (%p358) target = $region28
        $region27: #{forward.5} parent=11 // pred_region
          %s362 = ssub.s32 16, 16
          %363 = vsyncadd [#allocation12], %s362
          %s365 = sshll.u32 [#allocation11], 4
          %s366 = int_to_ptr.vmem [resolvable:$true] %s365
          %368 = dma.hbm_to_vmem [thread:$0]  %s5, 16, %s366, [#allocation12]
        $region28: #{forward.5} parent=11 // pred_fallthru
          _
        // Predicated region
        $region29: #{forward.5} parent=11 // pred_check
          %p369 = pneg %p190
        $region30: #{forward.5} parent=11 // pred_check_branch
          %371 = sbr.rel (%p369) target = $region32
        $region31: #{forward.5} parent=11 // pred_region
          %s373 = ssub.s32 256, 256
          %374 = vsyncadd [#allocation12], %s373
          %s375 = sshll.u32 [#allocation13], 4
          %s376 = int_to_ptr.vmem [resolvable:$true] %s375
          %381 = dma.hbm_to_vmem [thread:$0]  %s6, 256, %s376, [#allocation12], 128, 128, 8
        $region32: #{forward.5} parent=11 // pred_fallthru
          _
        // Predicated region
        $region33: #{forward.5} parent=11 // pred_check
          %p382 = pneg %p211
        $region34: #{forward.5} parent=11 // pred_check_branch
          %384 = sbr.rel (%p382) target = $region36
        $region35: #{forward.5} parent=11 // pred_region
          %s386 = ssub.s32 16, 16
          %387 = vsyncadd [#allocation15], %s386
          %s389 = sshll.u32 [#allocation14], 4
          %s390 = int_to_ptr.vmem [resolvable:$true] %s389
          %392 = dma.hbm_to_vmem [thread:$0]  %s7, 16, %s390, [#allocation15]
        $region36: #{forward.5} parent=11 // pred_fallthru
          _
        // Predicated region
        $region37: #{forward.5} parent=11 // pred_check
          %p393 = pneg %p232
        $region38: #{forward.5} parent=11 // pred_check_branch
          %395 = sbr.rel (%p393) target = $region40
        $region39: #{forward.5} parent=11 // pred_region
          %s397 = ssub.s32 768, 768
          %398 = vsyncadd [#allocation15], %s397
          %s399 = sshll.u32 [#allocation16], 4
          %s400 = int_to_ptr.vmem [resolvable:$true] %s399
          %405 = dma.hbm_to_vmem [thread:$0]  %s8, 768, %s400, [#allocation15], 192, 192, 12
        $region40: #{forward.5} parent=11 // pred_fallthru
          _
      $region12: #{forward.5} parent=5 // pred_fallthru
        _
      %p406 = scmp.lt.s32.totalorder %s33, 2
      // Predicated region
      $region41: #{forward.5} parent=5 // pred_check
        %p407 = pneg %p406
      $region42: #{forward.5} parent=5 // pred_check_branch
        %409 = sbr.rel (%p407) target = $region44
      $region43: #{forward.5} parent=5 // pred_region
        // Predicated region
        $region45: #{forward.5} parent=43 // pred_check
          %p410 = pneg %p53
        $region46: #{forward.5} parent=43 // pred_check_branch
          %412 = sbr.rel (%p410) target = $region48
        $region47: #{forward.5} parent=43 // pred_region
          %s413 = sand.u32 %s43, 1
          %s414 = scalar_lea.sflag [#allocation3], %s413
          %s415 = sand.u32 %s43, 1
          %s416 = smul.addr %s415, 8
          %s417 = scalar_lea.vmem [#allocation2], %s416
          %s419 = ssub.s32 128, 128
          %420 = vsyncadd %s414, %s419
          %s421 = smul.addr %s33, 128
          %s422 = scalar_lea.hbm %s0, %s421
          %s424 = sshll.u32 %s417, 4
          %s425 = int_to_ptr.vmem [resolvable:$true] %s424
          %427 = dma.hbm_to_vmem [thread:$0]  %s422, 128, %s425, %s414
        $region48: #{forward.5} parent=43 // pred_fallthru
          _
        // Predicated region
        $region49: #{forward.5} parent=43 // pred_check
          %p428 = pneg %p121
        $region50: #{forward.5} parent=43 // pred_check_branch
          %430 = sbr.rel (%p428) target = $region52
        $region51: #{forward.5} parent=43 // pred_region
          %s431 = sand.u32 %s33, 1
          %s432 = scalar_lea.sflag [#allocation9], %s431
          %s433 = sand.u32 %s111, 1
          %s434 = smul.addr %s433, 8
          %s435 = scalar_lea.vmem [#allocation8], %s434
          %s437 = ssub.s32 128, 128
          %438 = vsyncadd %s432, %s437
          %s439 = smul.addr %s33, 128
          %s440 = scalar_lea.hbm %s3, %s439
          %s442 = sshll.u32 %s435, 4
          %s443 = int_to_ptr.vmem [resolvable:$true] %s442
          %445 = dma.hbm_to_vmem [thread:$0]  %s440, 128, %s443, %s432
        $region52: #{forward.5} parent=43 // pred_fallthru
          _
      $region44: #{forward.5} parent=5 // pred_fallthru
        _
      %p446 = scmp.le.s32.totalorder 1, %s33
      %p447 = scmp.lt.s32.totalorder %s33, 3
      %p448 = pnand %p446, %p447
      %p449 = pneg %p448
      // Predicated region
      $region53: #{forward.5} parent=5 // pred_check
        _
      $region54: #{forward.5} parent=5 // pred_check_branch
        %451 = sbr.rel (%p448) target = $region56
      $region55: #{forward.5} parent=5 // pred_region
        %s452 = ssub.s32 %s33, 1
        %s453 = sand.u32 %s46, 1
        %s454 = scalar_lea.sflag [#allocation3], %s453
        %s455 = sand.u32 %s46, 1
        %s456 = smul.addr %s455, 8
        %s457 = scalar_lea.vmem [#allocation2], %s456
        // Predicated region
        $region57: #{forward.5} parent=55 // pred_check
          %p458 = pneg %p59
        $region58: #{forward.5} parent=55 // pred_check_branch
          %460 = sbr.rel (%p458) target = $region60
        $region59: #{forward.5} parent=55 // pred_region
          %461 = dma.done %s454, 128
        $region60: #{forward.5} parent=55 // pred_fallthru
          _
        // Predicated region
        $region61: #{forward.5} parent=55 // pred_check
          %p462 = pneg %p80
        $region62: #{forward.5} parent=55 // pred_check_branch
          %464 = sbr.rel (%p462) target = $region64
        $region63: #{forward.5} parent=55 // pred_region
          %465 = dma.done [#allocation6], 64
        $region64: #{forward.5} parent=55 // pred_fallthru
          _
        // Predicated region
        $region65: #{forward.5} parent=55 // pred_check
          %p466 = pneg %p101
        $region66: #{forward.5} parent=55 // pred_check_branch
          %468 = sbr.rel (%p466) target = $region68
        $region67: #{forward.5} parent=55 // pred_region
          %469 = dma.done [#allocation6], 64
        $region68: #{forward.5} parent=55 // pred_fallthru
          _
        %s470 = sand.u32 %s38, 1
        %s471 = scalar_lea.sflag [#allocation9], %s470
        %s472 = sand.u32 %s114, 1
        %s473 = smul.addr %s472, 8
        %s474 = scalar_lea.vmem [#allocation8], %s473
        // Predicated region
        $region69: #{forward.5} parent=55 // pred_check
          %p475 = pneg %p127
        $region70: #{forward.5} parent=55 // pred_check_branch
          %477 = sbr.rel (%p475) target = $region72
        $region71: #{forward.5} parent=55 // pred_region
          %478 = dma.done %s471, 128
        $region72: #{forward.5} parent=55 // pred_fallthru
          _
        // Predicated region
        $region73: #{forward.5} parent=55 // pred_check
          %p479 = pneg %p148
        $region74: #{forward.5} parent=55 // pred_check_branch
          %481 = sbr.rel (%p479) target = $region76
        $region75: #{forward.5} parent=55 // pred_region
          %482 = dma.done [#allocation9], 64
        $region76: #{forward.5} parent=55 // pred_fallthru
          _
        // Predicated region
        $region77: #{forward.5} parent=55 // pred_check
          %p483 = pneg %p169
        $region78: #{forward.5} parent=55 // pred_check_branch
          %485 = sbr.rel (%p483) target = $region80
        $region79: #{forward.5} parent=55 // pred_region
          %486 = dma.done [#allocation12], 16
        $region80: #{forward.5} parent=55 // pred_fallthru
          _
        // Predicated region
        $region81: #{forward.5} parent=55 // pred_check
          %p487 = pneg %p190
        $region82: #{forward.5} parent=55 // pred_check_branch
          %489 = sbr.rel (%p487) target = $region84
        $region83: #{forward.5} parent=55 // pred_region
          %490 = dma.done [#allocation12], 256
        $region84: #{forward.5} parent=55 // pred_fallthru
          _
        // Predicated region
        $region85: #{forward.5} parent=55 // pred_check
          %p491 = pneg %p211
        $region86: #{forward.5} parent=55 // pred_check_branch
          %493 = sbr.rel (%p491) target = $region88
        $region87: #{forward.5} parent=55 // pred_region
          %494 = dma.done [#allocation15], 16
        $region88: #{forward.5} parent=55 // pred_fallthru
          _
        // Predicated region
        $region89: #{forward.5} parent=55 // pred_check
          %p495 = pneg %p232
        $region90: #{forward.5} parent=55 // pred_check_branch
          %497 = sbr.rel (%p495) target = $region92
        $region91: #{forward.5} parent=55 // pred_region
          %498 = dma.done [#allocation15], 768
        $region92: #{forward.5} parent=55 // pred_fallthru
          _
        %s499 = sand.u32 %s46, 1
        %s500 = scalar_lea.sflag [#allocation3], %s499
        %s501 = sand.u32 %s46, 1
        %s502 = smul.addr %s501, 8
        %s503 = scalar_lea.vmem [#allocation2], %s502
        %p504 = pneg %p59
        %p505 = pneg %p56
        %p506 = pneg %p80
        %p507 = pneg %p77
        %p508 = pneg %p101
        %p509 = pneg %p98
        %s510 = sand.u32 %s38, 1
        %s511 = scalar_lea.sflag [#allocation9], %s510
        %s512 = sand.u32 %s114, 1
        %s513 = smul.addr %s512, 8
        %s514 = scalar_lea.vmem [#allocation8], %s513
        %p515 = pneg %p127
        %p516 = pneg %p124
        %p517 = pneg %p148
        %p518 = pneg %p145
        %p519 = pneg %p169
        %p520 = pneg %p166
        %p521 = pneg %p190
        %p522 = pneg %p187
        %p523 = pneg %p211
        %p524 = pneg %p208
        %p525 = pneg %p232
        %p526 = pneg %p229
        %p527 = pneg %p258
        %p528 = pneg %p255
        %s529 = sand.u32 %s245, 1
        %s530 = scalar_lea.sflag [#allocation4], %s529
        %s531 = sand.u32 %s245, 1
        %s532 = smul.addr %s531, 8
        %s533 = scalar_lea.vmem [#allocation17], %s532
        %p534 = pneg %p284
        %p535 = pneg %p281
        %s536 = sand.u32 %s38, 1
        %s537 = scalar_lea.sflag [#allocation19], %s536
        %s538 = sand.u32 %s271, 1
        %s539 = smul.addr %s538, 16
        %s540 = scalar_lea.vmem [#allocation18], %s539
        %p541 = pneg %p310
        %p542 = pneg %p307
        %s543 = sand.u32 %s38, 1
        %s544 = scalar_lea.sflag [#allocation19], %s543
        %s545 = sand.u32 %s297, 1
        %s546 = smul.addr %s545, 16
        %s547 = scalar_lea.vmem [#allocation20], %s546
        %v549 = vld [vmem:[%s457] sm:$0xff]
        %v550 = vld [vmem:[#allocation7] sm:$0x7]
        %v551 = vpack.c.bf16 %v549, %v549
        %v552 = vld [vmem:[#allocation5] sm:$0xf]
        %v553 = vlaneseq
        %v554 = vshrl.u32 %v553, 7
        %v555 = vsub.s32 0, %v554
        %v556 = vrot.slane %v550, %v555
        %vm557 = vcmask 64512
        %v559 = vsel %vm557, %v551, 0
        %vm561 = vcmask 1043456
        %v563 = vsel %vm561, %v552, 0
        %565 = vmatprep.subr.bf16.mxu0 0
        %566 = vmatpush1.bf16.msra.mxu0 %v563
        %567 = vmatprep.subr.bf16.mxu0 0
        %568 = vmatpush1.bf16.msra.mxu0 0
        %569 = vmatprep.subr.bf16.mxu0 0
        %570 = vmatpush1.bf16.msra.mxu0 0
        %571 = vmatprep.subr.bf16.mxu0 0
        %572 = vmatpush1.bf16.msra.mxu0 0
        %573 = vmatprep.subr.bf16.mxu0 0
        %574 = vmatpush1.bf16.msra.mxu0 0
        %575 = vmatprep.subr.bf16.mxu0 0
        %576 = vmatpush1.bf16.msra.mxu0 0
        %577 = vmatprep.subr.bf16.mxu0 0
        %578 = vmatpush1.bf16.msra.mxu0 0
        %579 = vmatprep.subr.bf16.mxu0 0
        %580 = vmatpush1.bf16.msra.mxu0 0
        %581 = vmatprep.subr.bf16.mxu0 0
        %582 = vmatpush1.bf16.msra.mxu0 0
        %583 = vmatprep.subr.bf16.mxu0 0
        %584 = vmatpush1.bf16.msra.mxu0 0
        %585 = vmatprep.subr.bf16.mxu0 0
        %586 = vmatpush1.bf16.msra.mxu0 0
        %587 = vmatprep.subr.bf16.mxu0 0
        %588 = vmatpush1.bf16.msra.mxu0 0
        %589 = vmatprep.subr.bf16.mxu0 0
        %590 = vmatpush1.bf16.msra.mxu0 0
        %591 = vmatprep.subr.bf16.mxu0 0
        %592 = vmatpush1.bf16.msra.mxu0 0
        %593 = vmatprep.subr.bf16.mxu0 0
        %594 = vmatpush1.bf16.msra.mxu0 0
        %595 = vmatprep.subr.bf16.mxu0 0
        %596 = vmatpush1.bf16.msra.mxu0 0
        %597 = vmatprep.mubr.bf16.mxu0 0
        %598 = vmatmul.mubr.bf16.gmra.mrb[0].mxu0 %v559
        %v599 = vpop.f32.mrb[0].mxu0
        %v600 = vadd.f32 %v556, %v599
        %v601 = vpop.f32.mrb[0].mxu0
        %v602 = vpop.f32.mrb[0].mxu0
        %v603 = vpop.f32.mrb[0].mxu0
        %604 = vdwg.mxu0
        %vm605 = vcmask 261120
        %v606 = vsel %vm605, %v600, 0.0
        %607 = vadd.xlane.f32.xlu0 %v606
        %v608 = vpop.xlane.xlu0 %607
        %v609 = vrcp.pop 32.0
        %v610 = vmul.f32 %v608, %v609
        %v611 = vsub.f32 %v600, %v610
        %v612 = vmul.f32 %v611, %v611
        %v613 = vsel %vm605, %v612, 0.0
        %614 = vadd.xlane.f32.xlu0 %v613
        %v615 = vpop.xlane.xlu0 %614
        %v616 = vmul.f32 %v615, %v609
        %v617 = vadd.f32 %v616, 1e-05
        %v618 = vrsqrt.pop %v617
        %v619 = vmul.f32 %v611, %v618
        %v620 = vlaneseq
        %v621 = vshrl.u32 %v620, 7
        %v622 = vsub.s32 1, %v621
        %v623 = vrot.slane %v550, %v622
        %v624 = vmul.f32 %v619, %v623
        %v625 = vlaneseq
        %v626 = vshrl.u32 %v625, 7
        %v627 = vsub.s32 2, %v626
        %v628 = vrot.slane %v550, %v627
        %v629 = vadd.f32 %v624, %v628
        %v630 = vsub.f32 0.0, %v629
        %v631 = vmul.f32 %v630, 1.442695
        %v632 = vpow.pop %v631
        %v633 = vadd.f32 %v632, 1.0
        %v634 = vrcp.pop %v633
        %v635 = vmul.f32 %v629, %v634
        %v636 = vld [vmem:[%s474] sm:$0xff]
        %v637 = vld [vmem:[#allocation10] sm:$0x7]
        %v638 = vld [vmem:[#allocation11] sm:$0x1]
        %v640 = vlaneseq
        %v641 = vshrl.u32 %v640, 7
        %v642 = vsub.s32 0, %v641
        %v643 = vrot.slane %v638, %v642
        %vm645 = vcmask 23552
        %v647 = vsel %vm645, %v636, 0
        %vm649 = vcmask 1042432
        %v651 = vsel %vm649, %v637, 0
        %653 = vmatprep.subr.mxu0 0.0
        %654 = vmatpush1.msra.mxu0 %v651
        %655 = vmatprep.subr.mxu0 0.0
        %656 = vmatpush1.msra.mxu0 0.0
        %657 = vmatprep.subr.mxu0 0.0
        %658 = vmatpush1.msra.mxu0 0.0
        %659 = vmatprep.subr.mxu0 0.0
        %660 = vmatpush1.msra.mxu0 0.0
        %661 = vmatprep.subr.mxu0 0.0
        %662 = vmatpush1.msra.mxu0 0.0
        %663 = vmatprep.subr.mxu0 0.0
        %664 = vmatpush1.msra.mxu0 0.0
        %665 = vmatprep.subr.mxu0 0.0
        %666 = vmatpush1.msra.mxu0 0.0
        %667 = vmatprep.subr.mxu0 0.0
        %668 = vmatpush1.msra.mxu0 0.0
        %669 = vmatprep.subr.mxu0 0.0
        %670 = vmatpush1.msra.mxu0 0.0
        %671 = vmatprep.subr.mxu0 0.0
        %672 = vmatpush1.msra.mxu0 0.0
        %673 = vmatprep.subr.mxu0 0.0
        %674 = vmatpush1.msra.mxu0 0.0
        %675 = vmatprep.subr.mxu0 0.0
        %676 = vmatpush1.msra.mxu0 0.0
        %677 = vmatprep.subr.mxu0 0.0
        %678 = vmatpush1.msra.mxu0 0.0
        %679 = vmatprep.subr.mxu0 0.0
        %680 = vmatpush1.msra.mxu0 0.0
        %681 = vmatprep.subr.mxu0 0.0
        %682 = vmatpush1.msra.mxu0 0.0
        %683 = vmatprep.subr.mxu0 0.0
        %684 = vmatpush1.msra.mxu0 0.0
        %685 = vmatprep.subr.mxu0 0.0
        %686 = vmatpush1.msra.mxu0 0.0
        %687 = vmatprep.subr.mxu0 0.0
        %688 = vmatpush1.msra.mxu0 0.0
        %689 = vmatprep.subr.mxu0 0.0
        %690 = vmatpush1.msra.mxu0 0.0
        %691 = vmatprep.subr.mxu0 0.0
        %692 = vmatpush1.msra.mxu0 0.0
        %693 = vmatprep.subr.mxu0 0.0
        %694 = vmatpush1.msra.mxu0 0.0
        %695 = vmatprep.subr.mxu0 0.0
        %696 = vmatpush1.msra.mxu0 0.0
        %697 = vmatprep.subr.mxu0 0.0
        %698 = vmatpush1.msra.mxu0 0.0
        %699 = vmatprep.subr.mxu0 0.0
        %700 = vmatpush1.msra.mxu0 0.0
        %701 = vmatprep.subr.mxu0 0.0
        %702 = vmatpush1.msra.mxu0 0.0
        %703 = vmatprep.subr.mxu0 0.0
        %704 = vmatpush1.msra.mxu0 0.0
        %705 = vmatprep.subr.mxu0 0.0
        %706 = vmatpush1.msra.mxu0 0.0
        %707 = vmatprep.subr.mxu0 0.0
        %708 = vmatpush1.msra.mxu0 0.0
        %709 = vmatprep.subr.mxu0 0.0
        %710 = vmatpush1.msra.mxu0 0.0
        %711 = vmatprep.subr.mxu0 0.0
        %712 = vmatpush1.msra.mxu0 0.0
        %713 = vmatprep.subr.mxu0 0.0
        %714 = vmatpush1.msra.mxu0 0.0
        %715 = vmatprep.subr.mxu0 0.0
        %716 = vmatpush1.msra.mxu0 0.0
        %717 = vmatprep.mubr.f32.mxu0 0.0
        %718 = vmatmul.mubr.f32.gmra.mrb[0].mxu0 %v647
        %v719 = vpop.f32.mrb[0].mxu0
        %v720 = vadd.f32 %v643, %v719
        %v721 = vpop.f32.mrb[0].mxu0
        %722 = vdwg.mxu0
        %v723 = vsub.f32 0.0, %v720
        %v724 = vmul.f32 %v723, 1.442695
        %v725 = vpow.pop %v724
        %v726 = vadd.f32 %v725, 1.0
        %v727 = vrcp.pop %v726
        %v728 = vmul.f32 %v720, %v727
        %v729 = vld [vmem:[#allocation13] sm:$0xff]
        %v730 = vld [vmem:[#allocation13 + $0x8] sm:$0xff]
        %v731 = vld [vmem:[#allocation14] sm:$0x1]
        %v733 = vlaneseq
        %v734 = vshrl.u32 %v733, 7
        %v735 = vsub.s32 0, %v734
        %v736 = vrot.slane %v731, %v735
        %vm738 = vcmask 130048
        %v740 = vsel %vm738, %v728, 0
        %742 = vmatprep.subr.mxu0 0.0
        %743 = vmatpush1.msra.mxu0 %v729
        %744 = vmatprep.subr.mxu0 0.0
        %745 = vmatpush1.msra.mxu0 %v730
        %746 = vmatprep.subr.mxu0 0.0
        %747 = vmatpush1.msra.mxu0 0.0
        %748 = vmatprep.subr.mxu0 0.0
        %749 = vmatpush1.msra.mxu0 0.0
        %750 = vmatprep.subr.mxu0 0.0
        %751 = vmatpush1.msra.mxu0 0.0
        %752 = vmatprep.subr.mxu0 0.0
        %753 = vmatpush1.msra.mxu0 0.0
        %754 = vmatprep.subr.mxu0 0.0
        %755 = vmatpush1.msra.mxu0 0.0
        %756 = vmatprep.subr.mxu0 0.0
        %757 = vmatpush1.msra.mxu0 0.0
        %758 = vmatprep.subr.mxu0 0.0
        %759 = vmatpush1.msra.mxu0 0.0
        %760 = vmatprep.subr.mxu0 0.0
        %761 = vmatpush1.msra.mxu0 0.0
        %762 = vmatprep.subr.mxu0 0.0
        %763 = vmatpush1.msra.mxu0 0.0
        %764 = vmatprep.subr.mxu0 0.0
        %765 = vmatpush1.msra.mxu0 0.0
        %766 = vmatprep.subr.mxu0 0.0
        %767 = vmatpush1.msra.mxu0 0.0
        %768 = vmatprep.subr.mxu0 0.0
        %769 = vmatpush1.msra.mxu0 0.0
        %770 = vmatprep.subr.mxu0 0.0
        %771 = vmatpush1.msra.mxu0 0.0
        %772 = vmatprep.subr.mxu0 0.0
        %773 = vmatpush1.msra.mxu0 0.0
        %774 = vmatprep.subr.mxu0 0.0
        %775 = vmatpush1.msra.mxu0 0.0
        %776 = vmatprep.subr.mxu0 0.0
        %777 = vmatpush1.msra.mxu0 0.0
        %778 = vmatprep.subr.mxu0 0.0
        %779 = vmatpush1.msra.mxu0 0.0
        %780 = vmatprep.subr.mxu0 0.0
        %781 = vmatpush1.msra.mxu0 0.0
        %782 = vmatprep.subr.mxu0 0.0
        %783 = vmatpush1.msra.mxu0 0.0
        %784 = vmatprep.subr.mxu0 0.0
        %785 = vmatpush1.msra.mxu0 0.0
        %786 = vmatprep.subr.mxu0 0.0
        %787 = vmatpush1.msra.mxu0 0.0
        %788 = vmatprep.subr.mxu0 0.0
        %789 = vmatpush1.msra.mxu0 0.0
        %790 = vmatprep.subr.mxu0 0.0
        %791 = vmatpush1.msra.mxu0 0.0
        %792 = vmatprep.subr.mxu0 0.0
        %793 = vmatpush1.msra.mxu0 0.0
        %794 = vmatprep.subr.mxu0 0.0
        %795 = vmatpush1.msra.mxu0 0.0
        %796 = vmatprep.subr.mxu0 0.0
        %797 = vmatpush1.msra.mxu0 0.0
        %798 = vmatprep.subr.mxu0 0.0
        %799 = vmatpush1.msra.mxu0 0.0
        %800 = vmatprep.subr.mxu0 0.0
        %801 = vmatpush1.msra.mxu0 0.0
        %802 = vmatprep.subr.mxu0 0.0
        %803 = vmatpush1.msra.mxu0 0.0
        %804 = vmatprep.subr.mxu0 0.0
        %805 = vmatpush1.msra.mxu0 0.0
        %806 = vmatprep.mubr.f32.mxu0 0.0
        %807 = vmatmul.mubr.f32.gmra.mrb[0].mxu0 %v740
        %v808 = vpop.f32.mrb[0].mxu0
        %v809 = vadd.f32 %v736, %v808
        %v810 = vpop.f32.mrb[0].mxu0
        %811 = vdwg.mxu0
        %v812 = vadd.f32 %v635, %v809
        %813 = vst.msk [vmem:[%s533] sm:$0xff] %vm605, %v812
        %v814 = vpack.c.bf16 %v812, %v812
        %v815 = vld [vmem:[#allocation16] sm:$0xff]
        %v816 = vld [vmem:[#allocation16 + $0x8] sm:$0xf]
        %v817 = vld [vmem:[#allocation16 + $0xc] sm:$0xff]
        %v818 = vld [vmem:[#allocation16 + $0x14] sm:$0xf]
        %v819 = vld [vmem:[#allocation16 + $0x18] sm:$0xff]
        %v820 = vld [vmem:[#allocation16 + $0x20] sm:$0xf]
        %v821 = vld [vmem:[#allocation16 + $0x24] sm:$0xff]
        %v822 = vld [vmem:[#allocation16 + $0x2c] sm:$0xf]
        %v831 = vunpack.c.l.b16 %v815
        %v832 = vunpack.c.h.b16 %v815
        %v833 = vunpack.c.l.b16 %v816
        %v834 = vunpack.c.l.b16 %v817
        %v835 = vunpack.c.h.b16 %v817
        %v836 = vunpack.c.l.b16 %v818
        %v837 = vunpack.c.l.b16 %v819
        %v838 = vunpack.c.h.b16 %v819
        %v839 = vunpack.c.l.b16 %v820
        %v840 = vunpack.c.l.b16 %v821
        %v841 = vunpack.c.h.b16 %v821
        %v842 = vunpack.c.l.b16 %v822
        %v843 = vpack.c.b16 %v834, %v831
        %v844 = vpack.c.b16 %v835, %v832
        %v845 = vpack.c.b16 %v836, %v833
        %v846 = vpack.c.b16 %v840, %v837
        %v847 = vpack.c.b16 %v841, %v838
        %v848 = vpack.c.b16 %v842, %v839
        %v856 = vsel %vm605, %v814, 0
        %858 = vmatprep.subr.bf16.mxu0 %v844
        %859 = vmatpush1.bf16.msra.mxu0 %v843
        %860 = vmatprep.subr.bf16.mxu0 %v847
        %861 = vmatpush1.bf16.msra.mxu0 %v846
        %862 = vmatprep.subr.bf16.mxu0 0
        %863 = vmatpush1.bf16.msra.mxu0 0
        %864 = vmatprep.subr.bf16.mxu0 0
        %865 = vmatpush1.bf16.msra.mxu0 0
        %866 = vmatprep.subr.bf16.mxu0 0
        %867 = vmatpush1.bf16.msra.mxu0 0
        %868 = vmatprep.subr.bf16.mxu0 0
        %869 = vmatpush1.bf16.msra.mxu0 0
        %870 = vmatprep.subr.bf16.mxu0 0
        %871 = vmatpush1.bf16.msra.mxu0 0
        %872 = vmatprep.subr.bf16.mxu0 0
        %873 = vmatpush1.bf16.msra.mxu0 0
        %874 = vmatprep.subr.bf16.mxu0 0
        %875 = vmatpush1.bf16.msra.mxu0 0
        %876 = vmatprep.subr.bf16.mxu0 0
        %877 = vmatpush1.bf16.msra.mxu0 0
        %878 = vmatprep.subr.bf16.mxu0 0
        %879 = vmatpush1.bf16.msra.mxu0 0
        %880 = vmatprep.subr.bf16.mxu0 0
        %881 = vmatpush1.bf16.msra.mxu0 0
        %882 = vmatprep.subr.bf16.mxu0 0
        %883 = vmatpush1.bf16.msra.mxu0 0
        %884 = vmatprep.subr.bf16.mxu0 0
        %885 = vmatpush1.bf16.msra.mxu0 0
        %886 = vmatprep.subr.bf16.mxu0 0
        %887 = vmatpush1.bf16.msra.mxu0 0
        %888 = vmatprep.subr.bf16.mxu0 0
        %889 = vmatpush1.bf16.msra.mxu0 0
        %890 = vmatprep.mubr.bf16.mxu0 0
        %891 = vmatmul.mubr.bf16.gmra.mrb[0].mxu0 %v856
        %v892 = vpop.f32.mrb[0].mxu0
        %v893 = vadd.f32 0.0, %v892
        %v894 = vpop.f32.mrb[0].mxu0
        %v895 = vadd.f32 0.0, %v894
        %v896 = vpop.f32.mrb[0].mxu0
        %v897 = vpop.f32.mrb[0].mxu0
        %898 = vdwg.mxu0
        %899 = vmatprep.subr.bf16.mxu0 0
        %900 = vmatpush1.bf16.msra.mxu0 %v845
        %901 = vmatprep.subr.bf16.mxu0 0
        %902 = vmatpush1.bf16.msra.mxu0 %v848
        %903 = vmatprep.subr.bf16.mxu0 0
        %904 = vmatpush1.bf16.msra.mxu0 0
        %905 = vmatprep.subr.bf16.mxu0 0
        %906 = vmatpush1.bf16.msra.mxu0 0
        %907 = vmatprep.subr.bf16.mxu0 0
        %908 = vmatpush1.bf16.msra.mxu0 0
        %909 = vmatprep.subr.bf16.mxu0 0
        %910 = vmatpush1.bf16.msra.mxu0 0
        %911 = vmatprep.subr.bf16.mxu0 0
        %912 = vmatpush1.bf16.msra.mxu0 0
        %913 = vmatprep.subr.bf16.mxu0 0
        %914 = vmatpush1.bf16.msra.mxu0 0
        %915 = vmatprep.subr.bf16.mxu0 0
        %916 = vmatpush1.bf16.msra.mxu0 0
        %917 = vmatprep.subr.bf16.mxu0 0
        %918 = vmatpush1.bf16.msra.mxu0 0
        %919 = vmatprep.subr.bf16.mxu0 0
        %920 = vmatpush1.bf16.msra.mxu0 0
        %921 = vmatprep.subr.bf16.mxu0 0
        %922 = vmatpush1.bf16.msra.mxu0 0
        %923 = vmatprep.subr.bf16.mxu0 0
        %924 = vmatpush1.bf16.msra.mxu0 0
        %925 = vmatprep.subr.bf16.mxu0 0
        %926 = vmatpush1.bf16.msra.mxu0 0
        %927 = vmatprep.subr.bf16.mxu0 0
        %928 = vmatpush1.bf16.msra.mxu0 0
        %929 = vmatprep.subr.bf16.mxu0 0
        %930 = vmatpush1.bf16.msra.mxu0 0
        %931 = vmatprep.mubr.bf16.mxu0 0
        %932 = vmatmul.mubr.bf16.gmra.mrb[0].mxu0 %v856
        %v933 = vpop.f32.mrb[0].mxu0
        %v934 = vadd.f32 0.0, %v933
        %v935 = vpop.f32.mrb[0].mxu0
        %v936 = vpop.f32.mrb[0].mxu0
        %v937 = vpop.f32.mrb[0].mxu0
        %938 = vdwg.mxu0
        %939 = vst [vmem:[%s540] sm:$0xff] %v893
        %vm940 = vcmask 523264
        %941 = vst.msk [vmem:[%s540 + $0x8] sm:$0xff] %vm940, %v895
        %944 = vrot.lane.b32.xlu0 %v895, 64
        %v945 = vpop.permute.xlu0 %944
        %946 = vrot.lane.b32.xlu0 %v934, 64
        %v947 = vpop.permute.xlu0 %946
        %v948 = vsel %vm940, %v945, %v947
        %951 = vst [vmem:[%s547] sm:$0xff] %v948
        %952 = vst.msk [vmem:[%s547 + $0x8] sm:$0xff] %vm940, %v947
        %s953 = sand.u32 %s245, 1
        %s954 = scalar_lea.sflag [#allocation4], %s953
        %s955 = sand.u32 %s245, 1
        %s956 = smul.addr %s955, 8
        %s957 = scalar_lea.vmem [#allocation17], %s956
        %s958 = sand.u32 %s38, 1
        %s959 = scalar_lea.sflag [#allocation19], %s958
        %s960 = sand.u32 %s271, 1
        %s961 = smul.addr %s960, 16
        %s962 = scalar_lea.vmem [#allocation18], %s961
        %s963 = sand.u32 %s38, 1
        %s964 = scalar_lea.sflag [#allocation19], %s963
        %s965 = sand.u32 %s297, 1
        %s966 = smul.addr %s965, 16
        %s967 = scalar_lea.vmem [#allocation20], %s966
        // Predicated region
        $region93: #{forward.5} parent=55 // pred_check
          %p968 = pneg %p255
        $region94: #{forward.5} parent=55 // pred_check_branch
          %970 = sbr.rel (%p968) target = $region96
        $region95: #{forward.5} parent=55 // pred_region
          %s972 = ssub.s32 128, 128
          %973 = vsyncadd %s954, %s972
          %s974 = smul.addr %s38, 128
          %s975 = scalar_lea.hbm %s9, %s974
          %s977 = sshll.u32 %s957, 4
          %s978 = int_to_ptr.vmem [resolvable:$true] %s977
          %980 = dma.vmem_to_hbm [thread:$0]  %s978, 128, %s975, %s954
        $region96: #{forward.5} parent=55 // pred_fallthru
          _
        // Predicated region
        $region97: #{forward.5} parent=55 // pred_check
          %p981 = pneg %p281
        $region98: #{forward.5} parent=55 // pred_check_branch
          %983 = sbr.rel (%p981) target = $region100
        $region99: #{forward.5} parent=55 // pred_region
          %s985 = ssub.s32 256, 256
          %986 = vsyncadd %s959, %s985
          %s987 = smul.addr %s38, 2
          %s988 = smul.addr %s987, 128
          %s989 = scalar_lea.hbm %s10, %s988
          %s991 = sshll.u32 %s962, 4
          %s992 = int_to_ptr.vmem [resolvable:$true] %s991
          %994 = dma.vmem_to_hbm [thread:$0]  %s992, 256, %s989, %s959
        $region100: #{forward.5} parent=55 // pred_fallthru
          _
        // Predicated region
        $region101: #{forward.5} parent=55 // pred_check
          %p995 = pneg %p307
        $region102: #{forward.5} parent=55 // pred_check_branch
          %997 = sbr.rel (%p995) target = $region104
        $region103: #{forward.5} parent=55 // pred_region
          %s999 = ssub.s32 256, 256
          %1000 = vsyncadd %s964, %s999
          %s1001 = smul.addr %s38, 2
          %s1002 = smul.addr %s1001, 128
          %s1003 = scalar_lea.hbm %s11, %s1002
          %s1005 = sshll.u32 %s967, 4
          %s1006 = int_to_ptr.vmem [resolvable:$true] %s1005
          %1008 = dma.vmem_to_hbm [thread:$0]  %s1006, 256, %s1003, %s964
        $region104: #{forward.5} parent=55 // pred_fallthru
          _
      $region56: #{forward.5} parent=5 // pred_fallthru
        _
      %p1009 = scmp.le.s32.totalorder 2, %s33
      // Predicated region
      $region105: #{forward.5} parent=5 // pred_check
        %p1010 = pneg %p1009
      $region106: #{forward.5} parent=5 // pred_check_branch
        %1012 = sbr.rel (%p1010) target = $region108
      $region107: #{forward.5} parent=5 // pred_region
        %s1013 = ssub.s32 %s33, 2
        // Predicated region
        $region109: #{forward.5} parent=107 // pred_check
          %p1014 = pneg %p261
        $region110: #{forward.5} parent=107 // pred_check_branch
          %1016 = sbr.rel (%p1014) target = $region112
        $region111: #{forward.5} parent=107 // pred_region
          %s1017 = sand.u32 %s246, 1
          %s1018 = scalar_lea.sflag [#allocation4], %s1017
          %s1019 = sand.u32 %s246, 1
          %s1020 = smul.addr %s1019, 8
          %s1021 = scalar_lea.vmem [#allocation17], %s1020
          %1022 = dma.done %s1018, 128
        $region112: #{forward.5} parent=107 // pred_fallthru
          _
        // Predicated region
        $region113: #{forward.5} parent=107 // pred_check
          %p1023 = pneg %p287
        $region114: #{forward.5} parent=107 // pred_check_branch
          %1025 = sbr.rel (%p1023) target = $region116
        $region115: #{forward.5} parent=107 // pred_region
          %s1026 = sand.u32 %s39, 1
          %s1027 = scalar_lea.sflag [#allocation19], %s1026
          %s1028 = sand.u32 %s272, 1
          %s1029 = smul.addr %s1028, 16
          %s1030 = scalar_lea.vmem [#allocation18], %s1029
          %1031 = dma.done %s1027, 256
        $region116: #{forward.5} parent=107 // pred_fallthru
          _
        // Predicated region
        $region117: #{forward.5} parent=107 // pred_check
          %p1032 = pneg %p313
        $region118: #{forward.5} parent=107 // pred_check_branch
          %1034 = sbr.rel (%p1032) target = $region120
        $region119: #{forward.5} parent=107 // pred_region
          %s1035 = sand.u32 %s39, 1
          %s1036 = scalar_lea.sflag [#allocation19], %s1035
          %s1037 = sand.u32 %s298, 1
          %s1038 = smul.addr %s1037, 16
          %s1039 = scalar_lea.vmem [#allocation20], %s1038
          %1040 = dma.done %s1036, 256
        $region120: #{forward.5} parent=107 // pred_fallthru
          _
      $region108: #{forward.5} parent=5 // pred_fallthru
        _
    $region6: #{forward.5} parent=1 // loop_footer
      %s37 = sadd.s32 1, %s33
    $region7: #{forward.5} parent=1 // loop_footer_branch
      %32 = sbr.rel target = $region3
    $region8: #{forward.5} parent=1 // loop_exit
      _
    %1041 = vsyncpa [#allocation3], 1
    %s1042 = scalar_lea.sflag [#allocation3], 1
    %1043 = vsyncpa %s1042, 1
    %1044 = vsyncpa [#allocation6], 1
    %1045 = vsyncpa [#allocation9], 1
    %s1046 = scalar_lea.sflag [#allocation9], 1
    %1047 = vsyncpa %s1046, 1
    %1048 = vsyncpa [#allocation12], 1
    %1049 = vsyncpa [#allocation15], 1
    %1050 = vsyncpa [#allocation4], 1
    %s1051 = scalar_lea.sflag [#allocation4], 1
    %1052 = vsyncpa %s1051, 1
    %1053 = vsyncpa [#allocation19], 1
    %s1054 = scalar_lea.sflag [#allocation19], 1
    %1055 = vsyncpa %s1054, 1

// kernel: forward.9
$region0: #{forward.9}
  #allocation0 [shape = 'u32[]', space=smem, size = 0x4, offset = 0x4, fixed_abs, tag = 'smem constant byte address 0x4 - core index']
  #allocation1 [shape = 'u32[144,128]{1,0:T(1,128)}', space=vmem, size = 0x12000, scoped, tag = 'internal scratch']
  #allocation2 [shape = 'f32[1,1]{1,0:T(1,128)S(1)}', space=vmem, size = 0x200, scoped, tag = 'scoped memory for forward.9']
  %s0 = inlined_call_operand.hbm [shape: f32[16,32], index: 0, kind: input, shape index: {}]
  %s1 = inlined_call_operand.hbm [shape: f32[2,16], index: 1, kind: input, shape index: {}]
  %s2 = inlined_call_operand.hbm [shape: f32[16,2], index: 2, kind: input, shape index: {}]
  %s3 = inlined_call_operand.hbm [shape: f32[32,16], index: 3, kind: input, shape index: {}]
  %s4 = inlined_call_operand.hbm [shape: f32[1,16], index: 4, kind: input, shape index: {}]
  %s5 = inlined_call_operand.hbm [shape: f32[16,1], index: 5, kind: input, shape index: {}]
  %s6 = inlined_call_operand.<no memory space> [shape: f32[1,1], index: 6, kind: input, shape index: {}]
  %s7 = inlined_call_operand.hbm [shape: f32[96,32], index: 7, kind: input, shape index: {}]
  %s8 = inlined_call_operand.hbm [shape: f32[3,32], index: 8, kind: input, shape index: {}]
  %s9 = inlined_call_operand.hbm [shape: f32[32,56], index: 9, kind: input, shape index: {}]
  %s10 = inlined_call_operand.hbm [shape: f32[1,56], index: 10, kind: input, shape index: {}]
  %s11 = inlined_call_operand.hbm [shape: f32[56,14], index: 11, kind: input, shape index: {}]
  %s12 = inlined_call_operand.hbm [shape: f32[1,14], index: 12, kind: input, shape index: {}]
  %s13 = inlined_call_operand.hbm [shape: f32[46,32], index: 13, kind: input, shape index: {}]
  %s14 = inlined_call_operand.hbm [shape: f32[3,32], index: 14, kind: input, shape index: {}]
  %s15 = inlined_call_operand.hbm [shape: f32[32,16], index: 15, kind: input, shape index: {}]
  %s16 = inlined_call_operand.hbm [shape: f32[3,16], index: 16, kind: input, shape index: {}]
  %s17 = inlined_call_operand.hbm [shape: f32[16,16], index: 17, kind: input, shape index: {}]
  %s18 = inlined_call_operand.hbm [shape: f32[1,16], index: 18, kind: input, shape index: {}]
  %s19 = inlined_call_operand.hbm [shape: f32[16,8], index: 19, kind: input, shape index: {}]
  %s20 = inlined_call_operand.hbm [shape: f32[1,8], index: 20, kind: input, shape index: {}]
  %s21 = inlined_call_operand.hbm [shape: f32[8,3], index: 21, kind: input, shape index: {}]
  %s22 = inlined_call_operand.hbm [shape: f32[1,3], index: 22, kind: input, shape index: {}]
  %s23 = inlined_call_operand.hbm [shape: f32[2,16], index: 23, kind: output, shape index: {0}]
  %s24 = inlined_call_operand.hbm [shape: f32[2,3], index: 24, kind: output, shape index: {1}]
  %s25 = inlined_call_operand.hbm [shape: f32[2,14], index: 25, kind: output, shape index: {2}]
  %26 = xla_tuple %s23, %s24, %s25
  %s27 = sld [smem:[#allocation0]]
  $region206: #{forward.9} parent=0
    _
  %s29 = ssub.s32 1, %s27
  %s30 = scalar_select 0, %s29, %s27
  %v31 = vstv %s6
  %32 = vst [vmem:[#allocation2] sm:$0x1] %v31
  $region1: #{forward.9} parent=0
    #allocation3 [shape = 'u8[8192]{0}', space=vmem, size = 0x2000, scoped, tag = 'input window, operand 0, single buffered']
    #allocation4 [shape = 's32[1]{0}', space=sflag, size = 0x4, scoped, tag = 'scoped memory for forward.9']
    #allocation5 [shape = 's32[1]{0}', space=sflag, size = 0x4, scoped, tag = 'scoped memory for forward.9']
    #allocation6 [shape = 'u8[1024]{0}', space=vmem, size = 0x400, scoped, tag = 'input window, operand 1, single buffered']
    #allocation7 [shape = 's32[1]{0}', space=sflag, size = 0x4, scoped, tag = 'scoped memory for forward.9']
    #allocation8 [shape = 'u8[8192]{0}', space=vmem, size = 0x2000, scoped, tag = 'input window, operand 2, single buffered']
    #allocation9 [shape = 'u8[16384]{0}', space=vmem, size = 0x4000, scoped, tag = 'input window, operand 3, single buffered']
    #allocation10 [shape = 's32[1]{0}', space=sflag, size = 0x4, scoped, tag = 'scoped memory for forward.9']
    #allocation11 [shape = 'u8[512]{0}', space=vmem, size = 0x400, scoped, tag = 'input window, operand 4, single buffered']
    #allocation12 [shape = 'u8[8192]{0}', space=vmem, size = 0x2000, scoped, tag = 'input window, operand 5, single buffered']
    #allocation13 [shape = 's32[1]{0}', space=sflag, size = 0x4, scoped, tag = 'scoped memory for forward.9']
    #allocation14 [shape = 'u8[49152]{0}', space=vmem, size = 0xc000, scoped, tag = 'input window, operand 7, single buffered']
    #allocation15 [shape = 'u8[2048]{0}', space=vmem, size = 0x800, scoped, tag = 'input window, operand 8, single buffered']
    #allocation16 [shape = 's32[1]{0}', space=sflag, size = 0x4, scoped, tag = 'scoped memory for forward.9']
    #allocation17 [shape = 'u8[16384]{0}', space=vmem, size = 0x4000, scoped, tag = 'input window, operand 9, single buffered']
    #allocation18 [shape = 'u8[512]{0}', space=vmem, size = 0x400, scoped, tag = 'input window, operand 10, single buffered']
    #allocation19 [shape = 's32[1]{0}', space=sflag, size = 0x4, scoped, tag = 'scoped memory for forward.9']
    #allocation20 [shape = 'u8[28672]{0}', space=vmem, size = 0x7000, scoped, tag = 'input window, operand 11, single buffered']
    #allocation21 [shape = 'u8[512]{0}', space=vmem, size = 0x400, scoped, tag = 'input window, operand 12, single buffered']
    #allocation22 [shape = 's32[1]{0}', space=sflag, size = 0x4, scoped, tag = 'scoped memory for forward.9']
    #allocation23 [shape = 'u8[24576]{0}', space=vmem, size = 0x6000, scoped, tag = 'input window, operand 13, single buffered']
    #allocation24 [shape = 'u8[2048]{0}', space=vmem, size = 0x800, scoped, tag = 'input window, operand 14, single buffered']
    #allocation25 [shape = 's32[1]{0}', space=sflag, size = 0x4, scoped, tag = 'scoped memory for forward.9']
    #allocation26 [shape = 'u8[16384]{0}', space=vmem, size = 0x4000, scoped, tag = 'input window, operand 15, single buffered']
    #allocation27 [shape = 'u8[2048]{0}', space=vmem, size = 0x800, scoped, tag = 'input window, operand 16, single buffered']
    #allocation28 [shape = 's32[1]{0}', space=sflag, size = 0x4, scoped, tag = 'scoped memory for forward.9']
    #allocation29 [shape = 'u8[8192]{0}', space=vmem, size = 0x2000, scoped, tag = 'input window, operand 17, single buffered']
    #allocation30 [shape = 'u8[512]{0}', space=vmem, size = 0x400, scoped, tag = 'input window, operand 18, single buffered']
    #allocation31 [shape = 's32[1]{0}', space=sflag, size = 0x4, scoped, tag = 'scoped memory for forward.9']
    #allocation32 [shape = 'u8[8192]{0}', space=vmem, size = 0x2000, scoped, tag = 'input window, operand 19, single buffered']
    #allocation33 [shape = 'u8[512]{0}', space=vmem, size = 0x400, scoped, tag = 'input window, operand 20, single buffered']
    #allocation34 [shape = 's32[1]{0}', space=sflag, size = 0x4, scoped, tag = 'scoped memory for forward.9']
    #allocation35 [shape = 'u8[4096]{0}', space=vmem, size = 0x1000, scoped, tag = 'input window, operand 21, single buffered']
    #allocation36 [shape = 'u8[512]{0}', space=vmem, size = 0x400, scoped, tag = 'input window, operand 22, single buffered']
    #allocation37 [shape = 's32[1]{0}', space=sflag, size = 0x4, scoped, tag = 'scoped memory for forward.9']
    #allocation38 [shape = 'u8[1024]{0}', space=vmem, size = 0x400, scoped, tag = 'output window, operand 0, single buffered']
    #allocation39 [shape = 'u8[1024]{0}', space=vmem, size = 0x400, scoped, tag = 'output window, operand 1, single buffered']
    #allocation40 [shape = 's32[1]{0}', space=sflag, size = 0x4, scoped, tag = 'scoped memory for forward.9']
    #allocation41 [shape = 'u8[1024]{0}', space=vmem, size = 0x400, scoped, tag = 'output window, operand 2, single buffered']
    %33 = vsyncpa [#allocation4], 0
    %34 = vsyncpa [#allocation7], 0
    %35 = vsyncpa [#allocation10], 0
    %36 = vsyncpa [#allocation13], 0
    %37 = vsyncpa [#allocation16], 0
    %38 = vsyncpa [#allocation19], 0
    %39 = vsyncpa [#allocation22], 0
    %40 = vsyncpa [#allocation25], 0
    %41 = vsyncpa [#allocation28], 0
    %42 = vsyncpa [#allocation31], 0
    %43 = vsyncpa [#allocation34], 0
    %44 = vsyncpa [#allocation37], 0
    %45 = vsyncpa [#allocation5], 0
    %46 = vsyncpa [#allocation40], 0
    // Predicated region
    $region2: #{forward.9} parent=1 // pred_check
      _
    $region3: #{forward.9} parent=1 // pred_check_branch
      %48 = sbr.rel (0) target = $region5
    $region4: #{forward.9} parent=1 // pred_region
      %s50 = ssub.s32 256, 256
      %51 = vsyncadd [#allocation4], %s50
      %s52 = sshll.u32 [#allocation3], 4
      %s53 = int_to_ptr.vmem [resolvable:$true] %s52
      %58 = dma.hbm_to_vmem [thread:$0]  %s0, 256, %s53, [#allocation4], 128, 128, 8
    $region5: #{forward.9} parent=1 // pred_fallthru
      _
    // Predicated region
    $region6: #{forward.9} parent=1 // pred_check
      _
    $region7: #{forward.9} parent=1 // pred_check_branch
      %60 = sbr.rel (0) target = $region9
    $region8: #{forward.9} parent=1 // pred_region
      %s62 = ssub.s32 32, 32
      %63 = vsyncadd [#allocation7], %s62
      %s65 = sshll.u32 [#allocation6], 4
      %s66 = int_to_ptr.vmem [resolvable:$true] %s65
      %68 = dma.hbm_to_vmem [thread:$0]  %s1, 32, %s66, [#allocation7]
    $region9: #{forward.9} parent=1 // pred_fallthru
      _
    // Predicated region
    $region10: #{forward.9} parent=1 // pred_check
      _
    $region11: #{forward.9} parent=1 // pred_check_branch
      %70 = sbr.rel (0) target = $region13
    $region12: #{forward.9} parent=1 // pred_region
      %s72 = ssub.s32 256, 256
      %73 = vsyncadd [#allocation7], %s72
      %s74 = sshll.u32 [#allocation8], 4
      %s75 = int_to_ptr.vmem [resolvable:$true] %s74
      %80 = dma.hbm_to_vmem [thread:$0]  %s2, 256, %s75, [#allocation7], 128, 128, 8
    $region13: #{forward.9} parent=1 // pred_fallthru
      _
    // Predicated region
    $region14: #{forward.9} parent=1 // pred_check
      _
    $region15: #{forward.9} parent=1 // pred_check_branch
      %82 = sbr.rel (0) target = $region17
    $region16: #{forward.9} parent=1 // pred_region
      %s84 = ssub.s32 512, 512
      %85 = vsyncadd [#allocation10], %s84
      %s86 = sshll.u32 [#allocation9], 4
      %s87 = int_to_ptr.vmem [resolvable:$true] %s86
      %92 = dma.hbm_to_vmem [thread:$0]  %s3, 512, %s87, [#allocation10], 128, 128, 8
    $region17: #{forward.9} parent=1 // pred_fallthru
      _
    // Predicated region
    $region18: #{forward.9} parent=1 // pred_check
      _
    $region19: #{forward.9} parent=1 // pred_check_branch
      %94 = sbr.rel (0) target = $region21
    $region20: #{forward.9} parent=1 // pred_region
      %s96 = ssub.s32 16, 16
      %97 = vsyncadd [#allocation10], %s96
      %s99 = sshll.u32 [#allocation11], 4
      %s100 = int_to_ptr.vmem [resolvable:$true] %s99
      %102 = dma.hbm_to_vmem [thread:$0]  %s4, 16, %s100, [#allocation10]
    $region21: #{forward.9} parent=1 // pred_fallthru
      _
    // Predicated region
    $region22: #{forward.9} parent=1 // pred_check
      _
    $region23: #{forward.9} parent=1 // pred_check_branch
      %104 = sbr.rel (0) target = $region25
    $region24: #{forward.9} parent=1 // pred_region
      %s106 = ssub.s32 256, 256
      %107 = vsyncadd [#allocation13], %s106
      %s108 = sshll.u32 [#allocation12], 4
      %s109 = int_to_ptr.vmem [resolvable:$true] %s108
      %114 = dma.hbm_to_vmem [thread:$0]  %s5, 256, %s109, [#allocation13], 128, 128, 8
    $region25: #{forward.9} parent=1 // pred_fallthru
      _
    // Predicated region
    $region26: #{forward.9} parent=1 // pred_check
      _
    $region27: #{forward.9} parent=1 // pred_check_branch
      %116 = sbr.rel (0) target = $region29
    $region28: #{forward.9} parent=1 // pred_region
      _
    $region29: #{forward.9} parent=1 // pred_fallthru
      _
    // Predicated region
    $region30: #{forward.9} parent=1 // pred_check
      _
    $region31: #{forward.9} parent=1 // pred_check_branch
      %118 = sbr.rel (0) target = $region33
    $region32: #{forward.9} parent=1 // pred_region
      %s120 = ssub.s32 1536, 1536
      %121 = vsyncadd [#allocation13], %s120
      %s122 = sshll.u32 [#allocation14], 4
      %s123 = int_to_ptr.vmem [resolvable:$true] %s122
      %128 = dma.hbm_to_vmem [thread:$0]  %s7, 1536, %s123, [#allocation13], 128, 128, 8
    $region33: #{forward.9} parent=1 // pred_fallthru
      _
    // Predicated region
    $region34: #{forward.9} parent=1 // pred_check
      _
    $region35: #{forward.9} parent=1 // pred_check_branch
      %130 = sbr.rel (0) target = $region37
    $region36: #{forward.9} parent=1 // pred_region
      %s132 = ssub.s32 64, 64
      %133 = vsyncadd [#allocation16], %s132
      %s135 = sshll.u32 [#allocation15], 4
      %s136 = int_to_ptr.vmem [resolvable:$true] %s135
      %138 = dma.hbm_to_vmem [thread:$0]  %s8, 64, %s136, [#allocation16]
    $region37: #{forward.9} parent=1 // pred_fallthru
      _
    // Predicated region
    $region38: #{forward.9} parent=1 // pred_check
      _
    $region39: #{forward.9} parent=1 // pred_check_branch
      %140 = sbr.rel (0) target = $region41
    $region40: #{forward.9} parent=1 // pred_region
      %s142 = ssub.s32 512, 512
      %143 = vsyncadd [#allocation16], %s142
      %s144 = sshll.u32 [#allocation17], 4
      %s145 = int_to_ptr.vmem [resolvable:$true] %s144
      %150 = dma.hbm_to_vmem [thread:$0]  %s9, 512, %s145, [#allocation16], 128, 128, 8
    $region41: #{forward.9} parent=1 // pred_fallthru
      _
    // Predicated region
    $region42: #{forward.9} parent=1 // pred_check
      _
    $region43: #{forward.9} parent=1 // pred_check_branch
      %152 = sbr.rel (0) target = $region45
    $region44: #{forward.9} parent=1 // pred_region
      %s154 = ssub.s32 16, 16
      %155 = vsyncadd [#allocation19], %s154
      %s157 = sshll.u32 [#allocation18], 4
      %s158 = int_to_ptr.vmem [resolvable:$true] %s157
      %160 = dma.hbm_to_vmem [thread:$0]  %s10, 16, %s158, [#allocation19]
    $region45: #{forward.9} parent=1 // pred_fallthru
      _
    // Predicated region
    $region46: #{forward.9} parent=1 // pred_check
      _
    $region47: #{forward.9} parent=1 // pred_check_branch
      %162 = sbr.rel (0) target = $region49
    $region48: #{forward.9} parent=1 // pred_region
      %s164 = ssub.s32 896, 896
      %165 = vsyncadd [#allocation19], %s164
      %s166 = sshll.u32 [#allocation20], 4
      %s167 = int_to_ptr.vmem [resolvable:$true] %s166
      %172 = dma.hbm_to_vmem [thread:$0]  %s11, 896, %s167, [#allocation19], 128, 128, 8
    $region49: #{forward.9} parent=1 // pred_fallthru
      _
    // Predicated region
    $region50: #{forward.9} parent=1 // pred_check
      _
    $region51: #{forward.9} parent=1 // pred_check_branch
      %174 = sbr.rel (0) target = $region53
    $region52: #{forward.9} parent=1 // pred_region
      %s176 = ssub.s32 16, 16
      %177 = vsyncadd [#allocation22], %s176
      %s179 = sshll.u32 [#allocation21], 4
      %s180 = int_to_ptr.vmem [resolvable:$true] %s179
      %182 = dma.hbm_to_vmem [thread:$0]  %s12, 16, %s180, [#allocation22]
    $region53: #{forward.9} parent=1 // pred_fallthru
      _
    // Predicated region
    $region54: #{forward.9} parent=1 // pred_check
      _
    $region55: #{forward.9} parent=1 // pred_check_branch
      %184 = sbr.rel (0) target = $region57
    $region56: #{forward.9} parent=1 // pred_region
      %s186 = ssub.s32 768, 768
      %187 = vsyncadd [#allocation22], %s186
      %s188 = sshll.u32 [#allocation23], 4
      %s189 = int_to_ptr.vmem [resolvable:$true] %s188
      %194 = dma.hbm_to_vmem [thread:$0]  %s13, 768, %s189, [#allocation22], 128, 128, 8
    $region57: #{forward.9} parent=1 // pred_fallthru
      _
    // Predicated region
    $region58: #{forward.9} parent=1 // pred_check
      _
    $region59: #{forward.9} parent=1 // pred_check_branch
      %196 = sbr.rel (0) target = $region61
    $region60: #{forward.9} parent=1 // pred_region
      %s198 = ssub.s32 64, 64
      %199 = vsyncadd [#allocation25], %s198
      %s201 = sshll.u32 [#allocation24], 4
      %s202 = int_to_ptr.vmem [resolvable:$true] %s201
      %204 = dma.hbm_to_vmem [thread:$0]  %s14, 64, %s202, [#allocation25]
    $region61: #{forward.9} parent=1 // pred_fallthru
      _
    // Predicated region
    $region62: #{forward.9} parent=1 // pred_check
      _
    $region63: #{forward.9} parent=1 // pred_check_branch
      %206 = sbr.rel (0) target = $region65
    $region64: #{forward.9} parent=1 // pred_region
      %s208 = ssub.s32 512, 512
      %209 = vsyncadd [#allocation25], %s208
      %s210 = sshll.u32 [#allocation26], 4
      %s211 = int_to_ptr.vmem [resolvable:$true] %s210
      %216 = dma.hbm_to_vmem [thread:$0]  %s15, 512, %s211, [#allocation25], 128, 128, 8
    $region65: #{forward.9} parent=1 // pred_fallthru
      _
    // Predicated region
    $region66: #{forward.9} parent=1 // pred_check
      _
    $region67: #{forward.9} parent=1 // pred_check_branch
      %218 = sbr.rel (0) target = $region69
    $region68: #{forward.9} parent=1 // pred_region
      %s220 = ssub.s32 64, 64
      %221 = vsyncadd [#allocation28], %s220
      %s223 = sshll.u32 [#allocation27], 4
      %s224 = int_to_ptr.vmem [resolvable:$true] %s223
      %226 = dma.hbm_to_vmem [thread:$0]  %s16, 64, %s224, [#allocation28]
    $region69: #{forward.9} parent=1 // pred_fallthru
      _
    // Predicated region
    $region70: #{forward.9} parent=1 // pred_check
      _
    $region71: #{forward.9} parent=1 // pred_check_branch
      %228 = sbr.rel (0) target = $region73
    $region72: #{forward.9} parent=1 // pred_region
      %s230 = ssub.s32 256, 256
      %231 = vsyncadd [#allocation28], %s230
      %s232 = sshll.u32 [#allocation29], 4
      %s233 = int_to_ptr.vmem [resolvable:$true] %s232
      %238 = dma.hbm_to_vmem [thread:$0]  %s17, 256, %s233, [#allocation28], 128, 128, 8
    $region73: #{forward.9} parent=1 // pred_fallthru
      _
    // Predicated region
    $region74: #{forward.9} parent=1 // pred_check
      _
    $region75: #{forward.9} parent=1 // pred_check_branch
      %240 = sbr.rel (0) target = $region77
    $region76: #{forward.9} parent=1 // pred_region
      %s242 = ssub.s32 16, 16
      %243 = vsyncadd [#allocation31], %s242
      %s245 = sshll.u32 [#allocation30], 4
      %s246 = int_to_ptr.vmem [resolvable:$true] %s245
      %248 = dma.hbm_to_vmem [thread:$0]  %s18, 16, %s246, [#allocation31]
    $region77: #{forward.9} parent=1 // pred_fallthru
      _
    // Predicated region
    $region78: #{forward.9} parent=1 // pred_check
      _
    $region79: #{forward.9} parent=1 // pred_check_branch
      %250 = sbr.rel (0) target = $region81
    $region80: #{forward.9} parent=1 // pred_region
      %s252 = ssub.s32 256, 256
      %253 = vsyncadd [#allocation31], %s252
      %s254 = sshll.u32 [#allocation32], 4
      %s255 = int_to_ptr.vmem [resolvable:$true] %s254
      %260 = dma.hbm_to_vmem [thread:$0]  %s19, 256, %s255, [#allocation31], 128, 128, 8
    $region81: #{forward.9} parent=1 // pred_fallthru
      _
    // Predicated region
    $region82: #{forward.9} parent=1 // pred_check
      _
    $region83: #{forward.9} parent=1 // pred_check_branch
      %262 = sbr.rel (0) target = $region85
    $region84: #{forward.9} parent=1 // pred_region
      %s264 = ssub.s32 16, 16
      %265 = vsyncadd [#allocation34], %s264
      %s267 = sshll.u32 [#allocation33], 4
      %s268 = int_to_ptr.vmem [resolvable:$true] %s267
      %270 = dma.hbm_to_vmem [thread:$0]  %s20, 16, %s268, [#allocation34]
    $region85: #{forward.9} parent=1 // pred_fallthru
      _
    // Predicated region
    $region86: #{forward.9} parent=1 // pred_check
      _
    $region87: #{forward.9} parent=1 // pred_check_branch
      %272 = sbr.rel (0) target = $region89
    $region88: #{forward.9} parent=1 // pred_region
      %s274 = ssub.s32 128, 128
      %275 = vsyncadd [#allocation34], %s274
      %s277 = sshll.u32 [#allocation35], 4
      %s278 = int_to_ptr.vmem [resolvable:$true] %s277
      %280 = dma.hbm_to_vmem [thread:$0]  %s21, 128, %s278, [#allocation34]
    $region89: #{forward.9} parent=1 // pred_fallthru
      _
    // Predicated region
    $region90: #{forward.9} parent=1 // pred_check
      _
    $region91: #{forward.9} parent=1 // pred_check_branch
      %282 = sbr.rel (0) target = $region93
    $region92: #{forward.9} parent=1 // pred_region
      %s284 = ssub.s32 16, 16
      %285 = vsyncadd [#allocation37], %s284
      %s287 = sshll.u32 [#allocation36], 4
      %s288 = int_to_ptr.vmem [resolvable:$true] %s287
      %290 = dma.hbm_to_vmem [thread:$0]  %s22, 16, %s288, [#allocation37]
    $region93: #{forward.9} parent=1 // pred_fallthru
      _
    // Predicated region
    $region94: #{forward.9} parent=1 // pred_check
      _
    $region95: #{forward.9} parent=1 // pred_check_branch
      %292 = sbr.rel (0) target = $region97
    $region96: #{forward.9} parent=1 // pred_region
      %293 = dma.done [#allocation4], 256
    $region97: #{forward.9} parent=1 // pred_fallthru
      _
    // Predicated region
    $region98: #{forward.9} parent=1 // pred_check
      _
    $region99: #{forward.9} parent=1 // pred_check_branch
      %295 = sbr.rel (0) target = $region101
    $region100: #{forward.9} parent=1 // pred_region
      %296 = dma.done [#allocation7], 32
    $region101: #{forward.9} parent=1 // pred_fallthru
      _
    // Predicated region
    $region102: #{forward.9} parent=1 // pred_check
      _
    $region103: #{forward.9} parent=1 // pred_check_branch
      %298 = sbr.rel (0) target = $region105
    $region104: #{forward.9} parent=1 // pred_region
      %299 = dma.done [#allocation7], 256
    $region105: #{forward.9} parent=1 // pred_fallthru
      _
    // Predicated region
    $region106: #{forward.9} parent=1 // pred_check
      _
    $region107: #{forward.9} parent=1 // pred_check_branch
      %301 = sbr.rel (0) target = $region109
    $region108: #{forward.9} parent=1 // pred_region
      %302 = dma.done [#allocation10], 512
    $region109: #{forward.9} parent=1 // pred_fallthru
      _
    // Predicated region
    $region110: #{forward.9} parent=1 // pred_check
      _
    $region111: #{forward.9} parent=1 // pred_check_branch
      %304 = sbr.rel (0) target = $region113
    $region112: #{forward.9} parent=1 // pred_region
      %305 = dma.done [#allocation10], 16
    $region113: #{forward.9} parent=1 // pred_fallthru
      _
    // Predicated region
    $region114: #{forward.9} parent=1 // pred_check
      _
    $region115: #{forward.9} parent=1 // pred_check_branch
      %307 = sbr.rel (0) target = $region117
    $region116: #{forward.9} parent=1 // pred_region
      %308 = dma.done [#allocation13], 256
    $region117: #{forward.9} parent=1 // pred_fallthru
      _
    // Predicated region
    $region118: #{forward.9} parent=1 // pred_check
      _
    $region119: #{forward.9} parent=1 // pred_check_branch
      %310 = sbr.rel (0) target = $region121
    $region120: #{forward.9} parent=1 // pred_region
      %311 = dma.done [#allocation13], 1536
    $region121: #{forward.9} parent=1 // pred_fallthru
      _
    // Predicated region
    $region122: #{forward.9} parent=1 // pred_check
      _
    $region123: #{forward.9} parent=1 // pred_check_branch
      %313 = sbr.rel (0) target = $region125
    $region124: #{forward.9} parent=1 // pred_region
      %314 = dma.done [#allocation16], 64
    $region125: #{forward.9} parent=1 // pred_fallthru
      _
    // Predicated region
    $region126: #{forward.9} parent=1 // pred_check
      _
    $region127: #{forward.9} parent=1 // pred_check_branch
      %316 = sbr.rel (0) target = $region129
    $region128: #{forward.9} parent=1 // pred_region
      %317 = dma.done [#allocation16], 512
    $region129: #{forward.9} parent=1 // pred_fallthru
      _
    // Predicated region
    $region130: #{forward.9} parent=1 // pred_check
      _
    $region131: #{forward.9} parent=1 // pred_check_branch
      %319 = sbr.rel (0) target = $region133
    $region132: #{forward.9} parent=1 // pred_region
      %320 = dma.done [#allocation19], 16
    $region133: #{forward.9} parent=1 // pred_fallthru
      _
    // Predicated region
    $region134: #{forward.9} parent=1 // pred_check
      _
    $region135: #{forward.9} parent=1 // pred_check_branch
      %322 = sbr.rel (0) target = $region137
    $region136: #{forward.9} parent=1 // pred_region
      %323 = dma.done [#allocation19], 896
    $region137: #{forward.9} parent=1 // pred_fallthru
      _
    // Predicated region
    $region138: #{forward.9} parent=1 // pred_check
      _
    $region139: #{forward.9} parent=1 // pred_check_branch
      %325 = sbr.rel (0) target = $region141
    $region140: #{forward.9} parent=1 // pred_region
      %326 = dma.done [#allocation22], 16
    $region141: #{forward.9} parent=1 // pred_fallthru
      _
    // Predicated region
    $region142: #{forward.9} parent=1 // pred_check
      _
    $region143: #{forward.9} parent=1 // pred_check_branch
      %328 = sbr.rel (0) target = $region145
    $region144: #{forward.9} parent=1 // pred_region
      %329 = dma.done [#allocation22], 768
    $region145: #{forward.9} parent=1 // pred_fallthru
      _
    // Predicated region
    $region146: #{forward.9} parent=1 // pred_check
      _
    $region147: #{forward.9} parent=1 // pred_check_branch
      %331 = sbr.rel (0) target = $region149
    $region148: #{forward.9} parent=1 // pred_region
      %332 = dma.done [#allocation25], 64
    $region149: #{forward.9} parent=1 // pred_fallthru
      _
    // Predicated region
    $region150: #{forward.9} parent=1 // pred_check
      _
    $region151: #{forward.9} parent=1 // pred_check_branch
      %334 = sbr.rel (0) target = $region153
    $region152: #{forward.9} parent=1 // pred_region
      %335 = dma.done [#allocation25], 512
    $region153: #{forward.9} parent=1 // pred_fallthru
      _
    // Predicated region
    $region154: #{forward.9} parent=1 // pred_check
      _
    $region155: #{forward.9} parent=1 // pred_check_branch
      %337 = sbr.rel (0) target = $region157
    $region156: #{forward.9} parent=1 // pred_region
      %338 = dma.done [#allocation28], 64
    $region157: #{forward.9} parent=1 // pred_fallthru
      _
    // Predicated region
    $region158: #{forward.9} parent=1 // pred_check
      _
    $region159: #{forward.9} parent=1 // pred_check_branch
      %340 = sbr.rel (0) target = $region161
    $region160: #{forward.9} parent=1 // pred_region
      %341 = dma.done [#allocation28], 256
    $region161: #{forward.9} parent=1 // pred_fallthru
      _
    // Predicated region
    $region162: #{forward.9} parent=1 // pred_check
      _
    $region163: #{forward.9} parent=1 // pred_check_branch
      %343 = sbr.rel (0) target = $region165
    $region164: #{forward.9} parent=1 // pred_region
      %344 = dma.done [#allocation31], 16
    $region165: #{forward.9} parent=1 // pred_fallthru
      _
    // Predicated region
    $region166: #{forward.9} parent=1 // pred_check
      _
    $region167: #{forward.9} parent=1 // pred_check_branch
      %346 = sbr.rel (0) target = $region169
    $region168: #{forward.9} parent=1 // pred_region
      %347 = dma.done [#allocation31], 256
    $region169: #{forward.9} parent=1 // pred_fallthru
      _
    // Predicated region
    $region170: #{forward.9} parent=1 // pred_check
      _
    $region171: #{forward.9} parent=1 // pred_check_branch
      %349 = sbr.rel (0) target = $region173
    $region172: #{forward.9} parent=1 // pred_region
      %350 = dma.done [#allocation34], 16
    $region173: #{forward.9} parent=1 // pred_fallthru
      _
    // Predicated region
    $region174: #{forward.9} parent=1 // pred_check
      _
    $region175: #{forward.9} parent=1 // pred_check_branch
      %352 = sbr.rel (0) target = $region177
    $region176: #{forward.9} parent=1 // pred_region
      %353 = dma.done [#allocation34], 128
    $region177: #{forward.9} parent=1 // pred_fallthru
      _
    // Predicated region
    $region178: #{forward.9} parent=1 // pred_check
      _
    $region179: #{forward.9} parent=1 // pred_check_branch
      %355 = sbr.rel (0) target = $region181
    $region180: #{forward.9} parent=1 // pred_region
      %356 = dma.done [#allocation37], 16
    $region181: #{forward.9} parent=1 // pred_fallthru
      _
    %v357 = vld [vmem:[#allocation3] sm:$0xff]
    %v358 = vld [vmem:[#allocation3 + $0x8] sm:$0xff]
    %v359 = vld [vmem:[#allocation6] sm:$0x3]
    %v360 = vld [vmem:[#allocation8] sm:$0xff]
    %v361 = vld [vmem:[#allocation8 + $0x8] sm:$0xff]
    %v362 = vld [vmem:[#allocation9] sm:$0xff]
    %v363 = vld [vmem:[#allocation9 + $0x8] sm:$0xff]
    %v364 = vld [vmem:[#allocation9 + $0x10] sm:$0xff]
    %v365 = vld [vmem:[#allocation9 + $0x18] sm:$0xff]
    %v366 = vld [vmem:[#allocation11] sm:$0x1]
    %v368 = vlaneseq
    %v369 = vshrl.u32 %v368, 7
    %v370 = vsub.s32 0, %v369
    %v371 = vrot.slane %v366, %v370
    %vm373 = vcmask 261120
    %v375 = vsel %vm373, %v357, 0
    %v378 = vsel %vm373, %v358, 0
    %380 = vmatprep.subr.mxu0 0.0
    %381 = vmatpush1.msra.mxu0 %v362
    %382 = vmatprep.subr.mxu0 0.0
    %383 = vmatpush1.msra.mxu0 %v363
    %384 = vmatprep.subr.mxu0 0.0
    %385 = vmatpush1.msra.mxu0 %v364
    %386 = vmatprep.subr.mxu0 0.0
    %387 = vmatpush1.msra.mxu0 %v365
    %388 = vmatprep.subr.mxu0 0.0
    %389 = vmatpush1.msra.mxu0 0.0
    %390 = vmatprep.subr.mxu0 0.0
    %391 = vmatpush1.msra.mxu0 0.0
    %392 = vmatprep.subr.mxu0 0.0
    %393 = vmatpush1.msra.mxu0 0.0
    %394 = vmatprep.subr.mxu0 0.0
    %395 = vmatpush1.msra.mxu0 0.0
    %396 = vmatprep.subr.mxu0 0.0
    %397 = vmatpush1.msra.mxu0 0.0
    %398 = vmatprep.subr.mxu0 0.0
    %399 = vmatpush1.msra.mxu0 0.0
    %400 = vmatprep.subr.mxu0 0.0
    %401 = vmatpush1.msra.mxu0 0.0
    %402 = vmatprep.subr.mxu0 0.0
    %403 = vmatpush1.msra.mxu0 0.0
    %404 = vmatprep.subr.mxu0 0.0
    %405 = vmatpush1.msra.mxu0 0.0
    %406 = vmatprep.subr.mxu0 0.0
    %407 = vmatpush1.msra.mxu0 0.0
    %408 = vmatprep.subr.mxu0 0.0
    %409 = vmatpush1.msra.mxu0 0.0
    %410 = vmatprep.subr.mxu0 0.0
    %411 = vmatpush1.msra.mxu0 0.0
    %412 = vmatprep.subr.mxu0 0.0
    %413 = vmatpush1.msra.mxu0 0.0
    %414 = vmatprep.subr.mxu0 0.0
    %415 = vmatpush1.msra.mxu0 0.0
    %416 = vmatprep.subr.mxu0 0.0
    %417 = vmatpush1.msra.mxu0 0.0
    %418 = vmatprep.subr.mxu0 0.0
    %419 = vmatpush1.msra.mxu0 0.0
    %420 = vmatprep.subr.mxu0 0.0
    %421 = vmatpush1.msra.mxu0 0.0
    %422 = vmatprep.subr.mxu0 0.0
    %423 = vmatpush1.msra.mxu0 0.0
    %424 = vmatprep.subr.mxu0 0.0
    %425 = vmatpush1.msra.mxu0 0.0
    %426 = vmatprep.subr.mxu0 0.0
    %427 = vmatpush1.msra.mxu0 0.0
    %428 = vmatprep.subr.mxu0 0.0
    %429 = vmatpush1.msra.mxu0 0.0
    %430 = vmatprep.subr.mxu0 0.0
    %431 = vmatpush1.msra.mxu0 0.0
    %432 = vmatprep.subr.mxu0 0.0
    %433 = vmatpush1.msra.mxu0 0.0
    %434 = vmatprep.subr.mxu0 0.0
    %435 = vmatpush1.msra.mxu0 0.0
    %436 = vmatprep.subr.mxu0 0.0
    %437 = vmatpush1.msra.mxu0 0.0
    %438 = vmatprep.subr.mxu0 0.0
    %439 = vmatpush1.msra.mxu0 0.0
    %440 = vmatprep.subr.mxu0 0.0
    %441 = vmatpush1.msra.mxu0 0.0
    %442 = vmatprep.subr.mxu0 0.0
    %443 = vmatpush1.msra.mxu0 0.0
    %444 = vmatprep.mubr.f32.mxu0 0.0
    %445 = vmatmul.mubr.f32.gmra.mrb[0].mxu0 %v375
    %v446 = vpop.f32.mrb[0].mxu0
    %v447 = vadd.f32 %v371, %v446
    %v448 = vpop.f32.mrb[0].mxu0
    %449 = vmatprep.mubr.f32.mxu0 0.0
    %450 = vmatmul.mubr.f32.gmra.mrb[0].mxu0 %v378
    %v451 = vpop.f32.mrb[0].mxu0
    %v452 = vadd.f32 %v371, %v451
    %v453 = vpop.f32.mrb[0].mxu0
    %454 = vdwg.mxu0
    %v455 = vsub.f32 0.0, %v447
    %v456 = vsub.f32 0.0, %v452
    %v457 = vmul.f32 %v455, 1.442695
    %v458 = vpow.pop %v457
    %v459 = vmul.f32 %v456, 1.442695
    %v460 = vpow.pop %v459
    %v461 = vadd.f32 %v458, 1.0
    %v462 = vadd.f32 %v460, 1.0
    %v463 = vrcp.pop %v461
    %v464 = vrcp.pop %v462
    %v465 = vmul.f32 %v447, %v463
    %v466 = vmul.f32 %v452, %v464
    %v467 = vld [vmem:[#allocation12] sm:$0xff]
    %v468 = vld [vmem:[#allocation12 + $0x8] sm:$0xff]
    %v469 = vld [vmem:[#allocation2] sm:$0x1]
    %v471 = vlaneseq
    %v472 = vshrl.u32 %v471, 7
    %v473 = vsub.s32 0, %v472
    %v474 = vrot.slane %v469, %v473
    %vm476 = vcmask 130048
    %v478 = vsel %vm476, %v465, 0
    %v481 = vsel %vm476, %v466, 0
    %483 = vmatprep.subr.mxu0 0.0
    %484 = vmatpush1.msra.mxu0 %v467
    %485 = vmatprep.subr.mxu0 0.0
    %486 = vmatpush1.msra.mxu0 %v468
    %487 = vmatprep.subr.mxu0 0.0
    %488 = vmatpush1.msra.mxu0 0.0
    %489 = vmatprep.subr.mxu0 0.0
    %490 = vmatpush1.msra.mxu0 0.0
    %491 = vmatprep.subr.mxu0 0.0
    %492 = vmatpush1.msra.mxu0 0.0
    %493 = vmatprep.subr.mxu0 0.0
    %494 = vmatpush1.msra.mxu0 0.0
    %495 = vmatprep.subr.mxu0 0.0
    %496 = vmatpush1.msra.mxu0 0.0
    %497 = vmatprep.subr.mxu0 0.0
    %498 = vmatpush1.msra.mxu0 0.0
    %499 = vmatprep.subr.mxu0 0.0
    %500 = vmatpush1.msra.mxu0 0.0
    %501 = vmatprep.subr.mxu0 0.0
    %502 = vmatpush1.msra.mxu0 0.0
    %503 = vmatprep.subr.mxu0 0.0
    %504 = vmatpush1.msra.mxu0 0.0
    %505 = vmatprep.subr.mxu0 0.0
    %506 = vmatpush1.msra.mxu0 0.0
    %507 = vmatprep.subr.mxu0 0.0
    %508 = vmatpush1.msra.mxu0 0.0
    %509 = vmatprep.subr.mxu0 0.0
    %510 = vmatpush1.msra.mxu0 0.0
    %511 = vmatprep.subr.mxu0 0.0
    %512 = vmatpush1.msra.mxu0 0.0
    %513 = vmatprep.subr.mxu0 0.0
    %514 = vmatpush1.msra.mxu0 0.0
    %515 = vmatprep.subr.mxu0 0.0
    %516 = vmatpush1.msra.mxu0 0.0
    %517 = vmatprep.subr.mxu0 0.0
    %518 = vmatpush1.msra.mxu0 0.0
    %519 = vmatprep.subr.mxu0 0.0
    %520 = vmatpush1.msra.mxu0 0.0
    %521 = vmatprep.subr.mxu0 0.0
    %522 = vmatpush1.msra.mxu0 0.0
    %523 = vmatprep.subr.mxu0 0.0
    %524 = vmatpush1.msra.mxu0 0.0
    %525 = vmatprep.subr.mxu0 0.0
    %526 = vmatpush1.msra.mxu0 0.0
    %527 = vmatprep.subr.mxu0 0.0
    %528 = vmatpush1.msra.mxu0 0.0
    %529 = vmatprep.subr.mxu0 0.0
    %530 = vmatpush1.msra.mxu0 0.0
    %531 = vmatprep.subr.mxu0 0.0
    %532 = vmatpush1.msra.mxu0 0.0
    %533 = vmatprep.subr.mxu0 0.0
    %534 = vmatpush1.msra.mxu0 0.0
    %535 = vmatprep.subr.mxu0 0.0
    %536 = vmatpush1.msra.mxu0 0.0
    %537 = vmatprep.subr.mxu0 0.0
    %538 = vmatpush1.msra.mxu0 0.0
    %539 = vmatprep.subr.mxu0 0.0
    %540 = vmatpush1.msra.mxu0 0.0
    %541 = vmatprep.subr.mxu0 0.0
    %542 = vmatpush1.msra.mxu0 0.0
    %543 = vmatprep.subr.mxu0 0.0
    %544 = vmatpush1.msra.mxu0 0.0
    %545 = vmatprep.subr.mxu0 0.0
    %546 = vmatpush1.msra.mxu0 0.0
    %547 = vmatprep.mubr.f32.mxu0 0.0
    %548 = vmatmul.mubr.f32.gmra.mrb[0].mxu0 %v478
    %v549 = vpop.f32.mrb[0].mxu0
    %v550 = vadd.f32 %v474, %v549
    %v551 = vpop.f32.mrb[0].mxu0
    %552 = vmatprep.mubr.f32.mxu0 0.0
    %553 = vmatmul.mubr.f32.gmra.mrb[0].mxu0 %v481
    %v554 = vpop.f32.mrb[0].mxu0
    %v555 = vadd.f32 %v474, %v554
    %v556 = vpop.f32.mrb[0].mxu0
    %557 = vdwg.mxu0
    %vm558 = vcmask 15360
    %v559 = vsel %vm558, %v360, 0.0
    %560 = vadd.xlane.f32.xlu0 %v559
    %v561 = vpop.xlane.xlu0 %560
    %v562 = vsel %vm558, %v361, 0.0
    %563 = vadd.xlane.f32.xlu0 %v562
    %v564 = vpop.xlane.xlu0 %563
    %vm565 = vcmp.gt.f32.partialorder %v561, 0.5
    %vm566 = vcmp.gt.f32.partialorder %v564, 0.5
    %v567 = vsel %vm565, %v550, -1e+30
    %v568 = vsel %vm566, %v555, -1e+30
    %vm569 = vcmask 7168
    %v570 = vsel %vm569, %v567, -inf
    %v571 = vsel %vm569, %v568, -inf
    %v572 = vmax.f32 %v570, %v571
    %v573 = vrot.slane %v572, 4
    %v574 = vmax.f32 %v572, %v573
    %v575 = vrot.slane %v574, 2
    %v576 = vmax.f32 %v574, %v575
    %v577 = vrot.slane %v576, 1
    %v578 = vmax.f32 %v576, %v577
    %v579 = vsub.f32 %v567, %v578
    %v580 = vsub.f32 %v568, %v578
    %v581 = vmul.f32 %v579, 1.442695
    %v582 = vpow.pop %v581
    %v583 = vmul.f32 %v580, 1.442695
    %v584 = vpow.pop %v583
    %v585 = vsel %vm569, %v582, 0.0
    %v586 = vsel %vm569, %v584, 0.0
    %v587 = vadd.f32 %v585, %v586
    %v588 = vrot.slane %v587, 4
    %v589 = vadd.f32 %v587, %v588
    %v590 = vrot.slane %v589, 2
    %v591 = vadd.f32 %v589, %v590
    %v592 = vrot.slane %v591, 1
    %v593 = vadd.f32 %v591, %v592
    %v594 = vrcp.pop %v593
    %v595 = vmul.f32 %v582, %v594
    %v596 = vmul.f32 %v584, %v594
    %vm597 = vcmask 123904
    %v598 = vsel %vm597, %v359, 0.0
    %599 = vadd.xlane.f32.xlu0 %v598
    %v600 = vpop.xlane.xlu0 %599
    %v602 = vsel %vm476, %v359, 0
    %604 = vmatprep.subr.mxu0 0.0
    %605 = vmatpush1.msra.mxu0 %v357
    %606 = vmatprep.subr.mxu0 0.0
    %607 = vmatpush1.msra.mxu0 %v358
    %608 = vmatprep.subr.mxu0 0.0
    %609 = vmatpush1.msra.mxu0 0.0
    %610 = vmatprep.subr.mxu0 0.0
    %611 = vmatpush1.msra.mxu0 0.0
    %612 = vmatprep.subr.mxu0 0.0
    %613 = vmatpush1.msra.mxu0 0.0
    %614 = vmatprep.subr.mxu0 0.0
    %615 = vmatpush1.msra.mxu0 0.0
    %616 = vmatprep.subr.mxu0 0.0
    %617 = vmatpush1.msra.mxu0 0.0
    %618 = vmatprep.subr.mxu0 0.0
    %619 = vmatpush1.msra.mxu0 0.0
    %620 = vmatprep.subr.mxu0 0.0
    %621 = vmatpush1.msra.mxu0 0.0
    %622 = vmatprep.subr.mxu0 0.0
    %623 = vmatpush1.msra.mxu0 0.0
    %624 = vmatprep.subr.mxu0 0.0
    %625 = vmatpush1.msra.mxu0 0.0
    %626 = vmatprep.subr.mxu0 0.0
    %627 = vmatpush1.msra.mxu0 0.0
    %628 = vmatprep.subr.mxu0 0.0
    %629 = vmatpush1.msra.mxu0 0.0
    %630 = vmatprep.subr.mxu0 0.0
    %631 = vmatpush1.msra.mxu0 0.0
    %632 = vmatprep.subr.mxu0 0.0
    %633 = vmatpush1.msra.mxu0 0.0
    %634 = vmatprep.subr.mxu0 0.0
    %635 = vmatpush1.msra.mxu0 0.0
    %636 = vmatprep.subr.mxu0 0.0
    %637 = vmatpush1.msra.mxu0 0.0
    %638 = vmatprep.subr.mxu0 0.0
    %639 = vmatpush1.msra.mxu0 0.0
    %640 = vmatprep.subr.mxu0 0.0
    %641 = vmatpush1.msra.mxu0 0.0
    %642 = vmatprep.subr.mxu0 0.0
    %643 = vmatpush1.msra.mxu0 0.0
    %644 = vmatprep.subr.mxu0 0.0
    %645 = vmatpush1.msra.mxu0 0.0
    %646 = vmatprep.subr.mxu0 0.0
    %647 = vmatpush1.msra.mxu0 0.0
    %648 = vmatprep.subr.mxu0 0.0
    %649 = vmatpush1.msra.mxu0 0.0
    %650 = vmatprep.subr.mxu0 0.0
    %651 = vmatpush1.msra.mxu0 0.0
    %652 = vmatprep.subr.mxu0 0.0
    %653 = vmatpush1.msra.mxu0 0.0
    %654 = vmatprep.subr.mxu0 0.0
    %655 = vmatpush1.msra.mxu0 0.0
    %656 = vmatprep.subr.mxu0 0.0
    %657 = vmatpush1.msra.mxu0 0.0
    %658 = vmatprep.subr.mxu0 0.0
    %659 = vmatpush1.msra.mxu0 0.0
    %660 = vmatprep.subr.mxu0 0.0
    %661 = vmatpush1.msra.mxu0 0.0
    %662 = vmatprep.subr.mxu0 0.0
    %663 = vmatpush1.msra.mxu0 0.0
    %664 = vmatprep.subr.mxu0 0.0
    %665 = vmatpush1.msra.mxu0 0.0
    %666 = vmatprep.subr.mxu0 0.0
    %667 = vmatpush1.msra.mxu0 0.0
    %668 = vmatprep.mubr.f32.mxu0 0.0
    %669 = vmatmul.mubr.f32.gmra.mrb[0].mxu0 %v602
    %v670 = vpop.f32.mrb[0].mxu0
    %v671 = vadd.f32 0.0, %v670
    %v672 = vpop.f32.mrb[0].mxu0
    %673 = vdwg.mxu0
    %v674 = vmax.f32 %v600, 1.0
    %v675 = vrcp.pop %v674
    %v676 = vmul.f32 %v671, %v675
    %678 = vset.pattern.permute.xlu0 0
    %679 = vperm.xlu0 %678, %v595
    %v680 = vpop.permute.xlu0 %679
    %683 = vset.pattern.permute.xlu0 0
    %684 = vperm.xlu0 %683, %v596
    %v685 = vpop.permute.xlu0 %684
    %v687 = vmul.f32 %v357, %v680
    %v688 = vmul.f32 %v358, %v685
    %689 = vmatprep.subr.mxu0 0.0
    %690 = vmatpush1.msra.mxu0 %v687
    %691 = vmatprep.subr.mxu0 0.0
    %692 = vmatpush1.msra.mxu0 %v688
    %693 = vmatprep.subr.mxu0 0.0
    %694 = vmatpush1.msra.mxu0 0.0
    %695 = vmatprep.subr.mxu0 0.0
    %696 = vmatpush1.msra.mxu0 0.0
    %697 = vmatprep.subr.mxu0 0.0
    %698 = vmatpush1.msra.mxu0 0.0
    %699 = vmatprep.subr.mxu0 0.0
    %700 = vmatpush1.msra.mxu0 0.0
    %701 = vmatprep.subr.mxu0 0.0
    %702 = vmatpush1.msra.mxu0 0.0
    %703 = vmatprep.subr.mxu0 0.0
    %704 = vmatpush1.msra.mxu0 0.0
    %705 = vmatprep.subr.mxu0 0.0
    %706 = vmatpush1.msra.mxu0 0.0
    %707 = vmatprep.subr.mxu0 0.0
    %708 = vmatpush1.msra.mxu0 0.0
    %709 = vmatprep.subr.mxu0 0.0
    %710 = vmatpush1.msra.mxu0 0.0
    %711 = vmatprep.subr.mxu0 0.0
    %712 = vmatpush1.msra.mxu0 0.0
    %713 = vmatprep.subr.mxu0 0.0
    %714 = vmatpush1.msra.mxu0 0.0
    %715 = vmatprep.subr.mxu0 0.0
    %716 = vmatpush1.msra.mxu0 0.0
    %717 = vmatprep.subr.mxu0 0.0
    %718 = vmatpush1.msra.mxu0 0.0
    %719 = vmatprep.subr.mxu0 0.0
    %720 = vmatpush1.msra.mxu0 0.0
    %721 = vmatprep.subr.mxu0 0.0
    %722 = vmatpush1.msra.mxu0 0.0
    %723 = vmatprep.subr.mxu0 0.0
    %724 = vmatpush1.msra.mxu0 0.0
    %725 = vmatprep.subr.mxu0 0.0
    %726 = vmatpush1.msra.mxu0 0.0
    %727 = vmatprep.subr.mxu0 0.0
    %728 = vmatpush1.msra.mxu0 0.0
    %729 = vmatprep.subr.mxu0 0.0
    %730 = vmatpush1.msra.mxu0 0.0
    %731 = vmatprep.subr.mxu0 0.0
    %732 = vmatpush1.msra.mxu0 0.0
    %733 = vmatprep.subr.mxu0 0.0
    %734 = vmatpush1.msra.mxu0 0.0
    %735 = vmatprep.subr.mxu0 0.0
    %736 = vmatpush1.msra.mxu0 0.0
    %737 = vmatprep.subr.mxu0 0.0
    %738 = vmatpush1.msra.mxu0 0.0
    %739 = vmatprep.subr.mxu0 0.0
    %740 = vmatpush1.msra.mxu0 0.0
    %741 = vmatprep.subr.mxu0 0.0
    %742 = vmatpush1.msra.mxu0 0.0
    %743 = vmatprep.subr.mxu0 0.0
    %744 = vmatpush1.msra.mxu0 0.0
    %745 = vmatprep.subr.mxu0 0.0
    %746 = vmatpush1.msra.mxu0 0.0
    %747 = vmatprep.subr.mxu0 0.0
    %748 = vmatpush1.msra.mxu0 0.0
    %749 = vmatprep.subr.mxu0 0.0
    %750 = vmatpush1.msra.mxu0 0.0
    %751 = vmatprep.subr.mxu0 0.0
    %752 = vmatpush1.msra.mxu0 0.0
    %753 = vmatprep.mubr.f32.mxu0 0.0
    %754 = vmatmul.mubr.f32.gmra.mrb[0].mxu0 %v602
    %v755 = vpop.f32.mrb[0].mxu0
    %v756 = vadd.f32 0.0, %v755
    %v757 = vpop.f32.mrb[0].mxu0
    %758 = vdwg.mxu0
    %vm759 = vcmp.gt.f32.partialorder %v360, 0.5
    %vm760 = vcmp.gt.f32.partialorder %v361, 0.5
    %v761 = vsel %vm759, 1, 0
    %v762 = vsel %vm760, 1, 0
    %763 = vset.pattern.permute.xlu0 0
    %764 = vperm.xlu0 %763, %v761
    %v765 = vpop.permute.xlu0 %764
    %766 = vset.pattern.permute.xlu0 0
    %767 = vperm.xlu0 %766, %v762
    %v768 = vpop.permute.xlu0 %767
    %vm769 = vcmp.eq.s32.totalorder %v765, 1
    %vm770 = vcmp.eq.s32.totalorder %v768, 1
    %v771 = vsel %vm769, %v357, -1e+30
    %v772 = vsel %vm770, %v358, -1e+30
    %v773 = vsel %vm373, %v771, -inf
    %v774 = vsel %vm373, %v772, -inf
    %v775 = vmax.f32 %v773, %v774
    %v776 = vrot.slane %v775, 4
    %v777 = vmax.f32 %v775, %v776
    %v778 = vrot.slane %v777, 2
    %v779 = vmax.f32 %v777, %v778
    %v780 = vrot.slane %v779, 1
    %v781 = vmax.f32 %v779, %v780
    %782 = vset.pattern.permute.xlu0 1
    %783 = vperm.xlu0 %782, %v761
    %v784 = vpop.permute.xlu0 %783
    %785 = vset.pattern.permute.xlu0 1
    %786 = vperm.xlu0 %785, %v762
    %v787 = vpop.permute.xlu0 %786
    %vm788 = vcmp.eq.s32.totalorder %v784, 1
    %vm789 = vcmp.eq.s32.totalorder %v787, 1
    %v790 = vsel %vm788, %v357, -1e+30
    %v791 = vsel %vm789, %v358, -1e+30
    %v792 = vsel %vm373, %v790, -inf
    %v793 = vsel %vm373, %v791, -inf
    %v794 = vmax.f32 %v792, %v793
    %v795 = vrot.slane %v794, 4
    %v796 = vmax.f32 %v794, %v795
    %v797 = vrot.slane %v796, 2
    %v798 = vmax.f32 %v796, %v797
    %v799 = vrot.slane %v798, 1
    %v800 = vmax.f32 %v798, %v799
    %vm801 = vcmask 1040384
    %v802 = vsel %vm801, %v781, %v800
    %vm803 = vcmp.gt.f32.partialorder %v600, 0.5
    %v804 = vsel %vm803, 1, 0
    %vm805 = vcmp.eq.s32.totalorder %v804, 1
    %v806 = vsel %vm805, %v802, 0.0
    %808 = vrot.lane.b32.xlu0 %v806, 32
    %v809 = vpop.permute.xlu0 %808
    %812 = vrot.lane.b32.xlu0 %v756, 64
    %v813 = vpop.permute.xlu0 %812
    %v815 = vsel %vm373, %v676, %v809
    %vm816 = vcmask 523264
    %v817 = vsel %vm816, %v815, %v813
    %v818 = vld [vmem:[#allocation15] sm:$0x7]
    %v819 = vld [vmem:[#allocation14] sm:$0xff]
    %v820 = vld [vmem:[#allocation14 + $0x8] sm:$0xff]
    %v821 = vld [vmem:[#allocation14 + $0x10] sm:$0xff]
    %v822 = vld [vmem:[#allocation14 + $0x18] sm:$0xff]
    %v823 = vld [vmem:[#allocation14 + $0x20] sm:$0xff]
    %v824 = vld [vmem:[#allocation14 + $0x28] sm:$0xff]
    %v825 = vld [vmem:[#allocation14 + $0x30] sm:$0xff]
    %v826 = vld [vmem:[#allocation14 + $0x38] sm:$0xff]
    %v827 = vld [vmem:[#allocation14 + $0x40] sm:$0xff]
    %v828 = vld [vmem:[#allocation14 + $0x48] sm:$0xff]
    %v829 = vld [vmem:[#allocation14 + $0x50] sm:$0xff]
    %v830 = vld [vmem:[#allocation14 + $0x58] sm:$0xff]
    %v831 = vlaneseq
    %v832 = vshrl.u32 %v831, 7
    %v833 = vsub.s32 0, %v832
    %v834 = vrot.slane %v818, %v833
    %vm835 = vcmask 785408
    %v837 = vsel %vm835, %v817, 0
    %839 = vmatprep.subr.mxu0 0.0
    %840 = vmatpush1.msra.mxu0 %v819
    %841 = vmatprep.subr.mxu0 0.0
    %842 = vmatpush1.msra.mxu0 %v820
    %843 = vmatprep.subr.mxu0 0.0
    %844 = vmatpush1.msra.mxu0 %v821
    %845 = vmatprep.subr.mxu0 0.0
    %846 = vmatpush1.msra.mxu0 %v822
    %847 = vmatprep.subr.mxu0 0.0
    %848 = vmatpush1.msra.mxu0 %v823
    %849 = vmatprep.subr.mxu0 0.0
    %850 = vmatpush1.msra.mxu0 %v824
    %851 = vmatprep.subr.mxu0 0.0
    %852 = vmatpush1.msra.mxu0 %v825
    %853 = vmatprep.subr.mxu0 0.0
    %854 = vmatpush1.msra.mxu0 %v826
    %855 = vmatprep.subr.mxu0 0.0
    %856 = vmatpush1.msra.mxu0 %v827
    %857 = vmatprep.subr.mxu0 0.0
    %858 = vmatpush1.msra.mxu0 %v828
    %859 = vmatprep.subr.mxu0 0.0
    %860 = vmatpush1.msra.mxu0 %v829
    %861 = vmatprep.subr.mxu0 0.0
    %862 = vmatpush1.msra.mxu0 %v830
    %863 = vmatprep.subr.mxu0 0.0
    %864 = vmatpush1.msra.mxu0 0.0
    %865 = vmatprep.subr.mxu0 0.0
    %866 = vmatpush1.msra.mxu0 0.0
    %867 = vmatprep.subr.mxu0 0.0
    %868 = vmatpush1.msra.mxu0 0.0
    %869 = vmatprep.subr.mxu0 0.0
    %870 = vmatpush1.msra.mxu0 0.0
    %871 = vmatprep.subr.mxu0 0.0
    %872 = vmatpush1.msra.mxu0 0.0
    %873 = vmatprep.subr.mxu0 0.0
    %874 = vmatpush1.msra.mxu0 0.0
    %875 = vmatprep.subr.mxu0 0.0
    %876 = vmatpush1.msra.mxu0 0.0
    %877 = vmatprep.subr.mxu0 0.0
    %878 = vmatpush1.msra.mxu0 0.0
    %879 = vmatprep.subr.mxu0 0.0
    %880 = vmatpush1.msra.mxu0 0.0
    %881 = vmatprep.subr.mxu0 0.0
    %882 = vmatpush1.msra.mxu0 0.0
    %883 = vmatprep.subr.mxu0 0.0
    %884 = vmatpush1.msra.mxu0 0.0
    %885 = vmatprep.subr.mxu0 0.0
    %886 = vmatpush1.msra.mxu0 0.0
    %887 = vmatprep.subr.mxu0 0.0
    %888 = vmatpush1.msra.mxu0 0.0
    %889 = vmatprep.subr.mxu0 0.0
    %890 = vmatpush1.msra.mxu0 0.0
    %891 = vmatprep.subr.mxu0 0.0
    %892 = vmatpush1.msra.mxu0 0.0
    %893 = vmatprep.subr.mxu0 0.0
    %894 = vmatpush1.msra.mxu0 0.0
    %895 = vmatprep.subr.mxu0 0.0
    %896 = vmatpush1.msra.mxu0 0.0
    %897 = vmatprep.subr.mxu0 0.0
    %898 = vmatpush1.msra.mxu0 0.0
    %899 = vmatprep.subr.mxu0 0.0
    %900 = vmatpush1.msra.mxu0 0.0
    %901 = vmatprep.subr.mxu0 0.0
    %902 = vmatpush1.msra.mxu0 0.0
    %903 = vmatprep.mubr.f32.mxu0 0.0
    %904 = vmatmul.mubr.f32.gmra.mrb[0].mxu0 %v837
    %v905 = vpop.f32.mrb[0].mxu0
    %v906 = vadd.f32 %v834, %v905
    %v907 = vpop.f32.mrb[0].mxu0
    %908 = vdwg.mxu0
    %vm909 = vcmask 254976
    %v910 = vsel %vm909, %v906, 0.0
    %911 = vadd.xlane.f32.xlu0 %v910
    %v912 = vpop.xlane.xlu0 %911
    %v913 = vrcp.pop 32.0
    %v914 = vmul.f32 %v912, %v913
    %v915 = vsub.f32 %v906, %v914
    %v916 = vmul.f32 %v915, %v915
    %v917 = vsel %vm909, %v916, 0.0
    %918 = vadd.xlane.f32.xlu0 %v917
    %v919 = vpop.xlane.xlu0 %918
    %v920 = vmul.f32 %v919, %v913
    %v921 = vadd.f32 %v920, 1e-05
    %v922 = vrsqrt.pop %v921
    %v923 = vmul.f32 %v915, %v922
    %v924 = vlaneseq
    %v925 = vshrl.u32 %v924, 7
    %v926 = vsub.s32 1, %v925
    %v927 = vrot.slane %v818, %v926
    %v928 = vmul.f32 %v923, %v927
    %v929 = vlaneseq
    %v930 = vshrl.u32 %v929, 7
    %v931 = vsub.s32 2, %v930
    %v932 = vrot.slane %v818, %v931
    %v933 = vadd.f32 %v928, %v932
    %v934 = vsub.f32 0.0, %v933
    %v935 = vmul.f32 %v934, 1.442695
    %v936 = vpow.pop %v935
    %v937 = vadd.f32 %v936, 1.0
    %v938 = vrcp.pop %v937
    %v939 = vmul.f32 %v933, %v938
    %v940 = vld [vmem:[#allocation17] sm:$0xff]
    %v941 = vld [vmem:[#allocation17 + $0x8] sm:$0xff]
    %v942 = vld [vmem:[#allocation17 + $0x10] sm:$0xff]
    %v943 = vld [vmem:[#allocation17 + $0x18] sm:$0xff]
    %v944 = vld [vmem:[#allocation18] sm:$0x1]
    %v946 = vlaneseq
    %v947 = vshrl.u32 %v946, 7
    %v948 = vsub.s32 0, %v947
    %v949 = vrot.slane %v944, %v948
    %v952 = vsel %vm373, %v939, 0
    %954 = vmatprep.subr.mxu0 0.0
    %955 = vmatpush1.msra.mxu0 %v940
    %956 = vmatprep.subr.mxu0 0.0
    %957 = vmatpush1.msra.mxu0 %v941
    %958 = vmatprep.subr.mxu0 0.0
    %959 = vmatpush1.msra.mxu0 %v942
    %960 = vmatprep.subr.mxu0 0.0
    %961 = vmatpush1.msra.mxu0 %v943
    %962 = vmatprep.subr.mxu0 0.0
    %963 = vmatpush1.msra.mxu0 0.0
    %964 = vmatprep.subr.mxu0 0.0
    %965 = vmatpush1.msra.mxu0 0.0
    %966 = vmatprep.subr.mxu0 0.0
    %967 = vmatpush1.msra.mxu0 0.0
    %968 = vmatprep.subr.mxu0 0.0
    %969 = vmatpush1.msra.mxu0 0.0
    %970 = vmatprep.subr.mxu0 0.0
    %971 = vmatpush1.msra.mxu0 0.0
    %972 = vmatprep.subr.mxu0 0.0
    %973 = vmatpush1.msra.mxu0 0.0
    %974 = vmatprep.subr.mxu0 0.0
    %975 = vmatpush1.msra.mxu0 0.0
    %976 = vmatprep.subr.mxu0 0.0
    %977 = vmatpush1.msra.mxu0 0.0
    %978 = vmatprep.subr.mxu0 0.0
    %979 = vmatpush1.msra.mxu0 0.0
    %980 = vmatprep.subr.mxu0 0.0
    %981 = vmatpush1.msra.mxu0 0.0
    %982 = vmatprep.subr.mxu0 0.0
    %983 = vmatpush1.msra.mxu0 0.0
    %984 = vmatprep.subr.mxu0 0.0
    %985 = vmatpush1.msra.mxu0 0.0
    %986 = vmatprep.subr.mxu0 0.0
    %987 = vmatpush1.msra.mxu0 0.0
    %988 = vmatprep.subr.mxu0 0.0
    %989 = vmatpush1.msra.mxu0 0.0
    %990 = vmatprep.subr.mxu0 0.0
    %991 = vmatpush1.msra.mxu0 0.0
    %992 = vmatprep.subr.mxu0 0.0
    %993 = vmatpush1.msra.mxu0 0.0
    %994 = vmatprep.subr.mxu0 0.0
    %995 = vmatpush1.msra.mxu0 0.0
    %996 = vmatprep.subr.mxu0 0.0
    %997 = vmatpush1.msra.mxu0 0.0
    %998 = vmatprep.subr.mxu0 0.0
    %999 = vmatpush1.msra.mxu0 0.0
    %1000 = vmatprep.subr.mxu0 0.0
    %1001 = vmatpush1.msra.mxu0 0.0
    %1002 = vmatprep.subr.mxu0 0.0
    %1003 = vmatpush1.msra.mxu0 0.0
    %1004 = vmatprep.subr.mxu0 0.0
    %1005 = vmatpush1.msra.mxu0 0.0
    %1006 = vmatprep.subr.mxu0 0.0
    %1007 = vmatpush1.msra.mxu0 0.0
    %1008 = vmatprep.subr.mxu0 0.0
    %1009 = vmatpush1.msra.mxu0 0.0
    %1010 = vmatprep.subr.mxu0 0.0
    %1011 = vmatpush1.msra.mxu0 0.0
    %1012 = vmatprep.subr.mxu0 0.0
    %1013 = vmatpush1.msra.mxu0 0.0
    %1014 = vmatprep.subr.mxu0 0.0
    %1015 = vmatpush1.msra.mxu0 0.0
    %1016 = vmatprep.subr.mxu0 0.0
    %1017 = vmatpush1.msra.mxu0 0.0
    %1018 = vmatprep.mubr.f32.mxu0 0.0
    %1019 = vmatmul.mubr.f32.gmra.mrb[0].mxu0 %v952
    %v1020 = vpop.f32.mrb[0].mxu0
    %v1021 = vadd.f32 %v949, %v1020
    %v1022 = vpop.f32.mrb[0].mxu0
    %1023 = vdwg.mxu0
    %v1024 = vsub.f32 0.0, %v1021
    %v1025 = vmul.f32 %v1024, 1.442695
    %v1026 = vpow.pop %v1025
    %v1027 = vadd.f32 %v1026, 1.0
    %v1028 = vrcp.pop %v1027
    %v1029 = vmul.f32 %v1021, %v1028
    %v1030 = vld [vmem:[#allocation20] sm:$0xff]
    %v1031 = vld [vmem:[#allocation20 + $0x8] sm:$0xff]
    %v1032 = vld [vmem:[#allocation20 + $0x10] sm:$0xff]
    %v1033 = vld [vmem:[#allocation20 + $0x18] sm:$0xff]
    %v1034 = vld [vmem:[#allocation20 + $0x20] sm:$0xff]
    %v1035 = vld [vmem:[#allocation20 + $0x28] sm:$0xff]
    %v1036 = vld [vmem:[#allocation20 + $0x30] sm:$0xff]
    %v1037 = vld [vmem:[#allocation21] sm:$0x1]
    %v1039 = vlaneseq
    %v1040 = vshrl.u32 %v1039, 7
    %v1041 = vsub.s32 0, %v1040
    %v1042 = vrot.slane %v1037, %v1041
    %vm1044 = vcmask 457728
    %v1046 = vsel %vm1044, %v1029, 0
    %1048 = vmatprep.subr.mxu0 0.0
    %1049 = vmatpush1.msra.mxu0 %v1030
    %1050 = vmatprep.subr.mxu0 0.0
    %1051 = vmatpush1.msra.mxu0 %v1031
    %1052 = vmatprep.subr.mxu0 0.0
    %1053 = vmatpush1.msra.mxu0 %v1032
    %1054 = vmatprep.subr.mxu0 0.0
    %1055 = vmatpush1.msra.mxu0 %v1033
    %1056 = vmatprep.subr.mxu0 0.0
    %1057 = vmatpush1.msra.mxu0 %v1034
    %1058 = vmatprep.subr.mxu0 0.0
    %1059 = vmatpush1.msra.mxu0 %v1035
    %1060 = vmatprep.subr.mxu0 0.0
    %1061 = vmatpush1.msra.mxu0 %v1036
    %1062 = vmatprep.subr.mxu0 0.0
    %1063 = vmatpush1.msra.mxu0 0.0
    %1064 = vmatprep.subr.mxu0 0.0
    %1065 = vmatpush1.msra.mxu0 0.0
    %1066 = vmatprep.subr.mxu0 0.0
    %1067 = vmatpush1.msra.mxu0 0.0
    %1068 = vmatprep.subr.mxu0 0.0
    %1069 = vmatpush1.msra.mxu0 0.0
    %1070 = vmatprep.subr.mxu0 0.0
    %1071 = vmatpush1.msra.mxu0 0.0
    %1072 = vmatprep.subr.mxu0 0.0
    %1073 = vmatpush1.msra.mxu0 0.0
    %1074 = vmatprep.subr.mxu0 0.0
    %1075 = vmatpush1.msra.mxu0 0.0
    %1076 = vmatprep.subr.mxu0 0.0
    %1077 = vmatpush1.msra.mxu0 0.0
    %1078 = vmatprep.subr.mxu0 0.0
    %1079 = vmatpush1.msra.mxu0 0.0
    %1080 = vmatprep.subr.mxu0 0.0
    %1081 = vmatpush1.msra.mxu0 0.0
    %1082 = vmatprep.subr.mxu0 0.0
    %1083 = vmatpush1.msra.mxu0 0.0
    %1084 = vmatprep.subr.mxu0 0.0
    %1085 = vmatpush1.msra.mxu0 0.0
    %1086 = vmatprep.subr.mxu0 0.0
    %1087 = vmatpush1.msra.mxu0 0.0
    %1088 = vmatprep.subr.mxu0 0.0
    %1089 = vmatpush1.msra.mxu0 0.0
    %1090 = vmatprep.subr.mxu0 0.0
    %1091 = vmatpush1.msra.mxu0 0.0
    %1092 = vmatprep.subr.mxu0 0.0
    %1093 = vmatpush1.msra.mxu0 0.0
    %1094 = vmatprep.subr.mxu0 0.0
    %1095 = vmatpush1.msra.mxu0 0.0
    %1096 = vmatprep.subr.mxu0 0.0
    %1097 = vmatpush1.msra.mxu0 0.0
    %1098 = vmatprep.subr.mxu0 0.0
    %1099 = vmatpush1.msra.mxu0 0.0
    %1100 = vmatprep.subr.mxu0 0.0
    %1101 = vmatpush1.msra.mxu0 0.0
    %1102 = vmatprep.subr.mxu0 0.0
    %1103 = vmatpush1.msra.mxu0 0.0
    %1104 = vmatprep.subr.mxu0 0.0
    %1105 = vmatpush1.msra.mxu0 0.0
    %1106 = vmatprep.subr.mxu0 0.0
    %1107 = vmatpush1.msra.mxu0 0.0
    %1108 = vmatprep.subr.mxu0 0.0
    %1109 = vmatpush1.msra.mxu0 0.0
    %1110 = vmatprep.subr.mxu0 0.0
    %1111 = vmatpush1.msra.mxu0 0.0
    %1112 = vmatprep.mubr.f32.mxu0 0.0
    %1113 = vmatmul.mubr.f32.gmra.mrb[0].mxu0 %v1046
    %v1114 = vpop.f32.mrb[0].mxu0
    %v1115 = vadd.f32 %v1042, %v1114
    %v1116 = vpop.f32.mrb[0].mxu0
    %1117 = vdwg.mxu0
    %v1118 = vtanh.pop %v1115
    %v1119 = vsub.f32 0.0, %v1115
    %v1120 = vmul.f32 %v1119, 1.442695
    %v1121 = vpow.pop %v1120
    %v1122 = vadd.f32 %v1121, 1.0
    %v1123 = vrcp.pop %v1122
    %v1124 = vmul.f32 1.0, %v1123
    %v1125 = vmax.f32 %v1115, 0.0
    %v1126 = vand.u32 2147483647, %v1115
    %v1127 = vsub.f32 0.0, %v1126
    %v1128 = vmul.f32 %v1127, 1.442695
    %v1129 = vpow.pop %v1128
    %v1130 = vadd.f32 %v1129, 1.0
    %v1131 = vlog2.pop %v1130
    %v1132 = vmul.f32 %v1131, 0.6931472
    %v1133 = vadd.f32 %v1125, %v1132
    %v1134 = vsel %vm569, %v1118, %v1124
    %vm1135 = vcmask 39936
    %v1136 = vsel %vm1135, %v1134, %v1133
    %vm1137 = vcmask 48128
    %v1138 = vsel %vm1137, %v1136, %v1115
    %vm1139 = vcmask 107520
    %1140 = vst.msk [vmem:[#allocation41] sm:$0x3] %vm1139, %v1138
    %1142 = vrot.lane.b32.xlu0 %v1138, 32
    %v1143 = vpop.permute.xlu0 %1142
    %v1145 = vsel %vm373, %v939, %v1143
    %v1146 = vld [vmem:[#allocation24] sm:$0x7]
    %v1147 = vld [vmem:[#allocation23] sm:$0xff]
    %v1148 = vld [vmem:[#allocation23 + $0x8] sm:$0xff]
    %v1149 = vld [vmem:[#allocation23 + $0x10] sm:$0xff]
    %v1150 = vld [vmem:[#allocation23 + $0x18] sm:$0xff]
    %v1151 = vld [vmem:[#allocation23 + $0x20] sm:$0xff]
    %v1152 = vld [vmem:[#allocation23 + $0x28] sm:$0x3f]
    %v1153 = vlaneseq
    %v1154 = vshrl.u32 %v1153, 7
    %v1155 = vsub.s32 0, %v1154
    %v1156 = vrot.slane %v1146, %v1155
    %vm1157 = vcmask 375808
    %v1159 = vsel %vm1157, %v1145, 0
    %vm1161 = vcmask 1045504
    %v1163 = vsel %vm1161, %v1152, 0
    %1165 = vmatprep.subr.mxu0 0.0
    %1166 = vmatpush1.msra.mxu0 %v1147
    %1167 = vmatprep.subr.mxu0 0.0
    %1168 = vmatpush1.msra.mxu0 %v1148
    %1169 = vmatprep.subr.mxu0 0.0
    %1170 = vmatpush1.msra.mxu0 %v1149
    %1171 = vmatprep.subr.mxu0 0.0
    %1172 = vmatpush1.msra.mxu0 %v1150
    %1173 = vmatprep.subr.mxu0 0.0
    %1174 = vmatpush1.msra.mxu0 %v1151
    %1175 = vmatprep.subr.mxu0 0.0
    %1176 = vmatpush1.msra.mxu0 %v1163
    %1177 = vmatprep.subr.mxu0 0.0
    %1178 = vmatpush1.msra.mxu0 0.0
    %1179 = vmatprep.subr.mxu0 0.0
    %1180 = vmatpush1.msra.mxu0 0.0
    %1181 = vmatprep.subr.mxu0 0.0
    %1182 = vmatpush1.msra.mxu0 0.0
    %1183 = vmatprep.subr.mxu0 0.0
    %1184 = vmatpush1.msra.mxu0 0.0
    %1185 = vmatprep.subr.mxu0 0.0
    %1186 = vmatpush1.msra.mxu0 0.0
    %1187 = vmatprep.subr.mxu0 0.0
    %1188 = vmatpush1.msra.mxu0 0.0
    %1189 = vmatprep.subr.mxu0 0.0
    %1190 = vmatpush1.msra.mxu0 0.0
    %1191 = vmatprep.subr.mxu0 0.0
    %1192 = vmatpush1.msra.mxu0 0.0
    %1193 = vmatprep.subr.mxu0 0.0
    %1194 = vmatpush1.msra.mxu0 0.0
    %1195 = vmatprep.subr.mxu0 0.0
    %1196 = vmatpush1.msra.mxu0 0.0
    %1197 = vmatprep.subr.mxu0 0.0
    %1198 = vmatpush1.msra.mxu0 0.0
    %1199 = vmatprep.subr.mxu0 0.0
    %1200 = vmatpush1.msra.mxu0 0.0
    %1201 = vmatprep.subr.mxu0 0.0
    %1202 = vmatpush1.msra.mxu0 0.0
    %1203 = vmatprep.subr.mxu0 0.0
    %1204 = vmatpush1.msra.mxu0 0.0
    %1205 = vmatprep.subr.mxu0 0.0
    %1206 = vmatpush1.msra.mxu0 0.0
    %1207 = vmatprep.subr.mxu0 0.0
    %1208 = vmatpush1.msra.mxu0 0.0
    %1209 = vmatprep.subr.mxu0 0.0
    %1210 = vmatpush1.msra.mxu0 0.0
    %1211 = vmatprep.subr.mxu0 0.0
    %1212 = vmatpush1.msra.mxu0 0.0
    %1213 = vmatprep.subr.mxu0 0.0
    %1214 = vmatpush1.msra.mxu0 0.0
    %1215 = vmatprep.subr.mxu0 0.0
    %1216 = vmatpush1.msra.mxu0 0.0
    %1217 = vmatprep.subr.mxu0 0.0
    %1218 = vmatpush1.msra.mxu0 0.0
    %1219 = vmatprep.subr.mxu0 0.0
    %1220 = vmatpush1.msra.mxu0 0.0
    %1221 = vmatprep.subr.mxu0 0.0
    %1222 = vmatpush1.msra.mxu0 0.0
    %1223 = vmatprep.subr.mxu0 0.0
    %1224 = vmatpush1.msra.mxu0 0.0
    %1225 = vmatprep.subr.mxu0 0.0
    %1226 = vmatpush1.msra.mxu0 0.0
    %1227 = vmatprep.subr.mxu0 0.0
    %1228 = vmatpush1.msra.mxu0 0.0
    %1229 = vmatprep.mubr.f32.mxu0 0.0
    %1230 = vmatmul.mubr.f32.gmra.mrb[0].mxu0 %v1159
    %v1231 = vpop.f32.mrb[0].mxu0
    %v1232 = vadd.f32 %v1156, %v1231
    %v1233 = vpop.f32.mrb[0].mxu0
    %1234 = vdwg.mxu0
    %v1235 = vsel %vm909, %v1232, 0.0
    %1236 = vadd.xlane.f32.xlu0 %v1235
    %v1237 = vpop.xlane.xlu0 %1236
    %v1238 = vmul.f32 %v1237, %v913
    %v1239 = vsub.f32 %v1232, %v1238
    %v1240 = vmul.f32 %v1239, %v1239
    %v1241 = vsel %vm909, %v1240, 0.0
    %1242 = vadd.xlane.f32.xlu0 %v1241
    %v1243 = vpop.xlane.xlu0 %1242
    %v1244 = vmul.f32 %v1243, %v913
    %v1245 = vadd.f32 %v1244, 1e-05
    %v1246 = vrsqrt.pop %v1245
    %v1247 = vmul.f32 %v1239, %v1246
    %v1248 = vlaneseq
    %v1249 = vshrl.u32 %v1248, 7
    %v1250 = vsub.s32 1, %v1249
    %v1251 = vrot.slane %v1146, %v1250
    %v1252 = vmul.f32 %v1247, %v1251
    %v1253 = vlaneseq
    %v1254 = vshrl.u32 %v1253, 7
    %v1255 = vsub.s32 2, %v1254
    %v1256 = vrot.slane %v1146, %v1255
    %v1257 = vadd.f32 %v1252, %v1256
    %v1258 = vsub.f32 0.0, %v1257
    %v1259 = vmul.f32 %v1258, 1.442695
    %v1260 = vpow.pop %v1259
    %v1261 = vadd.f32 %v1260, 1.0
    %v1262 = vrcp.pop %v1261
    %v1263 = vmul.f32 %v1257, %v1262
    %v1264 = vld [vmem:[#allocation27] sm:$0x7]
    %v1265 = vld [vmem:[#allocation26] sm:$0xff]
    %v1266 = vld [vmem:[#allocation26 + $0x8] sm:$0xff]
    %v1267 = vld [vmem:[#allocation26 + $0x10] sm:$0xff]
    %v1268 = vld [vmem:[#allocation26 + $0x18] sm:$0xff]
    %v1269 = vlaneseq
    %v1270 = vshrl.u32 %v1269, 7
    %v1271 = vsub.s32 0, %v1270
    %v1272 = vrot.slane %v1264, %v1271
    %v1274 = vsel %vm373, %v1263, 0
    %1276 = vmatprep.subr.mxu0 0.0
    %1277 = vmatpush1.msra.mxu0 %v1265
    %1278 = vmatprep.subr.mxu0 0.0
    %1279 = vmatpush1.msra.mxu0 %v1266
    %1280 = vmatprep.subr.mxu0 0.0
    %1281 = vmatpush1.msra.mxu0 %v1267
    %1282 = vmatprep.subr.mxu0 0.0
    %1283 = vmatpush1.msra.mxu0 %v1268
    %1284 = vmatprep.subr.mxu0 0.0
    %1285 = vmatpush1.msra.mxu0 0.0
    %1286 = vmatprep.subr.mxu0 0.0
    %1287 = vmatpush1.msra.mxu0 0.0
    %1288 = vmatprep.subr.mxu0 0.0
    %1289 = vmatpush1.msra.mxu0 0.0
    %1290 = vmatprep.subr.mxu0 0.0
    %1291 = vmatpush1.msra.mxu0 0.0
    %1292 = vmatprep.subr.mxu0 0.0
    %1293 = vmatpush1.msra.mxu0 0.0
    %1294 = vmatprep.subr.mxu0 0.0
    %1295 = vmatpush1.msra.mxu0 0.0
    %1296 = vmatprep.subr.mxu0 0.0
    %1297 = vmatpush1.msra.mxu0 0.0
    %1298 = vmatprep.subr.mxu0 0.0
    %1299 = vmatpush1.msra.mxu0 0.0
    %1300 = vmatprep.subr.mxu0 0.0
    %1301 = vmatpush1.msra.mxu0 0.0
    %1302 = vmatprep.subr.mxu0 0.0
    %1303 = vmatpush1.msra.mxu0 0.0
    %1304 = vmatprep.subr.mxu0 0.0
    %1305 = vmatpush1.msra.mxu0 0.0
    %1306 = vmatprep.subr.mxu0 0.0
    %1307 = vmatpush1.msra.mxu0 0.0
    %1308 = vmatprep.subr.mxu0 0.0
    %1309 = vmatpush1.msra.mxu0 0.0
    %1310 = vmatprep.subr.mxu0 0.0
    %1311 = vmatpush1.msra.mxu0 0.0
    %1312 = vmatprep.subr.mxu0 0.0
    %1313 = vmatpush1.msra.mxu0 0.0
    %1314 = vmatprep.subr.mxu0 0.0
    %1315 = vmatpush1.msra.mxu0 0.0
    %1316 = vmatprep.subr.mxu0 0.0
    %1317 = vmatpush1.msra.mxu0 0.0
    %1318 = vmatprep.subr.mxu0 0.0
    %1319 = vmatpush1.msra.mxu0 0.0
    %1320 = vmatprep.subr.mxu0 0.0
    %1321 = vmatpush1.msra.mxu0 0.0
    %1322 = vmatprep.subr.mxu0 0.0
    %1323 = vmatpush1.msra.mxu0 0.0
    %1324 = vmatprep.subr.mxu0 0.0
    %1325 = vmatpush1.msra.mxu0 0.0
    %1326 = vmatprep.subr.mxu0 0.0
    %1327 = vmatpush1.msra.mxu0 0.0
    %1328 = vmatprep.subr.mxu0 0.0
    %1329 = vmatpush1.msra.mxu0 0.0
    %1330 = vmatprep.subr.mxu0 0.0
    %1331 = vmatpush1.msra.mxu0 0.0
    %1332 = vmatprep.subr.mxu0 0.0
    %1333 = vmatpush1.msra.mxu0 0.0
    %1334 = vmatprep.subr.mxu0 0.0
    %1335 = vmatpush1.msra.mxu0 0.0
    %1336 = vmatprep.subr.mxu0 0.0
    %1337 = vmatpush1.msra.mxu0 0.0
    %1338 = vmatprep.subr.mxu0 0.0
    %1339 = vmatpush1.msra.mxu0 0.0
    %1340 = vmatprep.mubr.f32.mxu0 0.0
    %1341 = vmatmul.mubr.f32.gmra.mrb[0].mxu0 %v1274
    %v1342 = vpop.f32.mrb[0].mxu0
    %v1343 = vadd.f32 %v1272, %v1342
    %v1344 = vpop.f32.mrb[0].mxu0
    %1345 = vdwg.mxu0
    %v1346 = vsel %vm597, %v1343, 0.0
    %1347 = vadd.xlane.f32.xlu0 %v1346
    %v1348 = vpop.xlane.xlu0 %1347
    %v1349 = vrcp.pop 16.0
    %v1350 = vmul.f32 %v1348, %v1349
    %v1351 = vsub.f32 %v1343, %v1350
    %v1352 = vmul.f32 %v1351, %v1351
    %v1353 = vsel %vm597, %v1352, 0.0
    %1354 = vadd.xlane.f32.xlu0 %v1353
    %v1355 = vpop.xlane.xlu0 %1354
    %v1356 = vmul.f32 %v1355, %v1349
    %v1357 = vadd.f32 %v1356, 1e-05
    %v1358 = vrsqrt.pop %v1357
    %v1359 = vmul.f32 %v1351, %v1358
    %v1360 = vlaneseq
    %v1361 = vshrl.u32 %v1360, 7
    %v1362 = vsub.s32 1, %v1361
    %v1363 = vrot.slane %v1264, %v1362
    %v1364 = vmul.f32 %v1359, %v1363
    %v1365 = vlaneseq
    %v1366 = vshrl.u32 %v1365, 7
    %v1367 = vsub.s32 2, %v1366
    %v1368 = vrot.slane %v1264, %v1367
    %v1369 = vadd.f32 %v1364, %v1368
    %v1370 = vsub.f32 0.0, %v1369
    %v1371 = vmul.f32 %v1370, 1.442695
    %v1372 = vpow.pop %v1371
    %v1373 = vadd.f32 %v1372, 1.0
    %v1374 = vrcp.pop %v1373
    %v1375 = vmul.f32 %v1369, %v1374
    %v1376 = vld [vmem:[#allocation29] sm:$0xff]
    %v1377 = vld [vmem:[#allocation29 + $0x8] sm:$0xff]
    %v1378 = vld [vmem:[#allocation30] sm:$0x1]
    %v1380 = vlaneseq
    %v1381 = vshrl.u32 %v1380, 7
    %v1382 = vsub.s32 0, %v1381
    %v1383 = vrot.slane %v1378, %v1382
    %v1386 = vsel %vm476, %v1375, 0
    %1388 = vmatprep.subr.mxu0 0.0
    %1389 = vmatpush1.msra.mxu0 %v1376
    %1390 = vmatprep.subr.mxu0 0.0
    %1391 = vmatpush1.msra.mxu0 %v1377
    %1392 = vmatprep.subr.mxu0 0.0
    %1393 = vmatpush1.msra.mxu0 0.0
    %1394 = vmatprep.subr.mxu0 0.0
    %1395 = vmatpush1.msra.mxu0 0.0
    %1396 = vmatprep.subr.mxu0 0.0
    %1397 = vmatpush1.msra.mxu0 0.0
    %1398 = vmatprep.subr.mxu0 0.0
    %1399 = vmatpush1.msra.mxu0 0.0
    %1400 = vmatprep.subr.mxu0 0.0
    %1401 = vmatpush1.msra.mxu0 0.0
    %1402 = vmatprep.subr.mxu0 0.0
    %1403 = vmatpush1.msra.mxu0 0.0
    %1404 = vmatprep.subr.mxu0 0.0
    %1405 = vmatpush1.msra.mxu0 0.0
    %1406 = vmatprep.subr.mxu0 0.0
    %1407 = vmatpush1.msra.mxu0 0.0
    %1408 = vmatprep.subr.mxu0 0.0
    %1409 = vmatpush1.msra.mxu0 0.0
    %1410 = vmatprep.subr.mxu0 0.0
    %1411 = vmatpush1.msra.mxu0 0.0
    %1412 = vmatprep.subr.mxu0 0.0
    %1413 = vmatpush1.msra.mxu0 0.0
    %1414 = vmatprep.subr.mxu0 0.0
    %1415 = vmatpush1.msra.mxu0 0.0
    %1416 = vmatprep.subr.mxu0 0.0
    %1417 = vmatpush1.msra.mxu0 0.0
    %1418 = vmatprep.subr.mxu0 0.0
    %1419 = vmatpush1.msra.mxu0 0.0
    %1420 = vmatprep.subr.mxu0 0.0
    %1421 = vmatpush1.msra.mxu0 0.0
    %1422 = vmatprep.subr.mxu0 0.0
    %1423 = vmatpush1.msra.mxu0 0.0
    %1424 = vmatprep.subr.mxu0 0.0
    %1425 = vmatpush1.msra.mxu0 0.0
    %1426 = vmatprep.subr.mxu0 0.0
    %1427 = vmatpush1.msra.mxu0 0.0
    %1428 = vmatprep.subr.mxu0 0.0
    %1429 = vmatpush1.msra.mxu0 0.0
    %1430 = vmatprep.subr.mxu0 0.0
    %1431 = vmatpush1.msra.mxu0 0.0
    %1432 = vmatprep.subr.mxu0 0.0
    %1433 = vmatpush1.msra.mxu0 0.0
    %1434 = vmatprep.subr.mxu0 0.0
    %1435 = vmatpush1.msra.mxu0 0.0
    %1436 = vmatprep.subr.mxu0 0.0
    %1437 = vmatpush1.msra.mxu0 0.0
    %1438 = vmatprep.subr.mxu0 0.0
    %1439 = vmatpush1.msra.mxu0 0.0
    %1440 = vmatprep.subr.mxu0 0.0
    %1441 = vmatpush1.msra.mxu0 0.0
    %1442 = vmatprep.subr.mxu0 0.0
    %1443 = vmatpush1.msra.mxu0 0.0
    %1444 = vmatprep.subr.mxu0 0.0
    %1445 = vmatpush1.msra.mxu0 0.0
    %1446 = vmatprep.subr.mxu0 0.0
    %1447 = vmatpush1.msra.mxu0 0.0
    %1448 = vmatprep.subr.mxu0 0.0
    %1449 = vmatpush1.msra.mxu0 0.0
    %1450 = vmatprep.subr.mxu0 0.0
    %1451 = vmatpush1.msra.mxu0 0.0
    %1452 = vmatprep.mubr.f32.mxu0 0.0
    %1453 = vmatmul.mubr.f32.gmra.mrb[0].mxu0 %v1386
    %v1454 = vpop.f32.mrb[0].mxu0
    %v1455 = vadd.f32 %v1383, %v1454
    %v1456 = vpop.f32.mrb[0].mxu0
    %1457 = vdwg.mxu0
    %1458 = vst.msk [vmem:[#allocation38] sm:$0x3] %vm597, %v1455
    %v1459 = vld [vmem:[#allocation32] sm:$0xff]
    %v1460 = vld [vmem:[#allocation32 + $0x8] sm:$0xff]
    %v1461 = vld [vmem:[#allocation33] sm:$0x1]
    %v1463 = vlaneseq
    %v1464 = vshrl.u32 %v1463, 7
    %v1465 = vsub.s32 0, %v1464
    %v1466 = vrot.slane %v1461, %v1465
    %v1469 = vsel %vm476, %v1455, 0
    %1471 = vmatprep.subr.mxu0 0.0
    %1472 = vmatpush1.msra.mxu0 %v1459
    %1473 = vmatprep.subr.mxu0 0.0
    %1474 = vmatpush1.msra.mxu0 %v1460
    %1475 = vmatprep.subr.mxu0 0.0
    %1476 = vmatpush1.msra.mxu0 0.0
    %1477 = vmatprep.subr.mxu0 0.0
    %1478 = vmatpush1.msra.mxu0 0.0
    %1479 = vmatprep.subr.mxu0 0.0
    %1480 = vmatpush1.msra.mxu0 0.0
    %1481 = vmatprep.subr.mxu0 0.0
    %1482 = vmatpush1.msra.mxu0 0.0
    %1483 = vmatprep.subr.mxu0 0.0
    %1484 = vmatpush1.msra.mxu0 0.0
    %1485 = vmatprep.subr.mxu0 0.0
    %1486 = vmatpush1.msra.mxu0 0.0
    %1487 = vmatprep.subr.mxu0 0.0
    %1488 = vmatpush1.msra.mxu0 0.0
    %1489 = vmatprep.subr.mxu0 0.0
    %1490 = vmatpush1.msra.mxu0 0.0
    %1491 = vmatprep.subr.mxu0 0.0
    %1492 = vmatpush1.msra.mxu0 0.0
    %1493 = vmatprep.subr.mxu0 0.0
    %1494 = vmatpush1.msra.mxu0 0.0
    %1495 = vmatprep.subr.mxu0 0.0
    %1496 = vmatpush1.msra.mxu0 0.0
    %1497 = vmatprep.subr.mxu0 0.0
    %1498 = vmatpush1.msra.mxu0 0.0
    %1499 = vmatprep.subr.mxu0 0.0
    %1500 = vmatpush1.msra.mxu0 0.0
    %1501 = vmatprep.subr.mxu0 0.0
    %1502 = vmatpush1.msra.mxu0 0.0
    %1503 = vmatprep.subr.mxu0 0.0
    %1504 = vmatpush1.msra.mxu0 0.0
    %1505 = vmatprep.subr.mxu0 0.0
    %1506 = vmatpush1.msra.mxu0 0.0
    %1507 = vmatprep.subr.mxu0 0.0
    %1508 = vmatpush1.msra.mxu0 0.0
    %1509 = vmatprep.subr.mxu0 0.0
    %1510 = vmatpush1.msra.mxu0 0.0
    %1511 = vmatprep.subr.mxu0 0.0
    %1512 = vmatpush1.msra.mxu0 0.0
    %1513 = vmatprep.subr.mxu0 0.0
    %1514 = vmatpush1.msra.mxu0 0.0
    %1515 = vmatprep.subr.mxu0 0.0
    %1516 = vmatpush1.msra.mxu0 0.0
    %1517 = vmatprep.subr.mxu0 0.0
    %1518 = vmatpush1.msra.mxu0 0.0
    %1519 = vmatprep.subr.mxu0 0.0
    %1520 = vmatpush1.msra.mxu0 0.0
    %1521 = vmatprep.subr.mxu0 0.0
    %1522 = vmatpush1.msra.mxu0 0.0
    %1523 = vmatprep.subr.mxu0 0.0
    %1524 = vmatpush1.msra.mxu0 0.0
    %1525 = vmatprep.subr.mxu0 0.0
    %1526 = vmatpush1.msra.mxu0 0.0
    %1527 = vmatprep.subr.mxu0 0.0
    %1528 = vmatpush1.msra.mxu0 0.0
    %1529 = vmatprep.subr.mxu0 0.0
    %1530 = vmatpush1.msra.mxu0 0.0
    %1531 = vmatprep.subr.mxu0 0.0
    %1532 = vmatpush1.msra.mxu0 0.0
    %1533 = vmatprep.subr.mxu0 0.0
    %1534 = vmatpush1.msra.mxu0 0.0
    %1535 = vmatprep.mubr.f32.mxu0 0.0
    %1536 = vmatmul.mubr.f32.gmra.mrb[0].mxu0 %v1469
    %v1537 = vpop.f32.mrb[0].mxu0
    %v1538 = vadd.f32 %v1466, %v1537
    %v1539 = vpop.f32.mrb[0].mxu0
    %1540 = vdwg.mxu0
    %v1541 = vsub.f32 0.0, %v1538
    %v1542 = vmul.f32 %v1541, 1.442695
    %v1543 = vpow.pop %v1542
    %v1544 = vadd.f32 %v1543, 1.0
    %v1545 = vrcp.pop %v1544
    %v1546 = vmul.f32 %v1538, %v1545
    %v1547 = vld [vmem:[#allocation35] sm:$0xff]
    %v1548 = vld [vmem:[#allocation36] sm:$0x1]
    %v1550 = vlaneseq
    %v1551 = vshrl.u32 %v1550, 7
    %v1552 = vsub.s32 0, %v1551
    %v1553 = vrot.slane %v1548, %v1552
    %vm1555 = vcmask 64512
    %v1557 = vsel %vm1555, %v1546, 0
    %1559 = vmatprep.subr.mxu0 0.0
    %1560 = vmatpush1.msra.mxu0 %v1547
    %1561 = vmatprep.subr.mxu0 0.0
    %1562 = vmatpush1.msra.mxu0 0.0
    %1563 = vmatprep.subr.mxu0 0.0
    %1564 = vmatpush1.msra.mxu0 0.0
    %1565 = vmatprep.subr.mxu0 0.0
    %1566 = vmatpush1.msra.mxu0 0.0
    %1567 = vmatprep.subr.mxu0 0.0
    %1568 = vmatpush1.msra.mxu0 0.0
    %1569 = vmatprep.subr.mxu0 0.0
    %1570 = vmatpush1.msra.mxu0 0.0
    %1571 = vmatprep.subr.mxu0 0.0
    %1572 = vmatpush1.msra.mxu0 0.0
    %1573 = vmatprep.subr.mxu0 0.0
    %1574 = vmatpush1.msra.mxu0 0.0
    %1575 = vmatprep.subr.mxu0 0.0
    %1576 = vmatpush1.msra.mxu0 0.0
    %1577 = vmatprep.subr.mxu0 0.0
    %1578 = vmatpush1.msra.mxu0 0.0
    %1579 = vmatprep.subr.mxu0 0.0
    %1580 = vmatpush1.msra.mxu0 0.0
    %1581 = vmatprep.subr.mxu0 0.0
    %1582 = vmatpush1.msra.mxu0 0.0
    %1583 = vmatprep.subr.mxu0 0.0
    %1584 = vmatpush1.msra.mxu0 0.0
    %1585 = vmatprep.subr.mxu0 0.0
    %1586 = vmatpush1.msra.mxu0 0.0
    %1587 = vmatprep.subr.mxu0 0.0
    %1588 = vmatpush1.msra.mxu0 0.0
    %1589 = vmatprep.subr.mxu0 0.0
    %1590 = vmatpush1.msra.mxu0 0.0
    %1591 = vmatprep.subr.mxu0 0.0
    %1592 = vmatpush1.msra.mxu0 0.0
    %1593 = vmatprep.subr.mxu0 0.0
    %1594 = vmatpush1.msra.mxu0 0.0
    %1595 = vmatprep.subr.mxu0 0.0
    %1596 = vmatpush1.msra.mxu0 0.0
    %1597 = vmatprep.subr.mxu0 0.0
    %1598 = vmatpush1.msra.mxu0 0.0
    %1599 = vmatprep.subr.mxu0 0.0
    %1600 = vmatpush1.msra.mxu0 0.0
    %1601 = vmatprep.subr.mxu0 0.0
    %1602 = vmatpush1.msra.mxu0 0.0
    %1603 = vmatprep.subr.mxu0 0.0
    %1604 = vmatpush1.msra.mxu0 0.0
    %1605 = vmatprep.subr.mxu0 0.0
    %1606 = vmatpush1.msra.mxu0 0.0
    %1607 = vmatprep.subr.mxu0 0.0
    %1608 = vmatpush1.msra.mxu0 0.0
    %1609 = vmatprep.subr.mxu0 0.0
    %1610 = vmatpush1.msra.mxu0 0.0
    %1611 = vmatprep.subr.mxu0 0.0
    %1612 = vmatpush1.msra.mxu0 0.0
    %1613 = vmatprep.subr.mxu0 0.0
    %1614 = vmatpush1.msra.mxu0 0.0
    %1615 = vmatprep.subr.mxu0 0.0
    %1616 = vmatpush1.msra.mxu0 0.0
    %1617 = vmatprep.subr.mxu0 0.0
    %1618 = vmatpush1.msra.mxu0 0.0
    %1619 = vmatprep.subr.mxu0 0.0
    %1620 = vmatpush1.msra.mxu0 0.0
    %1621 = vmatprep.subr.mxu0 0.0
    %1622 = vmatpush1.msra.mxu0 0.0
    %1623 = vmatprep.mubr.f32.mxu0 0.0
    %1624 = vmatmul.mubr.f32.gmra.mrb[0].mxu0 %v1557
    %v1625 = vpop.f32.mrb[0].mxu0
    %v1626 = vadd.f32 %v1553, %v1625
    %v1627 = vpop.f32.mrb[0].mxu0
    %1628 = vdwg.mxu0
    %vm1629 = vcmask 17408
    %1630 = vst.msk [vmem:[#allocation39] sm:$0x3] %vm1629, %v1626
    // Predicated region
    $region182: #{forward.9} parent=1 // pred_check
      _
    $region183: #{forward.9} parent=1 // pred_check_branch
      %1632 = sbr.rel (0) target = $region185
    $region184: #{forward.9} parent=1 // pred_region
      %s1634 = ssub.s32 32, 32
      %1635 = vsyncadd [#allocation5], %s1634
      %s1637 = sshll.u32 [#allocation38], 4
      %s1638 = int_to_ptr.vmem [resolvable:$true] %s1637
      %1640 = dma.vmem_to_hbm [thread:$0]  %s1638, 32, %s23, [#allocation5]
    $region185: #{forward.9} parent=1 // pred_fallthru
      _
    // Predicated region
    $region186: #{forward.9} parent=1 // pred_check
      _
    $region187: #{forward.9} parent=1 // pred_check_branch
      %1642 = sbr.rel (0) target = $region189
    $region188: #{forward.9} parent=1 // pred_region
      %s1644 = ssub.s32 32, 32
      %1645 = vsyncadd [#allocation40], %s1644
      %s1647 = sshll.u32 [#allocation39], 4
      %s1648 = int_to_ptr.vmem [resolvable:$true] %s1647
      %1650 = dma.vmem_to_hbm [thread:$0]  %s1648, 32, %s24, [#allocation40]
    $region189: #{forward.9} parent=1 // pred_fallthru
      _
    // Predicated region
    $region190: #{forward.9} parent=1 // pred_check
      _
    $region191: #{forward.9} parent=1 // pred_check_branch
      %1652 = sbr.rel (0) target = $region193
    $region192: #{forward.9} parent=1 // pred_region
      %s1654 = ssub.s32 32, 32
      %1655 = vsyncadd [#allocation40], %s1654
      %s1657 = sshll.u32 [#allocation41], 4
      %s1658 = int_to_ptr.vmem [resolvable:$true] %s1657
      %1660 = dma.vmem_to_hbm [thread:$0]  %s1658, 32, %s25, [#allocation40]
    $region193: #{forward.9} parent=1 // pred_fallthru
      _
    // Predicated region
    $region194: #{forward.9} parent=1 // pred_check
      _
    $region195: #{forward.9} parent=1 // pred_check_branch
      %1662 = sbr.rel (0) target = $region197
    $region196: #{forward.9} parent=1 // pred_region
      %1663 = dma.done [#allocation5], 32
    $region197: #{forward.9} parent=1 // pred_fallthru
      _
    // Predicated region
    $region198: #{forward.9} parent=1 // pred_check
      _
    $region199: #{forward.9} parent=1 // pred_check_branch
      %1665 = sbr.rel (0) target = $region201
    $region200: #{forward.9} parent=1 // pred_region
      %1666 = dma.done [#allocation40], 32
    $region201: #{forward.9} parent=1 // pred_fallthru
      _
    // Predicated region
    $region202: #{forward.9} parent=1 // pred_check
      _
    $region203: #{forward.9} parent=1 // pred_check_branch
      %1668 = sbr.rel (0) target = $region205
    $region204: #{forward.9} parent=1 // pred_region
      %1669 = dma.done [#allocation40], 32
    $region205: #{forward.9} parent=1 // pred_fallthru
      _
    %1670 = vsyncpa [#allocation4], 1
    %1671 = vsyncpa [#allocation7], 1
    %1672 = vsyncpa [#allocation10], 1
    %1673 = vsyncpa [#allocation13], 1
    %1674 = vsyncpa [#allocation16], 1
    %1675 = vsyncpa [#allocation19], 1
    %1676 = vsyncpa [#allocation22], 1
    %1677 = vsyncpa [#allocation25], 1
    %1678 = vsyncpa [#allocation28], 1
    %1679 = vsyncpa [#allocation31], 1
    %1680 = vsyncpa [#allocation34], 1
    %1681 = vsyncpa [#allocation37], 1
    %1682 = vsyncpa [#allocation5], 1
    %1683 = vsyncpa [#allocation40], 1

// kernel: forward.6
$region0: #{forward.6}
  #allocation0 [shape = 'u32[]', space=smem, size = 0x4, offset = 0x4, fixed_abs, tag = 'smem constant byte address 0x4 - core index']
  #allocation1 [shape = 'u32[144,128]{1,0:T(1,128)}', space=vmem, size = 0x12000, scoped, tag = 'internal scratch']
  #allocation2 [shape = 'f32[3,8,32]{2,1,0:T(8,128)}', space=vmem, size = 0x3000, scoped, tag = 'scratch operand']
  %s0 = inlined_call_operand.hbm [shape: f32[16,192], index: 0, kind: input, shape index: {}]
  %s1 = inlined_call_operand.hbm [shape: f32[16,192], index: 1, kind: input, shape index: {}]
  %s2 = inlined_call_operand.hbm [shape: f32[16,4], index: 2, kind: input, shape index: {}, may-alias: {2,3}]
  %s3 = inlined_call_operand.hbm [shape: f32[16,4], index: 3, kind: input, shape index: {}, may-alias: {2,3}]
  %s4 = inlined_call_operand.hbm [shape: f32[16,32], index: 4, kind: input, shape index: {}]
  %s5 = inlined_call_operand.hbm [shape: f32[3,4,64], index: 5, kind: input, shape index: {}]
  %s6 = inlined_call_operand.hbm [shape: f32[3,3,64], index: 6, kind: input, shape index: {}]
  %s7 = inlined_call_operand.hbm [shape: bf16[3,64,32], index: 7, kind: input, shape index: {}]
  %s8 = inlined_call_operand.hbm [shape: f32[3,1,32], index: 8, kind: input, shape index: {}]
  %s9 = inlined_call_operand.hbm [shape: bf16[96,8], index: 9, kind: input, shape index: {}]
  %s10 = inlined_call_operand.hbm [shape: f32[1,8], index: 10, kind: input, shape index: {}]
  %s11 = inlined_call_operand.hbm [shape: bf16[8,3], index: 11, kind: input, shape index: {}]
  %s12 = inlined_call_operand.hbm [shape: f32[1,3], index: 12, kind: input, shape index: {}]
  %s13 = inlined_call_operand.hbm [shape: bf16[64,64], index: 13, kind: input, shape index: {}]
  %s14 = inlined_call_operand.hbm [shape: f32[3,64], index: 14, kind: input, shape index: {}]
  %s15 = inlined_call_operand.hbm [shape: bf16[64,32], index: 15, kind: input, shape index: {}]
  %s16 = inlined_call_operand.hbm [shape: f32[3,32], index: 16, kind: input, shape index: {}]
  %s17 = inlined_call_operand.hbm [shape: f32[16,32], index: 17, kind: output, shape index: {}]
  %s18 = sld [smem:[#allocation0]]
  $region177: #{forward.6} parent=0
    _
  %s20 = ssub.s32 1, %s18
  %s21 = scalar_select 0, %s20, %s18
  $region1: #{forward.6} parent=0
    #allocation3 [shape = 'u8[16384]{0}', space=vmem, size = 0x4000, scoped, tag = 'input window, operand 0']
    #allocation4 [shape = 's32[2]{0}', space=sflag, size = 0x8, scoped, tag = 'scoped memory for forward.6']
    #allocation5 [shape = 's32[2]{0}', space=sflag, size = 0x8, scoped, tag = 'scoped memory for forward.6']
    #allocation6 [shape = 'u8[16384]{0}', space=vmem, size = 0x4000, scoped, tag = 'input window, operand 1']
    #allocation7 [shape = 's32[2]{0}', space=sflag, size = 0x8, scoped, tag = 'scoped memory for forward.6']
    #allocation8 [shape = 'u8[8192]{0}', space=vmem, size = 0x2000, scoped, tag = 'input window, operand 2']
    #allocation9 [shape = 'u8[8192]{0}', space=vmem, size = 0x2000, scoped, tag = 'input window, operand 3']
    #allocation10 [shape = 's32[2]{0}', space=sflag, size = 0x8, scoped, tag = 'scoped memory for forward.6']
    #allocation11 [shape = 'u8[8192]{0}', space=vmem, size = 0x2000, scoped, tag = 'input window, operand 4']
    #allocation12 [shape = 'u8[6144]{0}', space=vmem, size = 0x1800, scoped, tag = 'input window, operand 5, single buffered']
    #allocation13 [shape = 's32[1]{0}', space=sflag, size = 0x4, scoped, tag = 'scoped memory for forward.6']
    #allocation14 [shape = 'u8[6144]{0}', space=vmem, size = 0x1800, scoped, tag = 'input window, operand 6, single buffered']
    #allocation15 [shape = 'u8[49152]{0}', space=vmem, size = 0xc000, scoped, tag = 'input window, operand 7, single buffered']
    #allocation16 [shape = 's32[1]{0}', space=sflag, size = 0x4, scoped, tag = 'scoped memory for forward.6']
    #allocation17 [shape = 'u8[1536]{0}', space=vmem, size = 0x800, scoped, tag = 'input window, operand 8, single buffered']
    #allocation18 [shape = 'u8[24576]{0}', space=vmem, size = 0x6000, scoped, tag = 'input window, operand 9, single buffered']
    #allocation19 [shape = 's32[1]{0}', space=sflag, size = 0x4, scoped, tag = 'scoped memory for forward.6']
    #allocation20 [shape = 'u8[512]{0}', space=vmem, size = 0x400, scoped, tag = 'input window, operand 10, single buffered']
    #allocation21 [shape = 'u8[2048]{0}', space=vmem, size = 0x800, scoped, tag = 'input window, operand 11, single buffered']
    #allocation22 [shape = 's32[1]{0}', space=sflag, size = 0x4, scoped, tag = 'scoped memory for forward.6']
    #allocation23 [shape = 'u8[512]{0}', space=vmem, size = 0x400, scoped, tag = 'input window, operand 12, single buffered']
    #allocation24 [shape = 'u8[16384]{0}', space=vmem, size = 0x4000, scoped, tag = 'input window, operand 13, single buffered']
    #allocation25 [shape = 's32[1]{0}', space=sflag, size = 0x4, scoped, tag = 'scoped memory for forward.6']
    #allocation26 [shape = 'u8[2048]{0}', space=vmem, size = 0x800, scoped, tag = 'input window, operand 14, single buffered']
    #allocation27 [shape = 'u8[16384]{0}', space=vmem, size = 0x4000, scoped, tag = 'input window, operand 15, single buffered']
    #allocation28 [shape = 's32[1]{0}', space=sflag, size = 0x4, scoped, tag = 'scoped memory for forward.6']
    #allocation29 [shape = 'u8[2048]{0}', space=vmem, size = 0x800, scoped, tag = 'input window, operand 16, single buffered']
    #allocation30 [shape = 'u8[8192]{0}', space=vmem, size = 0x2000, scoped, tag = 'output window, operand 0']
    %22 = vsyncpa [#allocation4], 0
    %s23 = scalar_lea.sflag [#allocation4], 1
    %24 = vsyncpa %s23, 0
    %25 = vsyncpa [#allocation7], 0
    %s26 = scalar_lea.sflag [#allocation7], 1
    %27 = vsyncpa %s26, 0
    %28 = vsyncpa [#allocation10], 0
    %s29 = scalar_lea.sflag [#allocation10], 1
    %30 = vsyncpa %s29, 0
    %31 = vsyncpa [#allocation13], 0
    %32 = vsyncpa [#allocation16], 0
    %33 = vsyncpa [#allocation19], 0
    %34 = vsyncpa [#allocation22], 0
    %35 = vsyncpa [#allocation25], 0
    %36 = vsyncpa [#allocation28], 0
    %37 = vsyncpa [#allocation5], 0
    %s38 = scalar_lea.sflag [#allocation5], 1
    %39 = vsyncpa %s38, 0
    loop: start=0, step=1, limit=6
    $region2: #{forward.6} parent=1 // loop_pre_header
      _
    $region3: #{forward.6} parent=1 // loop_header
      %s41 = sphi 0, %s45
      %p42 = scmp.ge.s32.totalorder %s41, 6
      %s48 = sphi 0, %s60
      %s49 = sphi 0, %s56
      %s50 = sphi 0, %s48
      %s51 = sphi 0, %s49
      %s52 = sphi 0, %s50
      %s53 = sphi 0, %s51
      %s63 = sphi 0, %s65
      %s66 = sphi 0, %s63
      %s67 = sphi 0, %s66
      %s83 = sphi 0, %s67
      %s89 = sphi 0, %s91
      %s92 = sphi 0, %s89
      %s93 = sphi 0, %s92
      %s109 = sphi 0, %s93
      %s115 = sphi 0, %s117
      %s118 = sphi 0, %s115
      %s119 = sphi 0, %s118
      %s135 = sphi 0, %s119
      %s141 = sphi 0, %s143
      %s144 = sphi 0, %s141
      %s145 = sphi 0, %s144
      %s161 = sphi 0, %s145
      %s167 = sphi 0, %s169
      %s170 = sphi 0, %s167
      %s171 = sphi 0, %s170
      %s187 = sphi 0, %s171
      %s191 = sphi 0, %s191
      %s193 = sphi 0, %s191
      %s194 = sphi 0, %s193
      %s208 = sphi 0, %s194
      %s212 = sphi 0, %s212
      %s214 = sphi 0, %s212
      %s215 = sphi 0, %s214
      %s229 = sphi 0, %s215
      %s233 = sphi 0, %s233
      %s235 = sphi 0, %s233
      %s236 = sphi 0, %s235
      %s250 = sphi 0, %s236
      %s254 = sphi 0, %s254
      %s256 = sphi 0, %s254
      %s257 = sphi 0, %s256
      %s271 = sphi 0, %s257
      %s275 = sphi 0, %s275
      %s277 = sphi 0, %s275
      %s278 = sphi 0, %s277
      %s292 = sphi 0, %s278
      %s296 = sphi 0, %s296
      %s298 = sphi 0, %s296
      %s299 = sphi 0, %s298
      %s313 = sphi 0, %s299
      %s317 = sphi 0, %s317
      %s319 = sphi 0, %s317
      %s320 = sphi 0, %s319
      %s334 = sphi 0, %s320
      %s338 = sphi 0, %s338
      %s340 = sphi 0, %s338
      %s341 = sphi 0, %s340
      %s355 = sphi 0, %s341
      %s359 = sphi 0, %s359
      %s361 = sphi 0, %s359
      %s362 = sphi 0, %s361
      %s376 = sphi 0, %s362
      %s380 = sphi 0, %s380
      %s382 = sphi 0, %s380
      %s383 = sphi 0, %s382
      %s397 = sphi 0, %s383
      %s401 = sphi 0, %s401
      %s403 = sphi 0, %s401
      %s404 = sphi 0, %s403
      %s418 = sphi 0, %s404
      %s422 = sphi 0, %s422
      %s424 = sphi 0, %s422
      %s425 = sphi 0, %s424
      %s439 = sphi 0, %s425
      %s445 = sphi 0, %s447
      %s448 = sphi 0, %s445
      %s449 = sphi 0, %s448
      %s465 = sphi 0, %s449
    $region4: #{forward.6} parent=1 // loop_header_branch
      %44 = sbr.rel (%p42) target = $region8
    $region5: #{forward.6} parent=1 // loop_body
      %s46 = ssub.s32 %s41, 1
      %s47 = ssub.s32 %s41, 2
      %s54 = sadd.s32 1, %s49
      %p55 = scmp.ge.s32.totalorder %s54, 2
      %s56 = scalar_select %p55, 0, %s54
      %s57 = sadd.s32 1, %s48
      %s58 = scalar_select %p55, %s57, %s48
      %p59 = scmp.ge.s32.totalorder %s58, 2
      %s60 = scalar_select %p59, 0, %s58
      %s61 = ssub.s32 %s48, %s60
      %p62 = scmp.eq.s32.totalorder %s61, 0
      %s64 = sadd.s32 %s63, 1
      %s65 = scalar_select %p62, %s63, %s64
      %p68 = pneg %p62
      %p69 = scmp.eq.s32.totalorder %s41, 3
      %p70 = por %p68, %p69
      %p71 = scmp.ne.s32.totalorder %s63, %s66
      %p72 = scmp.eq.s32.totalorder %s41, 0
      %p73 = por %p71, %p72
      %p74 = scmp.ne.s32.totalorder %s63, %s66
      %p75 = scmp.eq.s32.totalorder %s46, 3
      %p76 = por %p74, %p75
      %p77 = scmp.ne.s32.totalorder %s66, %s67
      %p78 = scmp.eq.s32.totalorder %s46, 0
      %p79 = por %p77, %p78
      %p80 = scmp.ne.s32.totalorder %s66, %s67
      %p81 = scmp.eq.s32.totalorder %s47, 3
      %p82 = por %p80, %p81
      %p84 = scmp.ne.s32.totalorder %s67, %s83
      %p85 = scmp.eq.s32.totalorder %s47, 0
      %p86 = por %p84, %p85
      %s87 = ssub.s32 %s49, %s56
      %p88 = scmp.eq.s32.totalorder %s87, 0
      %s90 = sadd.s32 %s89, 1
      %s91 = scalar_select %p88, %s89, %s90
      %p94 = pneg %p88
      %p95 = scmp.eq.s32.totalorder %s41, 3
      %p96 = por %p94, %p95
      %p97 = scmp.ne.s32.totalorder %s89, %s92
      %p98 = scmp.eq.s32.totalorder %s41, 0
      %p99 = por %p97, %p98
      %p100 = scmp.ne.s32.totalorder %s89, %s92
      %p101 = scmp.eq.s32.totalorder %s46, 3
      %p102 = por %p100, %p101
      %p103 = scmp.ne.s32.totalorder %s92, %s93
      %p104 = scmp.eq.s32.totalorder %s46, 0
      %p105 = por %p103, %p104
      %p106 = scmp.ne.s32.totalorder %s92, %s93
      %p107 = scmp.eq.s32.totalorder %s47, 3
      %p108 = por %p106, %p107
      %p110 = scmp.ne.s32.totalorder %s93, %s109
      %p111 = scmp.eq.s32.totalorder %s47, 0
      %p112 = por %p110, %p111
      %s113 = ssub.s32 %s48, %s60
      %p114 = scmp.eq.s32.totalorder %s113, 0
      %s116 = sadd.s32 %s115, 1
      %s117 = scalar_select %p114, %s115, %s116
      %p120 = pneg %p114
      %p121 = scmp.eq.s32.totalorder %s41, 3
      %p122 = por %p120, %p121
      %p123 = scmp.ne.s32.totalorder %s115, %s118
      %p124 = scmp.eq.s32.totalorder %s41, 0
      %p125 = por %p123, %p124
      %p126 = scmp.ne.s32.totalorder %s115, %s118
      %p127 = scmp.eq.s32.totalorder %s46, 3
      %p128 = por %p126, %p127
      %p129 = scmp.ne.s32.totalorder %s118, %s119
      %p130 = scmp.eq.s32.totalorder %s46, 0
      %p131 = por %p129, %p130
      %p132 = scmp.ne.s32.totalorder %s118, %s119
      %p133 = scmp.eq.s32.totalorder %s47, 3
      %p134 = por %p132, %p133
      %p136 = scmp.ne.s32.totalorder %s119, %s135
      %p137 = scmp.eq.s32.totalorder %s47, 0
      %p138 = por %p136, %p137
      %s139 = ssub.s32 %s49, %s56
      %p140 = scmp.eq.s32.totalorder %s139, 0
      %s142 = sadd.s32 %s141, 1
      %s143 = scalar_select %p140, %s141, %s142
      %p146 = pneg %p140
      %p147 = scmp.eq.s32.totalorder %s41, 3
      %p148 = por %p146, %p147
      %p149 = scmp.ne.s32.totalorder %s141, %s144
      %p150 = scmp.eq.s32.totalorder %s41, 0
      %p151 = por %p149, %p150
      %p152 = scmp.ne.s32.totalorder %s141, %s144
      %p153 = scmp.eq.s32.totalorder %s46, 3
      %p154 = por %p152, %p153
      %p155 = scmp.ne.s32.totalorder %s144, %s145
      %p156 = scmp.eq.s32.totalorder %s46, 0
      %p157 = por %p155, %p156
      %p158 = scmp.ne.s32.totalorder %s144, %s145
      %p159 = scmp.eq.s32.totalorder %s47, 3
      %p160 = por %p158, %p159
      %p162 = scmp.ne.s32.totalorder %s145, %s161
      %p163 = scmp.eq.s32.totalorder %s47, 0
      %p164 = por %p162, %p163
      %s165 = ssub.s32 %s48, %s60
      %p166 = scmp.eq.s32.totalorder %s165, 0
      %s168 = sadd.s32 %s167, 1
      %s169 = scalar_select %p166, %s167, %s168
      %p172 = pneg %p166
      %p173 = scmp.eq.s32.totalorder %s41, 3
      %p174 = por %p172, %p173
      %p175 = scmp.ne.s32.totalorder %s167, %s170
      %p176 = scmp.eq.s32.totalorder %s41, 0
      %p177 = por %p175, %p176
      %p178 = scmp.ne.s32.totalorder %s167, %s170
      %p179 = scmp.eq.s32.totalorder %s46, 3
      %p180 = por %p178, %p179
      %p181 = scmp.ne.s32.totalorder %s170, %s171
      %p182 = scmp.eq.s32.totalorder %s46, 0
      %p183 = por %p181, %p182
      %p184 = scmp.ne.s32.totalorder %s170, %s171
      %p185 = scmp.eq.s32.totalorder %s47, 3
      %p186 = por %p184, %p185
      %p188 = scmp.ne.s32.totalorder %s171, %s187
      %p189 = scmp.eq.s32.totalorder %s47, 0
      %p190 = por %p188, %p189
      %s192 = sadd.s32 %s191, 1
      %p195 = scmp.eq.s32.totalorder %s41, 3
      %p196 = scmp.ne.s32.totalorder %s191, %s193
      %p197 = scmp.eq.s32.totalorder %s41, 0
      %p198 = por %p196, %p197
      %p199 = scmp.ne.s32.totalorder %s191, %s193
      %p200 = scmp.eq.s32.totalorder %s46, 3
      %p201 = por %p199, %p200
      %p202 = scmp.ne.s32.totalorder %s193, %s194
      %p203 = scmp.eq.s32.totalorder %s46, 0
      %p204 = por %p202, %p203
      %p205 = scmp.ne.s32.totalorder %s193, %s194
      %p206 = scmp.eq.s32.totalorder %s47, 3
      %p207 = por %p205, %p206
      %p209 = scmp.ne.s32.totalorder %s194, %s208
      %p210 = scmp.eq.s32.totalorder %s47, 0
      %p211 = por %p209, %p210
      %s213 = sadd.s32 %s212, 1
      %p216 = scmp.eq.s32.totalorder %s41, 3
      %p217 = scmp.ne.s32.totalorder %s212, %s214
      %p218 = scmp.eq.s32.totalorder %s41, 0
      %p219 = por %p217, %p218
      %p220 = scmp.ne.s32.totalorder %s212, %s214
      %p221 = scmp.eq.s32.totalorder %s46, 3
      %p222 = por %p220, %p221
      %p223 = scmp.ne.s32.totalorder %s214, %s215
      %p224 = scmp.eq.s32.totalorder %s46, 0
      %p225 = por %p223, %p224
      %p226 = scmp.ne.s32.totalorder %s214, %s215
      %p227 = scmp.eq.s32.totalorder %s47, 3
      %p228 = por %p226, %p227
      %p230 = scmp.ne.s32.totalorder %s215, %s229
      %p231 = scmp.eq.s32.totalorder %s47, 0
      %p232 = por %p230, %p231
      %s234 = sadd.s32 %s233, 1
      %p237 = scmp.eq.s32.totalorder %s41, 3
      %p238 = scmp.ne.s32.totalorder %s233, %s235
      %p239 = scmp.eq.s32.totalorder %s41, 0
      %p240 = por %p238, %p239
      %p241 = scmp.ne.s32.totalorder %s233, %s235
      %p242 = scmp.eq.s32.totalorder %s46, 3
      %p243 = por %p241, %p242
      %p244 = scmp.ne.s32.totalorder %s235, %s236
      %p245 = scmp.eq.s32.totalorder %s46, 0
      %p246 = por %p244, %p245
      %p247 = scmp.ne.s32.totalorder %s235, %s236
      %p248 = scmp.eq.s32.totalorder %s47, 3
      %p249 = por %p247, %p248
      %p251 = scmp.ne.s32.totalorder %s236, %s250
      %p252 = scmp.eq.s32.totalorder %s47, 0
      %p253 = por %p251, %p252
      %s255 = sadd.s32 %s254, 1
      %p258 = scmp.eq.s32.totalorder %s41, 3
      %p259 = scmp.ne.s32.totalorder %s254, %s256
      %p260 = scmp.eq.s32.totalorder %s41, 0
      %p261 = por %p259, %p260
      %p262 = scmp.ne.s32.totalorder %s254, %s256
      %p263 = scmp.eq.s32.totalorder %s46, 3
      %p264 = por %p262, %p263
      %p265 = scmp.ne.s32.totalorder %s256, %s257
      %p266 = scmp.eq.s32.totalorder %s46, 0
      %p267 = por %p265, %p266
      %p268 = scmp.ne.s32.totalorder %s256, %s257
      %p269 = scmp.eq.s32.totalorder %s47, 3
      %p270 = por %p268, %p269
      %p272 = scmp.ne.s32.totalorder %s257, %s271
      %p273 = scmp.eq.s32.totalorder %s47, 0
      %p274 = por %p272, %p273
      %s276 = sadd.s32 %s275, 1
      %p279 = scmp.eq.s32.totalorder %s41, 3
      %p280 = scmp.ne.s32.totalorder %s275, %s277
      %p281 = scmp.eq.s32.totalorder %s41, 0
      %p282 = por %p280, %p281
      %p283 = scmp.ne.s32.totalorder %s275, %s277
      %p284 = scmp.eq.s32.totalorder %s46, 3
      %p285 = por %p283, %p284
      %p286 = scmp.ne.s32.totalorder %s277, %s278
      %p287 = scmp.eq.s32.totalorder %s46, 0
      %p288 = por %p286, %p287
      %p289 = scmp.ne.s32.totalorder %s277, %s278
      %p290 = scmp.eq.s32.totalorder %s47, 3
      %p291 = por %p289, %p290
      %p293 = scmp.ne.s32.totalorder %s278, %s292
      %p294 = scmp.eq.s32.totalorder %s47, 0
      %p295 = por %p293, %p294
      %s297 = sadd.s32 %s296, 1
      %p300 = scmp.eq.s32.totalorder %s41, 3
      %p301 = scmp.ne.s32.totalorder %s296, %s298
      %p302 = scmp.eq.s32.totalorder %s41, 0
      %p303 = por %p301, %p302
      %p304 = scmp.ne.s32.totalorder %s296, %s298
      %p305 = scmp.eq.s32.totalorder %s46, 3
      %p306 = por %p304, %p305
      %p307 = scmp.ne.s32.totalorder %s298, %s299
      %p308 = scmp.eq.s32.totalorder %s46, 0
      %p309 = por %p307, %p308
      %p310 = scmp.ne.s32.totalorder %s298, %s299
      %p311 = scmp.eq.s32.totalorder %s47, 3
      %p312 = por %p310, %p311
      %p314 = scmp.ne.s32.totalorder %s299, %s313
      %p315 = scmp.eq.s32.totalorder %s47, 0
      %p316 = por %p314, %p315
      %s318 = sadd.s32 %s317, 1
      %p321 = scmp.eq.s32.totalorder %s41, 3
      %p322 = scmp.ne.s32.totalorder %s317, %s319
      %p323 = scmp.eq.s32.totalorder %s41, 0
      %p324 = por %p322, %p323
      %p325 = scmp.ne.s32.totalorder %s317, %s319
      %p326 = scmp.eq.s32.totalorder %s46, 3
      %p327 = por %p325, %p326
      %p328 = scmp.ne.s32.totalorder %s319, %s320
      %p329 = scmp.eq.s32.totalorder %s46, 0
      %p330 = por %p328, %p329
      %p331 = scmp.ne.s32.totalorder %s319, %s320
      %p332 = scmp.eq.s32.totalorder %s47, 3
      %p333 = por %p331, %p332
      %p335 = scmp.ne.s32.totalorder %s320, %s334
      %p336 = scmp.eq.s32.totalorder %s47, 0
      %p337 = por %p335, %p336
      %s339 = sadd.s32 %s338, 1
      %p342 = scmp.eq.s32.totalorder %s41, 3
      %p343 = scmp.ne.s32.totalorder %s338, %s340
      %p344 = scmp.eq.s32.totalorder %s41, 0
      %p345 = por %p343, %p344
      %p346 = scmp.ne.s32.totalorder %s338, %s340
      %p347 = scmp.eq.s32.totalorder %s46, 3
      %p348 = por %p346, %p347
      %p349 = scmp.ne.s32.totalorder %s340, %s341
      %p350 = scmp.eq.s32.totalorder %s46, 0
      %p351 = por %p349, %p350
      %p352 = scmp.ne.s32.totalorder %s340, %s341
      %p353 = scmp.eq.s32.totalorder %s47, 3
      %p354 = por %p352, %p353
      %p356 = scmp.ne.s32.totalorder %s341, %s355
      %p357 = scmp.eq.s32.totalorder %s47, 0
      %p358 = por %p356, %p357
      %s360 = sadd.s32 %s359, 1
      %p363 = scmp.eq.s32.totalorder %s41, 3
      %p364 = scmp.ne.s32.totalorder %s359, %s361
      %p365 = scmp.eq.s32.totalorder %s41, 0
      %p366 = por %p364, %p365
      %p367 = scmp.ne.s32.totalorder %s359, %s361
      %p368 = scmp.eq.s32.totalorder %s46, 3
      %p369 = por %p367, %p368
      %p370 = scmp.ne.s32.totalorder %s361, %s362
      %p371 = scmp.eq.s32.totalorder %s46, 0
      %p372 = por %p370, %p371
      %p373 = scmp.ne.s32.totalorder %s361, %s362
      %p374 = scmp.eq.s32.totalorder %s47, 3
      %p375 = por %p373, %p374
      %p377 = scmp.ne.s32.totalorder %s362, %s376
      %p378 = scmp.eq.s32.totalorder %s47, 0
      %p379 = por %p377, %p378
      %s381 = sadd.s32 %s380, 1
      %p384 = scmp.eq.s32.totalorder %s41, 3
      %p385 = scmp.ne.s32.totalorder %s380, %s382
      %p386 = scmp.eq.s32.totalorder %s41, 0
      %p387 = por %p385, %p386
      %p388 = scmp.ne.s32.totalorder %s380, %s382
      %p389 = scmp.eq.s32.totalorder %s46, 3
      %p390 = por %p388, %p389
      %p391 = scmp.ne.s32.totalorder %s382, %s383
      %p392 = scmp.eq.s32.totalorder %s46, 0
      %p393 = por %p391, %p392
      %p394 = scmp.ne.s32.totalorder %s382, %s383
      %p395 = scmp.eq.s32.totalorder %s47, 3
      %p396 = por %p394, %p395
      %p398 = scmp.ne.s32.totalorder %s383, %s397
      %p399 = scmp.eq.s32.totalorder %s47, 0
      %p400 = por %p398, %p399
      %s402 = sadd.s32 %s401, 1
      %p405 = scmp.eq.s32.totalorder %s41, 3
      %p406 = scmp.ne.s32.totalorder %s401, %s403
      %p407 = scmp.eq.s32.totalorder %s41, 0
      %p408 = por %p406, %p407
      %p409 = scmp.ne.s32.totalorder %s401, %s403
      %p410 = scmp.eq.s32.totalorder %s46, 3
      %p411 = por %p409, %p410
      %p412 = scmp.ne.s32.totalorder %s403, %s404
      %p413 = scmp.eq.s32.totalorder %s46, 0
      %p414 = por %p412, %p413
      %p415 = scmp.ne.s32.totalorder %s403, %s404
      %p416 = scmp.eq.s32.totalorder %s47, 3
      %p417 = por %p415, %p416
      %p419 = scmp.ne.s32.totalorder %s404, %s418
      %p420 = scmp.eq.s32.totalorder %s47, 0
      %p421 = por %p419, %p420
      %s423 = sadd.s32 %s422, 1
      %p426 = scmp.eq.s32.totalorder %s41, 3
      %p427 = scmp.ne.s32.totalorder %s422, %s424
      %p428 = scmp.eq.s32.totalorder %s41, 0
      %p429 = por %p427, %p428
      %p430 = scmp.ne.s32.totalorder %s422, %s424
      %p431 = scmp.eq.s32.totalorder %s46, 3
      %p432 = por %p430, %p431
      %p433 = scmp.ne.s32.totalorder %s424, %s425
      %p434 = scmp.eq.s32.totalorder %s46, 0
      %p435 = por %p433, %p434
      %p436 = scmp.ne.s32.totalorder %s424, %s425
      %p437 = scmp.eq.s32.totalorder %s47, 3
      %p438 = por %p436, %p437
      %p440 = scmp.ne.s32.totalorder %s425, %s439
      %p441 = scmp.eq.s32.totalorder %s47, 0
      %p442 = por %p440, %p441
      %s443 = ssub.s32 %s48, %s60
      %p444 = scmp.eq.s32.totalorder %s443, 0
      %s446 = sadd.s32 %s445, 1
      %s447 = scalar_select %p444, %s445, %s446
      %p450 = pneg %p444
      %p451 = scmp.eq.s32.totalorder %s41, 3
      %p452 = por %p450, %p451
      %p453 = scmp.ne.s32.totalorder %s445, %s448
      %p454 = scmp.eq.s32.totalorder %s41, 0
      %p455 = por %p453, %p454
      %p456 = scmp.ne.s32.totalorder %s445, %s448
      %p457 = scmp.eq.s32.totalorder %s46, 3
      %p458 = por %p456, %p457
      %p459 = scmp.ne.s32.totalorder %s448, %s449
      %p460 = scmp.eq.s32.totalorder %s46, 0
      %p461 = por %p459, %p460
      %p462 = scmp.ne.s32.totalorder %s448, %s449
      %p463 = scmp.eq.s32.totalorder %s47, 3
      %p464 = por %p462, %p463
      %p466 = scmp.ne.s32.totalorder %s449, %s465
      %p467 = scmp.eq.s32.totalorder %s47, 0
      %p468 = por %p466, %p467
      %p469 = scmp.le.s32.totalorder 1, %s41
      %p470 = scmp.lt.s32.totalorder %s41, 5
      %p471 = pnand %p469, %p470
      %p472 = pneg %p471
      // Predicated region
      $region9: #{forward.6} parent=5 // pred_check
        _
      $region10: #{forward.6} parent=5 // pred_check_branch
        %474 = sbr.rel (%p471) target = $region12
      $region11: #{forward.6} parent=5 // pred_region
        %s475 = ssub.s32 %s41, 1
        // Predicated region
        $region13: #{forward.6} parent=11 // pred_check
          %p476 = pneg %p204
        $region14: #{forward.6} parent=11 // pred_check_branch
          %478 = sbr.rel (%p476) target = $region16
        $region15: #{forward.6} parent=11 // pred_region
          %s480 = ssub.s32 192, 192
          %481 = vsyncadd [#allocation13], %s480
          %s482 = sshll.u32 [#allocation12], 4
          %s483 = int_to_ptr.vmem [resolvable:$true] %s482
          %488 = dma.hbm_to_vmem [thread:$0]  %s5, 192, %s483, [#allocation13], 64, 64, 4
        $region16: #{forward.6} parent=11 // pred_fallthru
          _
        // Predicated region
        $region17: #{forward.6} parent=11 // pred_check
          %p489 = pneg %p225
        $region18: #{forward.6} parent=11 // pred_check_branch
          %491 = sbr.rel (%p489) target = $region20
        $region19: #{forward.6} parent=11 // pred_region
          %s493 = ssub.s32 192, 192
          %494 = vsyncadd [#allocation13], %s493
          %s495 = sshll.u32 [#allocation14], 4
          %s496 = int_to_ptr.vmem [resolvable:$true] %s495
          %501 = dma.hbm_to_vmem [thread:$0]  %s6, 192, %s496, [#allocation13], 64, 64, 4
        $region20: #{forward.6} parent=11 // pred_fallthru
          _
        // Predicated region
        $region21: #{forward.6} parent=11 // pred_check
          %p502 = pneg %p246
        $region22: #{forward.6} parent=11 // pred_check_branch
          %504 = sbr.rel (%p502) target = $region24
        $region23: #{forward.6} parent=11 // pred_region
          %s506 = ssub.s32 1536, 1536
          %507 = vsyncadd [#allocation16], %s506
          %s508 = sshll.u32 [#allocation15], 4
          %s509 = int_to_ptr.vmem [resolvable:$true] %s508
          %514 = dma.hbm_to_vmem [thread:$0]  %s7, 1536, %s509, [#allocation16], 64, 64, 4
        $region24: #{forward.6} parent=11 // pred_fallthru
          _
        // Predicated region
        $region25: #{forward.6} parent=11 // pred_check
          %p515 = pneg %p267
        $region26: #{forward.6} parent=11 // pred_check_branch
          %517 = sbr.rel (%p515) target = $region28
        $region27: #{forward.6} parent=11 // pred_region
          %s519 = ssub.s32 48, 48
          %520 = vsyncadd [#allocation16], %s519
          %s521 = sshll.u32 [#allocation17], 4
          %s522 = int_to_ptr.vmem [resolvable:$true] %s521
          %527 = dma.hbm_to_vmem [thread:$0]  %s8, 48, %s522, [#allocation16], 16, 16, 1
        $region28: #{forward.6} parent=11 // pred_fallthru
          _
        // Predicated region
        $region29: #{forward.6} parent=11 // pred_check
          %p528 = pneg %p288
        $region30: #{forward.6} parent=11 // pred_check_branch
          %530 = sbr.rel (%p528) target = $region32
        $region31: #{forward.6} parent=11 // pred_region
          %s532 = ssub.s32 768, 768
          %533 = vsyncadd [#allocation19], %s532
          %s534 = sshll.u32 [#allocation18], 4
          %s535 = int_to_ptr.vmem [resolvable:$true] %s534
          %540 = dma.hbm_to_vmem [thread:$0]  %s9, 768, %s535, [#allocation19], 64, 64, 4
        $region32: #{forward.6} parent=11 // pred_fallthru
          _
        // Predicated region
        $region33: #{forward.6} parent=11 // pred_check
          %p541 = pneg %p309
        $region34: #{forward.6} parent=11 // pred_check_branch
          %543 = sbr.rel (%p541) target = $region36
        $region35: #{forward.6} parent=11 // pred_region
          %s545 = ssub.s32 16, 16
          %546 = vsyncadd [#allocation19], %s545
          %s548 = sshll.u32 [#allocation20], 4
          %s549 = int_to_ptr.vmem [resolvable:$true] %s548
          %551 = dma.hbm_to_vmem [thread:$0]  %s10, 16, %s549, [#allocation19]
        $region36: #{forward.6} parent=11 // pred_fallthru
          _
        // Predicated region
        $region37: #{forward.6} parent=11 // pred_check
          %p552 = pneg %p330
        $region38: #{forward.6} parent=11 // pred_check_branch
          %554 = sbr.rel (%p552) target = $region40
        $region39: #{forward.6} parent=11 // pred_region
          %s556 = ssub.s32 64, 64
          %557 = vsyncadd [#allocation22], %s556
          %s559 = sshll.u32 [#allocation21], 4
          %s560 = int_to_ptr.vmem [resolvable:$true] %s559
          %562 = dma.hbm_to_vmem [thread:$0]  %s11, 64, %s560, [#allocation22]
        $region40: #{forward.6} parent=11 // pred_fallthru
          _
        // Predicated region
        $region41: #{forward.6} parent=11 // pred_check
          %p563 = pneg %p351
        $region42: #{forward.6} parent=11 // pred_check_branch
          %565 = sbr.rel (%p563) target = $region44
        $region43: #{forward.6} parent=11 // pred_region
          %s567 = ssub.s32 16, 16
          %568 = vsyncadd [#allocation22], %s567
          %s570 = sshll.u32 [#allocation23], 4
          %s571 = int_to_ptr.vmem [resolvable:$true] %s570
          %573 = dma.hbm_to_vmem [thread:$0]  %s12, 16, %s571, [#allocation22]
        $region44: #{forward.6} parent=11 // pred_fallthru
          _
        // Predicated region
        $region45: #{forward.6} parent=11 // pred_check
          %p574 = pneg %p372
        $region46: #{forward.6} parent=11 // pred_check_branch
          %576 = sbr.rel (%p574) target = $region48
        $region47: #{forward.6} parent=11 // pred_region
          %s578 = ssub.s32 512, 512
          %579 = vsyncadd [#allocation25], %s578
          %s580 = sshll.u32 [#allocation24], 4
          %s581 = int_to_ptr.vmem [resolvable:$true] %s580
          %586 = dma.hbm_to_vmem [thread:$0]  %s13, 512, %s581, [#allocation25], 64, 64, 4
        $region48: #{forward.6} parent=11 // pred_fallthru
          _
        // Predicated region
        $region49: #{forward.6} parent=11 // pred_check
          %p587 = pneg %p393
        $region50: #{forward.6} parent=11 // pred_check_branch
          %589 = sbr.rel (%p587) target = $region52
        $region51: #{forward.6} parent=11 // pred_region
          %s591 = ssub.s32 64, 64
          %592 = vsyncadd [#allocation25], %s591
          %s594 = sshll.u32 [#allocation26], 4
          %s595 = int_to_ptr.vmem [resolvable:$true] %s594
          %597 = dma.hbm_to_vmem [thread:$0]  %s14, 64, %s595, [#allocation25]
        $region52: #{forward.6} parent=11 // pred_fallthru
          _
        // Predicated region
        $region53: #{forward.6} parent=11 // pred_check
          %p598 = pneg %p414
        $region54: #{forward.6} parent=11 // pred_check_branch
          %600 = sbr.rel (%p598) target = $region56
        $region55: #{forward.6} parent=11 // pred_region
          %s602 = ssub.s32 512, 512
          %603 = vsyncadd [#allocation28], %s602
          %s604 = sshll.u32 [#allocation27], 4
          %s605 = int_to_ptr.vmem [resolvable:$true] %s604
          %610 = dma.hbm_to_vmem [thread:$0]  %s15, 512, %s605, [#allocation28], 64, 64, 4
        $region56: #{forward.6} parent=11 // pred_fallthru
          _
        // Predicated region
        $region57: #{forward.6} parent=11 // pred_check
          %p611 = pneg %p435
        $region58: #{forward.6} parent=11 // pred_check_branch
          %613 = sbr.rel (%p611) target = $region60
        $region59: #{forward.6} parent=11 // pred_region
          %s615 = ssub.s32 64, 64
          %616 = vsyncadd [#allocation28], %s615
          %s618 = sshll.u32 [#allocation29], 4
          %s619 = int_to_ptr.vmem [resolvable:$true] %s618
          %621 = dma.hbm_to_vmem [thread:$0]  %s16, 64, %s619, [#allocation28]
        $region60: #{forward.6} parent=11 // pred_fallthru
          _
      $region12: #{forward.6} parent=5 // pred_fallthru
        _
      %p622 = scmp.lt.s32.totalorder %s41, 4
      // Predicated region
      $region61: #{forward.6} parent=5 // pred_check
        %p623 = pneg %p622
      $region62: #{forward.6} parent=5 // pred_check_branch
        %625 = sbr.rel (%p623) target = $region64
      $region63: #{forward.6} parent=5 // pred_region
        // Predicated region
        $region65: #{forward.6} parent=63 // pred_check
          %p626 = pneg %p73
        $region66: #{forward.6} parent=63 // pred_check_branch
          %628 = sbr.rel (%p626) target = $region68
        $region67: #{forward.6} parent=63 // pred_region
          %s629 = sand.u32 %s63, 1
          %s630 = scalar_lea.sflag [#allocation4], %s629
          %s631 = sand.u32 %s63, 1
          %s632 = smul.addr %s631, 16
          %s633 = scalar_lea.vmem [#allocation3], %s632
          %s635 = ssub.s32 256, 256
          %636 = vsyncadd %s630, %s635
          %s637 = smul.addr %s48, 2
          %s638 = smul.addr %s637, 128
          %s639 = scalar_lea.hbm %s0, %s638
          %s641 = sshll.u32 %s633, 4
          %s642 = int_to_ptr.vmem [resolvable:$true] %s641
          %644 = dma.hbm_to_vmem [thread:$0]  %s639, 256, %s642, %s630
        $region68: #{forward.6} parent=63 // pred_fallthru
          _
        // Predicated region
        $region69: #{forward.6} parent=63 // pred_check
          %p645 = pneg %p99
        $region70: #{forward.6} parent=63 // pred_check_branch
          %647 = sbr.rel (%p645) target = $region72
        $region71: #{forward.6} parent=63 // pred_region
          %s648 = sand.u32 %s41, 1
          %s649 = scalar_lea.sflag [#allocation7], %s648
          %s650 = sand.u32 %s89, 1
          %s651 = smul.addr %s650, 16
          %s652 = scalar_lea.vmem [#allocation6], %s651
          %s654 = ssub.s32 256, 256
          %655 = vsyncadd %s649, %s654
          %s656 = smul.addr %s49, 2
          %s657 = smul.addr %s656, 128
          %s658 = scalar_lea.hbm %s1, %s657
          %s660 = sshll.u32 %s652, 4
          %s661 = int_to_ptr.vmem [resolvable:$true] %s660
          %663 = dma.hbm_to_vmem [thread:$0]  %s658, 256, %s661, %s649
        $region72: #{forward.6} parent=63 // pred_fallthru
          _
        // Predicated region
        $region73: #{forward.6} parent=63 // pred_check
          %p664 = pneg %p125
        $region74: #{forward.6} parent=63 // pred_check_branch
          %666 = sbr.rel (%p664) target = $region76
        $region75: #{forward.6} parent=63 // pred_region
          %s667 = sand.u32 %s41, 1
          %s668 = scalar_lea.sflag [#allocation7], %s667
          %s669 = sand.u32 %s115, 1
          %s670 = smul.addr %s669, 8
          %s671 = scalar_lea.vmem [#allocation8], %s670
          %s673 = ssub.s32 128, 128
          %674 = vsyncadd %s668, %s673
          %s675 = smul.addr %s48, 128
          %s676 = scalar_lea.hbm %s2, %s675
          %s678 = sshll.u32 %s671, 4
          %s679 = int_to_ptr.vmem [resolvable:$true] %s678
          %681 = dma.hbm_to_vmem [thread:$0]  %s676, 128, %s679, %s668
        $region76: #{forward.6} parent=63 // pred_fallthru
          _
        // Predicated region
        $region77: #{forward.6} parent=63 // pred_check
          %p682 = pneg %p151
        $region78: #{forward.6} parent=63 // pred_check_branch
          %684 = sbr.rel (%p682) target = $region80
        $region79: #{forward.6} parent=63 // pred_region
          %s685 = sand.u32 %s41, 1
          %s686 = scalar_lea.sflag [#allocation10], %s685
          %s687 = sand.u32 %s141, 1
          %s688 = smul.addr %s687, 8
          %s689 = scalar_lea.vmem [#allocation9], %s688
          %s691 = ssub.s32 128, 128
          %692 = vsyncadd %s686, %s691
          %s693 = smul.addr %s49, 128
          %s694 = scalar_lea.hbm %s3, %s693
          %s696 = sshll.u32 %s689, 4
          %s697 = int_to_ptr.vmem [resolvable:$true] %s696
          %699 = dma.hbm_to_vmem [thread:$0]  %s694, 128, %s697, %s686
        $region80: #{forward.6} parent=63 // pred_fallthru
          _
        // Predicated region
        $region81: #{forward.6} parent=63 // pred_check
          %p700 = pneg %p177
        $region82: #{forward.6} parent=63 // pred_check_branch
          %702 = sbr.rel (%p700) target = $region84
        $region83: #{forward.6} parent=63 // pred_region
          %s703 = sand.u32 %s41, 1
          %s704 = scalar_lea.sflag [#allocation10], %s703
          %s705 = sand.u32 %s167, 1
          %s706 = smul.addr %s705, 8
          %s707 = scalar_lea.vmem [#allocation11], %s706
          %s709 = ssub.s32 128, 128
          %710 = vsyncadd %s704, %s709
          %s711 = smul.addr %s48, 128
          %s712 = scalar_lea.hbm %s4, %s711
          %s714 = sshll.u32 %s707, 4
          %s715 = int_to_ptr.vmem [resolvable:$true] %s714
          %717 = dma.hbm_to_vmem [thread:$0]  %s712, 128, %s715, %s704
        $region84: #{forward.6} parent=63 // pred_fallthru
          _
      $region64: #{forward.6} parent=5 // pred_fallthru
        _
      %p718 = scmp.le.s32.totalorder 1, %s41
      %p719 = scmp.lt.s32.totalorder %s41, 5
      %p720 = pnand %p718, %p719
      %p721 = pneg %p720
      // Predicated region
      $region85: #{forward.6} parent=5 // pred_check
        _
      $region86: #{forward.6} parent=5 // pred_check_branch
        %723 = sbr.rel (%p720) target = $region88
      $region87: #{forward.6} parent=5 // pred_region
        %s724 = ssub.s32 %s41, 1
        %s725 = sand.u32 %s66, 1
        %s726 = scalar_lea.sflag [#allocation4], %s725
        %s727 = sand.u32 %s66, 1
        %s728 = smul.addr %s727, 16
        %s729 = scalar_lea.vmem [#allocation3], %s728
        // Predicated region
        $region89: #{forward.6} parent=87 // pred_check
          %p730 = pneg %p79
        $region90: #{forward.6} parent=87 // pred_check_branch
          %732 = sbr.rel (%p730) target = $region92
        $region91: #{forward.6} parent=87 // pred_region
          %733 = dma.done %s726, 256
        $region92: #{forward.6} parent=87 // pred_fallthru
          _
        %s734 = sand.u32 %s46, 1
        %s735 = scalar_lea.sflag [#allocation7], %s734
        %s736 = sand.u32 %s92, 1
        %s737 = smul.addr %s736, 16
        %s738 = scalar_lea.vmem [#allocation6], %s737
        // Predicated region
        $region93: #{forward.6} parent=87 // pred_check
          %p739 = pneg %p105
        $region94: #{forward.6} parent=87 // pred_check_branch
          %741 = sbr.rel (%p739) target = $region96
        $region95: #{forward.6} parent=87 // pred_region
          %742 = dma.done %s735, 256
        $region96: #{forward.6} parent=87 // pred_fallthru
          _
        %s743 = sand.u32 %s46, 1
        %s744 = scalar_lea.sflag [#allocation7], %s743
        %s745 = sand.u32 %s118, 1
        %s746 = smul.addr %s745, 8
        %s747 = scalar_lea.vmem [#allocation8], %s746
        // Predicated region
        $region97: #{forward.6} parent=87 // pred_check
          %p748 = pneg %p131
        $region98: #{forward.6} parent=87 // pred_check_branch
          %750 = sbr.rel (%p748) target = $region100
        $region99: #{forward.6} parent=87 // pred_region
          %751 = dma.done %s744, 128
        $region100: #{forward.6} parent=87 // pred_fallthru
          _
        %s752 = sand.u32 %s46, 1
        %s753 = scalar_lea.sflag [#allocation10], %s752
        %s754 = sand.u32 %s144, 1
        %s755 = smul.addr %s754, 8
        %s756 = scalar_lea.vmem [#allocation9], %s755
        // Predicated region
        $region101: #{forward.6} parent=87 // pred_check
          %p757 = pneg %p157
        $region102: #{forward.6} parent=87 // pred_check_branch
          %759 = sbr.rel (%p757) target = $region104
        $region103: #{forward.6} parent=87 // pred_region
          %760 = dma.done %s753, 128
        $region104: #{forward.6} parent=87 // pred_fallthru
          _
        %s761 = sand.u32 %s46, 1
        %s762 = scalar_lea.sflag [#allocation10], %s761
        %s763 = sand.u32 %s170, 1
        %s764 = smul.addr %s763, 8
        %s765 = scalar_lea.vmem [#allocation11], %s764
        // Predicated region
        $region105: #{forward.6} parent=87 // pred_check
          %p766 = pneg %p183
        $region106: #{forward.6} parent=87 // pred_check_branch
          %768 = sbr.rel (%p766) target = $region108
        $region107: #{forward.6} parent=87 // pred_region
          %769 = dma.done %s762, 128
        $region108: #{forward.6} parent=87 // pred_fallthru
          _
        // Predicated region
        $region109: #{forward.6} parent=87 // pred_check
          %p770 = pneg %p204
        $region110: #{forward.6} parent=87 // pred_check_branch
          %772 = sbr.rel (%p770) target = $region112
        $region111: #{forward.6} parent=87 // pred_region
          %773 = dma.done [#allocation13], 192
        $region112: #{forward.6} parent=87 // pred_fallthru
          _
        // Predicated region
        $region113: #{forward.6} parent=87 // pred_check
          %p774 = pneg %p225
        $region114: #{forward.6} parent=87 // pred_check_branch
          %776 = sbr.rel (%p774) target = $region116
        $region115: #{forward.6} parent=87 // pred_region
          %777 = dma.done [#allocation13], 192
        $region116: #{forward.6} parent=87 // pred_fallthru
          _
        // Predicated region
        $region117: #{forward.6} parent=87 // pred_check
          %p778 = pneg %p246
        $region118: #{forward.6} parent=87 // pred_check_branch
          %780 = sbr.rel (%p778) target = $region120
        $region119: #{forward.6} parent=87 // pred_region
          %781 = dma.done [#allocation16], 1536
        $region120: #{forward.6} parent=87 // pred_fallthru
          _
        // Predicated region
        $region121: #{forward.6} parent=87 // pred_check
          %p782 = pneg %p267
        $region122: #{forward.6} parent=87 // pred_check_branch
          %784 = sbr.rel (%p782) target = $region124
        $region123: #{forward.6} parent=87 // pred_region
          %785 = dma.done [#allocation16], 48
        $region124: #{forward.6} parent=87 // pred_fallthru
          _
        // Predicated region
        $region125: #{forward.6} parent=87 // pred_check
          %p786 = pneg %p288
        $region126: #{forward.6} parent=87 // pred_check_branch
          %788 = sbr.rel (%p786) target = $region128
        $region127: #{forward.6} parent=87 // pred_region
          %789 = dma.done [#allocation19], 768
        $region128: #{forward.6} parent=87 // pred_fallthru
          _
        // Predicated region
        $region129: #{forward.6} parent=87 // pred_check
          %p790 = pneg %p309
        $region130: #{forward.6} parent=87 // pred_check_branch
          %792 = sbr.rel (%p790) target = $region132
        $region131: #{forward.6} parent=87 // pred_region
          %793 = dma.done [#allocation19], 16
        $region132: #{forward.6} parent=87 // pred_fallthru
          _
        // Predicated region
        $region133: #{forward.6} parent=87 // pred_check
          %p794 = pneg %p330
        $region134: #{forward.6} parent=87 // pred_check_branch
          %796 = sbr.rel (%p794) target = $region136
        $region135: #{forward.6} parent=87 // pred_region
          %797 = dma.done [#allocation22], 64
        $region136: #{forward.6} parent=87 // pred_fallthru
          _
        // Predicated region
        $region137: #{forward.6} parent=87 // pred_check
          %p798 = pneg %p351
        $region138: #{forward.6} parent=87 // pred_check_branch
          %800 = sbr.rel (%p798) target = $region140
        $region139: #{forward.6} parent=87 // pred_region
          %801 = dma.done [#allocation22], 16
        $region140: #{forward.6} parent=87 // pred_fallthru
          _
        // Predicated region
        $region141: #{forward.6} parent=87 // pred_check
          %p802 = pneg %p372
        $region142: #{forward.6} parent=87 // pred_check_branch
          %804 = sbr.rel (%p802) target = $region144
        $region143: #{forward.6} parent=87 // pred_region
          %805 = dma.done [#allocation25], 512
        $region144: #{forward.6} parent=87 // pred_fallthru
          _
        // Predicated region
        $region145: #{forward.6} parent=87 // pred_check
          %p806 = pneg %p393
        $region146: #{forward.6} parent=87 // pred_check_branch
          %808 = sbr.rel (%p806) target = $region148
        $region147: #{forward.6} parent=87 // pred_region
          %809 = dma.done [#allocation25], 64
        $region148: #{forward.6} parent=87 // pred_fallthru
          _
        // Predicated region
        $region149: #{forward.6} parent=87 // pred_check
          %p810 = pneg %p414
        $region150: #{forward.6} parent=87 // pred_check_branch
          %812 = sbr.rel (%p810) target = $region152
        $region151: #{forward.6} parent=87 // pred_region
          %813 = dma.done [#allocation28], 512
        $region152: #{forward.6} parent=87 // pred_fallthru
          _
        // Predicated region
        $region153: #{forward.6} parent=87 // pred_check
          %p814 = pneg %p435
        $region154: #{forward.6} parent=87 // pred_check_branch
          %816 = sbr.rel (%p814) target = $region156
        $region155: #{forward.6} parent=87 // pred_region
          %817 = dma.done [#allocation28], 64
        $region156: #{forward.6} parent=87 // pred_fallthru
          _
        %s818 = sand.u32 %s66, 1
        %s819 = scalar_lea.sflag [#allocation4], %s818
        %s820 = sand.u32 %s66, 1
        %s821 = smul.addr %s820, 16
        %s822 = scalar_lea.vmem [#allocation3], %s821
        %p823 = pneg %p79
        %p824 = pneg %p76
        %s825 = sand.u32 %s46, 1
        %s826 = scalar_lea.sflag [#allocation7], %s825
        %s827 = sand.u32 %s92, 1
        %s828 = smul.addr %s827, 16
        %s829 = scalar_lea.vmem [#allocation6], %s828
        %p830 = pneg %p105
        %p831 = pneg %p102
        %s832 = sand.u32 %s46, 1
        %s833 = scalar_lea.sflag [#allocation7], %s832
        %s834 = sand.u32 %s118, 1
        %s835 = smul.addr %s834, 8
        %s836 = scalar_lea.vmem [#allocation8], %s835
        %p837 = pneg %p131
        %p838 = pneg %p128
        %s839 = sand.u32 %s46, 1
        %s840 = scalar_lea.sflag [#allocation10], %s839
        %s841 = sand.u32 %s144, 1
        %s842 = smul.addr %s841, 8
        %s843 = scalar_lea.vmem [#allocation9], %s842
        %p844 = pneg %p157
        %p845 = pneg %p154
        %s846 = sand.u32 %s46, 1
        %s847 = scalar_lea.sflag [#allocation10], %s846
        %s848 = sand.u32 %s170, 1
        %s849 = smul.addr %s848, 8
        %s850 = scalar_lea.vmem [#allocation11], %s849
        %p851 = pneg %p183
        %p852 = pneg %p180
        %p853 = pneg %p204
        %p854 = pneg %p201
        %p855 = pneg %p225
        %p856 = pneg %p222
        %p857 = pneg %p246
        %p858 = pneg %p243
        %p859 = pneg %p267
        %p860 = pneg %p264
        %p861 = pneg %p288
        %p862 = pneg %p285
        %p863 = pneg %p309
        %p864 = pneg %p306
        %p865 = pneg %p330
        %p866 = pneg %p327
        %p867 = pneg %p351
        %p868 = pneg %p348
        %p869 = pneg %p372
        %p870 = pneg %p369
        %p871 = pneg %p393
        %p872 = pneg %p390
        %p873 = pneg %p414
        %p874 = pneg %p411
        %p875 = pneg %p435
        %p876 = pneg %p432
        %p877 = pneg %p461
        %p878 = pneg %p458
        %s879 = sand.u32 %s448, 1
        %s880 = scalar_lea.sflag [#allocation5], %s879
        %s881 = sand.u32 %s448, 1
        %s882 = smul.addr %s881, 8
        %s883 = scalar_lea.vmem [#allocation30], %s882
        %p885 = scmp.eq.s32.totalorder %s51, 0
        // Predicated region
        $region157: #{forward.6} parent=87 // pred_check
          %p886 = pneg %p885
        $region158: #{forward.6} parent=87 // pred_check_branch
          %888 = sbr.rel (%p886) target = $region160
        $region159: #{forward.6} parent=87 // pred_region
          %vm889 = vcmask 261120
          %890 = vst.msk [vmem:[#allocation2] sm:$0xff] %vm889, 0.0
          %891 = vst.msk [vmem:[#allocation2 + $0x8] sm:$0xff] %vm889, 0.0
          %892 = vst.msk [vmem:[#allocation2 + $0x10] sm:$0xff] %vm889, 0.0
        $region160: #{forward.6} parent=87 // pred_fallthru
          _
        %v893 = vld [vmem:[%s747] sm:$0xff]
        %v894 = vld [vmem:[%s756] sm:$0xff]
        %v896 = vcombine.high %v893, %v893
        %v898 = vunpack.c.l.s4 1966171168
        %v899 = vunpack.c.0.s8 %v898
        %v900 = vlaneseq
        %v901 = vshrl.u32 %v900, 7
        %v902 = vsub.s32 %v899, %v901
        %v903 = vrot.slane %v893, %v902
        %v905 = vunpack.c.l.s4 1966171168
        %v906 = vunpack.c.0.s8 %v905
        %v907 = vlaneseq
        %v908 = vshrl.u32 %v907, 7
        %v909 = vsub.s32 %v906, %v908
        %v910 = vrot.slane %v896, %v909
        %v911 = vcombine.high %v903, %v903
        %v912 = vcombine.high %v910, %v910
        %v914 = vunpack.c.l.s4 1966171168
        %v915 = vunpack.c.0.s8 %v914
        %v916 = vlaneseq
        %v917 = vshrl.u32 %v916, 7
        %v918 = vsub.s32 %v915, %v917
        %v919 = vrot.slane %v903, %v918
        %v921 = vunpack.c.l.s4 1966171168
        %v922 = vunpack.c.0.s8 %v921
        %v923 = vlaneseq
        %v924 = vshrl.u32 %v923, 7
        %v925 = vsub.s32 %v922, %v924
        %v926 = vrot.slane %v910, %v925
        %v928 = vunpack.c.l.s4 1966171168
        %v929 = vunpack.c.0.s8 %v928
        %v930 = vlaneseq
        %v931 = vshrl.u32 %v930, 7
        %v932 = vsub.s32 %v929, %v931
        %v933 = vrot.slane %v911, %v932
        %v935 = vunpack.c.l.s4 1966171168
        %v936 = vunpack.c.0.s8 %v935
        %v937 = vlaneseq
        %v938 = vshrl.u32 %v937, 7
        %v939 = vsub.s32 %v936, %v938
        %v940 = vrot.slane %v912, %v939
        %v941 = vcombine.high %v919, %v919
        %v942 = vcombine.high %v926, %v926
        %v943 = vcombine.high %v933, %v933
        %v944 = vcombine.high %v940, %v940
        %v945 = vlaneseq
        %v946 = vshrl.u32 %v945, 7
        %v947 = vsub.s32 0, %v946
        %v948 = vrot.slane %v919, %v947
        %v949 = vlaneseq
        %v950 = vshrl.u32 %v949, 7
        %v951 = vsub.s32 0, %v950
        %v952 = vrot.slane %v933, %v951
        %v953 = vlaneseq
        %v954 = vshrl.u32 %v953, 7
        %v955 = vsub.s32 0, %v954
        %v956 = vrot.slane %v941, %v955
        %v957 = vlaneseq
        %v958 = vshrl.u32 %v957, 7
        %v959 = vsub.s32 0, %v958
        %v960 = vrot.slane %v943, %v959
        %v961 = vlaneseq
        %v962 = vshrl.u32 %v961, 7
        %v963 = vsub.s32 0, %v962
        %v964 = vrot.slane %v926, %v963
        %v965 = vlaneseq
        %v966 = vshrl.u32 %v965, 7
        %v967 = vsub.s32 0, %v966
        %v968 = vrot.slane %v940, %v967
        %v969 = vlaneseq
        %v970 = vshrl.u32 %v969, 7
        %v971 = vsub.s32 0, %v970
        %v972 = vrot.slane %v942, %v971
        %v973 = vlaneseq
        %v974 = vshrl.u32 %v973, 7
        %v975 = vsub.s32 0, %v974
        %v976 = vrot.slane %v944, %v975
        %v985 = vsub.f32 %v894, %v948
        %v986 = vsub.f32 %v894, %v952
        %v987 = vsub.f32 %v894, %v956
        %v988 = vsub.f32 %v894, %v960
        %v989 = vsub.f32 %v894, %v964
        %v990 = vsub.f32 %v894, %v968
        %v991 = vsub.f32 %v894, %v972
        %v992 = vsub.f32 %v894, %v976
        %v993 = vmul.f32 %v985, %v985
        %v994 = vmul.f32 %v986, %v986
        %v995 = vmul.f32 %v987, %v987
        %v996 = vmul.f32 %v988, %v988
        %v997 = vmul.f32 %v989, %v989
        %v998 = vmul.f32 %v990, %v990
        %v999 = vmul.f32 %v991, %v991
        %v1000 = vmul.f32 %v992, %v992
        %1009 = vrot.lane.b32.xlu0 %v993, 127
        %v1010 = vpop.permute.xlu0 %1009
        %1011 = vrot.lane.b32.xlu0 %v994, 127
        %v1012 = vpop.permute.xlu0 %1011
        %1013 = vrot.lane.b32.xlu0 %v995, 127
        %v1014 = vpop.permute.xlu0 %1013
        %1015 = vrot.lane.b32.xlu0 %v996, 127
        %v1016 = vpop.permute.xlu0 %1015
        %1017 = vrot.lane.b32.xlu0 %v997, 127
        %v1018 = vpop.permute.xlu0 %1017
        %1019 = vrot.lane.b32.xlu0 %v998, 127
        %v1020 = vpop.permute.xlu0 %1019
        %1021 = vrot.lane.b32.xlu0 %v999, 127
        %v1022 = vpop.permute.xlu0 %1021
        %1023 = vrot.lane.b32.xlu0 %v1000, 127
        %v1024 = vpop.permute.xlu0 %1023
        %v1033 = vadd.f32 %v993, %v1010
        %v1034 = vadd.f32 %v994, %v1012
        %v1035 = vadd.f32 %v995, %v1014
        %v1036 = vadd.f32 %v996, %v1016
        %v1037 = vadd.f32 %v997, %v1018
        %v1038 = vadd.f32 %v998, %v1020
        %v1039 = vadd.f32 %v999, %v1022
        %v1040 = vadd.f32 %v1000, %v1024
        %1041 = vrot.lane.b32.xlu0 %v993, 126
        %v1042 = vpop.permute.xlu0 %1041
        %1043 = vrot.lane.b32.xlu0 %v994, 126
        %v1044 = vpop.permute.xlu0 %1043
        %1045 = vrot.lane.b32.xlu0 %v995, 126
        %v1046 = vpop.permute.xlu0 %1045
        %1047 = vrot.lane.b32.xlu0 %v996, 126
        %v1048 = vpop.permute.xlu0 %1047
        %1049 = vrot.lane.b32.xlu0 %v997, 126
        %v1050 = vpop.permute.xlu0 %1049
        %1051 = vrot.lane.b32.xlu0 %v998, 126
        %v1052 = vpop.permute.xlu0 %1051
        %1053 = vrot.lane.b32.xlu0 %v999, 126
        %v1054 = vpop.permute.xlu0 %1053
        %1055 = vrot.lane.b32.xlu0 %v1000, 126
        %v1056 = vpop.permute.xlu0 %1055
        %v1065 = vadd.f32 %v1033, %v1042
        %v1066 = vadd.f32 %v1034, %v1044
        %v1067 = vadd.f32 %v1035, %v1046
        %v1068 = vadd.f32 %v1036, %v1048
        %v1069 = vadd.f32 %v1037, %v1050
        %v1070 = vadd.f32 %v1038, %v1052
        %v1071 = vadd.f32 %v1039, %v1054
        %v1072 = vadd.f32 %v1040, %v1056
        %v1073 = vrsqrt.pop %v1065
        %v1074 = vmul.f32 %v1065, %v1073
        %vm1075 = vcmp.eq.f32.partialorder %v1065, inf
        %v1076 = vsel %vm1075, %v1065, %v1074
        %vm1077 = vcmp.eq.f32.partialorder %v1065, 0.0
        %v1078 = vand.u32 %v1065, 2147483648
        %v1079 = vsel %vm1077, %v1078, %v1076
        %v1080 = vrsqrt.pop %v1066
        %v1081 = vmul.f32 %v1066, %v1080
        %vm1082 = vcmp.eq.f32.partialorder %v1066, inf
        %v1083 = vsel %vm1082, %v1066, %v1081
        %vm1084 = vcmp.eq.f32.partialorder %v1066, 0.0
        %v1085 = vand.u32 %v1066, 2147483648
        %v1086 = vsel %vm1084, %v1085, %v1083
        %v1087 = vrsqrt.pop %v1067
        %v1088 = vmul.f32 %v1067, %v1087
        %vm1089 = vcmp.eq.f32.partialorder %v1067, inf
        %v1090 = vsel %vm1089, %v1067, %v1088
        %vm1091 = vcmp.eq.f32.partialorder %v1067, 0.0
        %v1092 = vand.u32 %v1067, 2147483648
        %v1093 = vsel %vm1091, %v1092, %v1090
        %v1094 = vrsqrt.pop %v1068
        %v1095 = vmul.f32 %v1068, %v1094
        %vm1096 = vcmp.eq.f32.partialorder %v1068, inf
        %v1097 = vsel %vm1096, %v1068, %v1095
        %vm1098 = vcmp.eq.f32.partialorder %v1068, 0.0
        %v1099 = vand.u32 %v1068, 2147483648
        %v1100 = vsel %vm1098, %v1099, %v1097
        %v1101 = vrsqrt.pop %v1069
        %v1102 = vmul.f32 %v1069, %v1101
        %vm1103 = vcmp.eq.f32.partialorder %v1069, inf
        %v1104 = vsel %vm1103, %v1069, %v1102
        %vm1105 = vcmp.eq.f32.partialorder %v1069, 0.0
        %v1106 = vand.u32 %v1069, 2147483648
        %v1107 = vsel %vm1105, %v1106, %v1104
        %v1108 = vrsqrt.pop %v1070
        %v1109 = vmul.f32 %v1070, %v1108
        %vm1110 = vcmp.eq.f32.partialorder %v1070, inf
        %v1111 = vsel %vm1110, %v1070, %v1109
        %vm1112 = vcmp.eq.f32.partialorder %v1070, 0.0
        %v1113 = vand.u32 %v1070, 2147483648
        %v1114 = vsel %vm1112, %v1113, %v1111
        %v1115 = vrsqrt.pop %v1071
        %v1116 = vmul.f32 %v1071, %v1115
        %vm1117 = vcmp.eq.f32.partialorder %v1071, inf
        %v1118 = vsel %vm1117, %v1071, %v1116
        %vm1119 = vcmp.eq.f32.partialorder %v1071, 0.0
        %v1120 = vand.u32 %v1071, 2147483648
        %v1121 = vsel %vm1119, %v1120, %v1118
        %v1122 = vrsqrt.pop %v1072
        %v1123 = vmul.f32 %v1072, %v1122
        %vm1124 = vcmp.eq.f32.partialorder %v1072, inf
        %v1125 = vsel %vm1124, %v1072, %v1123
        %vm1126 = vcmp.eq.f32.partialorder %v1072, 0.0
        %v1127 = vand.u32 %v1072, 2147483648
        %v1128 = vsel %vm1126, %v1127, %v1125
        %v1129 = vadd.f32 %v1079, 1e-08
        %v1130 = vadd.f32 %v1086, 1e-08
        %v1131 = vadd.f32 %v1093, 1e-08
        %v1132 = vadd.f32 %v1100, 1e-08
        %v1133 = vadd.f32 %v1107, 1e-08
        %v1134 = vadd.f32 %v1114, 1e-08
        %v1135 = vadd.f32 %v1121, 1e-08
        %v1136 = vadd.f32 %v1128, 1e-08
        %v1137 = vrcp.pop %v1129
        %v1138 = vmul.f32 1.0, %v1137
        %v1139 = vrcp.pop %v1130
        %v1140 = vmul.f32 1.0, %v1139
        %v1141 = vrcp.pop %v1131
        %v1142 = vmul.f32 1.0, %v1141
        %v1143 = vrcp.pop %v1132
        %v1144 = vmul.f32 1.0, %v1143
        %v1145 = vrcp.pop %v1133
        %v1146 = vmul.f32 1.0, %v1145
        %v1147 = vrcp.pop %v1134
        %v1148 = vmul.f32 1.0, %v1147
        %v1149 = vrcp.pop %v1135
        %v1150 = vmul.f32 1.0, %v1149
        %v1151 = vrcp.pop %v1136
        %v1152 = vmul.f32 1.0, %v1151
        %v1153 = vmul.f32 %v1079, 0.25
        %v1154 = vmul.f32 %v1086, 0.25
        %v1155 = vmul.f32 %v1093, 0.25
        %v1156 = vmul.f32 %v1100, 0.25
        %v1157 = vmul.f32 %v1107, 0.25
        %v1158 = vmul.f32 %v1114, 0.25
        %v1159 = vmul.f32 %v1121, 0.25
        %v1160 = vmul.f32 %v1128, 0.25
        %v1161 = vmul.f32 %v985, %v1138
        %v1162 = vmul.f32 %v986, %v1140
        %v1163 = vmul.f32 %v987, %v1142
        %v1164 = vmul.f32 %v988, %v1144
        %v1165 = vmul.f32 %v989, %v1146
        %v1166 = vmul.f32 %v990, %v1148
        %v1167 = vmul.f32 %v991, %v1150
        %v1168 = vmul.f32 %v992, %v1152
        %1177 = vrot.lane.b32.xlu0 %v1138, 1
        %v1178 = vpop.permute.xlu0 %1177
        %1179 = vrot.lane.b32.xlu0 %v1140, 1
        %v1180 = vpop.permute.xlu0 %1179
        %1181 = vrot.lane.b32.xlu0 %v1142, 1
        %v1182 = vpop.permute.xlu0 %1181
        %1183 = vrot.lane.b32.xlu0 %v1144, 1
        %v1184 = vpop.permute.xlu0 %1183
        %1185 = vrot.lane.b32.xlu0 %v1146, 1
        %v1186 = vpop.permute.xlu0 %1185
        %1187 = vrot.lane.b32.xlu0 %v1148, 1
        %v1188 = vpop.permute.xlu0 %1187
        %1189 = vrot.lane.b32.xlu0 %v1150, 1
        %v1190 = vpop.permute.xlu0 %1189
        %1191 = vrot.lane.b32.xlu0 %v1152, 1
        %v1192 = vpop.permute.xlu0 %1191
        %v1201 = vmul.f32 %v985, %v1178
        %v1202 = vmul.f32 %v986, %v1180
        %v1203 = vmul.f32 %v987, %v1182
        %v1204 = vmul.f32 %v988, %v1184
        %v1205 = vmul.f32 %v989, %v1186
        %v1206 = vmul.f32 %v990, %v1188
        %v1207 = vmul.f32 %v991, %v1190
        %v1208 = vmul.f32 %v992, %v1192
        %1209 = vrot.lane.b32.xlu0 %v1138, 2
        %v1210 = vpop.permute.xlu0 %1209
        %1211 = vrot.lane.b32.xlu0 %v1140, 2
        %v1212 = vpop.permute.xlu0 %1211
        %1213 = vrot.lane.b32.xlu0 %v1142, 2
        %v1214 = vpop.permute.xlu0 %1213
        %1215 = vrot.lane.b32.xlu0 %v1144, 2
        %v1216 = vpop.permute.xlu0 %1215
        %1217 = vrot.lane.b32.xlu0 %v1146, 2
        %v1218 = vpop.permute.xlu0 %1217
        %1219 = vrot.lane.b32.xlu0 %v1148, 2
        %v1220 = vpop.permute.xlu0 %1219
        %1221 = vrot.lane.b32.xlu0 %v1150, 2
        %v1222 = vpop.permute.xlu0 %1221
        %1223 = vrot.lane.b32.xlu0 %v1152, 2
        %v1224 = vpop.permute.xlu0 %1223
        %v1233 = vmul.f32 %v985, %v1210
        %v1234 = vmul.f32 %v986, %v1212
        %v1235 = vmul.f32 %v987, %v1214
        %v1236 = vmul.f32 %v988, %v1216
        %v1237 = vmul.f32 %v989, %v1218
        %v1238 = vmul.f32 %v990, %v1220
        %v1239 = vmul.f32 %v991, %v1222
        %v1240 = vmul.f32 %v992, %v1224
        %vm1241 = vcmp.eq.f32.partialorder %v948, %v894
        %vm1242 = vcmp.eq.f32.partialorder %v952, %v894
        %vm1243 = vcmp.eq.f32.partialorder %v956, %v894
        %vm1244 = vcmp.eq.f32.partialorder %v960, %v894
        %vm1245 = vcmp.eq.f32.partialorder %v964, %v894
        %vm1246 = vcmp.eq.f32.partialorder %v968, %v894
        %vm1247 = vcmp.eq.f32.partialorder %v972, %v894
        %vm1248 = vcmp.eq.f32.partialorder %v976, %v894
        %s1249 = smul.u32 %s50, 8
        %v1250 = vstv %s1249
        %v1251 = vadd.s32 %v1250, 1
        %v1252 = vadd.s32 %v1250, 2
        %v1253 = vadd.s32 %v1250, 3
        %v1254 = vadd.s32 %v1250, 4
        %v1255 = vadd.s32 %v1250, 5
        %v1256 = vadd.s32 %v1250, 6
        %v1257 = vadd.s32 %v1250, 7
        %v1258 = vlaneseq
        %v1259 = vshrl.u32 %v1258, 7
        %s1260 = smul.u32 %s51, 8
        %v1261 = vstv %s1260
        %v1262 = vadd.s32 %v1259, %v1261
        %vm1263 = vcmp.le.f32.partialorder %v1065, 16.0
        %vm1264 = vcmp.le.f32.partialorder %v1066, 16.0
        %vm1265 = vcmp.le.f32.partialorder %v1067, 16.0
        %vm1266 = vcmp.le.f32.partialorder %v1068, 16.0
        %vm1267 = vcmp.le.f32.partialorder %v1069, 16.0
        %vm1268 = vcmp.le.f32.partialorder %v1070, 16.0
        %vm1269 = vcmp.le.f32.partialorder %v1071, 16.0
        %vm1270 = vcmp.le.f32.partialorder %v1072, 16.0
        %v1271 = vsel %vm1263, 1, 0
        %v1272 = vsel %vm1264, 1, 0
        %v1273 = vsel %vm1265, 1, 0
        %v1274 = vsel %vm1266, 1, 0
        %v1275 = vsel %vm1267, 1, 0
        %v1276 = vsel %vm1268, 1, 0
        %v1277 = vsel %vm1269, 1, 0
        %v1278 = vsel %vm1270, 1, 0
        %1279 = vrot.lane.b32.xlu0 %v1271, 3
        %v1280 = vpop.permute.xlu0 %1279
        %1281 = vrot.lane.b32.xlu0 %v1272, 3
        %v1282 = vpop.permute.xlu0 %1281
        %1283 = vrot.lane.b32.xlu0 %v1273, 3
        %v1284 = vpop.permute.xlu0 %1283
        %1285 = vrot.lane.b32.xlu0 %v1274, 3
        %v1286 = vpop.permute.xlu0 %1285
        %1287 = vrot.lane.b32.xlu0 %v1275, 3
        %v1288 = vpop.permute.xlu0 %1287
        %1289 = vrot.lane.b32.xlu0 %v1276, 3
        %v1290 = vpop.permute.xlu0 %1289
        %1291 = vrot.lane.b32.xlu0 %v1277, 3
        %v1292 = vpop.permute.xlu0 %1291
        %1293 = vrot.lane.b32.xlu0 %v1278, 3
        %v1294 = vpop.permute.xlu0 %1293
        %vm1295 = vcmp.ne.s32.totalorder %v1280, 0
        %vm1296 = vcmp.ne.s32.totalorder %v1282, 0
        %vm1297 = vcmp.ne.s32.totalorder %v1284, 0
        %vm1298 = vcmp.ne.s32.totalorder %v1286, 0
        %vm1299 = vcmp.ne.s32.totalorder %v1288, 0
        %vm1300 = vcmp.ne.s32.totalorder %v1290, 0
        %vm1301 = vcmp.ne.s32.totalorder %v1292, 0
        %vm1302 = vcmp.ne.s32.totalorder %v1294, 0
        %vm1303 = vmand %vm1241, %vm1295
        %vm1304 = vmand %vm1242, %vm1296
        %vm1305 = vmand %vm1243, %vm1297
        %vm1306 = vmand %vm1244, %vm1298
        %vm1307 = vmand %vm1245, %vm1299
        %vm1308 = vmand %vm1246, %vm1300
        %vm1309 = vmand %vm1247, %vm1301
        %vm1310 = vmand %vm1248, %vm1302
        %vm1311 = vcmp.ne.s32.totalorder %v1250, %v1262
        %vm1312 = vcmp.ne.s32.totalorder %v1251, %v1262
        %vm1313 = vcmp.ne.s32.totalorder %v1252, %v1262
        %vm1314 = vcmp.ne.s32.totalorder %v1253, %v1262
        %vm1315 = vcmp.ne.s32.totalorder %v1254, %v1262
        %vm1316 = vcmp.ne.s32.totalorder %v1255, %v1262
        %vm1317 = vcmp.ne.s32.totalorder %v1256, %v1262
        %vm1318 = vcmp.ne.s32.totalorder %v1257, %v1262
        %vm1319 = vmand %vm1303, %vm1311
        %vm1320 = vmand %vm1304, %vm1312
        %vm1321 = vmand %vm1305, %vm1313
        %vm1322 = vmand %vm1306, %vm1314
        %vm1323 = vmand %vm1307, %vm1315
        %vm1324 = vmand %vm1308, %vm1316
        %vm1325 = vmand %vm1309, %vm1317
        %vm1326 = vmand %vm1310, %vm1318
        %v1327 = vsel %vm1319, 1.0, 0.0
        %v1328 = vsel %vm1320, 1.0, 0.0
        %v1329 = vsel %vm1321, 1.0, 0.0
        %v1330 = vsel %vm1322, 1.0, 0.0
        %v1331 = vsel %vm1323, 1.0, 0.0
        %v1332 = vsel %vm1324, 1.0, 0.0
        %v1333 = vsel %vm1325, 1.0, 0.0
        %v1334 = vsel %vm1326, 1.0, 0.0
        %v1335 = vld [vmem:[%s729] sm:$0xff]
        %v1336 = vld [vmem:[%s729 + $0x8] sm:$0xff]
        %v1337 = vld [vmem:[%s738] sm:$0xff]
        %v1338 = vld [vmem:[%s738 + $0x8] sm:$0xff]
        %v1339 = vld [vmem:[#allocation12] sm:$0xf]
        %v1340 = vld [vmem:[#allocation14] sm:$0x7]
        %1342 = vset.pattern.permute.xlu0 0
        %1343 = vperm.xlu0 %1342, %v1161
        %v1344 = vpop.permute.xlu0 %1343
        %1347 = vset.pattern.permute.xlu0 0
        %1348 = vperm.xlu0 %1347, %v1162
        %v1349 = vpop.permute.xlu0 %1348
        %1352 = vset.pattern.permute.xlu0 0
        %1353 = vperm.xlu0 %1352, %v1163
        %v1354 = vpop.permute.xlu0 %1353
        %1357 = vset.pattern.permute.xlu0 0
        %1358 = vperm.xlu0 %1357, %v1164
        %v1359 = vpop.permute.xlu0 %1358
        %1362 = vset.pattern.permute.xlu0 0
        %1363 = vperm.xlu0 %1362, %v1165
        %v1364 = vpop.permute.xlu0 %1363
        %1367 = vset.pattern.permute.xlu0 0
        %1368 = vperm.xlu0 %1367, %v1166
        %v1369 = vpop.permute.xlu0 %1368
        %1372 = vset.pattern.permute.xlu0 0
        %1373 = vperm.xlu0 %1372, %v1167
        %v1374 = vpop.permute.xlu0 %1373
        %1377 = vset.pattern.permute.xlu0 0
        %1378 = vperm.xlu0 %1377, %v1168
        %v1379 = vpop.permute.xlu0 %1378
        %v1381 = vlaneseq
        %v1382 = vshrl.u32 %v1381, 7
        %v1383 = vsub.s32 0, %v1382
        %v1384 = vrot.slane %v1339, %v1383
        %v1385 = vmul.f32 %v1344, %v1384
        %v1386 = vmul.f32 %v1349, %v1384
        %v1387 = vmul.f32 %v1354, %v1384
        %v1388 = vmul.f32 %v1359, %v1384
        %v1389 = vmul.f32 %v1364, %v1384
        %v1390 = vmul.f32 %v1369, %v1384
        %v1391 = vmul.f32 %v1374, %v1384
        %v1392 = vmul.f32 %v1379, %v1384
        %1394 = vset.pattern.permute.xlu0 1
        %1395 = vperm.xlu0 %1394, %v1201
        %v1396 = vpop.permute.xlu0 %1395
        %1399 = vset.pattern.permute.xlu0 1
        %1400 = vperm.xlu0 %1399, %v1202
        %v1401 = vpop.permute.xlu0 %1400
        %1404 = vset.pattern.permute.xlu0 1
        %1405 = vperm.xlu0 %1404, %v1203
        %v1406 = vpop.permute.xlu0 %1405
        %1409 = vset.pattern.permute.xlu0 1
        %1410 = vperm.xlu0 %1409, %v1204
        %v1411 = vpop.permute.xlu0 %1410
        %1414 = vset.pattern.permute.xlu0 1
        %1415 = vperm.xlu0 %1414, %v1205
        %v1416 = vpop.permute.xlu0 %1415
        %1419 = vset.pattern.permute.xlu0 1
        %1420 = vperm.xlu0 %1419, %v1206
        %v1421 = vpop.permute.xlu0 %1420
        %1424 = vset.pattern.permute.xlu0 1
        %1425 = vperm.xlu0 %1424, %v1207
        %v1426 = vpop.permute.xlu0 %1425
        %1429 = vset.pattern.permute.xlu0 1
        %1430 = vperm.xlu0 %1429, %v1208
        %v1431 = vpop.permute.xlu0 %1430
        %v1433 = vlaneseq
        %v1434 = vshrl.u32 %v1433, 7
        %v1435 = vsub.s32 1, %v1434
        %v1436 = vrot.slane %v1339, %v1435
        %v1437 = vmul.f32 %v1396, %v1436
        %v1438 = vmul.f32 %v1401, %v1436
        %v1439 = vmul.f32 %v1406, %v1436
        %v1440 = vmul.f32 %v1411, %v1436
        %v1441 = vmul.f32 %v1416, %v1436
        %v1442 = vmul.f32 %v1421, %v1436
        %v1443 = vmul.f32 %v1426, %v1436
        %v1444 = vmul.f32 %v1431, %v1436
        %v1445 = vadd.f32 %v1385, %v1437
        %v1446 = vadd.f32 %v1386, %v1438
        %v1447 = vadd.f32 %v1387, %v1439
        %v1448 = vadd.f32 %v1388, %v1440
        %v1449 = vadd.f32 %v1389, %v1441
        %v1450 = vadd.f32 %v1390, %v1442
        %v1451 = vadd.f32 %v1391, %v1443
        %v1452 = vadd.f32 %v1392, %v1444
        %1454 = vset.pattern.permute.xlu0 2
        %1455 = vperm.xlu0 %1454, %v1233
        %v1456 = vpop.permute.xlu0 %1455
        %1459 = vset.pattern.permute.xlu0 2
        %1460 = vperm.xlu0 %1459, %v1234
        %v1461 = vpop.permute.xlu0 %1460
        %1464 = vset.pattern.permute.xlu0 2
        %1465 = vperm.xlu0 %1464, %v1235
        %v1466 = vpop.permute.xlu0 %1465
        %1469 = vset.pattern.permute.xlu0 2
        %1470 = vperm.xlu0 %1469, %v1236
        %v1471 = vpop.permute.xlu0 %1470
        %1474 = vset.pattern.permute.xlu0 2
        %1475 = vperm.xlu0 %1474, %v1237
        %v1476 = vpop.permute.xlu0 %1475
        %1479 = vset.pattern.permute.xlu0 2
        %1480 = vperm.xlu0 %1479, %v1238
        %v1481 = vpop.permute.xlu0 %1480
        %1484 = vset.pattern.permute.xlu0 2
        %1485 = vperm.xlu0 %1484, %v1239
        %v1486 = vpop.permute.xlu0 %1485
        %1489 = vset.pattern.permute.xlu0 2
        %1490 = vperm.xlu0 %1489, %v1240
        %v1491 = vpop.permute.xlu0 %1490
        %v1493 = vlaneseq
        %v1494 = vshrl.u32 %v1493, 7
        %v1495 = vsub.s32 2, %v1494
        %v1496 = vrot.slane %v1339, %v1495
        %v1497 = vmul.f32 %v1456, %v1496
        %v1498 = vmul.f32 %v1461, %v1496
        %v1499 = vmul.f32 %v1466, %v1496
        %v1500 = vmul.f32 %v1471, %v1496
        %v1501 = vmul.f32 %v1476, %v1496
        %v1502 = vmul.f32 %v1481, %v1496
        %v1503 = vmul.f32 %v1486, %v1496
        %v1504 = vmul.f32 %v1491, %v1496
        %v1505 = vadd.f32 %v1445, %v1497
        %v1506 = vadd.f32 %v1446, %v1498
        %v1507 = vadd.f32 %v1447, %v1499
        %v1508 = vadd.f32 %v1448, %v1500
        %v1509 = vadd.f32 %v1449, %v1501
        %v1510 = vadd.f32 %v1450, %v1502
        %v1511 = vadd.f32 %v1451, %v1503
        %v1512 = vadd.f32 %v1452, %v1504
        %1514 = vset.pattern.permute.xlu0 0
        %1515 = vperm.xlu0 %1514, %v1153
        %v1516 = vpop.permute.xlu0 %1515
        %1519 = vset.pattern.permute.xlu0 0
        %1520 = vperm.xlu0 %1519, %v1154
        %v1521 = vpop.permute.xlu0 %1520
        %1524 = vset.pattern.permute.xlu0 0
        %1525 = vperm.xlu0 %1524, %v1155
        %v1526 = vpop.permute.xlu0 %1525
        %1529 = vset.pattern.permute.xlu0 0
        %1530 = vperm.xlu0 %1529, %v1156
        %v1531 = vpop.permute.xlu0 %1530
        %1534 = vset.pattern.permute.xlu0 0
        %1535 = vperm.xlu0 %1534, %v1157
        %v1536 = vpop.permute.xlu0 %1535
        %1539 = vset.pattern.permute.xlu0 0
        %1540 = vperm.xlu0 %1539, %v1158
        %v1541 = vpop.permute.xlu0 %1540
        %1544 = vset.pattern.permute.xlu0 0
        %1545 = vperm.xlu0 %1544, %v1159
        %v1546 = vpop.permute.xlu0 %1545
        %1549 = vset.pattern.permute.xlu0 0
        %1550 = vperm.xlu0 %1549, %v1160
        %v1551 = vpop.permute.xlu0 %1550
        %v1553 = vlaneseq
        %v1554 = vshrl.u32 %v1553, 7
        %v1555 = vsub.s32 3, %v1554
        %v1556 = vrot.slane %v1339, %v1555
        %v1557 = vmul.f32 %v1516, %v1556
        %v1558 = vmul.f32 %v1521, %v1556
        %v1559 = vmul.f32 %v1526, %v1556
        %v1560 = vmul.f32 %v1531, %v1556
        %v1561 = vmul.f32 %v1536, %v1556
        %v1562 = vmul.f32 %v1541, %v1556
        %v1563 = vmul.f32 %v1546, %v1556
        %v1564 = vmul.f32 %v1551, %v1556
        %v1565 = vadd.f32 %v1505, %v1557
        %v1566 = vadd.f32 %v1506, %v1558
        %v1567 = vadd.f32 %v1507, %v1559
        %v1568 = vadd.f32 %v1508, %v1560
        %v1569 = vadd.f32 %v1509, %v1561
        %v1570 = vadd.f32 %v1510, %v1562
        %v1571 = vadd.f32 %v1511, %v1563
        %v1572 = vadd.f32 %v1512, %v1564
        %v1573 = vlaneseq
        %v1574 = vshrl.u32 %v1573, 7
        %v1575 = vsub.s32 0, %v1574
        %v1576 = vrot.slane %v1340, %v1575
        %v1577 = vadd.f32 %v1565, %v1576
        %v1578 = vadd.f32 %v1566, %v1576
        %v1579 = vadd.f32 %v1567, %v1576
        %v1580 = vadd.f32 %v1568, %v1576
        %v1581 = vadd.f32 %v1569, %v1576
        %v1582 = vadd.f32 %v1570, %v1576
        %v1583 = vadd.f32 %v1571, %v1576
        %v1584 = vadd.f32 %v1572, %v1576
        %v1586 = vcombine.high %v1335, %v1335
        %v1588 = vunpack.c.l.s4 1966171168
        %v1589 = vunpack.c.0.s8 %v1588
        %v1590 = vlaneseq
        %v1591 = vshrl.u32 %v1590, 7
        %v1592 = vsub.s32 %v1589, %v1591
        %v1593 = vrot.slane %v1335, %v1592
        %v1595 = vunpack.c.l.s4 1966171168
        %v1596 = vunpack.c.0.s8 %v1595
        %v1597 = vlaneseq
        %v1598 = vshrl.u32 %v1597, 7
        %v1599 = vsub.s32 %v1596, %v1598
        %v1600 = vrot.slane %v1586, %v1599
        %v1601 = vcombine.high %v1593, %v1593
        %v1602 = vcombine.high %v1600, %v1600
        %v1604 = vunpack.c.l.s4 1966171168
        %v1605 = vunpack.c.0.s8 %v1604
        %v1606 = vlaneseq
        %v1607 = vshrl.u32 %v1606, 7
        %v1608 = vsub.s32 %v1605, %v1607
        %v1609 = vrot.slane %v1593, %v1608
        %v1611 = vunpack.c.l.s4 1966171168
        %v1612 = vunpack.c.0.s8 %v1611
        %v1613 = vlaneseq
        %v1614 = vshrl.u32 %v1613, 7
        %v1615 = vsub.s32 %v1612, %v1614
        %v1616 = vrot.slane %v1600, %v1615
        %v1618 = vunpack.c.l.s4 1966171168
        %v1619 = vunpack.c.0.s8 %v1618
        %v1620 = vlaneseq
        %v1621 = vshrl.u32 %v1620, 7
        %v1622 = vsub.s32 %v1619, %v1621
        %v1623 = vrot.slane %v1601, %v1622
        %v1625 = vunpack.c.l.s4 1966171168
        %v1626 = vunpack.c.0.s8 %v1625
        %v1627 = vlaneseq
        %v1628 = vshrl.u32 %v1627, 7
        %v1629 = vsub.s32 %v1626, %v1628
        %v1630 = vrot.slane %v1602, %v1629
        %v1631 = vcombine.high %v1609, %v1609
        %v1632 = vcombine.high %v1616, %v1616
        %v1633 = vcombine.high %v1623, %v1623
        %v1634 = vcombine.high %v1630, %v1630
        %v1635 = vlaneseq
        %v1636 = vshrl.u32 %v1635, 7
        %v1637 = vsub.s32 0, %v1636
        %v1638 = vrot.slane %v1609, %v1637
        %v1639 = vlaneseq
        %v1640 = vshrl.u32 %v1639, 7
        %v1641 = vsub.s32 0, %v1640
        %v1642 = vrot.slane %v1623, %v1641
        %v1643 = vlaneseq
        %v1644 = vshrl.u32 %v1643, 7
        %v1645 = vsub.s32 0, %v1644
        %v1646 = vrot.slane %v1631, %v1645
        %v1647 = vlaneseq
        %v1648 = vshrl.u32 %v1647, 7
        %v1649 = vsub.s32 0, %v1648
        %v1650 = vrot.slane %v1633, %v1649
        %v1651 = vlaneseq
        %v1652 = vshrl.u32 %v1651, 7
        %v1653 = vsub.s32 0, %v1652
        %v1654 = vrot.slane %v1616, %v1653
        %v1655 = vlaneseq
        %v1656 = vshrl.u32 %v1655, 7
        %v1657 = vsub.s32 0, %v1656
        %v1658 = vrot.slane %v1630, %v1657
        %v1659 = vlaneseq
        %v1660 = vshrl.u32 %v1659, 7
        %v1661 = vsub.s32 0, %v1660
        %v1662 = vrot.slane %v1632, %v1661
        %v1663 = vlaneseq
        %v1664 = vshrl.u32 %v1663, 7
        %v1665 = vsub.s32 0, %v1664
        %v1666 = vrot.slane %v1634, %v1665
        %v1675 = vadd.f32 %v1638, %v1337
        %v1676 = vadd.f32 %v1642, %v1337
        %v1677 = vadd.f32 %v1646, %v1337
        %v1678 = vadd.f32 %v1650, %v1337
        %v1679 = vadd.f32 %v1654, %v1337
        %v1680 = vadd.f32 %v1658, %v1337
        %v1681 = vadd.f32 %v1662, %v1337
        %v1682 = vadd.f32 %v1666, %v1337
        %v1683 = vadd.f32 %v1675, %v1577
        %v1684 = vadd.f32 %v1676, %v1578
        %v1685 = vadd.f32 %v1677, %v1579
        %v1686 = vadd.f32 %v1678, %v1580
        %v1687 = vadd.f32 %v1679, %v1581
        %v1688 = vadd.f32 %v1680, %v1582
        %v1689 = vadd.f32 %v1681, %v1583
        %v1690 = vadd.f32 %v1682, %v1584
        %vm1691 = vcmask 523264
        %v1692 = vsel %vm1691, %v1683, 0.0
        %1693 = vadd.xlane.f32.xlu0 %v1692
        %v1694 = vpop.xlane.xlu0 %1693
        %v1695 = vsel %vm1691, %v1684, 0.0
        %1696 = vadd.xlane.f32.xlu0 %v1695
        %v1697 = vpop.xlane.xlu0 %1696
        %v1698 = vsel %vm1691, %v1685, 0.0
        %1699 = vadd.xlane.f32.xlu0 %v1698
        %v1700 = vpop.xlane.xlu0 %1699
        %v1701 = vsel %vm1691, %v1686, 0.0
        %1702 = vadd.xlane.f32.xlu0 %v1701
        %v1703 = vpop.xlane.xlu0 %1702
        %v1704 = vsel %vm1691, %v1687, 0.0
        %1705 = vadd.xlane.f32.xlu0 %v1704
        %v1706 = vpop.xlane.xlu0 %1705
        %v1707 = vsel %vm1691, %v1688, 0.0
        %1708 = vadd.xlane.f32.xlu0 %v1707
        %v1709 = vpop.xlane.xlu0 %1708
        %v1710 = vsel %vm1691, %v1689, 0.0
        %1711 = vadd.xlane.f32.xlu0 %v1710
        %v1712 = vpop.xlane.xlu0 %1711
        %v1713 = vsel %vm1691, %v1690, 0.0
        %1714 = vadd.xlane.f32.xlu0 %v1713
        %v1715 = vpop.xlane.xlu0 %1714
        %v1716 = vrcp.pop 64.0
        %v1717 = vmul.f32 %v1694, %v1716
        %v1718 = vmul.f32 %v1697, %v1716
        %v1719 = vmul.f32 %v1700, %v1716
        %v1720 = vmul.f32 %v1703, %v1716
        %v1721 = vmul.f32 %v1706, %v1716
        %v1722 = vmul.f32 %v1709, %v1716
        %v1723 = vmul.f32 %v1712, %v1716
        %v1724 = vmul.f32 %v1715, %v1716
        %v1725 = vsub.f32 %v1683, %v1717
        %v1726 = vsub.f32 %v1684, %v1718
        %v1727 = vsub.f32 %v1685, %v1719
        %v1728 = vsub.f32 %v1686, %v1720
        %v1729 = vsub.f32 %v1687, %v1721
        %v1730 = vsub.f32 %v1688, %v1722
        %v1731 = vsub.f32 %v1689, %v1723
        %v1732 = vsub.f32 %v1690, %v1724
        %v1733 = vmul.f32 %v1725, %v1725
        %v1734 = vmul.f32 %v1726, %v1726
        %v1735 = vmul.f32 %v1727, %v1727
        %v1736 = vmul.f32 %v1728, %v1728
        %v1737 = vmul.f32 %v1729, %v1729
        %v1738 = vmul.f32 %v1730, %v1730
        %v1739 = vmul.f32 %v1731, %v1731
        %v1740 = vmul.f32 %v1732, %v1732
        %v1741 = vsel %vm1691, %v1733, 0.0
        %1742 = vadd.xlane.f32.xlu0 %v1741
        %v1743 = vpop.xlane.xlu0 %1742
        %v1744 = vsel %vm1691, %v1734, 0.0
        %1745 = vadd.xlane.f32.xlu0 %v1744
        %v1746 = vpop.xlane.xlu0 %1745
        %v1747 = vsel %vm1691, %v1735, 0.0
        %1748 = vadd.xlane.f32.xlu0 %v1747
        %v1749 = vpop.xlane.xlu0 %1748
        %v1750 = vsel %vm1691, %v1736, 0.0
        %1751 = vadd.xlane.f32.xlu0 %v1750
        %v1752 = vpop.xlane.xlu0 %1751
        %v1753 = vsel %vm1691, %v1737, 0.0
        %1754 = vadd.xlane.f32.xlu0 %v1753
        %v1755 = vpop.xlane.xlu0 %1754
        %v1756 = vsel %vm1691, %v1738, 0.0
        %1757 = vadd.xlane.f32.xlu0 %v1756
        %v1758 = vpop.xlane.xlu0 %1757
        %v1759 = vsel %vm1691, %v1739, 0.0
        %1760 = vadd.xlane.f32.xlu0 %v1759
        %v1761 = vpop.xlane.xlu0 %1760
        %v1762 = vsel %vm1691, %v1740, 0.0
        %1763 = vadd.xlane.f32.xlu0 %v1762
        %v1764 = vpop.xlane.xlu0 %1763
        %v1765 = vmul.f32 %v1743, %v1716
        %v1766 = vmul.f32 %v1746, %v1716
        %v1767 = vmul.f32 %v1749, %v1716
        %v1768 = vmul.f32 %v1752, %v1716
        %v1769 = vmul.f32 %v1755, %v1716
        %v1770 = vmul.f32 %v1758, %v1716
        %v1771 = vmul.f32 %v1761, %v1716
        %v1772 = vmul.f32 %v1764, %v1716
        %v1773 = vadd.f32 %v1765, 1e-05
        %v1774 = vadd.f32 %v1766, 1e-05
        %v1775 = vadd.f32 %v1767, 1e-05
        %v1776 = vadd.f32 %v1768, 1e-05
        %v1777 = vadd.f32 %v1769, 1e-05
        %v1778 = vadd.f32 %v1770, 1e-05
        %v1779 = vadd.f32 %v1771, 1e-05
        %v1780 = vadd.f32 %v1772, 1e-05
        %v1781 = vrsqrt.pop %v1773
        %v1782 = vrsqrt.pop %v1774
        %v1783 = vrsqrt.pop %v1775
        %v1784 = vrsqrt.pop %v1776
        %v1785 = vrsqrt.pop %v1777
        %v1786 = vrsqrt.pop %v1778
        %v1787 = vrsqrt.pop %v1779
        %v1788 = vrsqrt.pop %v1780
        %v1789 = vmul.f32 %v1725, %v1781
        %v1790 = vmul.f32 %v1726, %v1782
        %v1791 = vmul.f32 %v1727, %v1783
        %v1792 = vmul.f32 %v1728, %v1784
        %v1793 = vmul.f32 %v1729, %v1785
        %v1794 = vmul.f32 %v1730, %v1786
        %v1795 = vmul.f32 %v1731, %v1787
        %v1796 = vmul.f32 %v1732, %v1788
        %v1797 = vlaneseq
        %v1798 = vshrl.u32 %v1797, 7
        %v1799 = vsub.s32 1, %v1798
        %v1800 = vrot.slane %v1340, %v1799
        %v1801 = vmul.f32 %v1789, %v1800
        %v1802 = vmul.f32 %v1790, %v1800
        %v1803 = vmul.f32 %v1791, %v1800
        %v1804 = vmul.f32 %v1792, %v1800
        %v1805 = vmul.f32 %v1793, %v1800
        %v1806 = vmul.f32 %v1794, %v1800
        %v1807 = vmul.f32 %v1795, %v1800
        %v1808 = vmul.f32 %v1796, %v1800
        %v1809 = vlaneseq
        %v1810 = vshrl.u32 %v1809, 7
        %v1811 = vsub.s32 2, %v1810
        %v1812 = vrot.slane %v1340, %v1811
        %v1813 = vadd.f32 %v1801, %v1812
        %v1814 = vadd.f32 %v1802, %v1812
        %v1815 = vadd.f32 %v1803, %v1812
        %v1816 = vadd.f32 %v1804, %v1812
        %v1817 = vadd.f32 %v1805, %v1812
        %v1818 = vadd.f32 %v1806, %v1812
        %v1819 = vadd.f32 %v1807, %v1812
        %v1820 = vadd.f32 %v1808, %v1812
        %v1821 = vsub.f32 0.0, %v1813
        %v1822 = vsub.f32 0.0, %v1814
        %v1823 = vsub.f32 0.0, %v1815
        %v1824 = vsub.f32 0.0, %v1816
        %v1825 = vsub.f32 0.0, %v1817
        %v1826 = vsub.f32 0.0, %v1818
        %v1827 = vsub.f32 0.0, %v1819
        %v1828 = vsub.f32 0.0, %v1820
        %v1829 = vmul.f32 %v1821, 1.442695
        %v1830 = vpow.pop %v1829
        %v1831 = vmul.f32 %v1822, 1.442695
        %v1832 = vpow.pop %v1831
        %v1833 = vmul.f32 %v1823, 1.442695
        %v1834 = vpow.pop %v1833
        %v1835 = vmul.f32 %v1824, 1.442695
        %v1836 = vpow.pop %v1835
        %v1837 = vmul.f32 %v1825, 1.442695
        %v1838 = vpow.pop %v1837
        %v1839 = vmul.f32 %v1826, 1.442695
        %v1840 = vpow.pop %v1839
        %v1841 = vmul.f32 %v1827, 1.442695
        %v1842 = vpow.pop %v1841
        %v1843 = vmul.f32 %v1828, 1.442695
        %v1844 = vpow.pop %v1843
        %v1845 = vadd.f32 %v1830, 1.0
        %v1846 = vadd.f32 %v1832, 1.0
        %v1847 = vadd.f32 %v1834, 1.0
        %v1848 = vadd.f32 %v1836, 1.0
        %v1849 = vadd.f32 %v1838, 1.0
        %v1850 = vadd.f32 %v1840, 1.0
        %v1851 = vadd.f32 %v1842, 1.0
        %v1852 = vadd.f32 %v1844, 1.0
        %v1853 = vrcp.pop %v1845
        %v1854 = vrcp.pop %v1846
        %v1855 = vrcp.pop %v1847
        %v1856 = vrcp.pop %v1848
        %v1857 = vrcp.pop %v1849
        %v1858 = vrcp.pop %v1850
        %v1859 = vrcp.pop %v1851
        %v1860 = vrcp.pop %v1852
        %v1861 = vmul.f32 %v1813, %v1853
        %v1862 = vmul.f32 %v1814, %v1854
        %v1863 = vmul.f32 %v1815, %v1855
        %v1864 = vmul.f32 %v1816, %v1856
        %v1865 = vmul.f32 %v1817, %v1857
        %v1866 = vmul.f32 %v1818, %v1858
        %v1867 = vmul.f32 %v1819, %v1859
        %v1868 = vmul.f32 %v1820, %v1860
        %v1869 = vpack.c.bf16 %v1862, %v1861
        %v1870 = vpack.c.bf16 %v1864, %v1863
        %v1871 = vpack.c.bf16 %v1866, %v1865
        %v1872 = vpack.c.bf16 %v1868, %v1867
        %v1873 = vld [vmem:[#allocation15] sm:$0xf]
        %v1874 = vld [vmem:[#allocation15 + $0x4] sm:$0xf]
        %v1875 = vld [vmem:[#allocation15 + $0x8] sm:$0xf]
        %v1876 = vld [vmem:[#allocation15 + $0xc] sm:$0xf]
        %v1877 = vld [vmem:[#allocation15 + $0x10] sm:$0xf]
        %v1878 = vld [vmem:[#allocation15 + $0x14] sm:$0xf]
        %v1879 = vld [vmem:[#allocation15 + $0x18] sm:$0xf]
        %v1880 = vld [vmem:[#allocation15 + $0x1c] sm:$0xf]
        %v1881 = vld [vmem:[#allocation17] sm:$0x1]
        %v1883 = vlaneseq
        %v1884 = vshrl.u32 %v1883, 7
        %v1885 = vsub.s32 0, %v1884
        %v1886 = vrot.slane %v1881, %v1885
        %v1896 = vunpack.c.l.b16 %v1873
        %v1897 = vunpack.c.l.b16 %v1874
        %v1898 = vunpack.c.l.b16 %v1875
        %v1899 = vunpack.c.l.b16 %v1876
        %v1900 = vunpack.c.l.b16 %v1877
        %v1901 = vunpack.c.l.b16 %v1878
        %v1902 = vunpack.c.l.b16 %v1879
        %v1903 = vunpack.c.l.b16 %v1880
        %v1904 = vpack.c.b16 %v1897, %v1896
        %v1905 = vpack.c.b16 %v1899, %v1898
        %v1906 = vpack.c.b16 %v1901, %v1900
        %v1907 = vpack.c.b16 %v1903, %v1902
        %v1913 = vsel %vm1691, %v1869, 0
        %v1916 = vsel %vm1691, %v1870, 0
        %v1919 = vsel %vm1691, %v1871, 0
        %v1922 = vsel %vm1691, %v1872, 0
        %1924 = vmatprep.subr.bf16.mxu0 0
        %1925 = vmatpush1.bf16.msra.mxu0 %v1904
        %1926 = vmatprep.subr.bf16.mxu0 0
        %1927 = vmatpush1.bf16.msra.mxu0 %v1905
        %1928 = vmatprep.subr.bf16.mxu0 0
        %1929 = vmatpush1.bf16.msra.mxu0 %v1906
        %1930 = vmatprep.subr.bf16.mxu0 0
        %1931 = vmatpush1.bf16.msra.mxu0 %v1907
        %1932 = vmatprep.subr.bf16.mxu0 0
        %1933 = vmatpush1.bf16.msra.mxu0 0
        %1934 = vmatprep.subr.bf16.mxu0 0
        %1935 = vmatpush1.bf16.msra.mxu0 0
        %1936 = vmatprep.subr.bf16.mxu0 0
        %1937 = vmatpush1.bf16.msra.mxu0 0
        %1938 = vmatprep.subr.bf16.mxu0 0
        %1939 = vmatpush1.bf16.msra.mxu0 0
        %1940 = vmatprep.subr.bf16.mxu0 0
        %1941 = vmatpush1.bf16.msra.mxu0 0
        %1942 = vmatprep.subr.bf16.mxu0 0
        %1943 = vmatpush1.bf16.msra.mxu0 0
        %1944 = vmatprep.subr.bf16.mxu0 0
        %1945 = vmatpush1.bf16.msra.mxu0 0
        %1946 = vmatprep.subr.bf16.mxu0 0
        %1947 = vmatpush1.bf16.msra.mxu0 0
        %1948 = vmatprep.subr.bf16.mxu0 0
        %1949 = vmatpush1.bf16.msra.mxu0 0
        %1950 = vmatprep.subr.bf16.mxu0 0
        %1951 = vmatpush1.bf16.msra.mxu0 0
        %1952 = vmatprep.subr.bf16.mxu0 0
        %1953 = vmatpush1.bf16.msra.mxu0 0
        %1954 = vmatprep.subr.bf16.mxu0 0
        %1955 = vmatpush1.bf16.msra.mxu0 0
        %1956 = vmatprep.mubr.bf16.mxu0 0
        %1957 = vmatmul.mubr.bf16.gmra.mrb[0].mxu0 %v1913
        %v1958 = vpop.f32.mrb[0].mxu0
        %v1959 = vadd.f32 %v1886, %v1958
        %v1960 = vpop.f32.mrb[0].mxu0
        %v1961 = vpop.f32.mrb[0].mxu0
        %v1962 = vadd.f32 %v1886, %v1961
        %v1963 = vpop.f32.mrb[0].mxu0
        %1964 = vmatprep.mubr.bf16.mxu0 0
        %1965 = vmatmul.mubr.bf16.gmra.mrb[0].mxu0 %v1916
        %v1966 = vpop.f32.mrb[0].mxu0
        %v1967 = vadd.f32 %v1886, %v1966
        %v1968 = vpop.f32.mrb[0].mxu0
        %v1969 = vpop.f32.mrb[0].mxu0
        %v1970 = vadd.f32 %v1886, %v1969
        %v1971 = vpop.f32.mrb[0].mxu0
        %1972 = vmatprep.mubr.bf16.mxu0 0
        %1973 = vmatmul.mubr.bf16.gmra.mrb[0].mxu0 %v1919
        %v1974 = vpop.f32.mrb[0].mxu0
        %v1975 = vadd.f32 %v1886, %v1974
        %v1976 = vpop.f32.mrb[0].mxu0
        %v1977 = vpop.f32.mrb[0].mxu0
        %v1978 = vadd.f32 %v1886, %v1977
        %v1979 = vpop.f32.mrb[0].mxu0
        %1980 = vmatprep.mubr.bf16.mxu0 0
        %1981 = vmatmul.mubr.bf16.gmra.mrb[0].mxu0 %v1922
        %v1982 = vpop.f32.mrb[0].mxu0
        %v1983 = vadd.f32 %v1886, %v1982
        %v1984 = vpop.f32.mrb[0].mxu0
        %v1985 = vpop.f32.mrb[0].mxu0
        %v1986 = vadd.f32 %v1886, %v1985
        %v1987 = vpop.f32.mrb[0].mxu0
        %1988 = vdwg.mxu0
        %1990 = vset.pattern.permute.xlu0 3
        %1991 = vperm.xlu0 %1990, %v1327
        %v1992 = vpop.permute.xlu0 %1991
        %1995 = vset.pattern.permute.xlu0 3
        %1996 = vperm.xlu0 %1995, %v1328
        %v1997 = vpop.permute.xlu0 %1996
        %2000 = vset.pattern.permute.xlu0 3
        %2001 = vperm.xlu0 %2000, %v1329
        %v2002 = vpop.permute.xlu0 %2001
        %2005 = vset.pattern.permute.xlu0 3
        %2006 = vperm.xlu0 %2005, %v1330
        %v2007 = vpop.permute.xlu0 %2006
        %2010 = vset.pattern.permute.xlu0 3
        %2011 = vperm.xlu0 %2010, %v1331
        %v2012 = vpop.permute.xlu0 %2011
        %2015 = vset.pattern.permute.xlu0 3
        %2016 = vperm.xlu0 %2015, %v1332
        %v2017 = vpop.permute.xlu0 %2016
        %2020 = vset.pattern.permute.xlu0 3
        %2021 = vperm.xlu0 %2020, %v1333
        %v2022 = vpop.permute.xlu0 %2021
        %2025 = vset.pattern.permute.xlu0 3
        %2026 = vperm.xlu0 %2025, %v1334
        %v2027 = vpop.permute.xlu0 %2026
        %v2029 = vmul.f32 %v1959, %v1992
        %v2030 = vmul.f32 %v1962, %v1997
        %v2031 = vmul.f32 %v1967, %v2002
        %v2032 = vmul.f32 %v1970, %v2007
        %v2033 = vmul.f32 %v1975, %v2012
        %v2034 = vmul.f32 %v1978, %v2017
        %v2035 = vmul.f32 %v1983, %v2022
        %v2036 = vmul.f32 %v1986, %v2027
        %v2037 = vld [vmem:[#allocation2] sm:$0xff]
        %vm2038 = vcmask 261120
        %v2039 = vsel %vm2038, %v2029, 0.0
        %v2040 = vrot.slane %v2039, 4
        %v2041 = vadd.f32 %v2039, %v2040
        %v2042 = vrot.slane %v2041, 2
        %v2043 = vadd.f32 %v2041, %v2042
        %v2044 = vrot.slane %v2043, 1
        %v2045 = vadd.f32 %v2043, %v2044
        %v2046 = vsel %vm2038, %v2030, 0.0
        %v2047 = vrot.slane %v2046, 4
        %v2048 = vadd.f32 %v2046, %v2047
        %v2049 = vrot.slane %v2048, 2
        %v2050 = vadd.f32 %v2048, %v2049
        %v2051 = vrot.slane %v2050, 1
        %v2052 = vadd.f32 %v2050, %v2051
        %v2053 = vsel %vm2038, %v2031, 0.0
        %v2054 = vrot.slane %v2053, 4
        %v2055 = vadd.f32 %v2053, %v2054
        %v2056 = vrot.slane %v2055, 2
        %v2057 = vadd.f32 %v2055, %v2056
        %v2058 = vrot.slane %v2057, 1
        %v2059 = vadd.f32 %v2057, %v2058
        %v2060 = vsel %vm2038, %v2032, 0.0
        %v2061 = vrot.slane %v2060, 4
        %v2062 = vadd.f32 %v2060, %v2061
        %v2063 = vrot.slane %v2062, 2
        %v2064 = vadd.f32 %v2062, %v2063
        %v2065 = vrot.slane %v2064, 1
        %v2066 = vadd.f32 %v2064, %v2065
        %v2067 = vsel %vm2038, %v2033, 0.0
        %v2068 = vrot.slane %v2067, 4
        %v2069 = vadd.f32 %v2067, %v2068
        %v2070 = vrot.slane %v2069, 2
        %v2071 = vadd.f32 %v2069, %v2070
        %v2072 = vrot.slane %v2071, 1
        %v2073 = vadd.f32 %v2071, %v2072
        %v2074 = vsel %vm2038, %v2034, 0.0
        %v2075 = vrot.slane %v2074, 4
        %v2076 = vadd.f32 %v2074, %v2075
        %v2077 = vrot.slane %v2076, 2
        %v2078 = vadd.f32 %v2076, %v2077
        %v2079 = vrot.slane %v2078, 1
        %v2080 = vadd.f32 %v2078, %v2079
        %v2081 = vsel %vm2038, %v2035, 0.0
        %v2082 = vrot.slane %v2081, 4
        %v2083 = vadd.f32 %v2081, %v2082
        %v2084 = vrot.slane %v2083, 2
        %v2085 = vadd.f32 %v2083, %v2084
        %v2086 = vrot.slane %v2085, 1
        %v2087 = vadd.f32 %v2085, %v2086
        %v2088 = vsel %vm2038, %v2036, 0.0
        %v2089 = vrot.slane %v2088, 4
        %v2090 = vadd.f32 %v2088, %v2089
        %v2091 = vrot.slane %v2090, 2
        %v2092 = vadd.f32 %v2090, %v2091
        %v2093 = vrot.slane %v2092, 1
        %v2094 = vadd.f32 %v2092, %v2093
        %vm2103 = vcmask 1041409
        %v2104 = vsel %vm2103, %v2052, %v2045
        %vm2105 = vcmask 1042434
        %v2106 = vsel %vm2105, %v2059, %v2104
        %vm2107 = vcmask 1043459
        %v2108 = vsel %vm2107, %v2066, %v2106
        %vm2109 = vcmask 1044484
        %v2110 = vsel %vm2109, %v2073, %v2108
        %vm2111 = vcmask 1045509
        %v2112 = vsel %vm2111, %v2080, %v2110
        %vm2113 = vcmask 1046534
        %v2114 = vsel %vm2113, %v2087, %v2112
        %vm2115 = vcmask 1047559
        %v2116 = vsel %vm2115, %v2094, %v2114
        %v2118 = vadd.f32 %v2037, %v2116
        %2119 = vst.msk [vmem:[#allocation2] sm:$0xff] %vm2038, %v2118
        %s2120 = scalar_lea.vmem [#allocation12], 4
        %v2121 = vld [vmem:[%s2120] sm:$0xf]
        %s2122 = scalar_lea.vmem [#allocation14], 4
        %v2123 = vld [vmem:[%s2122] sm:$0x7]
        %v2124 = vlaneseq
        %v2125 = vshrl.u32 %v2124, 7
        %v2126 = vsub.s32 0, %v2125
        %v2127 = vrot.slane %v2121, %v2126
        %v2128 = vmul.f32 %v1344, %v2127
        %v2129 = vmul.f32 %v1349, %v2127
        %v2130 = vmul.f32 %v1354, %v2127
        %v2131 = vmul.f32 %v1359, %v2127
        %v2132 = vmul.f32 %v1364, %v2127
        %v2133 = vmul.f32 %v1369, %v2127
        %v2134 = vmul.f32 %v1374, %v2127
        %v2135 = vmul.f32 %v1379, %v2127
        %v2136 = vlaneseq
        %v2137 = vshrl.u32 %v2136, 7
        %v2138 = vsub.s32 1, %v2137
        %v2139 = vrot.slane %v2121, %v2138
        %v2140 = vmul.f32 %v1396, %v2139
        %v2141 = vmul.f32 %v1401, %v2139
        %v2142 = vmul.f32 %v1406, %v2139
        %v2143 = vmul.f32 %v1411, %v2139
        %v2144 = vmul.f32 %v1416, %v2139
        %v2145 = vmul.f32 %v1421, %v2139
        %v2146 = vmul.f32 %v1426, %v2139
        %v2147 = vmul.f32 %v1431, %v2139
        %v2148 = vadd.f32 %v2128, %v2140
        %v2149 = vadd.f32 %v2129, %v2141
        %v2150 = vadd.f32 %v2130, %v2142
        %v2151 = vadd.f32 %v2131, %v2143
        %v2152 = vadd.f32 %v2132, %v2144
        %v2153 = vadd.f32 %v2133, %v2145
        %v2154 = vadd.f32 %v2134, %v2146
        %v2155 = vadd.f32 %v2135, %v2147
        %v2156 = vlaneseq
        %v2157 = vshrl.u32 %v2156, 7
        %v2158 = vsub.s32 2, %v2157
        %v2159 = vrot.slane %v2121, %v2158
        %v2160 = vmul.f32 %v1456, %v2159
        %v2161 = vmul.f32 %v1461, %v2159
        %v2162 = vmul.f32 %v1466, %v2159
        %v2163 = vmul.f32 %v1471, %v2159
        %v2164 = vmul.f32 %v1476, %v2159
        %v2165 = vmul.f32 %v1481, %v2159
        %v2166 = vmul.f32 %v1486, %v2159
        %v2167 = vmul.f32 %v1491, %v2159
        %v2168 = vadd.f32 %v2148, %v2160
        %v2169 = vadd.f32 %v2149, %v2161
        %v2170 = vadd.f32 %v2150, %v2162
        %v2171 = vadd.f32 %v2151, %v2163
        %v2172 = vadd.f32 %v2152, %v2164
        %v2173 = vadd.f32 %v2153, %v2165
        %v2174 = vadd.f32 %v2154, %v2166
        %v2175 = vadd.f32 %v2155, %v2167
        %v2176 = vlaneseq
        %v2177 = vshrl.u32 %v2176, 7
        %v2178 = vsub.s32 3, %v2177
        %v2179 = vrot.slane %v2121, %v2178
        %v2180 = vmul.f32 %v1516, %v2179
        %v2181 = vmul.f32 %v1521, %v2179
        %v2182 = vmul.f32 %v1526, %v2179
        %v2183 = vmul.f32 %v1531, %v2179
        %v2184 = vmul.f32 %v1536, %v2179
        %v2185 = vmul.f32 %v1541, %v2179
        %v2186 = vmul.f32 %v1546, %v2179
        %v2187 = vmul.f32 %v1551, %v2179
        %v2188 = vadd.f32 %v2168, %v2180
        %v2189 = vadd.f32 %v2169, %v2181
        %v2190 = vadd.f32 %v2170, %v2182
        %v2191 = vadd.f32 %v2171, %v2183
        %v2192 = vadd.f32 %v2172, %v2184
        %v2193 = vadd.f32 %v2173, %v2185
        %v2194 = vadd.f32 %v2174, %v2186
        %v2195 = vadd.f32 %v2175, %v2187
        %v2196 = vlaneseq
        %v2197 = vshrl.u32 %v2196, 7
        %v2198 = vsub.s32 0, %v2197
        %v2199 = vrot.slane %v2123, %v2198
        %v2200 = vadd.f32 %v2188, %v2199
        %v2201 = vadd.f32 %v2189, %v2199
        %v2202 = vadd.f32 %v2190, %v2199
        %v2203 = vadd.f32 %v2191, %v2199
        %v2204 = vadd.f32 %v2192, %v2199
        %v2205 = vadd.f32 %v2193, %v2199
        %v2206 = vadd.f32 %v2194, %v2199
        %v2207 = vadd.f32 %v2195, %v2199
        %2216 = vrot.lane.b32.xlu0 %v2200, 64
        %v2217 = vpop.permute.xlu0 %2216
        %2218 = vrot.lane.b32.xlu0 %v2201, 64
        %v2219 = vpop.permute.xlu0 %2218
        %2220 = vrot.lane.b32.xlu0 %v2202, 64
        %v2221 = vpop.permute.xlu0 %2220
        %2222 = vrot.lane.b32.xlu0 %v2203, 64
        %v2223 = vpop.permute.xlu0 %2222
        %2224 = vrot.lane.b32.xlu0 %v2204, 64
        %v2225 = vpop.permute.xlu0 %2224
        %2226 = vrot.lane.b32.xlu0 %v2205, 64
        %v2227 = vpop.permute.xlu0 %2226
        %2228 = vrot.lane.b32.xlu0 %v2206, 64
        %v2229 = vpop.permute.xlu0 %2228
        %2230 = vrot.lane.b32.xlu0 %v2207, 64
        %v2231 = vpop.permute.xlu0 %2230
        %v2240 = vadd.f32 %v1675, %v2217
        %v2241 = vadd.f32 %v1676, %v2219
        %v2242 = vadd.f32 %v1677, %v2221
        %v2243 = vadd.f32 %v1678, %v2223
        %v2244 = vadd.f32 %v1679, %v2225
        %v2245 = vadd.f32 %v1680, %v2227
        %v2246 = vadd.f32 %v1681, %v2229
        %v2247 = vadd.f32 %v1682, %v2231
        %2256 = vrot.lane.b32.xlu0 %v2240, 64
        %v2257 = vpop.permute.xlu0 %2256
        %2258 = vrot.lane.b32.xlu0 %v2241, 64
        %v2259 = vpop.permute.xlu0 %2258
        %2260 = vrot.lane.b32.xlu0 %v2242, 64
        %v2261 = vpop.permute.xlu0 %2260
        %2262 = vrot.lane.b32.xlu0 %v2243, 64
        %v2263 = vpop.permute.xlu0 %2262
        %2264 = vrot.lane.b32.xlu0 %v2244, 64
        %v2265 = vpop.permute.xlu0 %2264
        %2266 = vrot.lane.b32.xlu0 %v2245, 64
        %v2267 = vpop.permute.xlu0 %2266
        %2268 = vrot.lane.b32.xlu0 %v2246, 64
        %v2269 = vpop.permute.xlu0 %2268
        %2270 = vrot.lane.b32.xlu0 %v2247, 64
        %v2271 = vpop.permute.xlu0 %2270
        %v2280 = vsel %vm1691, %v2257, 0.0
        %2281 = vadd.xlane.f32.xlu0 %v2280
        %v2282 = vpop.xlane.xlu0 %2281
        %v2283 = vsel %vm1691, %v2259, 0.0
        %2284 = vadd.xlane.f32.xlu0 %v2283
        %v2285 = vpop.xlane.xlu0 %2284
        %v2286 = vsel %vm1691, %v2261, 0.0
        %2287 = vadd.xlane.f32.xlu0 %v2286
        %v2288 = vpop.xlane.xlu0 %2287
        %v2289 = vsel %vm1691, %v2263, 0.0
        %2290 = vadd.xlane.f32.xlu0 %v2289
        %v2291 = vpop.xlane.xlu0 %2290
        %v2292 = vsel %vm1691, %v2265, 0.0
        %2293 = vadd.xlane.f32.xlu0 %v2292
        %v2294 = vpop.xlane.xlu0 %2293
        %v2295 = vsel %vm1691, %v2267, 0.0
        %2296 = vadd.xlane.f32.xlu0 %v2295
        %v2297 = vpop.xlane.xlu0 %2296
        %v2298 = vsel %vm1691, %v2269, 0.0
        %2299 = vadd.xlane.f32.xlu0 %v2298
        %v2300 = vpop.xlane.xlu0 %2299
        %v2301 = vsel %vm1691, %v2271, 0.0
        %2302 = vadd.xlane.f32.xlu0 %v2301
        %v2303 = vpop.xlane.xlu0 %2302
        %v2304 = vmul.f32 %v2282, %v1716
        %v2305 = vmul.f32 %v2285, %v1716
        %v2306 = vmul.f32 %v2288, %v1716
        %v2307 = vmul.f32 %v2291, %v1716
        %v2308 = vmul.f32 %v2294, %v1716
        %v2309 = vmul.f32 %v2297, %v1716
        %v2310 = vmul.f32 %v2300, %v1716
        %v2311 = vmul.f32 %v2303, %v1716
        %v2312 = vsub.f32 %v2240, %v2304
        %v2313 = vsub.f32 %v2241, %v2305
        %v2314 = vsub.f32 %v2242, %v2306
        %v2315 = vsub.f32 %v2243, %v2307
        %v2316 = vsub.f32 %v2244, %v2308
        %v2317 = vsub.f32 %v2245, %v2309
        %v2318 = vsub.f32 %v2246, %v2310
        %v2319 = vsub.f32 %v2247, %v2311
        %v2320 = vmul.f32 %v2312, %v2312
        %v2321 = vmul.f32 %v2313, %v2313
        %v2322 = vmul.f32 %v2314, %v2314
        %v2323 = vmul.f32 %v2315, %v2315
        %v2324 = vmul.f32 %v2316, %v2316
        %v2325 = vmul.f32 %v2317, %v2317
        %v2326 = vmul.f32 %v2318, %v2318
        %v2327 = vmul.f32 %v2319, %v2319
        %2336 = vrot.lane.b32.xlu0 %v2320, 64
        %v2337 = vpop.permute.xlu0 %2336
        %2338 = vrot.lane.b32.xlu0 %v2321, 64
        %v2339 = vpop.permute.xlu0 %2338
        %2340 = vrot.lane.b32.xlu0 %v2322, 64
        %v2341 = vpop.permute.xlu0 %2340
        %2342 = vrot.lane.b32.xlu0 %v2323, 64
        %v2343 = vpop.permute.xlu0 %2342
        %2344 = vrot.lane.b32.xlu0 %v2324, 64
        %v2345 = vpop.permute.xlu0 %2344
        %2346 = vrot.lane.b32.xlu0 %v2325, 64
        %v2347 = vpop.permute.xlu0 %2346
        %2348 = vrot.lane.b32.xlu0 %v2326, 64
        %v2349 = vpop.permute.xlu0 %2348
        %2350 = vrot.lane.b32.xlu0 %v2327, 64
        %v2351 = vpop.permute.xlu0 %2350
        %v2360 = vsel %vm1691, %v2337, 0.0
        %2361 = vadd.xlane.f32.xlu0 %v2360
        %v2362 = vpop.xlane.xlu0 %2361
        %v2363 = vsel %vm1691, %v2339, 0.0
        %2364 = vadd.xlane.f32.xlu0 %v2363
        %v2365 = vpop.xlane.xlu0 %2364
        %v2366 = vsel %vm1691, %v2341, 0.0
        %2367 = vadd.xlane.f32.xlu0 %v2366
        %v2368 = vpop.xlane.xlu0 %2367
        %v2369 = vsel %vm1691, %v2343, 0.0
        %2370 = vadd.xlane.f32.xlu0 %v2369
        %v2371 = vpop.xlane.xlu0 %2370
        %v2372 = vsel %vm1691, %v2345, 0.0
        %2373 = vadd.xlane.f32.xlu0 %v2372
        %v2374 = vpop.xlane.xlu0 %2373
        %v2375 = vsel %vm1691, %v2347, 0.0
        %2376 = vadd.xlane.f32.xlu0 %v2375
        %v2377 = vpop.xlane.xlu0 %2376
        %v2378 = vsel %vm1691, %v2349, 0.0
        %2379 = vadd.xlane.f32.xlu0 %v2378
        %v2380 = vpop.xlane.xlu0 %2379
        %v2381 = vsel %vm1691, %v2351, 0.0
        %2382 = vadd.xlane.f32.xlu0 %v2381
        %v2383 = vpop.xlane.xlu0 %2382
        %v2384 = vmul.f32 %v2362, %v1716
        %v2385 = vmul.f32 %v2365, %v1716
        %v2386 = vmul.f32 %v2368, %v1716
        %v2387 = vmul.f32 %v2371, %v1716
        %v2388 = vmul.f32 %v2374, %v1716
        %v2389 = vmul.f32 %v2377, %v1716
        %v2390 = vmul.f32 %v2380, %v1716
        %v2391 = vmul.f32 %v2383, %v1716
        %v2392 = vadd.f32 %v2384, 1e-05
        %v2393 = vadd.f32 %v2385, 1e-05
        %v2394 = vadd.f32 %v2386, 1e-05
        %v2395 = vadd.f32 %v2387, 1e-05
        %v2396 = vadd.f32 %v2388, 1e-05
        %v2397 = vadd.f32 %v2389, 1e-05
        %v2398 = vadd.f32 %v2390, 1e-05
        %v2399 = vadd.f32 %v2391, 1e-05
        %v2400 = vrsqrt.pop %v2392
        %v2401 = vrsqrt.pop %v2393
        %v2402 = vrsqrt.pop %v2394
        %v2403 = vrsqrt.pop %v2395
        %v2404 = vrsqrt.pop %v2396
        %v2405 = vrsqrt.pop %v2397
        %v2406 = vrsqrt.pop %v2398
        %v2407 = vrsqrt.pop %v2399
        %v2408 = vmul.f32 %v2312, %v2400
        %v2409 = vmul.f32 %v2313, %v2401
        %v2410 = vmul.f32 %v2314, %v2402
        %v2411 = vmul.f32 %v2315, %v2403
        %v2412 = vmul.f32 %v2316, %v2404
        %v2413 = vmul.f32 %v2317, %v2405
        %v2414 = vmul.f32 %v2318, %v2406
        %v2415 = vmul.f32 %v2319, %v2407
        %v2416 = vlaneseq
        %v2417 = vshrl.u32 %v2416, 7
        %v2418 = vsub.s32 1, %v2417
        %v2419 = vrot.slane %v2123, %v2418
        %2421 = vrot.lane.b32.xlu0 %v2419, 64
        %v2422 = vpop.permute.xlu0 %2421
        %v2424 = vmul.f32 %v2408, %v2422
        %v2425 = vmul.f32 %v2409, %v2422
        %v2426 = vmul.f32 %v2410, %v2422
        %v2427 = vmul.f32 %v2411, %v2422
        %v2428 = vmul.f32 %v2412, %v2422
        %v2429 = vmul.f32 %v2413, %v2422
        %v2430 = vmul.f32 %v2414, %v2422
        %v2431 = vmul.f32 %v2415, %v2422
        %v2432 = vlaneseq
        %v2433 = vshrl.u32 %v2432, 7
        %v2434 = vsub.s32 2, %v2433
        %v2435 = vrot.slane %v2123, %v2434
        %2437 = vrot.lane.b32.xlu0 %v2435, 64
        %v2438 = vpop.permute.xlu0 %2437
        %v2440 = vadd.f32 %v2424, %v2438
        %v2441 = vadd.f32 %v2425, %v2438
        %v2442 = vadd.f32 %v2426, %v2438
        %v2443 = vadd.f32 %v2427, %v2438
        %v2444 = vadd.f32 %v2428, %v2438
        %v2445 = vadd.f32 %v2429, %v2438
        %v2446 = vadd.f32 %v2430, %v2438
        %v2447 = vadd.f32 %v2431, %v2438
        %v2448 = vsub.f32 0.0, %v2440
        %v2449 = vsub.f32 0.0, %v2441
        %v2450 = vsub.f32 0.0, %v2442
        %v2451 = vsub.f32 0.0, %v2443
        %v2452 = vsub.f32 0.0, %v2444
        %v2453 = vsub.f32 0.0, %v2445
        %v2454 = vsub.f32 0.0, %v2446
        %v2455 = vsub.f32 0.0, %v2447
        %v2456 = vmul.f32 %v2448, 1.442695
        %v2457 = vpow.pop %v2456
        %v2458 = vmul.f32 %v2449, 1.442695
        %v2459 = vpow.pop %v2458
        %v2460 = vmul.f32 %v2450, 1.442695
        %v2461 = vpow.pop %v2460
        %v2462 = vmul.f32 %v2451, 1.442695
        %v2463 = vpow.pop %v2462
        %v2464 = vmul.f32 %v2452, 1.442695
        %v2465 = vpow.pop %v2464
        %v2466 = vmul.f32 %v2453, 1.442695
        %v2467 = vpow.pop %v2466
        %v2468 = vmul.f32 %v2454, 1.442695
        %v2469 = vpow.pop %v2468
        %v2470 = vmul.f32 %v2455, 1.442695
        %v2471 = vpow.pop %v2470
        %v2472 = vadd.f32 %v2457, 1.0
        %v2473 = vadd.f32 %v2459, 1.0
        %v2474 = vadd.f32 %v2461, 1.0
        %v2475 = vadd.f32 %v2463, 1.0
        %v2476 = vadd.f32 %v2465, 1.0
        %v2477 = vadd.f32 %v2467, 1.0
        %v2478 = vadd.f32 %v2469, 1.0
        %v2479 = vadd.f32 %v2471, 1.0
        %v2480 = vrcp.pop %v2472
        %v2481 = vrcp.pop %v2473
        %v2482 = vrcp.pop %v2474
        %v2483 = vrcp.pop %v2475
        %v2484 = vrcp.pop %v2476
        %v2485 = vrcp.pop %v2477
        %v2486 = vrcp.pop %v2478
        %v2487 = vrcp.pop %v2479
        %v2488 = vmul.f32 %v2440, %v2480
        %v2489 = vmul.f32 %v2441, %v2481
        %v2490 = vmul.f32 %v2442, %v2482
        %v2491 = vmul.f32 %v2443, %v2483
        %v2492 = vmul.f32 %v2444, %v2484
        %v2493 = vmul.f32 %v2445, %v2485
        %v2494 = vmul.f32 %v2446, %v2486
        %v2495 = vmul.f32 %v2447, %v2487
        %v2496 = vpack.c.bf16 %v2489, %v2488
        %v2497 = vpack.c.bf16 %v2491, %v2490
        %v2498 = vpack.c.bf16 %v2493, %v2492
        %v2499 = vpack.c.bf16 %v2495, %v2494
        %s2500 = scalar_lea.vmem [#allocation15], 32
        %v2501 = vld [vmem:[%s2500] sm:$0xf]
        %v2502 = vld [vmem:[%s2500 + $0x4] sm:$0xf]
        %v2503 = vld [vmem:[%s2500 + $0x8] sm:$0xf]
        %v2504 = vld [vmem:[%s2500 + $0xc] sm:$0xf]
        %v2505 = vld [vmem:[%s2500 + $0x10] sm:$0xf]
        %v2506 = vld [vmem:[%s2500 + $0x14] sm:$0xf]
        %v2507 = vld [vmem:[%s2500 + $0x18] sm:$0xf]
        %v2508 = vld [vmem:[%s2500 + $0x1c] sm:$0xf]
        %s2509 = scalar_lea.vmem [#allocation17], 1
        %v2510 = vld [vmem:[%s2509] sm:$0x1]
        %v2512 = vlaneseq
        %v2513 = vshrl.u32 %v2512, 7
        %v2514 = vsub.s32 0, %v2513
        %v2515 = vrot.slane %v2510, %v2514
        %2521 = vrot.lane.b32.xlu0 %v2496, 64
        %v2522 = vpop.permute.xlu0 %2521
        %2523 = vrot.lane.b32.xlu0 %v2497, 64
        %v2524 = vpop.permute.xlu0 %2523
        %2525 = vrot.lane.b32.xlu0 %v2498, 64
        %v2526 = vpop.permute.xlu0 %2525
        %2527 = vrot.lane.b32.xlu0 %v2499, 64
        %v2528 = vpop.permute.xlu0 %2527
        %v2537 = vunpack.c.l.b16 %v2501
        %v2538 = vunpack.c.l.b16 %v2502
        %v2539 = vunpack.c.l.b16 %v2503
        %v2540 = vunpack.c.l.b16 %v2504
        %v2541 = vunpack.c.l.b16 %v2505
        %v2542 = vunpack.c.l.b16 %v2506
        %v2543 = vunpack.c.l.b16 %v2507
        %v2544 = vunpack.c.l.b16 %v2508
        %v2545 = vpack.c.b16 %v2538, %v2537
        %v2546 = vpack.c.b16 %v2540, %v2539
        %v2547 = vpack.c.b16 %v2542, %v2541
        %v2548 = vpack.c.b16 %v2544, %v2543
        %v2554 = vsel %vm1691, %v2522, 0
        %v2557 = vsel %vm1691, %v2524, 0
        %v2560 = vsel %vm1691, %v2526, 0
        %v2563 = vsel %vm1691, %v2528, 0
        %2565 = vmatprep.subr.bf16.mxu0 0
        %2566 = vmatpush1.bf16.msra.mxu0 %v2545
        %2567 = vmatprep.subr.bf16.mxu0 0
        %2568 = vmatpush1.bf16.msra.mxu0 %v2546
        %2569 = vmatprep.subr.bf16.mxu0 0
        %2570 = vmatpush1.bf16.msra.mxu0 %v2547
        %2571 = vmatprep.subr.bf16.mxu0 0
        %2572 = vmatpush1.bf16.msra.mxu0 %v2548
        %2573 = vmatprep.subr.bf16.mxu0 0
        %2574 = vmatpush1.bf16.msra.mxu0 0
        %2575 = vmatprep.subr.bf16.mxu0 0
        %2576 = vmatpush1.bf16.msra.mxu0 0
        %2577 = vmatprep.subr.bf16.mxu0 0
        %2578 = vmatpush1.bf16.msra.mxu0 0
        %2579 = vmatprep.subr.bf16.mxu0 0
        %2580 = vmatpush1.bf16.msra.mxu0 0
        %2581 = vmatprep.subr.bf16.mxu0 0
        %2582 = vmatpush1.bf16.msra.mxu0 0
        %2583 = vmatprep.subr.bf16.mxu0 0
        %2584 = vmatpush1.bf16.msra.mxu0 0
        %2585 = vmatprep.subr.bf16.mxu0 0
        %2586 = vmatpush1.bf16.msra.mxu0 0
        %2587 = vmatprep.subr.bf16.mxu0 0
        %2588 = vmatpush1.bf16.msra.mxu0 0
        %2589 = vmatprep.subr.bf16.mxu0 0
        %2590 = vmatpush1.bf16.msra.mxu0 0
        %2591 = vmatprep.subr.bf16.mxu0 0
        %2592 = vmatpush1.bf16.msra.mxu0 0
        %2593 = vmatprep.subr.bf16.mxu0 0
        %2594 = vmatpush1.bf16.msra.mxu0 0
        %2595 = vmatprep.subr.bf16.mxu0 0
        %2596 = vmatpush1.bf16.msra.mxu0 0
        %2597 = vmatprep.mubr.bf16.mxu0 0
        %2598 = vmatmul.mubr.bf16.gmra.mrb[0].mxu0 %v2554
        %v2599 = vpop.f32.mrb[0].mxu0
        %v2600 = vadd.f32 %v2515, %v2599
        %v2601 = vpop.f32.mrb[0].mxu0
        %v2602 = vpop.f32.mrb[0].mxu0
        %v2603 = vadd.f32 %v2515, %v2602
        %v2604 = vpop.f32.mrb[0].mxu0
        %2605 = vmatprep.mubr.bf16.mxu0 0
        %2606 = vmatmul.mubr.bf16.gmra.mrb[0].mxu0 %v2557
        %v2607 = vpop.f32.mrb[0].mxu0
        %v2608 = vadd.f32 %v2515, %v2607
        %v2609 = vpop.f32.mrb[0].mxu0
        %v2610 = vpop.f32.mrb[0].mxu0
        %v2611 = vadd.f32 %v2515, %v2610
        %v2612 = vpop.f32.mrb[0].mxu0
        %2613 = vmatprep.mubr.bf16.mxu0 0
        %2614 = vmatmul.mubr.bf16.gmra.mrb[0].mxu0 %v2560
        %v2615 = vpop.f32.mrb[0].mxu0
        %v2616 = vadd.f32 %v2515, %v2615
        %v2617 = vpop.f32.mrb[0].mxu0
        %v2618 = vpop.f32.mrb[0].mxu0
        %v2619 = vadd.f32 %v2515, %v2618
        %v2620 = vpop.f32.mrb[0].mxu0
        %2621 = vmatprep.mubr.bf16.mxu0 0
        %2622 = vmatmul.mubr.bf16.gmra.mrb[0].mxu0 %v2563
        %v2623 = vpop.f32.mrb[0].mxu0
        %v2624 = vadd.f32 %v2515, %v2623
        %v2625 = vpop.f32.mrb[0].mxu0
        %v2626 = vpop.f32.mrb[0].mxu0
        %v2627 = vadd.f32 %v2515, %v2626
        %v2628 = vpop.f32.mrb[0].mxu0
        %2629 = vdwg.mxu0
        %v2630 = vmul.f32 %v2600, %v1992
        %v2631 = vmul.f32 %v2603, %v1997
        %v2632 = vmul.f32 %v2608, %v2002
        %v2633 = vmul.f32 %v2611, %v2007
        %v2634 = vmul.f32 %v2616, %v2012
        %v2635 = vmul.f32 %v2619, %v2017
        %v2636 = vmul.f32 %v2624, %v2022
        %v2637 = vmul.f32 %v2627, %v2027
        %s2638 = scalar_lea.vmem [#allocation2], 8
        %v2639 = vld [vmem:[%s2638] sm:$0xff]
        %v2640 = vsel %vm2038, %v2630, 0.0
        %v2641 = vrot.slane %v2640, 4
        %v2642 = vadd.f32 %v2640, %v2641
        %v2643 = vrot.slane %v2642, 2
        %v2644 = vadd.f32 %v2642, %v2643
        %v2645 = vrot.slane %v2644, 1
        %v2646 = vadd.f32 %v2644, %v2645
        %v2647 = vsel %vm2038, %v2631, 0.0
        %v2648 = vrot.slane %v2647, 4
        %v2649 = vadd.f32 %v2647, %v2648
        %v2650 = vrot.slane %v2649, 2
        %v2651 = vadd.f32 %v2649, %v2650
        %v2652 = vrot.slane %v2651, 1
        %v2653 = vadd.f32 %v2651, %v2652
        %v2654 = vsel %vm2038, %v2632, 0.0
        %v2655 = vrot.slane %v2654, 4
        %v2656 = vadd.f32 %v2654, %v2655
        %v2657 = vrot.slane %v2656, 2
        %v2658 = vadd.f32 %v2656, %v2657
        %v2659 = vrot.slane %v2658, 1
        %v2660 = vadd.f32 %v2658, %v2659
        %v2661 = vsel %vm2038, %v2633, 0.0
        %v2662 = vrot.slane %v2661, 4
        %v2663 = vadd.f32 %v2661, %v2662
        %v2664 = vrot.slane %v2663, 2
        %v2665 = vadd.f32 %v2663, %v2664
        %v2666 = vrot.slane %v2665, 1
        %v2667 = vadd.f32 %v2665, %v2666
        %v2668 = vsel %vm2038, %v2634, 0.0
        %v2669 = vrot.slane %v2668, 4
        %v2670 = vadd.f32 %v2668, %v2669
        %v2671 = vrot.slane %v2670, 2
        %v2672 = vadd.f32 %v2670, %v2671
        %v2673 = vrot.slane %v2672, 1
        %v2674 = vadd.f32 %v2672, %v2673
        %v2675 = vsel %vm2038, %v2635, 0.0
        %v2676 = vrot.slane %v2675, 4
        %v2677 = vadd.f32 %v2675, %v2676
        %v2678 = vrot.slane %v2677, 2
        %v2679 = vadd.f32 %v2677, %v2678
        %v2680 = vrot.slane %v2679, 1
        %v2681 = vadd.f32 %v2679, %v2680
        %v2682 = vsel %vm2038, %v2636, 0.0
        %v2683 = vrot.slane %v2682, 4
        %v2684 = vadd.f32 %v2682, %v2683
        %v2685 = vrot.slane %v2684, 2
        %v2686 = vadd.f32 %v2684, %v2685
        %v2687 = vrot.slane %v2686, 1
        %v2688 = vadd.f32 %v2686, %v2687
        %v2689 = vsel %vm2038, %v2637, 0.0
        %v2690 = vrot.slane %v2689, 4
        %v2691 = vadd.f32 %v2689, %v2690
        %v2692 = vrot.slane %v2691, 2
        %v2693 = vadd.f32 %v2691, %v2692
        %v2694 = vrot.slane %v2693, 1
        %v2695 = vadd.f32 %v2693, %v2694
        %v2704 = vsel %vm2103, %v2653, %v2646
        %v2705 = vsel %vm2105, %v2660, %v2704
        %v2706 = vsel %vm2107, %v2667, %v2705
        %v2707 = vsel %vm2109, %v2674, %v2706
        %v2708 = vsel %vm2111, %v2681, %v2707
        %v2709 = vsel %vm2113, %v2688, %v2708
        %v2710 = vsel %vm2115, %v2695, %v2709
        %v2712 = vadd.f32 %v2639, %v2710
        %2713 = vst.msk [vmem:[%s2638] sm:$0xff] %vm2038, %v2712
        %s2714 = scalar_lea.vmem [#allocation12], 8
        %v2715 = vld [vmem:[%s2714] sm:$0xf]
        %s2716 = scalar_lea.vmem [#allocation14], 8
        %v2717 = vld [vmem:[%s2716] sm:$0x7]
        %v2718 = vlaneseq
        %v2719 = vshrl.u32 %v2718, 7
        %v2720 = vsub.s32 0, %v2719
        %v2721 = vrot.slane %v2715, %v2720
        %v2722 = vmul.f32 %v1344, %v2721
        %v2723 = vmul.f32 %v1349, %v2721
        %v2724 = vmul.f32 %v1354, %v2721
        %v2725 = vmul.f32 %v1359, %v2721
        %v2726 = vmul.f32 %v1364, %v2721
        %v2727 = vmul.f32 %v1369, %v2721
        %v2728 = vmul.f32 %v1374, %v2721
        %v2729 = vmul.f32 %v1379, %v2721
        %v2730 = vlaneseq
        %v2731 = vshrl.u32 %v2730, 7
        %v2732 = vsub.s32 1, %v2731
        %v2733 = vrot.slane %v2715, %v2732
        %v2734 = vmul.f32 %v1396, %v2733
        %v2735 = vmul.f32 %v1401, %v2733
        %v2736 = vmul.f32 %v1406, %v2733
        %v2737 = vmul.f32 %v1411, %v2733
        %v2738 = vmul.f32 %v1416, %v2733
        %v2739 = vmul.f32 %v1421, %v2733
        %v2740 = vmul.f32 %v1426, %v2733
        %v2741 = vmul.f32 %v1431, %v2733
        %v2742 = vadd.f32 %v2722, %v2734
        %v2743 = vadd.f32 %v2723, %v2735
        %v2744 = vadd.f32 %v2724, %v2736
        %v2745 = vadd.f32 %v2725, %v2737
        %v2746 = vadd.f32 %v2726, %v2738
        %v2747 = vadd.f32 %v2727, %v2739
        %v2748 = vadd.f32 %v2728, %v2740
        %v2749 = vadd.f32 %v2729, %v2741
        %v2750 = vlaneseq
        %v2751 = vshrl.u32 %v2750, 7
        %v2752 = vsub.s32 2, %v2751
        %v2753 = vrot.slane %v2715, %v2752
        %v2754 = vmul.f32 %v1456, %v2753
        %v2755 = vmul.f32 %v1461, %v2753
        %v2756 = vmul.f32 %v1466, %v2753
        %v2757 = vmul.f32 %v1471, %v2753
        %v2758 = vmul.f32 %v1476, %v2753
        %v2759 = vmul.f32 %v1481, %v2753
        %v2760 = vmul.f32 %v1486, %v2753
        %v2761 = vmul.f32 %v1491, %v2753
        %v2762 = vadd.f32 %v2742, %v2754
        %v2763 = vadd.f32 %v2743, %v2755
        %v2764 = vadd.f32 %v2744, %v2756
        %v2765 = vadd.f32 %v2745, %v2757
        %v2766 = vadd.f32 %v2746, %v2758
        %v2767 = vadd.f32 %v2747, %v2759
        %v2768 = vadd.f32 %v2748, %v2760
        %v2769 = vadd.f32 %v2749, %v2761
        %v2770 = vlaneseq
        %v2771 = vshrl.u32 %v2770, 7
        %v2772 = vsub.s32 3, %v2771
        %v2773 = vrot.slane %v2715, %v2772
        %v2774 = vmul.f32 %v1516, %v2773
        %v2775 = vmul.f32 %v1521, %v2773
        %v2776 = vmul.f32 %v1526, %v2773
        %v2777 = vmul.f32 %v1531, %v2773
        %v2778 = vmul.f32 %v1536, %v2773
        %v2779 = vmul.f32 %v1541, %v2773
        %v2780 = vmul.f32 %v1546, %v2773
        %v2781 = vmul.f32 %v1551, %v2773
        %v2782 = vadd.f32 %v2762, %v2774
        %v2783 = vadd.f32 %v2763, %v2775
        %v2784 = vadd.f32 %v2764, %v2776
        %v2785 = vadd.f32 %v2765, %v2777
        %v2786 = vadd.f32 %v2766, %v2778
        %v2787 = vadd.f32 %v2767, %v2779
        %v2788 = vadd.f32 %v2768, %v2780
        %v2789 = vadd.f32 %v2769, %v2781
        %v2790 = vlaneseq
        %v2791 = vshrl.u32 %v2790, 7
        %v2792 = vsub.s32 0, %v2791
        %v2793 = vrot.slane %v2717, %v2792
        %v2794 = vadd.f32 %v2782, %v2793
        %v2795 = vadd.f32 %v2783, %v2793
        %v2796 = vadd.f32 %v2784, %v2793
        %v2797 = vadd.f32 %v2785, %v2793
        %v2798 = vadd.f32 %v2786, %v2793
        %v2799 = vadd.f32 %v2787, %v2793
        %v2800 = vadd.f32 %v2788, %v2793
        %v2801 = vadd.f32 %v2789, %v2793
        %v2803 = vcombine.high %v1336, %v1336
        %v2805 = vunpack.c.l.s4 1966171168
        %v2806 = vunpack.c.0.s8 %v2805
        %v2807 = vlaneseq
        %v2808 = vshrl.u32 %v2807, 7
        %v2809 = vsub.s32 %v2806, %v2808
        %v2810 = vrot.slane %v1336, %v2809
        %v2812 = vunpack.c.l.s4 1966171168
        %v2813 = vunpack.c.0.s8 %v2812
        %v2814 = vlaneseq
        %v2815 = vshrl.u32 %v2814, 7
        %v2816 = vsub.s32 %v2813, %v2815
        %v2817 = vrot.slane %v2803, %v2816
        %v2818 = vcombine.high %v2810, %v2810
        %v2819 = vcombine.high %v2817, %v2817
        %v2821 = vunpack.c.l.s4 1966171168
        %v2822 = vunpack.c.0.s8 %v2821
        %v2823 = vlaneseq
        %v2824 = vshrl.u32 %v2823, 7
        %v2825 = vsub.s32 %v2822, %v2824
        %v2826 = vrot.slane %v2810, %v2825
        %v2828 = vunpack.c.l.s4 1966171168
        %v2829 = vunpack.c.0.s8 %v2828
        %v2830 = vlaneseq
        %v2831 = vshrl.u32 %v2830, 7
        %v2832 = vsub.s32 %v2829, %v2831
        %v2833 = vrot.slane %v2817, %v2832
        %v2835 = vunpack.c.l.s4 1966171168
        %v2836 = vunpack.c.0.s8 %v2835
        %v2837 = vlaneseq
        %v2838 = vshrl.u32 %v2837, 7
        %v2839 = vsub.s32 %v2836, %v2838
        %v2840 = vrot.slane %v2818, %v2839
        %v2842 = vunpack.c.l.s4 1966171168
        %v2843 = vunpack.c.0.s8 %v2842
        %v2844 = vlaneseq
        %v2845 = vshrl.u32 %v2844, 7
        %v2846 = vsub.s32 %v2843, %v2845
        %v2847 = vrot.slane %v2819, %v2846
        %v2848 = vcombine.high %v2826, %v2826
        %v2849 = vcombine.high %v2833, %v2833
        %v2850 = vcombine.high %v2840, %v2840
        %v2851 = vcombine.high %v2847, %v2847
        %v2852 = vlaneseq
        %v2853 = vshrl.u32 %v2852, 7
        %v2854 = vsub.s32 0, %v2853
        %v2855 = vrot.slane %v2826, %v2854
        %v2856 = vlaneseq
        %v2857 = vshrl.u32 %v2856, 7
        %v2858 = vsub.s32 0, %v2857
        %v2859 = vrot.slane %v2840, %v2858
        %v2860 = vlaneseq
        %v2861 = vshrl.u32 %v2860, 7
        %v2862 = vsub.s32 0, %v2861
        %v2863 = vrot.slane %v2848, %v2862
        %v2864 = vlaneseq
        %v2865 = vshrl.u32 %v2864, 7
        %v2866 = vsub.s32 0, %v2865
        %v2867 = vrot.slane %v2850, %v2866
        %v2868 = vlaneseq
        %v2869 = vshrl.u32 %v2868, 7
        %v2870 = vsub.s32 0, %v2869
        %v2871 = vrot.slane %v2833, %v2870
        %v2872 = vlaneseq
        %v2873 = vshrl.u32 %v2872, 7
        %v2874 = vsub.s32 0, %v2873
        %v2875 = vrot.slane %v2847, %v2874
        %v2876 = vlaneseq
        %v2877 = vshrl.u32 %v2876, 7
        %v2878 = vsub.s32 0, %v2877
        %v2879 = vrot.slane %v2849, %v2878
        %v2880 = vlaneseq
        %v2881 = vshrl.u32 %v2880, 7
        %v2882 = vsub.s32 0, %v2881
        %v2883 = vrot.slane %v2851, %v2882
        %v2892 = vadd.f32 %v2855, %v1338
        %v2893 = vadd.f32 %v2859, %v1338
        %v2894 = vadd.f32 %v2863, %v1338
        %v2895 = vadd.f32 %v2867, %v1338
        %v2896 = vadd.f32 %v2871, %v1338
        %v2897 = vadd.f32 %v2875, %v1338
        %v2898 = vadd.f32 %v2879, %v1338
        %v2899 = vadd.f32 %v2883, %v1338
        %v2900 = vadd.f32 %v2892, %v2794
        %v2901 = vadd.f32 %v2893, %v2795
        %v2902 = vadd.f32 %v2894, %v2796
        %v2903 = vadd.f32 %v2895, %v2797
        %v2904 = vadd.f32 %v2896, %v2798
        %v2905 = vadd.f32 %v2897, %v2799
        %v2906 = vadd.f32 %v2898, %v2800
        %v2907 = vadd.f32 %v2899, %v2801
        %v2908 = vsel %vm1691, %v2900, 0.0
        %2909 = vadd.xlane.f32.xlu0 %v2908
        %v2910 = vpop.xlane.xlu0 %2909
        %v2911 = vsel %vm1691, %v2901, 0.0
        %2912 = vadd.xlane.f32.xlu0 %v2911
        %v2913 = vpop.xlane.xlu0 %2912
        %v2914 = vsel %vm1691, %v2902, 0.0
        %2915 = vadd.xlane.f32.xlu0 %v2914
        %v2916 = vpop.xlane.xlu0 %2915
        %v2917 = vsel %vm1691, %v2903, 0.0
        %2918 = vadd.xlane.f32.xlu0 %v2917
        %v2919 = vpop.xlane.xlu0 %2918
        %v2920 = vsel %vm1691, %v2904, 0.0
        %2921 = vadd.xlane.f32.xlu0 %v2920
        %v2922 = vpop.xlane.xlu0 %2921
        %v2923 = vsel %vm1691, %v2905, 0.0
        %2924 = vadd.xlane.f32.xlu0 %v2923
        %v2925 = vpop.xlane.xlu0 %2924
        %v2926 = vsel %vm1691, %v2906, 0.0
        %2927 = vadd.xlane.f32.xlu0 %v2926
        %v2928 = vpop.xlane.xlu0 %2927
        %v2929 = vsel %vm1691, %v2907, 0.0
        %2930 = vadd.xlane.f32.xlu0 %v2929
        %v2931 = vpop.xlane.xlu0 %2930
        %v2932 = vmul.f32 %v2910, %v1716
        %v2933 = vmul.f32 %v2913, %v1716
        %v2934 = vmul.f32 %v2916, %v1716
        %v2935 = vmul.f32 %v2919, %v1716
        %v2936 = vmul.f32 %v2922, %v1716
        %v2937 = vmul.f32 %v2925, %v1716
        %v2938 = vmul.f32 %v2928, %v1716
        %v2939 = vmul.f32 %v2931, %v1716
        %v2940 = vsub.f32 %v2900, %v2932
        %v2941 = vsub.f32 %v2901, %v2933
        %v2942 = vsub.f32 %v2902, %v2934
        %v2943 = vsub.f32 %v2903, %v2935
        %v2944 = vsub.f32 %v2904, %v2936
        %v2945 = vsub.f32 %v2905, %v2937
        %v2946 = vsub.f32 %v2906, %v2938
        %v2947 = vsub.f32 %v2907, %v2939
        %v2948 = vmul.f32 %v2940, %v2940
        %v2949 = vmul.f32 %v2941, %v2941
        %v2950 = vmul.f32 %v2942, %v2942
        %v2951 = vmul.f32 %v2943, %v2943
        %v2952 = vmul.f32 %v2944, %v2944
        %v2953 = vmul.f32 %v2945, %v2945
        %v2954 = vmul.f32 %v2946, %v2946
        %v2955 = vmul.f32 %v2947, %v2947
        %v2956 = vsel %vm1691, %v2948, 0.0
        %2957 = vadd.xlane.f32.xlu0 %v2956
        %v2958 = vpop.xlane.xlu0 %2957
        %v2959 = vsel %vm1691, %v2949, 0.0
        %2960 = vadd.xlane.f32.xlu0 %v2959
        %v2961 = vpop.xlane.xlu0 %2960
        %v2962 = vsel %vm1691, %v2950, 0.0
        %2963 = vadd.xlane.f32.xlu0 %v2962
        %v2964 = vpop.xlane.xlu0 %2963
        %v2965 = vsel %vm1691, %v2951, 0.0
        %2966 = vadd.xlane.f32.xlu0 %v2965
        %v2967 = vpop.xlane.xlu0 %2966
        %v2968 = vsel %vm1691, %v2952, 0.0
        %2969 = vadd.xlane.f32.xlu0 %v2968
        %v2970 = vpop.xlane.xlu0 %2969
        %v2971 = vsel %vm1691, %v2953, 0.0
        %2972 = vadd.xlane.f32.xlu0 %v2971
        %v2973 = vpop.xlane.xlu0 %2972
        %v2974 = vsel %vm1691, %v2954, 0.0
        %2975 = vadd.xlane.f32.xlu0 %v2974
        %v2976 = vpop.xlane.xlu0 %2975
        %v2977 = vsel %vm1691, %v2955, 0.0
        %2978 = vadd.xlane.f32.xlu0 %v2977
        %v2979 = vpop.xlane.xlu0 %2978
        %v2980 = vmul.f32 %v2958, %v1716
        %v2981 = vmul.f32 %v2961, %v1716
        %v2982 = vmul.f32 %v2964, %v1716
        %v2983 = vmul.f32 %v2967, %v1716
        %v2984 = vmul.f32 %v2970, %v1716
        %v2985 = vmul.f32 %v2973, %v1716
        %v2986 = vmul.f32 %v2976, %v1716
        %v2987 = vmul.f32 %v2979, %v1716
        %v2988 = vadd.f32 %v2980, 1e-05
        %v2989 = vadd.f32 %v2981, 1e-05
        %v2990 = vadd.f32 %v2982, 1e-05
        %v2991 = vadd.f32 %v2983, 1e-05
        %v2992 = vadd.f32 %v2984, 1e-05
        %v2993 = vadd.f32 %v2985, 1e-05
        %v2994 = vadd.f32 %v2986, 1e-05
        %v2995 = vadd.f32 %v2987, 1e-05
        %v2996 = vrsqrt.pop %v2988
        %v2997 = vrsqrt.pop %v2989
        %v2998 = vrsqrt.pop %v2990
        %v2999 = vrsqrt.pop %v2991
        %v3000 = vrsqrt.pop %v2992
        %v3001 = vrsqrt.pop %v2993
        %v3002 = vrsqrt.pop %v2994
        %v3003 = vrsqrt.pop %v2995
        %v3004 = vmul.f32 %v2940, %v2996
        %v3005 = vmul.f32 %v2941, %v2997
        %v3006 = vmul.f32 %v2942, %v2998
        %v3007 = vmul.f32 %v2943, %v2999
        %v3008 = vmul.f32 %v2944, %v3000
        %v3009 = vmul.f32 %v2945, %v3001
        %v3010 = vmul.f32 %v2946, %v3002
        %v3011 = vmul.f32 %v2947, %v3003
        %v3012 = vlaneseq
        %v3013 = vshrl.u32 %v3012, 7
        %v3014 = vsub.s32 1, %v3013
        %v3015 = vrot.slane %v2717, %v3014
        %v3016 = vmul.f32 %v3004, %v3015
        %v3017 = vmul.f32 %v3005, %v3015
        %v3018 = vmul.f32 %v3006, %v3015
        %v3019 = vmul.f32 %v3007, %v3015
        %v3020 = vmul.f32 %v3008, %v3015
        %v3021 = vmul.f32 %v3009, %v3015
        %v3022 = vmul.f32 %v3010, %v3015
        %v3023 = vmul.f32 %v3011, %v3015
        %v3024 = vlaneseq
        %v3025 = vshrl.u32 %v3024, 7
        %v3026 = vsub.s32 2, %v3025
        %v3027 = vrot.slane %v2717, %v3026
        %v3028 = vadd.f32 %v3016, %v3027
        %v3029 = vadd.f32 %v3017, %v3027
        %v3030 = vadd.f32 %v3018, %v3027
        %v3031 = vadd.f32 %v3019, %v3027
        %v3032 = vadd.f32 %v3020, %v3027
        %v3033 = vadd.f32 %v3021, %v3027
        %v3034 = vadd.f32 %v3022, %v3027
        %v3035 = vadd.f32 %v3023, %v3027
        %v3036 = vsub.f32 0.0, %v3028
        %v3037 = vsub.f32 0.0, %v3029
        %v3038 = vsub.f32 0.0, %v3030
        %v3039 = vsub.f32 0.0, %v3031
        %v3040 = vsub.f32 0.0, %v3032
        %v3041 = vsub.f32 0.0, %v3033
        %v3042 = vsub.f32 0.0, %v3034
        %v3043 = vsub.f32 0.0, %v3035
        %v3044 = vmul.f32 %v3036, 1.442695
        %v3045 = vpow.pop %v3044
        %v3046 = vmul.f32 %v3037, 1.442695
        %v3047 = vpow.pop %v3046
        %v3048 = vmul.f32 %v3038, 1.442695
        %v3049 = vpow.pop %v3048
        %v3050 = vmul.f32 %v3039, 1.442695
        %v3051 = vpow.pop %v3050
        %v3052 = vmul.f32 %v3040, 1.442695
        %v3053 = vpow.pop %v3052
        %v3054 = vmul.f32 %v3041, 1.442695
        %v3055 = vpow.pop %v3054
        %v3056 = vmul.f32 %v3042, 1.442695
        %v3057 = vpow.pop %v3056
        %v3058 = vmul.f32 %v3043, 1.442695
        %v3059 = vpow.pop %v3058
        %v3060 = vadd.f32 %v3045, 1.0
        %v3061 = vadd.f32 %v3047, 1.0
        %v3062 = vadd.f32 %v3049, 1.0
        %v3063 = vadd.f32 %v3051, 1.0
        %v3064 = vadd.f32 %v3053, 1.0
        %v3065 = vadd.f32 %v3055, 1.0
        %v3066 = vadd.f32 %v3057, 1.0
        %v3067 = vadd.f32 %v3059, 1.0
        %v3068 = vrcp.pop %v3060
        %v3069 = vrcp.pop %v3061
        %v3070 = vrcp.pop %v3062
        %v3071 = vrcp.pop %v3063
        %v3072 = vrcp.pop %v3064
        %v3073 = vrcp.pop %v3065
        %v3074 = vrcp.pop %v3066
        %v3075 = vrcp.pop %v3067
        %v3076 = vmul.f32 %v3028, %v3068
        %v3077 = vmul.f32 %v3029, %v3069
        %v3078 = vmul.f32 %v3030, %v3070
        %v3079 = vmul.f32 %v3031, %v3071
        %v3080 = vmul.f32 %v3032, %v3072
        %v3081 = vmul.f32 %v3033, %v3073
        %v3082 = vmul.f32 %v3034, %v3074
        %v3083 = vmul.f32 %v3035, %v3075
        %v3084 = vpack.c.bf16 %v3077, %v3076
        %v3085 = vpack.c.bf16 %v3079, %v3078
        %v3086 = vpack.c.bf16 %v3081, %v3080
        %v3087 = vpack.c.bf16 %v3083, %v3082
        %s3088 = scalar_lea.vmem [#allocation15], 64
        %v3089 = vld [vmem:[%s3088] sm:$0xf]
        %v3090 = vld [vmem:[%s3088 + $0x4] sm:$0xf]
        %v3091 = vld [vmem:[%s3088 + $0x8] sm:$0xf]
        %v3092 = vld [vmem:[%s3088 + $0xc] sm:$0xf]
        %v3093 = vld [vmem:[%s3088 + $0x10] sm:$0xf]
        %v3094 = vld [vmem:[%s3088 + $0x14] sm:$0xf]
        %v3095 = vld [vmem:[%s3088 + $0x18] sm:$0xf]
        %v3096 = vld [vmem:[%s3088 + $0x1c] sm:$0xf]
        %s3097 = scalar_lea.vmem [#allocation17], 2
        %v3098 = vld [vmem:[%s3097] sm:$0x1]
        %v3100 = vlaneseq
        %v3101 = vshrl.u32 %v3100, 7
        %v3102 = vsub.s32 0, %v3101
        %v3103 = vrot.slane %v3098, %v3102
        %v3113 = vunpack.c.l.b16 %v3089
        %v3114 = vunpack.c.l.b16 %v3090
        %v3115 = vunpack.c.l.b16 %v3091
        %v3116 = vunpack.c.l.b16 %v3092
        %v3117 = vunpack.c.l.b16 %v3093
        %v3118 = vunpack.c.l.b16 %v3094
        %v3119 = vunpack.c.l.b16 %v3095
        %v3120 = vunpack.c.l.b16 %v3096
        %v3121 = vpack.c.b16 %v3114, %v3113
        %v3122 = vpack.c.b16 %v3116, %v3115
        %v3123 = vpack.c.b16 %v3118, %v3117
        %v3124 = vpack.c.b16 %v3120, %v3119
        %v3130 = vsel %vm1691, %v3084, 0
        %v3133 = vsel %vm1691, %v3085, 0
        %v3136 = vsel %vm1691, %v3086, 0
        %v3139 = vsel %vm1691, %v3087, 0
        %3141 = vmatprep.subr.bf16.mxu0 0
        %3142 = vmatpush1.bf16.msra.mxu0 %v3121
        %3143 = vmatprep.subr.bf16.mxu0 0
        %3144 = vmatpush1.bf16.msra.mxu0 %v3122
        %3145 = vmatprep.subr.bf16.mxu0 0
        %3146 = vmatpush1.bf16.msra.mxu0 %v3123
        %3147 = vmatprep.subr.bf16.mxu0 0
        %3148 = vmatpush1.bf16.msra.mxu0 %v3124
        %3149 = vmatprep.subr.bf16.mxu0 0
        %3150 = vmatpush1.bf16.msra.mxu0 0
        %3151 = vmatprep.subr.bf16.mxu0 0
        %3152 = vmatpush1.bf16.msra.mxu0 0
        %3153 = vmatprep.subr.bf16.mxu0 0
        %3154 = vmatpush1.bf16.msra.mxu0 0
        %3155 = vmatprep.subr.bf16.mxu0 0
        %3156 = vmatpush1.bf16.msra.mxu0 0
        %3157 = vmatprep.subr.bf16.mxu0 0
        %3158 = vmatpush1.bf16.msra.mxu0 0
        %3159 = vmatprep.subr.bf16.mxu0 0
        %3160 = vmatpush1.bf16.msra.mxu0 0
        %3161 = vmatprep.subr.bf16.mxu0 0
        %3162 = vmatpush1.bf16.msra.mxu0 0
        %3163 = vmatprep.subr.bf16.mxu0 0
        %3164 = vmatpush1.bf16.msra.mxu0 0
        %3165 = vmatprep.subr.bf16.mxu0 0
        %3166 = vmatpush1.bf16.msra.mxu0 0
        %3167 = vmatprep.subr.bf16.mxu0 0
        %3168 = vmatpush1.bf16.msra.mxu0 0
        %3169 = vmatprep.subr.bf16.mxu0 0
        %3170 = vmatpush1.bf16.msra.mxu0 0
        %3171 = vmatprep.subr.bf16.mxu0 0
        %3172 = vmatpush1.bf16.msra.mxu0 0
        %3173 = vmatprep.mubr.bf16.mxu0 0
        %3174 = vmatmul.mubr.bf16.gmra.mrb[0].mxu0 %v3130
        %v3175 = vpop.f32.mrb[0].mxu0
        %v3176 = vadd.f32 %v3103, %v3175
        %v3177 = vpop.f32.mrb[0].mxu0
        %v3178 = vpop.f32.mrb[0].mxu0
        %v3179 = vadd.f32 %v3103, %v3178
        %v3180 = vpop.f32.mrb[0].mxu0
        %3181 = vmatprep.mubr.bf16.mxu0 0
        %3182 = vmatmul.mubr.bf16.gmra.mrb[0].mxu0 %v3133
        %v3183 = vpop.f32.mrb[0].mxu0
        %v3184 = vadd.f32 %v3103, %v3183
        %v3185 = vpop.f32.mrb[0].mxu0
        %v3186 = vpop.f32.mrb[0].mxu0
        %v3187 = vadd.f32 %v3103, %v3186
        %v3188 = vpop.f32.mrb[0].mxu0
        %3189 = vmatprep.mubr.bf16.mxu0 0
        %3190 = vmatmul.mubr.bf16.gmra.mrb[0].mxu0 %v3136
        %v3191 = vpop.f32.mrb[0].mxu0
        %v3192 = vadd.f32 %v3103, %v3191
        %v3193 = vpop.f32.mrb[0].mxu0
        %v3194 = vpop.f32.mrb[0].mxu0
        %v3195 = vadd.f32 %v3103, %v3194
        %v3196 = vpop.f32.mrb[0].mxu0
        %3197 = vmatprep.mubr.bf16.mxu0 0
        %3198 = vmatmul.mubr.bf16.gmra.mrb[0].mxu0 %v3139
        %v3199 = vpop.f32.mrb[0].mxu0
        %v3200 = vadd.f32 %v3103, %v3199
        %v3201 = vpop.f32.mrb[0].mxu0
        %v3202 = vpop.f32.mrb[0].mxu0
        %v3203 = vadd.f32 %v3103, %v3202
        %v3204 = vpop.f32.mrb[0].mxu0
        %3205 = vdwg.mxu0
        %v3206 = vmul.f32 %v3176, %v1992
        %v3207 = vmul.f32 %v3179, %v1997
        %v3208 = vmul.f32 %v3184, %v2002
        %v3209 = vmul.f32 %v3187, %v2007
        %v3210 = vmul.f32 %v3192, %v2012
        %v3211 = vmul.f32 %v3195, %v2017
        %v3212 = vmul.f32 %v3200, %v2022
        %v3213 = vmul.f32 %v3203, %v2027
        %s3214 = scalar_lea.vmem [#allocation2], 16
        %v3215 = vld [vmem:[%s3214] sm:$0xff]
        %v3216 = vsel %vm2038, %v3206, 0.0
        %v3217 = vrot.slane %v3216, 4
        %v3218 = vadd.f32 %v3216, %v3217
        %v3219 = vrot.slane %v3218, 2
        %v3220 = vadd.f32 %v3218, %v3219
        %v3221 = vrot.slane %v3220, 1
        %v3222 = vadd.f32 %v3220, %v3221
        %v3223 = vsel %vm2038, %v3207, 0.0
        %v3224 = vrot.slane %v3223, 4
        %v3225 = vadd.f32 %v3223, %v3224
        %v3226 = vrot.slane %v3225, 2
        %v3227 = vadd.f32 %v3225, %v3226
        %v3228 = vrot.slane %v3227, 1
        %v3229 = vadd.f32 %v3227, %v3228
        %v3230 = vsel %vm2038, %v3208, 0.0
        %v3231 = vrot.slane %v3230, 4
        %v3232 = vadd.f32 %v3230, %v3231
        %v3233 = vrot.slane %v3232, 2
        %v3234 = vadd.f32 %v3232, %v3233
        %v3235 = vrot.slane %v3234, 1
        %v3236 = vadd.f32 %v3234, %v3235
        %v3237 = vsel %vm2038, %v3209, 0.0
        %v3238 = vrot.slane %v3237, 4
        %v3239 = vadd.f32 %v3237, %v3238
        %v3240 = vrot.slane %v3239, 2
        %v3241 = vadd.f32 %v3239, %v3240
        %v3242 = vrot.slane %v3241, 1
        %v3243 = vadd.f32 %v3241, %v3242
        %v3244 = vsel %vm2038, %v3210, 0.0
        %v3245 = vrot.slane %v3244, 4
        %v3246 = vadd.f32 %v3244, %v3245
        %v3247 = vrot.slane %v3246, 2
        %v3248 = vadd.f32 %v3246, %v3247
        %v3249 = vrot.slane %v3248, 1
        %v3250 = vadd.f32 %v3248, %v3249
        %v3251 = vsel %vm2038, %v3211, 0.0
        %v3252 = vrot.slane %v3251, 4
        %v3253 = vadd.f32 %v3251, %v3252
        %v3254 = vrot.slane %v3253, 2
        %v3255 = vadd.f32 %v3253, %v3254
        %v3256 = vrot.slane %v3255, 1
        %v3257 = vadd.f32 %v3255, %v3256
        %v3258 = vsel %vm2038, %v3212, 0.0
        %v3259 = vrot.slane %v3258, 4
        %v3260 = vadd.f32 %v3258, %v3259
        %v3261 = vrot.slane %v3260, 2
        %v3262 = vadd.f32 %v3260, %v3261
        %v3263 = vrot.slane %v3262, 1
        %v3264 = vadd.f32 %v3262, %v3263
        %v3265 = vsel %vm2038, %v3213, 0.0
        %v3266 = vrot.slane %v3265, 4
        %v3267 = vadd.f32 %v3265, %v3266
        %v3268 = vrot.slane %v3267, 2
        %v3269 = vadd.f32 %v3267, %v3268
        %v3270 = vrot.slane %v3269, 1
        %v3271 = vadd.f32 %v3269, %v3270
        %v3280 = vsel %vm2103, %v3229, %v3222
        %v3281 = vsel %vm2105, %v3236, %v3280
        %v3282 = vsel %vm2107, %v3243, %v3281
        %v3283 = vsel %vm2109, %v3250, %v3282
        %v3284 = vsel %vm2111, %v3257, %v3283
        %v3285 = vsel %vm2113, %v3264, %v3284
        %v3286 = vsel %vm2115, %v3271, %v3285
        %v3288 = vadd.f32 %v3215, %v3286
        %3289 = vst.msk [vmem:[%s3214] sm:$0xff] %vm2038, %v3288
        %p3290 = scmp.eq.s32.totalorder %s51, 1
        // Predicated region
        $region161: #{forward.6} parent=87 // pred_check
          %p3291 = pneg %p3290
        $region162: #{forward.6} parent=87 // pred_check_branch
          %3293 = sbr.rel (%p3291) target = $region164
        $region163: #{forward.6} parent=87 // pred_region
          %v3294 = vld [vmem:[%s765] sm:$0xff]
          %v3295 = vld [vmem:[#allocation2] sm:$0xff]
          %v3296 = vld [vmem:[%s2638] sm:$0xff]
          %v3297 = vld [vmem:[%s3214] sm:$0xff]
          %3299 = vrot.lane.b32.xlu0 %v3296, 32
          %v3300 = vpop.permute.xlu0 %3299
          %3303 = vrot.lane.b32.xlu0 %v3297, 64
          %v3304 = vpop.permute.xlu0 %3303
          %v3306 = vsel %vm2038, %v3295, %v3300
          %v3307 = vsel %vm1691, %v3306, %v3304
          %v3308 = vpack.c.bf16 %v3307, %v3307
          %v3309 = vld [vmem:[#allocation18] sm:$0xf]
          %v3310 = vld [vmem:[#allocation18 + $0x4] sm:$0xf]
          %v3311 = vld [vmem:[#allocation18 + $0x8] sm:$0xf]
          %v3312 = vld [vmem:[#allocation18 + $0xc] sm:$0xf]
          %v3313 = vld [vmem:[#allocation18 + $0x10] sm:$0xf]
          %v3314 = vld [vmem:[#allocation18 + $0x14] sm:$0xf]
          %v3315 = vld [vmem:[#allocation18 + $0x18] sm:$0xf]
          %v3316 = vld [vmem:[#allocation18 + $0x1c] sm:$0xf]
          %v3317 = vld [vmem:[#allocation18 + $0x20] sm:$0xf]
          %v3318 = vld [vmem:[#allocation18 + $0x24] sm:$0xf]
          %v3319 = vld [vmem:[#allocation18 + $0x28] sm:$0xf]
          %v3320 = vld [vmem:[#allocation18 + $0x2c] sm:$0xf]
          %v3321 = vld [vmem:[#allocation20] sm:$0x1]
          %v3323 = vlaneseq
          %v3324 = vshrl.u32 %v3323, 7
          %v3325 = vsub.s32 0, %v3324
          %v3326 = vrot.slane %v3321, %v3325
          %v3340 = vunpack.c.l.b16 %v3309
          %v3341 = vunpack.c.l.b16 %v3310
          %v3342 = vunpack.c.l.b16 %v3311
          %v3343 = vunpack.c.l.b16 %v3312
          %v3344 = vunpack.c.l.b16 %v3313
          %v3345 = vunpack.c.l.b16 %v3314
          %v3346 = vunpack.c.l.b16 %v3315
          %v3347 = vunpack.c.l.b16 %v3316
          %v3348 = vunpack.c.l.b16 %v3317
          %v3349 = vunpack.c.l.b16 %v3318
          %v3350 = vunpack.c.l.b16 %v3319
          %v3351 = vunpack.c.l.b16 %v3320
          %v3352 = vpack.c.b16 %v3341, %v3340
          %v3353 = vpack.c.b16 %v3343, %v3342
          %v3354 = vpack.c.b16 %v3345, %v3344
          %v3355 = vpack.c.b16 %v3347, %v3346
          %v3356 = vpack.c.b16 %v3349, %v3348
          %v3357 = vpack.c.b16 %v3351, %v3350
          %vm3364 = vcmask 785408
          %v3366 = vsel %vm3364, %v3308, 0
          %3368 = vmatprep.subr.bf16.mxu0 0
          %3369 = vmatpush1.bf16.msra.mxu0 %v3352
          %3370 = vmatprep.subr.bf16.mxu0 0
          %3371 = vmatpush1.bf16.msra.mxu0 %v3353
          %3372 = vmatprep.subr.bf16.mxu0 0
          %3373 = vmatpush1.bf16.msra.mxu0 %v3354
          %3374 = vmatprep.subr.bf16.mxu0 0
          %3375 = vmatpush1.bf16.msra.mxu0 %v3355
          %3376 = vmatprep.subr.bf16.mxu0 0
          %3377 = vmatpush1.bf16.msra.mxu0 %v3356
          %3378 = vmatprep.subr.bf16.mxu0 0
          %3379 = vmatpush1.bf16.msra.mxu0 %v3357
          %3380 = vmatprep.subr.bf16.mxu0 0
          %3381 = vmatpush1.bf16.msra.mxu0 0
          %3382 = vmatprep.subr.bf16.mxu0 0
          %3383 = vmatpush1.bf16.msra.mxu0 0
          %3384 = vmatprep.subr.bf16.mxu0 0
          %3385 = vmatpush1.bf16.msra.mxu0 0
          %3386 = vmatprep.subr.bf16.mxu0 0
          %3387 = vmatpush1.bf16.msra.mxu0 0
          %3388 = vmatprep.subr.bf16.mxu0 0
          %3389 = vmatpush1.bf16.msra.mxu0 0
          %3390 = vmatprep.subr.bf16.mxu0 0
          %3391 = vmatpush1.bf16.msra.mxu0 0
          %3392 = vmatprep.subr.bf16.mxu0 0
          %3393 = vmatpush1.bf16.msra.mxu0 0
          %3394 = vmatprep.subr.bf16.mxu0 0
          %3395 = vmatpush1.bf16.msra.mxu0 0
          %3396 = vmatprep.subr.bf16.mxu0 0
          %3397 = vmatpush1.bf16.msra.mxu0 0
          %3398 = vmatprep.subr.bf16.mxu0 0
          %3399 = vmatpush1.bf16.msra.mxu0 0
          %3400 = vmatprep.mubr.bf16.mxu0 0
          %3401 = vmatmul.mubr.bf16.gmra.mrb[0].mxu0 %v3366
          %v3402 = vpop.f32.mrb[0].mxu0
          %v3403 = vadd.f32 %v3326, %v3402
          %v3404 = vpop.f32.mrb[0].mxu0
          %v3405 = vpop.f32.mrb[0].mxu0
          %v3406 = vpop.f32.mrb[0].mxu0
          %3407 = vdwg.mxu0
          %v3408 = vsub.f32 0.0, %v3403
          %v3409 = vmul.f32 %v3408, 1.442695
          %v3410 = vpow.pop %v3409
          %v3411 = vadd.f32 %v3410, 1.0
          %v3412 = vrcp.pop %v3411
          %v3413 = vmul.f32 %v3403, %v3412
          %v3414 = vpack.c.bf16 %v3413, %v3413
          %v3415 = vld [vmem:[#allocation21] sm:$0xf]
          %v3416 = vld [vmem:[#allocation23] sm:$0x1]
          %v3418 = vlaneseq
          %v3419 = vshrl.u32 %v3418, 7
          %v3420 = vsub.s32 0, %v3419
          %v3421 = vrot.slane %v3416, %v3420
          %vm3423 = vcmask 64512
          %v3425 = vsel %vm3423, %v3414, 0
          %vm3427 = vcmask 1043456
          %v3429 = vsel %vm3427, %v3415, 0
          %3431 = vmatprep.subr.bf16.mxu0 0
          %3432 = vmatpush1.bf16.msra.mxu0 %v3429
          %3433 = vmatprep.subr.bf16.mxu0 0
          %3434 = vmatpush1.bf16.msra.mxu0 0
          %3435 = vmatprep.subr.bf16.mxu0 0
          %3436 = vmatpush1.bf16.msra.mxu0 0
          %3437 = vmatprep.subr.bf16.mxu0 0
          %3438 = vmatpush1.bf16.msra.mxu0 0
          %3439 = vmatprep.subr.bf16.mxu0 0
          %3440 = vmatpush1.bf16.msra.mxu0 0
          %3441 = vmatprep.subr.bf16.mxu0 0
          %3442 = vmatpush1.bf16.msra.mxu0 0
          %3443 = vmatprep.subr.bf16.mxu0 0
          %3444 = vmatpush1.bf16.msra.mxu0 0
          %3445 = vmatprep.subr.bf16.mxu0 0
          %3446 = vmatpush1.bf16.msra.mxu0 0
          %3447 = vmatprep.subr.bf16.mxu0 0
          %3448 = vmatpush1.bf16.msra.mxu0 0
          %3449 = vmatprep.subr.bf16.mxu0 0
          %3450 = vmatpush1.bf16.msra.mxu0 0
          %3451 = vmatprep.subr.bf16.mxu0 0
          %3452 = vmatpush1.bf16.msra.mxu0 0
          %3453 = vmatprep.subr.bf16.mxu0 0
          %3454 = vmatpush1.bf16.msra.mxu0 0
          %3455 = vmatprep.subr.bf16.mxu0 0
          %3456 = vmatpush1.bf16.msra.mxu0 0
          %3457 = vmatprep.subr.bf16.mxu0 0
          %3458 = vmatpush1.bf16.msra.mxu0 0
          %3459 = vmatprep.subr.bf16.mxu0 0
          %3460 = vmatpush1.bf16.msra.mxu0 0
          %3461 = vmatprep.subr.bf16.mxu0 0
          %3462 = vmatpush1.bf16.msra.mxu0 0
          %3463 = vmatprep.mubr.bf16.mxu0 0
          %3464 = vmatmul.mubr.bf16.gmra.mrb[0].mxu0 %v3425
          %v3465 = vpop.f32.mrb[0].mxu0
          %v3466 = vadd.f32 %v3421, %v3465
          %v3467 = vpop.f32.mrb[0].mxu0
          %v3468 = vpop.f32.mrb[0].mxu0
          %v3469 = vpop.f32.mrb[0].mxu0
          %3470 = vdwg.mxu0
          %vm3471 = vcmask 23552
          %v3472 = vsel %vm3471, %v3466, -inf
          %3473 = vmax.xlane.f32.xlu0 %v3472
          %v3474 = vpop.xlane.xlu0 %3473
          %v3475 = vsub.f32 %v3466, %v3474
          %v3476 = vmul.f32 %v3475, 1.442695
          %v3477 = vpow.pop %v3476
          %v3478 = vsel %vm3471, %v3477, 0.0
          %3479 = vadd.xlane.f32.xlu0 %v3478
          %v3480 = vpop.xlane.xlu0 %3479
          %v3481 = vrcp.pop %v3480
          %v3482 = vmul.f32 %v3477, %v3481
          %3484 = vset.pattern.permute.xlu0 0
          %3485 = vperm.xlu0 %3484, %v3482
          %v3486 = vpop.permute.xlu0 %3485
          %v3488 = vmul.f32 %v3307, %v3486
          %3489 = vset.pattern.permute.xlu0 1
          %3490 = vperm.xlu0 %3489, %v3482
          %v3491 = vpop.permute.xlu0 %3490
          %v3493 = vmul.f32 %v3307, %v3491
          %3495 = vrot.lane.b32.xlu0 %v3493, 96
          %v3496 = vpop.permute.xlu0 %3495
          %v3498 = vadd.f32 %v3488, %v3496
          %3499 = vset.pattern.permute.xlu0 2
          %3500 = vperm.xlu0 %3499, %v3482
          %v3501 = vpop.permute.xlu0 %3500
          %v3503 = vmul.f32 %v3307, %v3501
          %3505 = vrot.lane.b32.xlu0 %v3503, 64
          %v3506 = vpop.permute.xlu0 %3505
          %v3508 = vadd.f32 %v3498, %v3506
          %v3509 = vld [vmem:[#allocation26] sm:$0x7]
          %3511 = vrot.lane.b32.xlu0 %v3508, 32
          %v3512 = vpop.permute.xlu0 %3511
          %v3514 = vsel %vm2038, %v3294, %v3512
          %v3515 = vpack.c.bf16 %v3514, %v3514
          %v3516 = vld [vmem:[#allocation24] sm:$0xf]
          %v3517 = vld [vmem:[#allocation24 + $0x4] sm:$0xf]
          %v3518 = vld [vmem:[#allocation24 + $0x8] sm:$0xf]
          %v3519 = vld [vmem:[#allocation24 + $0xc] sm:$0xf]
          %v3520 = vld [vmem:[#allocation24 + $0x10] sm:$0xf]
          %v3521 = vld [vmem:[#allocation24 + $0x14] sm:$0xf]
          %v3522 = vld [vmem:[#allocation24 + $0x18] sm:$0xf]
          %v3523 = vld [vmem:[#allocation24 + $0x1c] sm:$0xf]
          %v3524 = vlaneseq
          %v3525 = vshrl.u32 %v3524, 7
          %v3526 = vsub.s32 0, %v3525
          %v3527 = vrot.slane %v3509, %v3526
          %v3536 = vunpack.c.l.b16 %v3516
          %v3537 = vunpack.c.l.b16 %v3517
          %v3538 = vunpack.c.l.b16 %v3518
          %v3539 = vunpack.c.l.b16 %v3519
          %v3540 = vunpack.c.l.b16 %v3520
          %v3541 = vunpack.c.l.b16 %v3521
          %v3542 = vunpack.c.l.b16 %v3522
          %v3543 = vunpack.c.l.b16 %v3523
          %v3544 = vpack.c.b16 %v3537, %v3536
          %v3545 = vpack.c.b16 %v3539, %v3538
          %v3546 = vpack.c.b16 %v3541, %v3540
          %v3547 = vpack.c.b16 %v3543, %v3542
          %v3553 = vsel %vm1691, %v3515, 0
          %3555 = vmatprep.subr.bf16.mxu0 0
          %3556 = vmatpush1.bf16.msra.mxu0 %v3544
          %3557 = vmatprep.subr.bf16.mxu0 0
          %3558 = vmatpush1.bf16.msra.mxu0 %v3545
          %3559 = vmatprep.subr.bf16.mxu0 0
          %3560 = vmatpush1.bf16.msra.mxu0 %v3546
          %3561 = vmatprep.subr.bf16.mxu0 0
          %3562 = vmatpush1.bf16.msra.mxu0 %v3547
          %3563 = vmatprep.subr.bf16.mxu0 0
          %3564 = vmatpush1.bf16.msra.mxu0 0
          %3565 = vmatprep.subr.bf16.mxu0 0
          %3566 = vmatpush1.bf16.msra.mxu0 0
          %3567 = vmatprep.subr.bf16.mxu0 0
          %3568 = vmatpush1.bf16.msra.mxu0 0
          %3569 = vmatprep.subr.bf16.mxu0 0
          %3570 = vmatpush1.bf16.msra.mxu0 0
          %3571 = vmatprep.subr.bf16.mxu0 0
          %3572 = vmatpush1.bf16.msra.mxu0 0
          %3573 = vmatprep.subr.bf16.mxu0 0
          %3574 = vmatpush1.bf16.msra.mxu0 0
          %3575 = vmatprep.subr.bf16.mxu0 0
          %3576 = vmatpush1.bf16.msra.mxu0 0
          %3577 = vmatprep.subr.bf16.mxu0 0
          %3578 = vmatpush1.bf16.msra.mxu0 0
          %3579 = vmatprep.subr.bf16.mxu0 0
          %3580 = vmatpush1.bf16.msra.mxu0 0
          %3581 = vmatprep.subr.bf16.mxu0 0
          %3582 = vmatpush1.bf16.msra.mxu0 0
          %3583 = vmatprep.subr.bf16.mxu0 0
          %3584 = vmatpush1.bf16.msra.mxu0 0
          %3585 = vmatprep.subr.bf16.mxu0 0
          %3586 = vmatpush1.bf16.msra.mxu0 0
          %3587 = vmatprep.mubr.bf16.mxu0 0
          %3588 = vmatmul.mubr.bf16.gmra.mrb[0].mxu0 %v3553
          %v3589 = vpop.f32.mrb[0].mxu0
          %v3590 = vadd.f32 %v3527, %v3589
          %v3591 = vpop.f32.mrb[0].mxu0
          %v3592 = vpop.f32.mrb[0].mxu0
          %v3593 = vpop.f32.mrb[0].mxu0
          %3594 = vdwg.mxu0
          %v3595 = vsel %vm1691, %v3590, 0.0
          %3596 = vadd.xlane.f32.xlu0 %v3595
          %v3597 = vpop.xlane.xlu0 %3596
          %v3598 = vmul.f32 %v3597, %v1716
          %v3599 = vsub.f32 %v3590, %v3598
          %v3600 = vmul.f32 %v3599, %v3599
          %v3601 = vsel %vm1691, %v3600, 0.0
          %3602 = vadd.xlane.f32.xlu0 %v3601
          %v3603 = vpop.xlane.xlu0 %3602
          %v3604 = vmul.f32 %v3603, %v1716
          %v3605 = vadd.f32 %v3604, 1e-05
          %v3606 = vrsqrt.pop %v3605
          %v3607 = vmul.f32 %v3599, %v3606
          %v3608 = vlaneseq
          %v3609 = vshrl.u32 %v3608, 7
          %v3610 = vsub.s32 1, %v3609
          %v3611 = vrot.slane %v3509, %v3610
          %v3612 = vmul.f32 %v3607, %v3611
          %v3613 = vlaneseq
          %v3614 = vshrl.u32 %v3613, 7
          %v3615 = vsub.s32 2, %v3614
          %v3616 = vrot.slane %v3509, %v3615
          %v3617 = vadd.f32 %v3612, %v3616
          %v3618 = vsub.f32 0.0, %v3617
          %v3619 = vmul.f32 %v3618, 1.442695
          %v3620 = vpow.pop %v3619
          %v3621 = vadd.f32 %v3620, 1.0
          %v3622 = vrcp.pop %v3621
          %v3623 = vmul.f32 %v3617, %v3622
          %v3624 = vld [vmem:[#allocation29] sm:$0x7]
          %v3625 = vpack.c.bf16 %v3623, %v3623
          %v3626 = vld [vmem:[#allocation27] sm:$0xf]
          %v3627 = vld [vmem:[#allocation27 + $0x4] sm:$0xf]
          %v3628 = vld [vmem:[#allocation27 + $0x8] sm:$0xf]
          %v3629 = vld [vmem:[#allocation27 + $0xc] sm:$0xf]
          %v3630 = vld [vmem:[#allocation27 + $0x10] sm:$0xf]
          %v3631 = vld [vmem:[#allocation27 + $0x14] sm:$0xf]
          %v3632 = vld [vmem:[#allocation27 + $0x18] sm:$0xf]
          %v3633 = vld [vmem:[#allocation27 + $0x1c] sm:$0xf]
          %v3634 = vlaneseq
          %v3635 = vshrl.u32 %v3634, 7
          %v3636 = vsub.s32 0, %v3635
          %v3637 = vrot.slane %v3624, %v3636
          %v3646 = vunpack.c.l.b16 %v3626
          %v3647 = vunpack.c.l.b16 %v3627
          %v3648 = vunpack.c.l.b16 %v3628
          %v3649 = vunpack.c.l.b16 %v3629
          %v3650 = vunpack.c.l.b16 %v3630
          %v3651 = vunpack.c.l.b16 %v3631
          %v3652 = vunpack.c.l.b16 %v3632
          %v3653 = vunpack.c.l.b16 %v3633
          %v3654 = vpack.c.b16 %v3647, %v3646
          %v3655 = vpack.c.b16 %v3649, %v3648
          %v3656 = vpack.c.b16 %v3651, %v3650
          %v3657 = vpack.c.b16 %v3653, %v3652
          %v3663 = vsel %vm1691, %v3625, 0
          %3665 = vmatprep.subr.bf16.mxu0 0
          %3666 = vmatpush1.bf16.msra.mxu0 %v3654
          %3667 = vmatprep.subr.bf16.mxu0 0
          %3668 = vmatpush1.bf16.msra.mxu0 %v3655
          %3669 = vmatprep.subr.bf16.mxu0 0
          %3670 = vmatpush1.bf16.msra.mxu0 %v3656
          %3671 = vmatprep.subr.bf16.mxu0 0
          %3672 = vmatpush1.bf16.msra.mxu0 %v3657
          %3673 = vmatprep.subr.bf16.mxu0 0
          %3674 = vmatpush1.bf16.msra.mxu0 0
          %3675 = vmatprep.subr.bf16.mxu0 0
          %3676 = vmatpush1.bf16.msra.mxu0 0
          %3677 = vmatprep.subr.bf16.mxu0 0
          %3678 = vmatpush1.bf16.msra.mxu0 0
          %3679 = vmatprep.subr.bf16.mxu0 0
          %3680 = vmatpush1.bf16.msra.mxu0 0
          %3681 = vmatprep.subr.bf16.mxu0 0
          %3682 = vmatpush1.bf16.msra.mxu0 0
          %3683 = vmatprep.subr.bf16.mxu0 0
          %3684 = vmatpush1.bf16.msra.mxu0 0
          %3685 = vmatprep.subr.bf16.mxu0 0
          %3686 = vmatpush1.bf16.msra.mxu0 0
          %3687 = vmatprep.subr.bf16.mxu0 0
          %3688 = vmatpush1.bf16.msra.mxu0 0
          %3689 = vmatprep.subr.bf16.mxu0 0
          %3690 = vmatpush1.bf16.msra.mxu0 0
          %3691 = vmatprep.subr.bf16.mxu0 0
          %3692 = vmatpush1.bf16.msra.mxu0 0
          %3693 = vmatprep.subr.bf16.mxu0 0
          %3694 = vmatpush1.bf16.msra.mxu0 0
          %3695 = vmatprep.subr.bf16.mxu0 0
          %3696 = vmatpush1.bf16.msra.mxu0 0
          %3697 = vmatprep.mubr.bf16.mxu0 0
          %3698 = vmatmul.mubr.bf16.gmra.mrb[0].mxu0 %v3663
          %v3699 = vpop.f32.mrb[0].mxu0
          %v3700 = vadd.f32 %v3637, %v3699
          %v3701 = vpop.f32.mrb[0].mxu0
          %v3702 = vpop.f32.mrb[0].mxu0
          %v3703 = vpop.f32.mrb[0].mxu0
          %3704 = vdwg.mxu0
          %v3705 = vadd.f32 %v3700, %v3294
          %v3706 = vsel %vm2038, %v3705, 0.0
          %3707 = vadd.xlane.f32.xlu0 %v3706
          %v3708 = vpop.xlane.xlu0 %3707
          %v3709 = vrcp.pop 32.0
          %v3710 = vmul.f32 %v3708, %v3709
          %v3711 = vsub.f32 %v3705, %v3710
          %v3712 = vmul.f32 %v3711, %v3711
          %v3713 = vsel %vm2038, %v3712, 0.0
          %3714 = vadd.xlane.f32.xlu0 %v3713
          %v3715 = vpop.xlane.xlu0 %3714
          %v3716 = vmul.f32 %v3715, %v3709
          %v3717 = vadd.f32 %v3716, 1e-05
          %v3718 = vrsqrt.pop %v3717
          %v3719 = vmul.f32 %v3711, %v3718
          %v3720 = vlaneseq
          %v3721 = vshrl.u32 %v3720, 7
          %v3722 = vsub.s32 1, %v3721
          %v3723 = vrot.slane %v3624, %v3722
          %v3724 = vmul.f32 %v3719, %v3723
          %v3725 = vlaneseq
          %v3726 = vshrl.u32 %v3725, 7
          %v3727 = vsub.s32 2, %v3726
          %v3728 = vrot.slane %v3624, %v3727
          %v3729 = vadd.f32 %v3724, %v3728
          %3730 = vst.msk [vmem:[%s883] sm:$0xff] %vm2038, %v3729
        $region164: #{forward.6} parent=87 // pred_fallthru
          _
        %s3731 = sand.u32 %s448, 1
        %s3732 = scalar_lea.sflag [#allocation5], %s3731
        %s3733 = sand.u32 %s448, 1
        %s3734 = smul.addr %s3733, 8
        %s3735 = scalar_lea.vmem [#allocation30], %s3734
        // Predicated region
        $region165: #{forward.6} parent=87 // pred_check
          %p3736 = pneg %p458
        $region166: #{forward.6} parent=87 // pred_check_branch
          %3738 = sbr.rel (%p3736) target = $region168
        $region167: #{forward.6} parent=87 // pred_region
          %s3740 = ssub.s32 128, 128
          %3741 = vsyncadd %s3732, %s3740
          %s3742 = smul.addr %s50, 128
          %s3743 = scalar_lea.hbm %s17, %s3742
          %s3745 = sshll.u32 %s3735, 4
          %s3746 = int_to_ptr.vmem [resolvable:$true] %s3745
          %3748 = dma.vmem_to_hbm [thread:$0]  %s3746, 128, %s3743, %s3732
        $region168: #{forward.6} parent=87 // pred_fallthru
          _
      $region88: #{forward.6} parent=5 // pred_fallthru
        _
      %p3749 = scmp.le.s32.totalorder 2, %s41
      // Predicated region
      $region169: #{forward.6} parent=5 // pred_check
        %p3750 = pneg %p3749
      $region170: #{forward.6} parent=5 // pred_check_branch
        %3752 = sbr.rel (%p3750) target = $region172
      $region171: #{forward.6} parent=5 // pred_region
        %s3753 = ssub.s32 %s41, 2
        // Predicated region
        $region173: #{forward.6} parent=171 // pred_check
          %p3754 = pneg %p464
        $region174: #{forward.6} parent=171 // pred_check_branch
          %3756 = sbr.rel (%p3754) target = $region176
        $region175: #{forward.6} parent=171 // pred_region
          %s3757 = sand.u32 %s449, 1
          %s3758 = scalar_lea.sflag [#allocation5], %s3757
          %s3759 = sand.u32 %s449, 1
          %s3760 = smul.addr %s3759, 8
          %s3761 = scalar_lea.vmem [#allocation30], %s3760
          %3762 = dma.done %s3758, 128
        $region176: #{forward.6} parent=171 // pred_fallthru
          _
      $region172: #{forward.6} parent=5 // pred_fallthru
        _
    $region6: #{forward.6} parent=1 // loop_footer
      %s45 = sadd.s32 1, %s41
    $region7: #{forward.6} parent=1 // loop_footer_branch
      %40 = sbr.rel target = $region3
    $region8: #{forward.6} parent=1 // loop_exit
      _
    %3763 = vsyncpa [#allocation4], 1
    %s3764 = scalar_lea.sflag [#allocation4], 1
    %3765 = vsyncpa %s3764, 1
    %3766 = vsyncpa [#allocation7], 1
    %s3767 = scalar_lea.sflag [#allocation7], 1
    %3768 = vsyncpa %s3767, 1
    %3769 = vsyncpa [#allocation10], 1
    %s3770 = scalar_lea.sflag [#allocation10], 1
    %3771 = vsyncpa %s3770, 1
    %3772 = vsyncpa [#allocation13], 1
    %3773 = vsyncpa [#allocation16], 1
    %3774 = vsyncpa [#allocation19], 1
    %3775 = vsyncpa [#allocation22], 1
    %3776 = vsyncpa [#allocation25], 1
    %3777 = vsyncpa [#allocation28], 1
    %3778 = vsyncpa [#allocation5], 1
    %s3779 = scalar_lea.sflag [#allocation5], 1
    %3780 = vsyncpa %s3779, 1

</llo_original>
